<compile_context>
chip_gen: v7x
topology: tpu7x:2x2x1
jax: 0.10.0
libtpu: 0.0.40
codegen_flags: <defaults>
</compile_context>

<pallas_src>
import functools
import math

import jax
import jax.numpy as jnp
from jax.experimental import pallas as pl
from jax.experimental.pallas import tpu as pltpu

LANE = 128      # vreg lane width
SUBLANE = 8     # vreg sublane count


def _ceil_to(x, m):
    return ((x + m - 1) // m) * m


def _pad_axis(x, axis, size):
    pad = size - x.shape[axis]
    if pad <= 0:
        return x
    widths = [(0, 0)] * x.ndim
    widths[axis] = (0, pad)
    return jnp.pad(x, widths)


def _spec(shape):
    n = len(shape)
    return pl.BlockSpec(shape, lambda i: (0,) * n)


# ----------------------- Fused 2-layer LSTM kernel ----------------------------
def fused_lstm2_kernel(x_ref, wih0_ref, whh0_ref, b0_ref,
                       wih1_ref, whh1_ref, b1_ref,
                       h0i_ref, c0i_ref, h1i_ref, c1i_ref,
                       out_ref, h0n_ref, c0n_ref, h1n_ref, c1n_ref,
                       xg_scr, h0_scr, c0_scr, h1_scr, c1_scr,
                       *, T, Bp):
    Hp = h0_scr.shape[-1]

    # Layer-0 input projection for every timestep, hoisted out of the
    # sequential recurrence: one (T*Bp, Ep) x (Ep, 4Hp) bf16 MXU matmul.
    xg_scr[...] = jnp.dot(x_ref[...], wih0_ref[...],
                          preferred_element_type=jnp.float32)

    h0_scr[...] = h0i_ref[...]
    c0_scr[...] = c0i_ref[...]
    h1_scr[...] = h1i_ref[...]
    c1_scr[...] = c1i_ref[...]

    def cell(gates, c):
        # Gate slices are lane-aligned because Hp % 128 == 0 (i, f, g, o).
        i_g = jax.nn.sigmoid(gates[:, 0 * Hp:1 * Hp])
        f_g = jax.nn.sigmoid(gates[:, 1 * Hp:2 * Hp])
        g_g = jnp.tanh(gates[:, 2 * Hp:3 * Hp])
        o_g = jax.nn.sigmoid(gates[:, 3 * Hp:4 * Hp])
        c_new = f_g * c + i_g * g_g
        h_new = o_g * jnp.tanh(c_new)
        return h_new, c_new

    def step(t, carry):
        row = pl.multiple_of(t * Bp, Bp)
        h0 = h0_scr[...]
        c0 = c0_scr[...]
        h1 = h1_scr[...]
        c1 = c1_scr[...]

        # Layer 0: precomputed x-gates + recurrent term.
        gates0 = (xg_scr[pl.ds(row, Bp), :]
                  + jnp.dot(h0.astype(jnp.bfloat16), whh0_ref[...],
                            preferred_element_type=jnp.float32)
                  + b0_ref[...])
        h0_new, c0_new = cell(gates0, c0)

        # Inter-layer dropout: identity (eval mode).
        # Layer 1.
        gates1 = (jnp.dot(h0_new.astype(jnp.bfloat16), wih1_ref[...],
                          preferred_element_type=jnp.float32)
                  + jnp.dot(h1.astype(jnp.bfloat16), whh1_ref[...],
                            preferred_element_type=jnp.float32)
                  + b1_ref[...])
        h1_new, c1_new = cell(gates1, c1)

        h0_scr[...] = h0_new
        c0_scr[...] = c0_new
        h1_scr[...] = h1_new
        c1_scr[...] = c1_new
        out_ref[pl.ds(row, Bp), :] = h1_new.astype(out_ref.dtype)
        return carry

    jax.lax.fori_loop(0, T, step, 0, unroll=True)

    # Final states written once, after the loop (not every timestep).
    h0n_ref[...] = h0_scr[...]
    c0n_ref[...] = c0_scr[...]
    h1n_ref[...] = h1_scr[...]
    c1n_ref[...] = c1_scr[...]


def fused_lstm2_pallas(x_flat, wih0_t, whh0_t, b0, wih1_t, whh1_t, b1,
                       h0_0, c0_0, h0_1, c0_1, *, T, Bp, Hp):
    """x_flat: (T*Bp, Ep) bf16 (time-major).  Returns (out (T*Bp,Hp) f32,
    h_N/c_N per layer, each (Bp, Hp) f32)."""
    TB, Ep = x_flat.shape
    kernel = functools.partial(fused_lstm2_kernel, T=T, Bp=Bp)

    grid_spec = pltpu.PrefetchScalarGridSpec(
        num_scalar_prefetch=0,
        grid=(1,),
        in_specs=[
            _spec((TB, Ep)),
            _spec(wih0_t.shape), _spec(whh0_t.shape), _spec(b0.shape),
            _spec(wih1_t.shape), _spec(whh1_t.shape), _spec(b1.shape),
            _spec((Bp, Hp)), _spec((Bp, Hp)),
            _spec((Bp, Hp)), _spec((Bp, Hp)),
        ],
        out_specs=[
            _spec((TB, Hp)),
            _spec((Bp, Hp)), _spec((Bp, Hp)),
            _spec((Bp, Hp)), _spec((Bp, Hp)),
        ],
        scratch_shapes=[
            pltpu.VMEM((TB, 4 * Hp), jnp.float32),   # hoisted x-gates (layer 0)
            pltpu.VMEM((Bp, Hp), jnp.float32),       # h layer 0
            pltpu.VMEM((Bp, Hp), jnp.float32),       # c layer 0
            pltpu.VMEM((Bp, Hp), jnp.float32),       # h layer 1
            pltpu.VMEM((Bp, Hp), jnp.float32),       # c layer 1
        ],
    )

    out_shape = (
        jax.ShapeDtypeStruct((TB, Hp), jnp.float32),
        jax.ShapeDtypeStruct((Bp, Hp), jnp.float32),
        jax.ShapeDtypeStruct((Bp, Hp), jnp.float32),
        jax.ShapeDtypeStruct((Bp, Hp), jnp.float32),
        jax.ShapeDtypeStruct((Bp, Hp), jnp.float32),
    )

    return pl.pallas_call(
        kernel,
        out_shape=out_shape,
        grid_spec=grid_spec,
        compiler_params=pltpu.CompilerParams(
            dimension_semantics=("arbitrary",),
            vmem_limit_bytes=48 * 1024 * 1024),
    )(x_flat, wih0_t, whh0_t, b0, wih1_t, whh1_t, b1,
      h0_0, c0_0, h0_1, c0_1)


# ------------------------------ Tiled linear ----------------------------------
def linear_kernel(x_ref, w_ref, b_ref, o_ref):
    o_ref[...] = (jnp.dot(x_ref[...], w_ref[...],
                          preferred_element_type=jnp.float32)
                  + b_ref[...])


def linear_pallas(x_bf16, w_t, b2d):
    """x: (Np, Hp) bf16, w_t: (Hp, Dp) bf16, b2d: (1, Dp) f32 -> (Np, Dp) f32.
    Np multiple of 8, Dp multiple of 128 (lane-dense output stores)."""
    Np, Hp = x_bf16.shape
    Dp = w_t.shape[1]
    tn = math.gcd(Np, 256)   # N tile (multiple of 8)
    td = 128                 # lane-dense Dout tile (works on v5e/v6e/v7x)
    grid = (Np // tn, Dp // td)

    grid_spec = pltpu.PrefetchScalarGridSpec(
        num_scalar_prefetch=0,
        grid=grid,
        in_specs=[
            pl.BlockSpec((tn, Hp), lambda i, j: (i, 0)),
            pl.BlockSpec((Hp, td), lambda i, j: (0, j)),
            pl.BlockSpec((1, td), lambda i, j: (0, j)),
        ],
        out_specs=pl.BlockSpec((tn, td), lambda i, j: (i, j)),
    )

    return pl.pallas_call(
        linear_kernel,
        out_shape=jax.ShapeDtypeStruct((Np, Dp), jnp.float32),
        grid_spec=grid_spec,
        compiler_params=pltpu.CompilerParams(
            dimension_semantics=("parallel", "parallel"),
            vmem_limit_bytes=48 * 1024 * 1024),
    )(x_bf16, w_t, b2d)


# ----------------------- One-time parameter preparation -----------------------
def prepare_params(params, *, embed_size, hidden_size, num_layers):
    """Convert PyTorch-layout params into kernel-ready layout ONCE:
    transposed, gate-blocked, zero-padded to (8,128)-friendly shapes, bf16
    matmul operands, fused f32 biases."""
    assert num_layers == 2, "fused kernel is specialized for 2 LSTM layers"
    H = hidden_size
    Ep = _ceil_to(embed_size, LANE)
    Hp = _ceil_to(H, LANE)
    Bp = _ceil_to(params["h0"].shape[1], SUBLANE)

    prep = {}
    # Embedding table: pad E -> Ep, bf16 (it feeds a bf16 MXU matmul).
    prep["embed"] = _pad_axis(params["embed"], 1, Ep).astype(jnp.bfloat16)

    for layer in range(num_layers):
        in_dim = embed_size if layer == 0 else H
        Ip = Ep if layer == 0 else Hp
        w_ih = params[f"lstm_w_ih_l{layer}"].reshape(4, H, in_dim)
        w_hh = params[f"lstm_w_hh_l{layer}"].reshape(4, H, H)
        b = (params[f"lstm_b_ih_l{layer}"]
             + params[f"lstm_b_hh_l{layer}"]).reshape(4, H)
        # Pad each gate block to Hp and the contraction dim, then lay out as
        # (in, 4*Hp) so each gate occupies its own lane-aligned column block.
        w_ih = _pad_axis(_pad_axis(w_ih, 1, Hp), 2, Ip)      # (4, Hp, Ip)
        w_hh = _pad_axis(_pad_axis(w_hh, 1, Hp), 2, Hp)      # (4, Hp, Hp)
        b = _pad_axis(b, 1, Hp)                              # (4, Hp)
        prep[f"wih{layer}_t"] = (jnp.transpose(w_ih, (2, 0, 1))
                                 .reshape(Ip, 4 * Hp).astype(jnp.bfloat16))
        prep[f"whh{layer}_t"] = (jnp.transpose(w_hh, (2, 0, 1))
                                 .reshape(Hp, 4 * Hp).astype(jnp.bfloat16))
        prep[f"b{layer}"] = b.reshape(1, 4 * Hp).astype(jnp.float32)

    # Linear: pre-transpose, pad K -> Hp and Dout -> multiple of 128.
    Dout = params["linear_w"].shape[0]
    Dp = _ceil_to(Dout, LANE)
    w_t = jnp.transpose(params["linear_w"])                  # (H, Dout)
    prep["linear_w_t"] = _pad_axis(_pad_axis(w_t, 0, Hp), 1, Dp).astype(jnp.bfloat16)
    prep["linear_b"] = _pad_axis(params["linear_b"].reshape(1, Dout),
                                 1, Dp).astype(jnp.float32)

    # Initial states padded to (num_layers, Bp, Hp); padded cols stay zero.
    prep["h0"] = _pad_axis(_pad_axis(params["h0"], 1, Bp), 2, Hp).astype(jnp.float32)
    prep["c0"] = _pad_axis(_pad_axis(params["c0"], 1, Bp), 2, Hp).astype(jnp.float32)
    return prep


# ------------------------------ Full RNNLM forward ----------------------------
def rnnlm_forward(token_ids, prep, *, hidden_size, vocab_size):
    B, T = token_ids.shape
    H = hidden_size
    Ep = prep["embed"].shape[1]
    Hp = prep["whh0_t"].shape[0]
    Bp = prep["h0"].shape[1]
    Dout = vocab_size + 4 * hidden_size

    # Embedding lookup (glue gather in XLA; table pre-padded, bf16).
    x = jnp.take(prep["embed"], token_ids, axis=0)           # (B, T, Ep) bf16
    # drop1: identity (eval mode)

    x = jnp.transpose(x, (1, 0, 2))                          # (T, B, Ep)
    x = _pad_axis(x, 1, Bp)                                  # (T, Bp, Ep)
    x = x.reshape(T * Bp, Ep)                                # time-major, flat

    out_flat, h0n, c0n, h1n, c1n = fused_lstm2_pallas(
        x,
        prep["wih0_t"], prep["whh0_t"], prep["b0"],
        prep["wih1_t"], prep["whh1_t"], prep["b1"],
        prep["h0"][0], prep["c0"][0], prep["h0"][1], prep["c0"][1],
        T=T, Bp=Bp, Hp=Hp)

    out = out_flat.reshape(T, Bp, Hp)[:, :B, :]              # (T, B, Hp)
    out_bt = jnp.transpose(out, (1, 0, 2)).reshape(B * T, Hp)
    # drop2: identity (eval mode)

    Np = _ceil_to(B * T, SUBLANE)
    out_bt = _pad_axis(out_bt, 0, Np).astype(jnp.bfloat16)
    logits = linear_pallas(out_bt, prep["linear_w_t"], prep["linear_b"])
    logits = logits[:B * T, :Dout].reshape(B, T, Dout)

    h_n = jnp.stack([h0n[:B, :H], h1n[:B, :H]], axis=0)
    c_n = jnp.stack([c0n[:B, :H], c1n[:B, :H]], axis=0)
    return logits, (h_n, c_n)


# --------------------------------- Param init ---------------------------------
def init_params(key, vocab_size, embed_size, hidden_size, num_layers, batch_size):
    params = {}
    keys = jax.random.split(key, 3 + 4 * num_layers)
    ki = iter(keys)

    # Embedding: uniform(-0.1, 0.1)
    params["embed"] = jax.random.uniform(
        next(ki), (vocab_size, embed_size), jnp.float32, -0.1, 0.1)

    # Linear: weight uniform(-0.1, 0.1), bias 0
    out_dim = vocab_size + 4 * hidden_size
    params["linear_w"] = jax.random.uniform(
        next(ki), (out_dim, hidden_size), jnp.float32, -0.1, 0.1)
    params["linear_b"] = jnp.zeros((out_dim,), jnp.float32)

    # LSTM weights: PyTorch default uniform(-1/sqrt(H), 1/sqrt(H));
    # forget-gate bias slice [H:2H] zeroed (per init_weights()).
    k = 1.0 / math.sqrt(hidden_size)
    for layer in range(num_layers):
        in_dim = embed_size if layer == 0 else hidden_size
        params[f"lstm_w_ih_l{layer}"] = jax.random.uniform(
            next(ki), (4 * hidden_size, in_dim), jnp.float32, -k, k)
        params[f"lstm_w_hh_l{layer}"] = jax.random.uniform(
            next(ki), (4 * hidden_size, hidden_size), jnp.float32, -k, k)
        b_ih = jax.random.uniform(
            next(ki), (4 * hidden_size,), jnp.float32, -k, k)
        b_hh = jax.random.uniform(
            next(ki), (4 * hidden_size,), jnp.float32, -k, k)
        b_ih = b_ih.at[hidden_size:2 * hidden_size].set(0.0)
        b_hh = b_hh.at[hidden_size:2 * hidden_size].set(0.0)
        params[f"lstm_b_ih_l{layer}"] = b_ih
        params[f"lstm_b_hh_l{layer}"] = b_hh

    # initial_state: zeros (num_layers, B, H) for both h and c
    params["h0"] = jnp.zeros((num_layers, batch_size, hidden_size), jnp.float32)
    params["c0"] = jnp.zeros((num_layers, batch_size, hidden_size), jnp.float32)
    return params


# ------------------------------------ Main ------------------------------------
if __name__ == "__main__":
    # Small, deterministic configuration consistent with the module's forward.
    vocab_size = 50
    embed_size = 32
    hidden_size = 32
    num_layers = 2
    batch_size = 4
    seq_len = 8

    key = jax.random.PRNGKey(0)
    k_param, k_tok = jax.random.split(key)

    params = init_params(k_param, vocab_size, embed_size, hidden_size,
                         num_layers, batch_size)
    prep = prepare_params(params, embed_size=embed_size,
                          hidden_size=hidden_size, num_layers=num_layers)

    token_ids = jax.random.randint(k_tok, (batch_size, seq_len), 0, vocab_size,
                                   dtype=jnp.int32)

    fwd = jax.jit(functools.partial(rnnlm_forward,
                                    hidden_size=hidden_size,
                                    vocab_size=vocab_size))
    logits, (h_n, c_n) = fwd(token_ids, prep)
    jax.block_until_ready((logits, h_n, c_n))

    expected_out_dim = vocab_size + 4 * hidden_size
    assert logits.shape == (batch_size, seq_len, expected_out_dim), logits.shape
    assert h_n.shape == (num_layers, batch_size, hidden_size), h_n.shape
    assert c_n.shape == (num_layers, batch_size, hidden_size), c_n.shape
    assert bool(jnp.all(jnp.isfinite(logits)))

    print("KERNEL_OK")
</pallas_src>

<mosaic_0001>
module attributes {stable_mosaic.version = 11 : i64} {
  func.func @linear_kernel(%arg0: i32, %arg1: i32, %arg2: memref<32x128xbf16, #tpu.memory_space<vmem>>, %arg3: memref<128x128xbf16, #tpu.memory_space<vmem>>, %arg4: memref<1x128xf32, #tpu.memory_space<vmem>>, %arg5: memref<32x128xf32, #tpu.memory_space<vmem>>) attributes {dimension_semantics = [#tpu.dimension_semantics<parallel>, #tpu.dimension_semantics<parallel>], iteration_bounds = array<i64: 1, 2>, scalar_prefetch = 0 : i64, scratch_operands = 0 : i64, tpu.core_type = #tpu.core_type<tc>, window_params = [{transform_indices = @transform_0, window_bounds = array<i64: 32, 128>}, {transform_indices = @transform_1, window_bounds = array<i64: 128, 128>}, {transform_indices = @transform_2, window_bounds = array<i64: 1, 128>}, {transform_indices = @transform_3, window_bounds = array<i64: 32, 128>}]} {
    %c0 = arith.constant 0 : index
    %c0_0 = arith.constant 0 : index
    %0 = vector.load %arg2[%c0, %c0_0] : memref<32x128xbf16, #tpu.memory_space<vmem>>, vector<32x128xbf16>
    %c0_1 = arith.constant 0 : index
    %c0_2 = arith.constant 0 : index
    %1 = vector.load %arg3[%c0_1, %c0_2] : memref<128x128xbf16, #tpu.memory_space<vmem>>, vector<128x128xbf16>
    %cst = arith.constant dense<0.000000e+00> : vector<32x128xf32>
    %2 = tpu.matmul %0, %1, %cst {dimension_numbers = #tpu.dot_dimension_numbers<[1], [0], [0], [1], [0, 0, 1, 1], [], []>} : vector<32x128xbf16>, vector<128x128xbf16>, vector<32x128xf32> -> vector<32x128xf32>
    %c0_3 = arith.constant 0 : index
    %c0_4 = arith.constant 0 : index
    %3 = vector.load %arg4[%c0_3, %c0_4] : memref<1x128xf32, #tpu.memory_space<vmem>>, vector<1x128xf32>
    %4 = vector.broadcast %3 : vector<1x128xf32> to vector<32x128xf32>
    %5 = arith.addf %2, %4 : vector<32x128xf32>
    %c0_5 = arith.constant 0 : index
    %c0_6 = arith.constant 0 : index
    %6 = vector.load %arg5[%c0_5, %c0_6] : memref<32x128xf32, #tpu.memory_space<vmem>>, vector<32x128xf32>
    tpu.vector_store %arg5[%c0_5, %c0_6], %5 {strides = array<i32>} : memref<32x128xf32, #tpu.memory_space<vmem>>, vector<32x128xf32>,
    return
  }
  func.func @transform_0(%arg0: i32, %arg1: i32) -> (i32, i32) {
    %c0_i32 = arith.constant 0 : i32
    %c0_i32_0 = arith.constant 0 : i32
    return %arg0, %c0_i32 : i32, i32
  }
  func.func @transform_1(%arg0: i32, %arg1: i32) -> (i32, i32) {
    %c0_i32 = arith.constant 0 : i32
    %c0_i32_0 = arith.constant 0 : i32
    return %c0_i32, %arg1 : i32, i32
  }
  func.func @transform_2(%arg0: i32, %arg1: i32) -> (i32, i32) {
    %c0_i32 = arith.constant 0 : i32
    %c0_i32_0 = arith.constant 0 : i32
    return %c0_i32, %arg1 : i32, i32
  }
  func.func @transform_3(%arg0: i32, %arg1: i32) -> (i32, i32) {
    %c0_i32 = arith.constant 0 : i32
    return %arg0, %arg1 : i32, i32
  }
}

module attributes {stable_mosaic.version = 11 : i64} {
  func.func @fused_lstm2_kernel(%arg0: i32, %arg1: memref<64x128xbf16, #tpu.memory_space<vmem>>, %arg2: memref<128x512xbf16, #tpu.memory_space<vmem>>, %arg3: memref<128x512xbf16, #tpu.memory_space<vmem>>, %arg4: memref<1x512xf32, #tpu.memory_space<vmem>>, %arg5: memref<128x512xbf16, #tpu.memory_space<vmem>>, %arg6: memref<128x512xbf16, #tpu.memory_space<vmem>>, %arg7: memref<1x512xf32, #tpu.memory_space<vmem>>, %arg8: memref<8x128xf32, #tpu.memory_space<vmem>>, %arg9: memref<8x128xf32, #tpu.memory_space<vmem>>, %arg10: memref<8x128xf32, #tpu.memory_space<vmem>>, %arg11: memref<8x128xf32, #tpu.memory_space<vmem>>, %arg12: memref<64x128xf32, #tpu.memory_space<vmem>>, %arg13: memref<8x128xf32, #tpu.memory_space<vmem>>, %arg14: memref<8x128xf32, #tpu.memory_space<vmem>>, %arg15: memref<8x128xf32, #tpu.memory_space<vmem>>, %arg16: memref<8x128xf32, #tpu.memory_space<vmem>>, %arg17: memref<64x512xf32, #tpu.memory_space<vmem>>, %arg18: memref<8x128xf32, #tpu.memory_space<vmem>>, %arg19: memref<8x128xf32, #tpu.memory_space<vmem>>, %arg20: memref<8x128xf32, #tpu.memory_space<vmem>>, %arg21: memref<8x128xf32, #tpu.memory_space<vmem>>) attributes {dimension_semantics = [#tpu.dimension_semantics<arbitrary>], iteration_bounds = array<i64: 1>, scalar_prefetch = 0 : i64, scratch_operands = 5 : i64, tpu.core_type = #tpu.core_type<tc>, window_params = [{pipeline_mode = #tpu.pipeline_mode<synchronous>, transform_indices = @transform_0, window_bounds = array<i64: 64, 128>}, {pipeline_mode = #tpu.pipeline_mode<synchronous>, transform_indices = @transform_1, window_bounds = array<i64: 128, 512>}, {pipeline_mode = #tpu.pipeline_mode<synchronous>, transform_indices = @transform_2, window_bounds = array<i64: 128, 512>}, {pipeline_mode = #tpu.pipeline_mode<synchronous>, transform_indices = @transform_3, window_bounds = array<i64: 1, 512>}, {pipeline_mode = #tpu.pipeline_mode<synchronous>, transform_indices = @transform_4, window_bounds = array<i64: 128, 512>}, {pipeline_mode = #tpu.pipeline_mode<synchronous>, transform_indices = @transform_5, window_bounds = array<i64: 128, 512>}, {pipeline_mode = #tpu.pipeline_mode<synchronous>, transform_indices = @transform_6, window_bounds = array<i64: 1, 512>}, {pipeline_mode = #tpu.pipeline_mode<synchronous>, transform_indices = @transform_7, window_bounds = array<i64: 8, 128>}, {pipeline_mode = #tpu.pipeline_mode<synchronous>, transform_indices = @transform_8, window_bounds = array<i64: 8, 128>}, {pipeline_mode = #tpu.pipeline_mode<synchronous>, transform_indices = @transform_9, window_bounds = array<i64: 8, 128>}, {pipeline_mode = #tpu.pipeline_mode<synchronous>, transform_indices = @transform_10, window_bounds = array<i64: 8, 128>}, {pipeline_mode = #tpu.pipeline_mode<synchronous>, transform_indices = @transform_11, window_bounds = array<i64: 64, 128>}, {pipeline_mode = #tpu.pipeline_mode<synchronous>, transform_indices = @transform_12, window_bounds = array<i64: 8, 128>}, {pipeline_mode = #tpu.pipeline_mode<synchronous>, transform_indices = @transform_13, window_bounds = array<i64: 8, 128>}, {pipeline_mode = #tpu.pipeline_mode<synchronous>, transform_indices = @transform_14, window_bounds = array<i64: 8, 128>}, {pipeline_mode = #tpu.pipeline_mode<synchronous>, transform_indices = @transform_15, window_bounds = array<i64: 8, 128>}]} {
    %c0 = arith.constant 0 : index
    %c0_0 = arith.constant 0 : index
    %0 = vector.load %arg1[%c0, %c0_0] : memref<64x128xbf16, #tpu.memory_space<vmem>>, vector<64x128xbf16>
    %c0_1 = arith.constant 0 : index
    %c0_2 = arith.constant 0 : index
    %1 = vector.load %arg2[%c0_1, %c0_2] : memref<128x512xbf16, #tpu.memory_space<vmem>>, vector<128x512xbf16>
    %cst = arith.constant dense<0.000000e+00> : vector<64x512xf32>
    %2 = tpu.matmul %0, %1, %cst {dimension_numbers = #tpu.dot_dimension_numbers<[1], [0], [0], [1], [0, 0, 1, 1], [], []>} : vector<64x128xbf16>, vector<128x512xbf16>, vector<64x512xf32> -> vector<64x512xf32>
    %c0_3 = arith.constant 0 : index
    %c0_4 = arith.constant 0 : index
    %3 = vector.load %arg17[%c0_3, %c0_4] : memref<64x512xf32, #tpu.memory_space<vmem>>, vector<64x512xf32>
    tpu.vector_store %arg17[%c0_3, %c0_4], %2 {strides = array<i32>} : memref<64x512xf32, #tpu.memory_space<vmem>>, vector<64x512xf32>,
    %c0_5 = arith.constant 0 : index
    %c0_6 = arith.constant 0 : index
    %4 = vector.load %arg8[%c0_5, %c0_6] : memref<8x128xf32, #tpu.memory_space<vmem>>, vector<8x128xf32>
    %c0_7 = arith.constant 0 : index
    %c0_8 = arith.constant 0 : index
    %5 = vector.load %arg18[%c0_7, %c0_8] : memref<8x128xf32, #tpu.memory_space<vmem>>, vector<8x128xf32>
    tpu.vector_store %arg18[%c0_7, %c0_8], %4 {strides = array<i32>} : memref<8x128xf32, #tpu.memory_space<vmem>>, vector<8x128xf32>,
    %c0_9 = arith.constant 0 : index
    %c0_10 = arith.constant 0 : index
    %6 = vector.load %arg9[%c0_9, %c0_10] : memref<8x128xf32, #tpu.memory_space<vmem>>, vector<8x128xf32>
    %c0_11 = arith.constant 0 : index
    %c0_12 = arith.constant 0 : index
    %7 = vector.load %arg19[%c0_11, %c0_12] : memref<8x128xf32, #tpu.memory_space<vmem>>, vector<8x128xf32>
    tpu.vector_store %arg19[%c0_11, %c0_12], %6 {strides = array<i32>} : memref<8x128xf32, #tpu.memory_space<vmem>>, vector<8x128xf32>,
    %c0_13 = arith.constant 0 : index
    %c0_14 = arith.constant 0 : index
    %8 = vector.load %arg10[%c0_13, %c0_14] : memref<8x128xf32, #tpu.memory_space<vmem>>, vector<8x128xf32>
    %c0_15 = arith.constant 0 : index
    %c0_16 = arith.constant 0 : index
    %9 = vector.load %arg20[%c0_15, %c0_16] : memref<8x128xf32, #tpu.memory_space<vmem>>, vector<8x128xf32>
    tpu.vector_store %arg20[%c0_15, %c0_16], %8 {strides = array<i32>} : memref<8x128xf32, #tpu.memory_space<vmem>>, vector<8x128xf32>,
    %c0_17 = arith.constant 0 : index
    %c0_18 = arith.constant 0 : index
    %10 = vector.load %arg11[%c0_17, %c0_18] : memref<8x128xf32, #tpu.memory_space<vmem>>, vector<8x128xf32>
    %c0_19 = arith.constant 0 : index
    %c0_20 = arith.constant 0 : index
    %11 = vector.load %arg21[%c0_19, %c0_20] : memref<8x128xf32, #tpu.memory_space<vmem>>, vector<8x128xf32>
    tpu.vector_store %arg21[%c0_19, %c0_20], %10 {strides = array<i32>} : memref<8x128xf32, #tpu.memory_space<vmem>>, vector<8x128xf32>,
    %c0_i32 = arith.constant 0 : i32
    %c8_i32 = arith.constant 8 : i32
    %12 = arith.muli %c0_i32, %c8_i32 : i32
    %13 = tpu.assume_multiple %12, 8 : i32
    %c0_21 = arith.constant 0 : index
    %c0_22 = arith.constant 0 : index
    %14 = vector.load %arg18[%c0_21, %c0_22] : memref<8x128xf32, #tpu.memory_space<vmem>>, vector<8x128xf32>
    %c0_23 = arith.constant 0 : index
    %c0_24 = arith.constant 0 : index
    %15 = vector.load %arg19[%c0_23, %c0_24] : memref<8x128xf32, #tpu.memory_space<vmem>>, vector<8x128xf32>
    %c0_25 = arith.constant 0 : index
    %c0_26 = arith.constant 0 : index
    %16 = vector.load %arg20[%c0_25, %c0_26] : memref<8x128xf32, #tpu.memory_space<vmem>>, vector<8x128xf32>
    %c0_27 = arith.constant 0 : index
    %c0_28 = arith.constant 0 : index
    %17 = vector.load %arg21[%c0_27, %c0_28] : memref<8x128xf32, #tpu.memory_space<vmem>>, vector<8x128xf32>
    %18 = arith.index_cast %13 : i32 to index
    %c0_29 = arith.constant 0 : index
    %19 = vector.load %arg17[%18, %c0_29] : memref<64x512xf32, #tpu.memory_space<vmem>>, vector<8x512xf32>
    %20 = arith.truncf %14 : vector<8x128xf32> to vector<8x128xbf16>
    %c0_30 = arith.constant 0 : index
    %c0_31 = arith.constant 0 : index
    %21 = vector.load %arg3[%c0_30, %c0_31] : memref<128x512xbf16, #tpu.memory_space<vmem>>, vector<128x512xbf16>
    %cst_32 = arith.constant dense<0.000000e+00> : vector<8x512xf32>
    %22 = tpu.matmul %20, %21, %cst_32 {dimension_numbers = #tpu.dot_dimension_numbers<[1], [0], [0], [1], [0, 0, 1, 1], [], []>} : vector<8x128xbf16>, vector<128x512xbf16>, vector<8x512xf32> -> vector<8x512xf32>
    %23 = arith.addf %19, %22 : vector<8x512xf32>
    %c0_33 = arith.constant 0 : index
    %c0_34 = arith.constant 0 : index
    %24 = vector.load %arg4[%c0_33, %c0_34] : memref<1x512xf32, #tpu.memory_space<vmem>>, vector<1x512xf32>
    %25 = vector.broadcast %24 : vector<1x512xf32> to vector<8x512xf32>
    %26 = arith.addf %23, %25 : vector<8x512xf32>
    %27 = vector.extract_strided_slice %26 {offsets = [0, 0], sizes = [8, 128], strides = [1, 1]} : vector<8x512xf32> to vector<8x128xf32>
    %28 = arith.negf %27 : vector<8x128xf32>
    %29 = math.exp %28 : vector<8x128xf32>
    %cst_35 = arith.constant 1.000000e+00 : f32
    %30 = vector.broadcast %cst_35 : f32 to vector<8x128xf32>
    %31 = arith.addf %30, %29 : vector<8x128xf32>
    %32 = arith.divf %30, %31 : vector<8x128xf32>
    %33 = vector.extract_strided_slice %26 {offsets = [0, 128], sizes = [8, 128], strides = [1, 1]} : vector<8x512xf32> to vector<8x128xf32>
    %34 = arith.negf %33 : vector<8x128xf32>
    %35 = math.exp %34 : vector<8x128xf32>
    %cst_36 = arith.constant 1.000000e+00 : f32
    %36 = vector.broadcast %cst_36 : f32 to vector<8x128xf32>
    %37 = arith.addf %36, %35 : vector<8x128xf32>
    %38 = arith.divf %36, %37 : vector<8x128xf32>
    %39 = vector.extract_strided_slice %26 {offsets = [0, 256], sizes = [8, 128], strides = [1, 1]} : vector<8x512xf32> to vector<8x128xf32>
    %40 = math.tanh %39 : vector<8x128xf32>
    %41 = vector.extract_strided_slice %26 {offsets = [0, 384], sizes = [8, 128], strides = [1, 1]} : vector<8x512xf32> to vector<8x128xf32>
    %42 = arith.negf %41 : vector<8x128xf32>
    %43 = math.exp %42 : vector<8x128xf32>
    %cst_37 = arith.constant 1.000000e+00 : f32
    %44 = vector.broadcast %cst_37 : f32 to vector<8x128xf32>
    %45 = arith.addf %44, %43 : vector<8x128xf32>
    %46 = arith.divf %44, %45 : vector<8x128xf32>
    %47 = arith.mulf %38, %15 : vector<8x128xf32>
    %48 = arith.mulf %32, %40 : vector<8x128xf32>
    %49 = arith.addf %47, %48 : vector<8x128xf32>
    %50 = math.tanh %49 : vector<8x128xf32>
    %51 = arith.mulf %46, %50 : vector<8x128xf32>
    %52 = arith.truncf %51 : vector<8x128xf32> to vector<8x128xbf16>
    %c0_38 = arith.constant 0 : index
    %c0_39 = arith.constant 0 : index
    %53 = vector.load %arg5[%c0_38, %c0_39] : memref<128x512xbf16, #tpu.memory_space<vmem>>, vector<128x512xbf16>
    %cst_40 = arith.constant dense<0.000000e+00> : vector<8x512xf32>
    %54 = tpu.matmul %52, %53, %cst_40 {dimension_numbers = #tpu.dot_dimension_numbers<[1], [0], [0], [1], [0, 0, 1, 1], [], []>} : vector<8x128xbf16>, vector<128x512xbf16>, vector<8x512xf32> -> vector<8x512xf32>
    %55 = arith.truncf %16 : vector<8x128xf32> to vector<8x128xbf16>
    %c0_41 = arith.constant 0 : index
    %c0_42 = arith.constant 0 : index
    %56 = vector.load %arg6[%c0_41, %c0_42] : memref<128x512xbf16, #tpu.memory_space<vmem>>, vector<128x512xbf16>
    %cst_43 = arith.constant dense<0.000000e+00> : vector<8x512xf32>
    %57 = tpu.matmul %55, %56, %cst_43 {dimension_numbers = #tpu.dot_dimension_numbers<[1], [0], [0], [1], [0, 0, 1, 1], [], []>} : vector<8x128xbf16>, vector<128x512xbf16>, vector<8x512xf32> -> vector<8x512xf32>
    %58 = arith.addf %54, %57 : vector<8x512xf32>
    %c0_44 = arith.constant 0 : index
    %c0_45 = arith.constant 0 : index
    %59 = vector.load %arg7[%c0_44, %c0_45] : memref<1x512xf32, #tpu.memory_space<vmem>>, vector<1x512xf32>
    %60 = vector.broadcast %59 : vector<1x512xf32> to vector<8x512xf32>
    %61 = arith.addf %58, %60 : vector<8x512xf32>
    %62 = vector.extract_strided_slice %61 {offsets = [0, 0], sizes = [8, 128], strides = [1, 1]} : vector<8x512xf32> to vector<8x128xf32>
    %63 = arith.negf %62 : vector<8x128xf32>
    %64 = math.exp %63 : vector<8x128xf32>
    %cst_46 = arith.constant 1.000000e+00 : f32
    %65 = vector.broadcast %cst_46 : f32 to vector<8x128xf32>
    %66 = arith.addf %65, %64 : vector<8x128xf32>
    %67 = arith.divf %65, %66 : vector<8x128xf32>
    %68 = vector.extract_strided_slice %61 {offsets = [0, 128], sizes = [8, 128], strides = [1, 1]} : vector<8x512xf32> to vector<8x128xf32>
    %69 = arith.negf %68 : vector<8x128xf32>
    %70 = math.exp %69 : vector<8x128xf32>
    %cst_47 = arith.constant 1.000000e+00 : f32
    %71 = vector.broadcast %cst_47 : f32 to vector<8x128xf32>
    %72 = arith.addf %71, %70 : vector<8x128xf32>
    %73 = arith.divf %71, %72 : vector<8x128xf32>
    %74 = vector.extract_strided_slice %61 {offsets = [0, 256], sizes = [8, 128], strides = [1, 1]} : vector<8x512xf32> to vector<8x128xf32>
    %75 = math.tanh %74 : vector<8x128xf32>
    %76 = vector.extract_strided_slice %61 {offsets = [0, 384], sizes = [8, 128], strides = [1, 1]} : vector<8x512xf32> to vector<8x128xf32>
    %77 = arith.negf %76 : vector<8x128xf32>
    %78 = math.exp %77 : vector<8x128xf32>
    %cst_48 = arith.constant 1.000000e+00 : f32
    %79 = vector.broadcast %cst_48 : f32 to vector<8x128xf32>
    %80 = arith.addf %79, %78 : vector<8x128xf32>
    %81 = arith.divf %79, %80 : vector<8x128xf32>
    %82 = arith.mulf %73, %17 : vector<8x128xf32>
    %83 = arith.mulf %67, %75 : vector<8x128xf32>
    %84 = arith.addf %82, %83 : vector<8x128xf32>
    %85 = math.tanh %84 : vector<8x128xf32>
    %86 = arith.mulf %81, %85 : vector<8x128xf32>
    %c0_49 = arith.constant 0 : index
    %c0_50 = arith.constant 0 : index
    %87 = vector.load %arg18[%c0_49, %c0_50] : memref<8x128xf32, #tpu.memory_space<vmem>>, vector<8x128xf32>
    tpu.vector_store %arg18[%c0_49, %c0_50], %51 {strides = array<i32>} : memref<8x128xf32, #tpu.memory_space<vmem>>, vector<8x128xf32>,
    %c0_51 = arith.constant 0 : index
    %c0_52 = arith.constant 0 : index
    %88 = vector.load %arg19[%c0_51, %c0_52] : memref<8x128xf32, #tpu.memory_space<vmem>>, vector<8x128xf32>
    tpu.vector_store %arg19[%c0_51, %c0_52], %49 {strides = array<i32>} : memref<8x128xf32, #tpu.memory_space<vmem>>, vector<8x128xf32>,
    %c0_53 = arith.constant 0 : index
    %c0_54 = arith.constant 0 : index
    %89 = vector.load %arg20[%c0_53, %c0_54] : memref<8x128xf32, #tpu.memory_space<vmem>>, vector<8x128xf32>
    tpu.vector_store %arg20[%c0_53, %c0_54], %86 {strides = array<i32>} : memref<8x128xf32, #tpu.memory_space<vmem>>, vector<8x128xf32>,
    %c0_55 = arith.constant 0 : index
    %c0_56 = arith.constant 0 : index
    %90 = vector.load %arg21[%c0_55, %c0_56] : memref<8x128xf32, #tpu.memory_space<vmem>>, vector<8x128xf32>
    tpu.vector_store %arg21[%c0_55, %c0_56], %84 {strides = array<i32>} : memref<8x128xf32, #tpu.memory_space<vmem>>, vector<8x128xf32>,
    %91 = arith.index_cast %13 : i32 to index
    %c0_57 = arith.constant 0 : index
    %92 = vector.load %arg12[%91, %c0_57] : memref<64x128xf32, #tpu.memory_space<vmem>>, vector<8x128xf32>
    tpu.vector_store %arg12[%91, %c0_57], %86 {strides = array<i32>} : memref<64x128xf32, #tpu.memory_space<vmem>>, vector<8x128xf32>,
    %c1_i32 = arith.constant 1 : i32
    %c8_i32_58 = arith.constant 8 : i32
    %93 = arith.muli %c1_i32, %c8_i32_58 : i32
    %94 = tpu.assume_multiple %93, 8 : i32
    %c0_59 = arith.constant 0 : index
    %c0_60 = arith.constant 0 : index
    %95 = vector.load %arg18[%c0_59, %c0_60] : memref<8x128xf32, #tpu.memory_space<vmem>>, vector<8x128xf32>
    %c0_61 = arith.constant 0 : index
    %c0_62 = arith.constant 0 : index
    %96 = vector.load %arg19[%c0_61, %c0_62] : memref<8x128xf32, #tpu.memory_space<vmem>>, vector<8x128xf32>
    %c0_63 = arith.constant 0 : index
    %c0_64 = arith.constant 0 : index
    %97 = vector.load %arg20[%c0_63, %c0_64] : memref<8x128xf32, #tpu.memory_space<vmem>>, vector<8x128xf32>
    %c0_65 = arith.constant 0 : index
    %c0_66 = arith.constant 0 : index
    %98 = vector.load %arg21[%c0_65, %c0_66] : memref<8x128xf32, #tpu.memory_space<vmem>>, vector<8x128xf32>
    %99 = arith.index_cast %94 : i32 to index
    %c0_67 = arith.constant 0 : index
    %100 = vector.load %arg17[%99, %c0_67] : memref<64x512xf32, #tpu.memory_space<vmem>>, vector<8x512xf32>
    %101 = arith.truncf %95 : vector<8x128xf32> to vector<8x128xbf16>
    %c0_68 = arith.constant 0 : index
    %c0_69 = arith.constant 0 : index
    %102 = vector.load %arg3[%c0_68, %c0_69] : memref<128x512xbf16, #tpu.memory_space<vmem>>, vector<128x512xbf16>
    %cst_70 = arith.constant dense<0.000000e+00> : vector<8x512xf32>
    %103 = tpu.matmul %101, %102, %cst_70 {dimension_numbers = #tpu.dot_dimension_numbers<[1], [0], [0], [1], [0, 0, 1, 1], [], []>} : vector<8x128xbf16>, vector<128x512xbf16>, vector<8x512xf32> -> vector<8x512xf32>
    %104 = arith.addf %100, %103 : vector<8x512xf32>
    %c0_71 = arith.constant 0 : index
    %c0_72 = arith.constant 0 : index
    %105 = vector.load %arg4[%c0_71, %c0_72] : memref<1x512xf32, #tpu.memory_space<vmem>>, vector<1x512xf32>
    %106 = vector.broadcast %105 : vector<1x512xf32> to vector<8x512xf32>
    %107 = arith.addf %104, %106 : vector<8x512xf32>
    %108 = vector.extract_strided_slice %107 {offsets = [0, 0], sizes = [8, 128], strides = [1, 1]} : vector<8x512xf32> to vector<8x128xf32>
    %109 = arith.negf %108 : vector<8x128xf32>
    %110 = math.exp %109 : vector<8x128xf32>
    %cst_73 = arith.constant 1.000000e+00 : f32
    %111 = vector.broadcast %cst_73 : f32 to vector<8x128xf32>
    %112 = arith.addf %111, %110 : vector<8x128xf32>
    %113 = arith.divf %111, %112 : vector<8x128xf32>
    %114 = vector.extract_strided_slice %107 {offsets = [0, 128], sizes = [8, 128], strides = [1, 1]} : vector<8x512xf32> to vector<8x128xf32>
    %115 = arith.negf %114 : vector<8x128xf32>
    %116 = math.exp %115 : vector<8x128xf32>
    %cst_74 = arith.constant 1.000000e+00 : f32
    %117 = vector.broadcast %cst_74 : f32 to vector<8x128xf32>
    %118 = arith.addf %117, %116 : vector<8x128xf32>
    %119 = arith.divf %117, %118 : vector<8x128xf32>
    %120 = vector.extract_strided_slice %107 {offsets = [0, 256], sizes = [8, 128], strides = [1, 1]} : vector<8x512xf32> to vector<8x128xf32>
    %121 = math.tanh %120 : vector<8x128xf32>
    %122 = vector.extract_strided_slice %107 {offsets = [0, 384], sizes = [8, 128], strides = [1, 1]} : vector<8x512xf32> to vector<8x128xf32>
    %123 = arith.negf %122 : vector<8x128xf32>
    %124 = math.exp %123 : vector<8x128xf32>
    %cst_75 = arith.constant 1.000000e+00 : f32
    %125 = vector.broadcast %cst_75 : f32 to vector<8x128xf32>
    %126 = arith.addf %125, %124 : vector<8x128xf32>
    %127 = arith.divf %125, %126 : vector<8x128xf32>
    %128 = arith.mulf %119, %96 : vector<8x128xf32>
    %129 = arith.mulf %113, %121 : vector<8x128xf32>
    %130 = arith.addf %128, %129 : vector<8x128xf32>
    %131 = math.tanh %130 : vector<8x128xf32>
    %132 = arith.mulf %127, %131 : vector<8x128xf32>
    %133 = arith.truncf %132 : vector<8x128xf32> to vector<8x128xbf16>
    %c0_76 = arith.constant 0 : index
    %c0_77 = arith.constant 0 : index
    %134 = vector.load %arg5[%c0_76, %c0_77] : memref<128x512xbf16, #tpu.memory_space<vmem>>, vector<128x512xbf16>
    %cst_78 = arith.constant dense<0.000000e+00> : vector<8x512xf32>
    %135 = tpu.matmul %133, %134, %cst_78 {dimension_numbers = #tpu.dot_dimension_numbers<[1], [0], [0], [1], [0, 0, 1, 1], [], []>} : vector<8x128xbf16>, vector<128x512xbf16>, vector<8x512xf32> -> vector<8x512xf32>
    %136 = arith.truncf %97 : vector<8x128xf32> to vector<8x128xbf16>
    %c0_79 = arith.constant 0 : index
    %c0_80 = arith.constant 0 : index
    %137 = vector.load %arg6[%c0_79, %c0_80] : memref<128x512xbf16, #tpu.memory_space<vmem>>, vector<128x512xbf16>
    %cst_81 = arith.constant dense<0.000000e+00> : vector<8x512xf32>
    %138 = tpu.matmul %136, %137, %cst_81 {dimension_numbers = #tpu.dot_dimension_numbers<[1], [0], [0], [1], [0, 0, 1, 1], [], []>} : vector<8x128xbf16>, vector<128x512xbf16>, vector<8x512xf32> -> vector<8x512xf32>
    %139 = arith.addf %135, %138 : vector<8x512xf32>
    %c0_82 = arith.constant 0 : index
    %c0_83 = arith.constant 0 : index
    %140 = vector.load %arg7[%c0_82, %c0_83] : memref<1x512xf32, #tpu.memory_space<vmem>>, vector<1x512xf32>
    %141 = vector.broadcast %140 : vector<1x512xf32> to vector<8x512xf32>
    %142 = arith.addf %139, %141 : vector<8x512xf32>
    %143 = vector.extract_strided_slice %142 {offsets = [0, 0], sizes = [8, 128], strides = [1, 1]} : vector<8x512xf32> to vector<8x128xf32>
    %144 = arith.negf %143 : vector<8x128xf32>
    %145 = math.exp %144 : vector<8x128xf32>
    %cst_84 = arith.constant 1.000000e+00 : f32
    %146 = vector.broadcast %cst_84 : f32 to vector<8x128xf32>
    %147 = arith.addf %146, %145 : vector<8x128xf32>
    %148 = arith.divf %146, %147 : vector<8x128xf32>
    %149 = vector.extract_strided_slice %142 {offsets = [0, 128], sizes = [8, 128], strides = [1, 1]} : vector<8x512xf32> to vector<8x128xf32>
    %150 = arith.negf %149 : vector<8x128xf32>
    %151 = math.exp %150 : vector<8x128xf32>
    %cst_85 = arith.constant 1.000000e+00 : f32
    %152 = vector.broadcast %cst_85 : f32 to vector<8x128xf32>
    %153 = arith.addf %152, %151 : vector<8x128xf32>
    %154 = arith.divf %152, %153 : vector<8x128xf32>
    %155 = vector.extract_strided_slice %142 {offsets = [0, 256], sizes = [8, 128], strides = [1, 1]} : vector<8x512xf32> to vector<8x128xf32>
    %156 = math.tanh %155 : vector<8x128xf32>
    %157 = vector.extract_strided_slice %142 {offsets = [0, 384], sizes = [8, 128], strides = [1, 1]} : vector<8x512xf32> to vector<8x128xf32>
    %158 = arith.negf %157 : vector<8x128xf32>
    %159 = math.exp %158 : vector<8x128xf32>
    %cst_86 = arith.constant 1.000000e+00 : f32
    %160 = vector.broadcast %cst_86 : f32 to vector<8x128xf32>
    %161 = arith.addf %160, %159 : vector<8x128xf32>
    %162 = arith.divf %160, %161 : vector<8x128xf32>
    %163 = arith.mulf %154, %98 : vector<8x128xf32>
    %164 = arith.mulf %148, %156 : vector<8x128xf32>
    %165 = arith.addf %163, %164 : vector<8x128xf32>
    %166 = math.tanh %165 : vector<8x128xf32>
    %167 = arith.mulf %162, %166 : vector<8x128xf32>
    %c0_87 = arith.constant 0 : index
    %c0_88 = arith.constant 0 : index
    %168 = vector.load %arg18[%c0_87, %c0_88] : memref<8x128xf32, #tpu.memory_space<vmem>>, vector<8x128xf32>
    tpu.vector_store %arg18[%c0_87, %c0_88], %132 {strides = array<i32>} : memref<8x128xf32, #tpu.memory_space<vmem>>, vector<8x128xf32>,
    %c0_89 = arith.constant 0 : index
    %c0_90 = arith.constant 0 : index
    %169 = vector.load %arg19[%c0_89, %c0_90] : memref<8x128xf32, #tpu.memory_space<vmem>>, vector<8x128xf32>
    tpu.vector_store %arg19[%c0_89, %c0_90], %130 {strides = array<i32>} : memref<8x128xf32, #tpu.memory_space<vmem>>, vector<8x128xf32>,
    %c0_91 = arith.constant 0 : index
    %c0_92 = arith.constant 0 : index
    %170 = vector.load %arg20[%c0_91, %c0_92] : memref<8x128xf32, #tpu.memory_space<vmem>>, vector<8x128xf32>
    tpu.vector_store %arg20[%c0_91, %c0_92], %167 {strides = array<i32>} : memref<8x128xf32, #tpu.memory_space<vmem>>, vector<8x128xf32>,
    %c0_93 = arith.constant 0 : index
    %c0_94 = arith.constant 0 : index
    %171 = vector.load %arg21[%c0_93, %c0_94] : memref<8x128xf32, #tpu.memory_space<vmem>>, vector<8x128xf32>
    tpu.vector_store %arg21[%c0_93, %c0_94], %165 {strides = array<i32>} : memref<8x128xf32, #tpu.memory_space<vmem>>, vector<8x128xf32>,
    %172 = arith.index_cast %94 : i32 to index
    %c0_95 = arith.constant 0 : index
    %173 = vector.load %arg12[%172, %c0_95] : memref<64x128xf32, #tpu.memory_space<vmem>>, vector<8x128xf32>
    tpu.vector_store %arg12[%172, %c0_95], %167 {strides = array<i32>} : memref<64x128xf32, #tpu.memory_space<vmem>>, vector<8x128xf32>,
    %c2_i32 = arith.constant 2 : i32
    %c8_i32_96 = arith.constant 8 : i32
    %174 = arith.muli %c2_i32, %c8_i32_96 : i32
    %175 = tpu.assume_multiple %174, 8 : i32
    %c0_97 = arith.constant 0 : index
    %c0_98 = arith.constant 0 : index
    %176 = vector.load %arg18[%c0_97, %c0_98] : memref<8x128xf32, #tpu.memory_space<vmem>>, vector<8x128xf32>
    %c0_99 = arith.constant 0 : index
    %c0_100 = arith.constant 0 : index
    %177 = vector.load %arg19[%c0_99, %c0_100] : memref<8x128xf32, #tpu.memory_space<vmem>>, vector<8x128xf32>
    %c0_101 = arith.constant 0 : index
    %c0_102 = arith.constant 0 : index
    %178 = vector.load %arg20[%c0_101, %c0_102] : memref<8x128xf32, #tpu.memory_space<vmem>>, vector<8x128xf32>
    %c0_103 = arith.constant 0 : index
    %c0_104 = arith.constant 0 : index
    %179 = vector.load %arg21[%c0_103, %c0_104] : memref<8x128xf32, #tpu.memory_space<vmem>>, vector<8x128xf32>
    %180 = arith.index_cast %175 : i32 to index
    %c0_105 = arith.constant 0 : index
    %181 = vector.load %arg17[%180, %c0_105] : memref<64x512xf32, #tpu.memory_space<vmem>>, vector<8x512xf32>
    %182 = arith.truncf %176 : vector<8x128xf32> to vector<8x128xbf16>
    %c0_106 = arith.constant 0 : index
    %c0_107 = arith.constant 0 : index
    %183 = vector.load %arg3[%c0_106, %c0_107] : memref<128x512xbf16, #tpu.memory_space<vmem>>, vector<128x512xbf16>
    %cst_108 = arith.constant dense<0.000000e+00> : vector<8x512xf32>
    %184 = tpu.matmul %182, %183, %cst_108 {dimension_numbers = #tpu.dot_dimension_numbers<[1], [0], [0], [1], [0, 0, 1, 1], [], []>} : vector<8x128xbf16>, vector<128x512xbf16>, vector<8x512xf32> -> vector<8x512xf32>
    %185 = arith.addf %181, %184 : vector<8x512xf32>
    %c0_109 = arith.constant 0 : index
    %c0_110 = arith.constant 0 : index
    %186 = vector.load %arg4[%c0_109, %c0_110] : memref<1x512xf32, #tpu.memory_space<vmem>>, vector<1x512xf32>
    %187 = vector.broadcast %186 : vector<1x512xf32> to vector<8x512xf32>
    %188 = arith.addf %185, %187 : vector<8x512xf32>
    %189 = vector.extract_strided_slice %188 {offsets = [0, 0], sizes = [8, 128], strides = [1, 1]} : vector<8x512xf32> to vector<8x128xf32>
    %190 = arith.negf %189 : vector<8x128xf32>
    %191 = math.exp %190 : vector<8x128xf32>
    %cst_111 = arith.constant 1.000000e+00 : f32
    %192 = vector.broadcast %cst_111 : f32 to vector<8x128xf32>
    %193 = arith.addf %192, %191 : vector<8x128xf32>
    %194 = arith.divf %192, %193 : vector<8x128xf32>
    %195 = vector.extract_strided_slice %188 {offsets = [0, 128], sizes = [8, 128], strides = [1, 1]} : vector<8x512xf32> to vector<8x128xf32>
    %196 = arith.negf %195 : vector<8x128xf32>
    %197 = math.exp %196 : vector<8x128xf32>
    %cst_112 = arith.constant 1.000000e+00 : f32
    %198 = vector.broadcast %cst_112 : f32 to vector<8x128xf32>
    %199 = arith.addf %198, %197 : vector<8x128xf32>
    %200 = arith.divf %198, %199 : vector<8x128xf32>
    %201 = vector.extract_strided_slice %188 {offsets = [0, 256], sizes = [8, 128], strides = [1, 1]} : vector<8x512xf32> to vector<8x128xf32>
    %202 = math.tanh %201 : vector<8x128xf32>
    %203 = vector.extract_strided_slice %188 {offsets = [0, 384], sizes = [8, 128], strides = [1, 1]} : vector<8x512xf32> to vector<8x128xf32>
    %204 = arith.negf %203 : vector<8x128xf32>
    %205 = math.exp %204 : vector<8x128xf32>
    %cst_113 = arith.constant 1.000000e+00 : f32
    %206 = vector.broadcast %cst_113 : f32 to vector<8x128xf32>
    %207 = arith.addf %206, %205 : vector<8x128xf32>
    %208 = arith.divf %206, %207 : vector<8x128xf32>
    %209 = arith.mulf %200, %177 : vector<8x128xf32>
    %210 = arith.mulf %194, %202 : vector<8x128xf32>
    %211 = arith.addf %209, %210 : vector<8x128xf32>
    %212 = math.tanh %211 : vector<8x128xf32>
    %213 = arith.mulf %208, %212 : vector<8x128xf32>
    %214 = arith.truncf %213 : vector<8x128xf32> to vector<8x128xbf16>
    %c0_114 = arith.constant 0 : index
    %c0_115 = arith.constant 0 : index
    %215 = vector.load %arg5[%c0_114, %c0_115] : memref<128x512xbf16, #tpu.memory_space<vmem>>, vector<128x512xbf16>
    %cst_116 = arith.constant dense<0.000000e+00> : vector<8x512xf32>
    %216 = tpu.matmul %214, %215, %cst_116 {dimension_numbers = #tpu.dot_dimension_numbers<[1], [0], [0], [1], [0, 0, 1, 1], [], []>} : vector<8x128xbf16>, vector<128x512xbf16>, vector<8x512xf32> -> vector<8x512xf32>
    %217 = arith.truncf %178 : vector<8x128xf32> to vector<8x128xbf16>
    %c0_117 = arith.constant 0 : index
    %c0_118 = arith.constant 0 : index
    %218 = vector.load %arg6[%c0_117, %c0_118] : memref<128x512xbf16, #tpu.memory_space<vmem>>, vector<128x512xbf16>
    %cst_119 = arith.constant dense<0.000000e+00> : vector<8x512xf32>
    %219 = tpu.matmul %217, %218, %cst_119 {dimension_numbers = #tpu.dot_dimension_numbers<[1], [0], [0], [1], [0, 0, 1, 1], [], []>} : vector<8x128xbf16>, vector<128x512xbf16>, vector<8x512xf32> -> vector<8x512xf32>
    %220 = arith.addf %216, %219 : vector<8x512xf32>
    %c0_120 = arith.constant 0 : index
    %c0_121 = arith.constant 0 : index
    %221 = vector.load %arg7[%c0_120, %c0_121] : memref<1x512xf32, #tpu.memory_space<vmem>>, vector<1x512xf32>
    %222 = vector.broadcast %221 : vector<1x512xf32> to vector<8x512xf32>
    %223 = arith.addf %220, %222 : vector<8x512xf32>
    %224 = vector.extract_strided_slice %223 {offsets = [0, 0], sizes = [8, 128], strides = [1, 1]} : vector<8x512xf32> to vector<8x128xf32>
    %225 = arith.negf %224 : vector<8x128xf32>
    %226 = math.exp %225 : vector<8x128xf32>
    %cst_122 = arith.constant 1.000000e+00 : f32
    %227 = vector.broadcast %cst_122 : f32 to vector<8x128xf32>
    %228 = arith.addf %227, %226 : vector<8x128xf32>
    %229 = arith.divf %227, %228 : vector<8x128xf32>
    %230 = vector.extract_strided_slice %223 {offsets = [0, 128], sizes = [8, 128], strides = [1, 1]} : vector<8x512xf32> to vector<8x128xf32>
    %231 = arith.negf %230 : vector<8x128xf32>
    %232 = math.exp %231 : vector<8x128xf32>
    %cst_123 = arith.constant 1.000000e+00 : f32
    %233 = vector.broadcast %cst_123 : f32 to vector<8x128xf32>
    %234 = arith.addf %233, %232 : vector<8x128xf32>
    %235 = arith.divf %233, %234 : vector<8x128xf32>
    %236 = vector.extract_strided_slice %223 {offsets = [0, 256], sizes = [8, 128], strides = [1, 1]} : vector<8x512xf32> to vector<8x128xf32>
    %237 = math.tanh %236 : vector<8x128xf32>
    %238 = vector.extract_strided_slice %223 {offsets = [0, 384], sizes = [8, 128], strides = [1, 1]} : vector<8x512xf32> to vector<8x128xf32>
    %239 = arith.negf %238 : vector<8x128xf32>
    %240 = math.exp %239 : vector<8x128xf32>
    %cst_124 = arith.constant 1.000000e+00 : f32
    %241 = vector.broadcast %cst_124 : f32 to vector<8x128xf32>
    %242 = arith.addf %241, %240 : vector<8x128xf32>
    %243 = arith.divf %241, %242 : vector<8x128xf32>
    %244 = arith.mulf %235, %179 : vector<8x128xf32>
    %245 = arith.mulf %229, %237 : vector<8x128xf32>
    %246 = arith.addf %244, %245 : vector<8x128xf32>
    %247 = math.tanh %246 : vector<8x128xf32>
    %248 = arith.mulf %243, %247 : vector<8x128xf32>
    %c0_125 = arith.constant 0 : index
    %c0_126 = arith.constant 0 : index
    %249 = vector.load %arg18[%c0_125, %c0_126] : memref<8x128xf32, #tpu.memory_space<vmem>>, vector<8x128xf32>
    tpu.vector_store %arg18[%c0_125, %c0_126], %213 {strides = array<i32>} : memref<8x128xf32, #tpu.memory_space<vmem>>, vector<8x128xf32>,
    %c0_127 = arith.constant 0 : index
    %c0_128 = arith.constant 0 : index
    %250 = vector.load %arg19[%c0_127, %c0_128] : memref<8x128xf32, #tpu.memory_space<vmem>>, vector<8x128xf32>
    tpu.vector_store %arg19[%c0_127, %c0_128], %211 {strides = array<i32>} : memref<8x128xf32, #tpu.memory_space<vmem>>, vector<8x128xf32>,
    %c0_129 = arith.constant 0 : index
    %c0_130 = arith.constant 0 : index
    %251 = vector.load %arg20[%c0_129, %c0_130] : memref<8x128xf32, #tpu.memory_space<vmem>>, vector<8x128xf32>
    tpu.vector_store %arg20[%c0_129, %c0_130], %248 {strides = array<i32>} : memref<8x128xf32, #tpu.memory_space<vmem>>, vector<8x128xf32>,
    %c0_131 = arith.constant 0 : index
    %c0_132 = arith.constant 0 : index
    %252 = vector.load %arg21[%c0_131, %c0_132] : memref<8x128xf32, #tpu.memory_space<vmem>>, vector<8x128xf32>
    tpu.vector_store %arg21[%c0_131, %c0_132], %246 {strides = array<i32>} : memref<8x128xf32, #tpu.memory_space<vmem>>, vector<8x128xf32>,
    %253 = arith.index_cast %175 : i32 to index
    %c0_133 = arith.constant 0 : index
    %254 = vector.load %arg12[%253, %c0_133] : memref<64x128xf32, #tpu.memory_space<vmem>>, vector<8x128xf32>
    tpu.vector_store %arg12[%253, %c0_133], %248 {strides = array<i32>} : memref<64x128xf32, #tpu.memory_space<vmem>>, vector<8x128xf32>,
    %c3_i32 = arith.constant 3 : i32
    %c8_i32_134 = arith.constant 8 : i32
    %255 = arith.muli %c3_i32, %c8_i32_134 : i32
    %256 = tpu.assume_multiple %255, 8 : i32
    %c0_135 = arith.constant 0 : index
    %c0_136 = arith.constant 0 : index
    %257 = vector.load %arg18[%c0_135, %c0_136] : memref<8x128xf32, #tpu.memory_space<vmem>>, vector<8x128xf32>
    %c0_137 = arith.constant 0 : index
    %c0_138 = arith.constant 0 : index
    %258 = vector.load %arg19[%c0_137, %c0_138] : memref<8x128xf32, #tpu.memory_space<vmem>>, vector<8x128xf32>
    %c0_139 = arith.constant 0 : index
    %c0_140 = arith.constant 0 : index
    %259 = vector.load %arg20[%c0_139, %c0_140] : memref<8x128xf32, #tpu.memory_space<vmem>>, vector<8x128xf32>
    %c0_141 = arith.constant 0 : index
    %c0_142 = arith.constant 0 : index
    %260 = vector.load %arg21[%c0_141, %c0_142] : memref<8x128xf32, #tpu.memory_space<vmem>>, vector<8x128xf32>
    %261 = arith.index_cast %256 : i32 to index
    %c0_143 = arith.constant 0 : index
    %262 = vector.load %arg17[%261, %c0_143] : memref<64x512xf32, #tpu.memory_space<vmem>>, vector<8x512xf32>
    %263 = arith.truncf %257 : vector<8x128xf32> to vector<8x128xbf16>
    %c0_144 = arith.constant 0 : index
    %c0_145 = arith.constant 0 : index
    %264 = vector.load %arg3[%c0_144, %c0_145] : memref<128x512xbf16, #tpu.memory_space<vmem>>, vector<128x512xbf16>
    %cst_146 = arith.constant dense<0.000000e+00> : vector<8x512xf32>
    %265 = tpu.matmul %263, %264, %cst_146 {dimension_numbers = #tpu.dot_dimension_numbers<[1], [0], [0], [1], [0, 0, 1, 1], [], []>} : vector<8x128xbf16>, vector<128x512xbf16>, vector<8x512xf32> -> vector<8x512xf32>
    %266 = arith.addf %262, %265 : vector<8x512xf32>
    %c0_147 = arith.constant 0 : index
    %c0_148 = arith.constant 0 : index
    %267 = vector.load %arg4[%c0_147, %c0_148] : memref<1x512xf32, #tpu.memory_space<vmem>>, vector<1x512xf32>
    %268 = vector.broadcast %267 : vector<1x512xf32> to vector<8x512xf32>
    %269 = arith.addf %266, %268 : vector<8x512xf32>
    %270 = vector.extract_strided_slice %269 {offsets = [0, 0], sizes = [8, 128], strides = [1, 1]} : vector<8x512xf32> to vector<8x128xf32>
    %271 = arith.negf %270 : vector<8x128xf32>
    %272 = math.exp %271 : vector<8x128xf32>
    %cst_149 = arith.constant 1.000000e+00 : f32
    %273 = vector.broadcast %cst_149 : f32 to vector<8x128xf32>
    %274 = arith.addf %273, %272 : vector<8x128xf32>
    %275 = arith.divf %273, %274 : vector<8x128xf32>
    %276 = vector.extract_strided_slice %269 {offsets = [0, 128], sizes = [8, 128], strides = [1, 1]} : vector<8x512xf32> to vector<8x128xf32>
    %277 = arith.negf %276 : vector<8x128xf32>
    %278 = math.exp %277 : vector<8x128xf32>
    %cst_150 = arith.constant 1.000000e+00 : f32
    %279 = vector.broadcast %cst_150 : f32 to vector<8x128xf32>
    %280 = arith.addf %279, %278 : vector<8x128xf32>
    %281 = arith.divf %279, %280 : vector<8x128xf32>
    %282 = vector.extract_strided_slice %269 {offsets = [0, 256], sizes = [8, 128], strides = [1, 1]} : vector<8x512xf32> to vector<8x128xf32>
    %283 = math.tanh %282 : vector<8x128xf32>
    %284 = vector.extract_strided_slice %269 {offsets = [0, 384], sizes = [8, 128], strides = [1, 1]} : vector<8x512xf32> to vector<8x128xf32>
    %285 = arith.negf %284 : vector<8x128xf32>
    %286 = math.exp %285 : vector<8x128xf32>
    %cst_151 = arith.constant 1.000000e+00 : f32
    %287 = vector.broadcast %cst_151 : f32 to vector<8x128xf32>
    %288 = arith.addf %287, %286 : vector<8x128xf32>
    %289 = arith.divf %287, %288 : vector<8x128xf32>
    %290 = arith.mulf %281, %258 : vector<8x128xf32>
    %291 = arith.mulf %275, %283 : vector<8x128xf32>
    %292 = arith.addf %290, %291 : vector<8x128xf32>
    %293 = math.tanh %292 : vector<8x128xf32>
    %294 = arith.mulf %289, %293 : vector<8x128xf32>
    %295 = arith.truncf %294 : vector<8x128xf32> to vector<8x128xbf16>
    %c0_152 = arith.constant 0 : index
    %c0_153 = arith.constant 0 : index
    %296 = vector.load %arg5[%c0_152, %c0_153] : memref<128x512xbf16, #tpu.memory_space<vmem>>, vector<128x512xbf16>
    %cst_154 = arith.constant dense<0.000000e+00> : vector<8x512xf32>
    %297 = tpu.matmul %295, %296, %cst_154 {dimension_numbers = #tpu.dot_dimension_numbers<[1], [0], [0], [1], [0, 0, 1, 1], [], []>} : vector<8x128xbf16>, vector<128x512xbf16>, vector<8x512xf32> -> vector<8x512xf32>
    %298 = arith.truncf %259 : vector<8x128xf32> to vector<8x128xbf16>
    %c0_155 = arith.constant 0 : index
    %c0_156 = arith.constant 0 : index
    %299 = vector.load %arg6[%c0_155, %c0_156] : memref<128x512xbf16, #tpu.memory_space<vmem>>, vector<128x512xbf16>
    %cst_157 = arith.constant dense<0.000000e+00> : vector<8x512xf32>
    %300 = tpu.matmul %298, %299, %cst_157 {dimension_numbers = #tpu.dot_dimension_numbers<[1], [0], [0], [1], [0, 0, 1, 1], [], []>} : vector<8x128xbf16>, vector<128x512xbf16>, vector<8x512xf32> -> vector<8x512xf32>
    %301 = arith.addf %297, %300 : vector<8x512xf32>
    %c0_158 = arith.constant 0 : index
    %c0_159 = arith.constant 0 : index
    %302 = vector.load %arg7[%c0_158, %c0_159] : memref<1x512xf32, #tpu.memory_space<vmem>>, vector<1x512xf32>
    %303 = vector.broadcast %302 : vector<1x512xf32> to vector<8x512xf32>
    %304 = arith.addf %301, %303 : vector<8x512xf32>
    %305 = vector.extract_strided_slice %304 {offsets = [0, 0], sizes = [8, 128], strides = [1, 1]} : vector<8x512xf32> to vector<8x128xf32>
    %306 = arith.negf %305 : vector<8x128xf32>
    %307 = math.exp %306 : vector<8x128xf32>
    %cst_160 = arith.constant 1.000000e+00 : f32
    %308 = vector.broadcast %cst_160 : f32 to vector<8x128xf32>
    %309 = arith.addf %308, %307 : vector<8x128xf32>
    %310 = arith.divf %308, %309 : vector<8x128xf32>
    %311 = vector.extract_strided_slice %304 {offsets = [0, 128], sizes = [8, 128], strides = [1, 1]} : vector<8x512xf32> to vector<8x128xf32>
    %312 = arith.negf %311 : vector<8x128xf32>
    %313 = math.exp %312 : vector<8x128xf32>
    %cst_161 = arith.constant 1.000000e+00 : f32
    %314 = vector.broadcast %cst_161 : f32 to vector<8x128xf32>
    %315 = arith.addf %314, %313 : vector<8x128xf32>
    %316 = arith.divf %314, %315 : vector<8x128xf32>
    %317 = vector.extract_strided_slice %304 {offsets = [0, 256], sizes = [8, 128], strides = [1, 1]} : vector<8x512xf32> to vector<8x128xf32>
    %318 = math.tanh %317 : vector<8x128xf32>
    %319 = vector.extract_strided_slice %304 {offsets = [0, 384], sizes = [8, 128], strides = [1, 1]} : vector<8x512xf32> to vector<8x128xf32>
    %320 = arith.negf %319 : vector<8x128xf32>
    %321 = math.exp %320 : vector<8x128xf32>
    %cst_162 = arith.constant 1.000000e+00 : f32
    %322 = vector.broadcast %cst_162 : f32 to vector<8x128xf32>
    %323 = arith.addf %322, %321 : vector<8x128xf32>
    %324 = arith.divf %322, %323 : vector<8x128xf32>
    %325 = arith.mulf %316, %260 : vector<8x128xf32>
    %326 = arith.mulf %310, %318 : vector<8x128xf32>
    %327 = arith.addf %325, %326 : vector<8x128xf32>
    %328 = math.tanh %327 : vector<8x128xf32>
    %329 = arith.mulf %324, %328 : vector<8x128xf32>
    %c0_163 = arith.constant 0 : index
    %c0_164 = arith.constant 0 : index
    %330 = vector.load %arg18[%c0_163, %c0_164] : memref<8x128xf32, #tpu.memory_space<vmem>>, vector<8x128xf32>
    tpu.vector_store %arg18[%c0_163, %c0_164], %294 {strides = array<i32>} : memref<8x128xf32, #tpu.memory_space<vmem>>, vector<8x128xf32>,
    %c0_165 = arith.constant 0 : index
    %c0_166 = arith.constant 0 : index
    %331 = vector.load %arg19[%c0_165, %c0_166] : memref<8x128xf32, #tpu.memory_space<vmem>>, vector<8x128xf32>
    tpu.vector_store %arg19[%c0_165, %c0_166], %292 {strides = array<i32>} : memref<8x128xf32, #tpu.memory_space<vmem>>, vector<8x128xf32>,
    %c0_167 = arith.constant 0 : index
    %c0_168 = arith.constant 0 : index
    %332 = vector.load %arg20[%c0_167, %c0_168] : memref<8x128xf32, #tpu.memory_space<vmem>>, vector<8x128xf32>
    tpu.vector_store %arg20[%c0_167, %c0_168], %329 {strides = array<i32>} : memref<8x128xf32, #tpu.memory_space<vmem>>, vector<8x128xf32>,
    %c0_169 = arith.constant 0 : index
    %c0_170 = arith.constant 0 : index
    %333 = vector.load %arg21[%c0_169, %c0_170] : memref<8x128xf32, #tpu.memory_space<vmem>>, vector<8x128xf32>
    tpu.vector_store %arg21[%c0_169, %c0_170], %327 {strides = array<i32>} : memref<8x128xf32, #tpu.memory_space<vmem>>, vector<8x128xf32>,
    %334 = arith.index_cast %256 : i32 to index
    %c0_171 = arith.constant 0 : index
    %335 = vector.load %arg12[%334, %c0_171] : memref<64x128xf32, #tpu.memory_space<vmem>>, vector<8x128xf32>
    tpu.vector_store %arg12[%334, %c0_171], %329 {strides = array<i32>} : memref<64x128xf32, #tpu.memory_space<vmem>>, vector<8x128xf32>,
    %c4_i32 = arith.constant 4 : i32
    %c8_i32_172 = arith.constant 8 : i32
    %336 = arith.muli %c4_i32, %c8_i32_172 : i32
    %337 = tpu.assume_multiple %336, 8 : i32
    %c0_173 = arith.constant 0 : index
    %c0_174 = arith.constant 0 : index
    %338 = vector.load %arg18[%c0_173, %c0_174] : memref<8x128xf32, #tpu.memory_space<vmem>>, vector<8x128xf32>
    %c0_175 = arith.constant 0 : index
    %c0_176 = arith.constant 0 : index
    %339 = vector.load %arg19[%c0_175, %c0_176] : memref<8x128xf32, #tpu.memory_space<vmem>>, vector<8x128xf32>
    %c0_177 = arith.constant 0 : index
    %c0_178 = arith.constant 0 : index
    %340 = vector.load %arg20[%c0_177, %c0_178] : memref<8x128xf32, #tpu.memory_space<vmem>>, vector<8x128xf32>
    %c0_179 = arith.constant 0 : index
    %c0_180 = arith.constant 0 : index
    %341 = vector.load %arg21[%c0_179, %c0_180] : memref<8x128xf32, #tpu.memory_space<vmem>>, vector<8x128xf32>
    %342 = arith.index_cast %337 : i32 to index
    %c0_181 = arith.constant 0 : index
    %343 = vector.load %arg17[%342, %c0_181] : memref<64x512xf32, #tpu.memory_space<vmem>>, vector<8x512xf32>
    %344 = arith.truncf %338 : vector<8x128xf32> to vector<8x128xbf16>
    %c0_182 = arith.constant 0 : index
    %c0_183 = arith.constant 0 : index
    %345 = vector.load %arg3[%c0_182, %c0_183] : memref<128x512xbf16, #tpu.memory_space<vmem>>, vector<128x512xbf16>
    %cst_184 = arith.constant dense<0.000000e+00> : vector<8x512xf32>
    %346 = tpu.matmul %344, %345, %cst_184 {dimension_numbers = #tpu.dot_dimension_numbers<[1], [0], [0], [1], [0, 0, 1, 1], [], []>} : vector<8x128xbf16>, vector<128x512xbf16>, vector<8x512xf32> -> vector<8x512xf32>
    %347 = arith.addf %343, %346 : vector<8x512xf32>
    %c0_185 = arith.constant 0 : index
    %c0_186 = arith.constant 0 : index
    %348 = vector.load %arg4[%c0_185, %c0_186] : memref<1x512xf32, #tpu.memory_space<vmem>>, vector<1x512xf32>
    %349 = vector.broadcast %348 : vector<1x512xf32> to vector<8x512xf32>
    %350 = arith.addf %347, %349 : vector<8x512xf32>
    %351 = vector.extract_strided_slice %350 {offsets = [0, 0], sizes = [8, 128], strides = [1, 1]} : vector<8x512xf32> to vector<8x128xf32>
    %352 = arith.negf %351 : vector<8x128xf32>
    %353 = math.exp %352 : vector<8x128xf32>
    %cst_187 = arith.constant 1.000000e+00 : f32
    %354 = vector.broadcast %cst_187 : f32 to vector<8x128xf32>
    %355 = arith.addf %354, %353 : vector<8x128xf32>
    %356 = arith.divf %354, %355 : vector<8x128xf32>
    %357 = vector.extract_strided_slice %350 {offsets = [0, 128], sizes = [8, 128], strides = [1, 1]} : vector<8x512xf32> to vector<8x128xf32>
    %358 = arith.negf %357 : vector<8x128xf32>
    %359 = math.exp %358 : vector<8x128xf32>
    %cst_188 = arith.constant 1.000000e+00 : f32
    %360 = vector.broadcast %cst_188 : f32 to vector<8x128xf32>
    %361 = arith.addf %360, %359 : vector<8x128xf32>
    %362 = arith.divf %360, %361 : vector<8x128xf32>
    %363 = vector.extract_strided_slice %350 {offsets = [0, 256], sizes = [8, 128], strides = [1, 1]} : vector<8x512xf32> to vector<8x128xf32>
    %364 = math.tanh %363 : vector<8x128xf32>
    %365 = vector.extract_strided_slice %350 {offsets = [0, 384], sizes = [8, 128], strides = [1, 1]} : vector<8x512xf32> to vector<8x128xf32>
    %366 = arith.negf %365 : vector<8x128xf32>
    %367 = math.exp %366 : vector<8x128xf32>
    %cst_189 = arith.constant 1.000000e+00 : f32
    %368 = vector.broadcast %cst_189 : f32 to vector<8x128xf32>
    %369 = arith.addf %368, %367 : vector<8x128xf32>
    %370 = arith.divf %368, %369 : vector<8x128xf32>
    %371 = arith.mulf %362, %339 : vector<8x128xf32>
    %372 = arith.mulf %356, %364 : vector<8x128xf32>
    %373 = arith.addf %371, %372 : vector<8x128xf32>
    %374 = math.tanh %373 : vector<8x128xf32>
    %375 = arith.mulf %370, %374 : vector<8x128xf32>
    %376 = arith.truncf %375 : vector<8x128xf32> to vector<8x128xbf16>
    %c0_190 = arith.constant 0 : index
    %c0_191 = arith.constant 0 : index
    %377 = vector.load %arg5[%c0_190, %c0_191] : memref<128x512xbf16, #tpu.memory_space<vmem>>, vector<128x512xbf16>
    %cst_192 = arith.constant dense<0.000000e+00> : vector<8x512xf32>
    %378 = tpu.matmul %376, %377, %cst_192 {dimension_numbers = #tpu.dot_dimension_numbers<[1], [0], [0], [1], [0, 0, 1, 1], [], []>} : vector<8x128xbf16>, vector<128x512xbf16>, vector<8x512xf32> -> vector<8x512xf32>
    %379 = arith.truncf %340 : vector<8x128xf32> to vector<8x128xbf16>
    %c0_193 = arith.constant 0 : index
    %c0_194 = arith.constant 0 : index
    %380 = vector.load %arg6[%c0_193, %c0_194] : memref<128x512xbf16, #tpu.memory_space<vmem>>, vector<128x512xbf16>
    %cst_195 = arith.constant dense<0.000000e+00> : vector<8x512xf32>
    %381 = tpu.matmul %379, %380, %cst_195 {dimension_numbers = #tpu.dot_dimension_numbers<[1], [0], [0], [1], [0, 0, 1, 1], [], []>} : vector<8x128xbf16>, vector<128x512xbf16>, vector<8x512xf32> -> vector<8x512xf32>
    %382 = arith.addf %378, %381 : vector<8x512xf32>
    %c0_196 = arith.constant 0 : index
    %c0_197 = arith.constant 0 : index
    %383 = vector.load %arg7[%c0_196, %c0_197] : memref<1x512xf32, #tpu.memory_space<vmem>>, vector<1x512xf32>
    %384 = vector.broadcast %383 : vector<1x512xf32> to vector<8x512xf32>
    %385 = arith.addf %382, %384 : vector<8x512xf32>
    %386 = vector.extract_strided_slice %385 {offsets = [0, 0], sizes = [8, 128], strides = [1, 1]} : vector<8x512xf32> to vector<8x128xf32>
    %387 = arith.negf %386 : vector<8x128xf32>
    %388 = math.exp %387 : vector<8x128xf32>
    %cst_198 = arith.constant 1.000000e+00 : f32
    %389 = vector.broadcast %cst_198 : f32 to vector<8x128xf32>
    %390 = arith.addf %389, %388 : vector<8x128xf32>
    %391 = arith.divf %389, %390 : vector<8x128xf32>
    %392 = vector.extract_strided_slice %385 {offsets = [0, 128], sizes = [8, 128], strides = [1, 1]} : vector<8x512xf32> to vector<8x128xf32>
    %393 = arith.negf %392 : vector<8x128xf32>
    %394 = math.exp %393 : vector<8x128xf32>
    %cst_199 = arith.constant 1.000000e+00 : f32
    %395 = vector.broadcast %cst_199 : f32 to vector<8x128xf32>
    %396 = arith.addf %395, %394 : vector<8x128xf32>
    %397 = arith.divf %395, %396 : vector<8x128xf32>
    %398 = vector.extract_strided_slice %385 {offsets = [0, 256], sizes = [8, 128], strides = [1, 1]} : vector<8x512xf32> to vector<8x128xf32>
    %399 = math.tanh %398 : vector<8x128xf32>
    %400 = vector.extract_strided_slice %385 {offsets = [0, 384], sizes = [8, 128], strides = [1, 1]} : vector<8x512xf32> to vector<8x128xf32>
    %401 = arith.negf %400 : vector<8x128xf32>
    %402 = math.exp %401 : vector<8x128xf32>
    %cst_200 = arith.constant 1.000000e+00 : f32
    %403 = vector.broadcast %cst_200 : f32 to vector<8x128xf32>
    %404 = arith.addf %403, %402 : vector<8x128xf32>
    %405 = arith.divf %403, %404 : vector<8x128xf32>
    %406 = arith.mulf %397, %341 : vector<8x128xf32>
    %407 = arith.mulf %391, %399 : vector<8x128xf32>
    %408 = arith.addf %406, %407 : vector<8x128xf32>
    %409 = math.tanh %408 : vector<8x128xf32>
    %410 = arith.mulf %405, %409 : vector<8x128xf32>
    %c0_201 = arith.constant 0 : index
    %c0_202 = arith.constant 0 : index
    %411 = vector.load %arg18[%c0_201, %c0_202] : memref<8x128xf32, #tpu.memory_space<vmem>>, vector<8x128xf32>
    tpu.vector_store %arg18[%c0_201, %c0_202], %375 {strides = array<i32>} : memref<8x128xf32, #tpu.memory_space<vmem>>, vector<8x128xf32>,
    %c0_203 = arith.constant 0 : index
    %c0_204 = arith.constant 0 : index
    %412 = vector.load %arg19[%c0_203, %c0_204] : memref<8x128xf32, #tpu.memory_space<vmem>>, vector<8x128xf32>
    tpu.vector_store %arg19[%c0_203, %c0_204], %373 {strides = array<i32>} : memref<8x128xf32, #tpu.memory_space<vmem>>, vector<8x128xf32>,
    %c0_205 = arith.constant 0 : index
    %c0_206 = arith.constant 0 : index
    %413 = vector.load %arg20[%c0_205, %c0_206] : memref<8x128xf32, #tpu.memory_space<vmem>>, vector<8x128xf32>
    tpu.vector_store %arg20[%c0_205, %c0_206], %410 {strides = array<i32>} : memref<8x128xf32, #tpu.memory_space<vmem>>, vector<8x128xf32>,
    %c0_207 = arith.constant 0 : index
    %c0_208 = arith.constant 0 : index
    %414 = vector.load %arg21[%c0_207, %c0_208] : memref<8x128xf32, #tpu.memory_space<vmem>>, vector<8x128xf32>
    tpu.vector_store %arg21[%c0_207, %c0_208], %408 {strides = array<i32>} : memref<8x128xf32, #tpu.memory_space<vmem>>, vector<8x128xf32>,
    %415 = arith.index_cast %337 : i32 to index
    %c0_209 = arith.constant 0 : index
    %416 = vector.load %arg12[%415, %c0_209] : memref<64x128xf32, #tpu.memory_space<vmem>>, vector<8x128xf32>
    tpu.vector_store %arg12[%415, %c0_209], %410 {strides = array<i32>} : memref<64x128xf32, #tpu.memory_space<vmem>>, vector<8x128xf32>,
    %c5_i32 = arith.constant 5 : i32
    %c8_i32_210 = arith.constant 8 : i32
    %417 = arith.muli %c5_i32, %c8_i32_210 : i32
    %418 = tpu.assume_multiple %417, 8 : i32
    %c0_211 = arith.constant 0 : index
    %c0_212 = arith.constant 0 : index
    %419 = vector.load %arg18[%c0_211, %c0_212] : memref<8x128xf32, #tpu.memory_space<vmem>>, vector<8x128xf32>
    %c0_213 = arith.constant 0 : index
    %c0_214 = arith.constant 0 : index
    %420 = vector.load %arg19[%c0_213, %c0_214] : memref<8x128xf32, #tpu.memory_space<vmem>>, vector<8x128xf32>
    %c0_215 = arith.constant 0 : index
    %c0_216 = arith.constant 0 : index
    %421 = vector.load %arg20[%c0_215, %c0_216] : memref<8x128xf32, #tpu.memory_space<vmem>>, vector<8x128xf32>
    %c0_217 = arith.constant 0 : index
    %c0_218 = arith.constant 0 : index
    %422 = vector.load %arg21[%c0_217, %c0_218] : memref<8x128xf32, #tpu.memory_space<vmem>>, vector<8x128xf32>
    %423 = arith.index_cast %418 : i32 to index
    %c0_219 = arith.constant 0 : index
    %424 = vector.load %arg17[%423, %c0_219] : memref<64x512xf32, #tpu.memory_space<vmem>>, vector<8x512xf32>
    %425 = arith.truncf %419 : vector<8x128xf32> to vector<8x128xbf16>
    %c0_220 = arith.constant 0 : index
    %c0_221 = arith.constant 0 : index
    %426 = vector.load %arg3[%c0_220, %c0_221] : memref<128x512xbf16, #tpu.memory_space<vmem>>, vector<128x512xbf16>
    %cst_222 = arith.constant dense<0.000000e+00> : vector<8x512xf32>
    %427 = tpu.matmul %425, %426, %cst_222 {dimension_numbers = #tpu.dot_dimension_numbers<[1], [0], [0], [1], [0, 0, 1, 1], [], []>} : vector<8x128xbf16>, vector<128x512xbf16>, vector<8x512xf32> -> vector<8x512xf32>
    %428 = arith.addf %424, %427 : vector<8x512xf32>
    %c0_223 = arith.constant 0 : index
    %c0_224 = arith.constant 0 : index
    %429 = vector.load %arg4[%c0_223, %c0_224] : memref<1x512xf32, #tpu.memory_space<vmem>>, vector<1x512xf32>
    %430 = vector.broadcast %429 : vector<1x512xf32> to vector<8x512xf32>
    %431 = arith.addf %428, %430 : vector<8x512xf32>
    %432 = vector.extract_strided_slice %431 {offsets = [0, 0], sizes = [8, 128], strides = [1, 1]} : vector<8x512xf32> to vector<8x128xf32>
    %433 = arith.negf %432 : vector<8x128xf32>
    %434 = math.exp %433 : vector<8x128xf32>
    %cst_225 = arith.constant 1.000000e+00 : f32
    %435 = vector.broadcast %cst_225 : f32 to vector<8x128xf32>
    %436 = arith.addf %435, %434 : vector<8x128xf32>
    %437 = arith.divf %435, %436 : vector<8x128xf32>
    %438 = vector.extract_strided_slice %431 {offsets = [0, 128], sizes = [8, 128], strides = [1, 1]} : vector<8x512xf32> to vector<8x128xf32>
    %439 = arith.negf %438 : vector<8x128xf32>
    %440 = math.exp %439 : vector<8x128xf32>
    %cst_226 = arith.constant 1.000000e+00 : f32
    %441 = vector.broadcast %cst_226 : f32 to vector<8x128xf32>
    %442 = arith.addf %441, %440 : vector<8x128xf32>
    %443 = arith.divf %441, %442 : vector<8x128xf32>
    %444 = vector.extract_strided_slice %431 {offsets = [0, 256], sizes = [8, 128], strides = [1, 1]} : vector<8x512xf32> to vector<8x128xf32>
    %445 = math.tanh %444 : vector<8x128xf32>
    %446 = vector.extract_strided_slice %431 {offsets = [0, 384], sizes = [8, 128], strides = [1, 1]} : vector<8x512xf32> to vector<8x128xf32>
    %447 = arith.negf %446 : vector<8x128xf32>
    %448 = math.exp %447 : vector<8x128xf32>
    %cst_227 = arith.constant 1.000000e+00 : f32
    %449 = vector.broadcast %cst_227 : f32 to vector<8x128xf32>
    %450 = arith.addf %449, %448 : vector<8x128xf32>
    %451 = arith.divf %449, %450 : vector<8x128xf32>
    %452 = arith.mulf %443, %420 : vector<8x128xf32>
    %453 = arith.mulf %437, %445 : vector<8x128xf32>
    %454 = arith.addf %452, %453 : vector<8x128xf32>
    %455 = math.tanh %454 : vector<8x128xf32>
    %456 = arith.mulf %451, %455 : vector<8x128xf32>
    %457 = arith.truncf %456 : vector<8x128xf32> to vector<8x128xbf16>
    %c0_228 = arith.constant 0 : index
    %c0_229 = arith.constant 0 : index
    %458 = vector.load %arg5[%c0_228, %c0_229] : memref<128x512xbf16, #tpu.memory_space<vmem>>, vector<128x512xbf16>
    %cst_230 = arith.constant dense<0.000000e+00> : vector<8x512xf32>
    %459 = tpu.matmul %457, %458, %cst_230 {dimension_numbers = #tpu.dot_dimension_numbers<[1], [0], [0], [1], [0, 0, 1, 1], [], []>} : vector<8x128xbf16>, vector<128x512xbf16>, vector<8x512xf32> -> vector<8x512xf32>
    %460 = arith.truncf %421 : vector<8x128xf32> to vector<8x128xbf16>
    %c0_231 = arith.constant 0 : index
    %c0_232 = arith.constant 0 : index
    %461 = vector.load %arg6[%c0_231, %c0_232] : memref<128x512xbf16, #tpu.memory_space<vmem>>, vector<128x512xbf16>
    %cst_233 = arith.constant dense<0.000000e+00> : vector<8x512xf32>
    %462 = tpu.matmul %460, %461, %cst_233 {dimension_numbers = #tpu.dot_dimension_numbers<[1], [0], [0], [1], [0, 0, 1, 1], [], []>} : vector<8x128xbf16>, vector<128x512xbf16>, vector<8x512xf32> -> vector<8x512xf32>
    %463 = arith.addf %459, %462 : vector<8x512xf32>
    %c0_234 = arith.constant 0 : index
    %c0_235 = arith.constant 0 : index
    %464 = vector.load %arg7[%c0_234, %c0_235] : memref<1x512xf32, #tpu.memory_space<vmem>>, vector<1x512xf32>
    %465 = vector.broadcast %464 : vector<1x512xf32> to vector<8x512xf32>
    %466 = arith.addf %463, %465 : vector<8x512xf32>
    %467 = vector.extract_strided_slice %466 {offsets = [0, 0], sizes = [8, 128], strides = [1, 1]} : vector<8x512xf32> to vector<8x128xf32>
    %468 = arith.negf %467 : vector<8x128xf32>
    %469 = math.exp %468 : vector<8x128xf32>
    %cst_236 = arith.constant 1.000000e+00 : f32
    %470 = vector.broadcast %cst_236 : f32 to vector<8x128xf32>
    %471 = arith.addf %470, %469 : vector<8x128xf32>
    %472 = arith.divf %470, %471 : vector<8x128xf32>
    %473 = vector.extract_strided_slice %466 {offsets = [0, 128], sizes = [8, 128], strides = [1, 1]} : vector<8x512xf32> to vector<8x128xf32>
    %474 = arith.negf %473 : vector<8x128xf32>
    %475 = math.exp %474 : vector<8x128xf32>
    %cst_237 = arith.constant 1.000000e+00 : f32
    %476 = vector.broadcast %cst_237 : f32 to vector<8x128xf32>
    %477 = arith.addf %476, %475 : vector<8x128xf32>
    %478 = arith.divf %476, %477 : vector<8x128xf32>
    %479 = vector.extract_strided_slice %466 {offsets = [0, 256], sizes = [8, 128], strides = [1, 1]} : vector<8x512xf32> to vector<8x128xf32>
    %480 = math.tanh %479 : vector<8x128xf32>
    %481 = vector.extract_strided_slice %466 {offsets = [0, 384], sizes = [8, 128], strides = [1, 1]} : vector<8x512xf32> to vector<8x128xf32>
    %482 = arith.negf %481 : vector<8x128xf32>
    %483 = math.exp %482 : vector<8x128xf32>
    %cst_238 = arith.constant 1.000000e+00 : f32
    %484 = vector.broadcast %cst_238 : f32 to vector<8x128xf32>
    %485 = arith.addf %484, %483 : vector<8x128xf32>
    %486 = arith.divf %484, %485 : vector<8x128xf32>
    %487 = arith.mulf %478, %422 : vector<8x128xf32>
    %488 = arith.mulf %472, %480 : vector<8x128xf32>
    %489 = arith.addf %487, %488 : vector<8x128xf32>
    %490 = math.tanh %489 : vector<8x128xf32>
    %491 = arith.mulf %486, %490 : vector<8x128xf32>
    %c0_239 = arith.constant 0 : index
    %c0_240 = arith.constant 0 : index
    %492 = vector.load %arg18[%c0_239, %c0_240] : memref<8x128xf32, #tpu.memory_space<vmem>>, vector<8x128xf32>
    tpu.vector_store %arg18[%c0_239, %c0_240], %456 {strides = array<i32>} : memref<8x128xf32, #tpu.memory_space<vmem>>, vector<8x128xf32>,
    %c0_241 = arith.constant 0 : index
    %c0_242 = arith.constant 0 : index
    %493 = vector.load %arg19[%c0_241, %c0_242] : memref<8x128xf32, #tpu.memory_space<vmem>>, vector<8x128xf32>
    tpu.vector_store %arg19[%c0_241, %c0_242], %454 {strides = array<i32>} : memref<8x128xf32, #tpu.memory_space<vmem>>, vector<8x128xf32>,
    %c0_243 = arith.constant 0 : index
    %c0_244 = arith.constant 0 : index
    %494 = vector.load %arg20[%c0_243, %c0_244] : memref<8x128xf32, #tpu.memory_space<vmem>>, vector<8x128xf32>
    tpu.vector_store %arg20[%c0_243, %c0_244], %491 {strides = array<i32>} : memref<8x128xf32, #tpu.memory_space<vmem>>, vector<8x128xf32>,
    %c0_245 = arith.constant 0 : index
    %c0_246 = arith.constant 0 : index
    %495 = vector.load %arg21[%c0_245, %c0_246] : memref<8x128xf32, #tpu.memory_space<vmem>>, vector<8x128xf32>
    tpu.vector_store %arg21[%c0_245, %c0_246], %489 {strides = array<i32>} : memref<8x128xf32, #tpu.memory_space<vmem>>, vector<8x128xf32>,
    %496 = arith.index_cast %418 : i32 to index
    %c0_247 = arith.constant 0 : index
    %497 = vector.load %arg12[%496, %c0_247] : memref<64x128xf32, #tpu.memory_space<vmem>>, vector<8x128xf32>
    tpu.vector_store %arg12[%496, %c0_247], %491 {strides = array<i32>} : memref<64x128xf32, #tpu.memory_space<vmem>>, vector<8x128xf32>,
    %c6_i32 = arith.constant 6 : i32
    %c8_i32_248 = arith.constant 8 : i32
    %498 = arith.muli %c6_i32, %c8_i32_248 : i32
    %499 = tpu.assume_multiple %498, 8 : i32
    %c0_249 = arith.constant 0 : index
    %c0_250 = arith.constant 0 : index
    %500 = vector.load %arg18[%c0_249, %c0_250] : memref<8x128xf32, #tpu.memory_space<vmem>>, vector<8x128xf32>
    %c0_251 = arith.constant 0 : index
    %c0_252 = arith.constant 0 : index
    %501 = vector.load %arg19[%c0_251, %c0_252] : memref<8x128xf32, #tpu.memory_space<vmem>>, vector<8x128xf32>
    %c0_253 = arith.constant 0 : index
    %c0_254 = arith.constant 0 : index
    %502 = vector.load %arg20[%c0_253, %c0_254] : memref<8x128xf32, #tpu.memory_space<vmem>>, vector<8x128xf32>
    %c0_255 = arith.constant 0 : index
    %c0_256 = arith.constant 0 : index
    %503 = vector.load %arg21[%c0_255, %c0_256] : memref<8x128xf32, #tpu.memory_space<vmem>>, vector<8x128xf32>
    %504 = arith.index_cast %499 : i32 to index
    %c0_257 = arith.constant 0 : index
    %505 = vector.load %arg17[%504, %c0_257] : memref<64x512xf32, #tpu.memory_space<vmem>>, vector<8x512xf32>
    %506 = arith.truncf %500 : vector<8x128xf32> to vector<8x128xbf16>
    %c0_258 = arith.constant 0 : index
    %c0_259 = arith.constant 0 : index
    %507 = vector.load %arg3[%c0_258, %c0_259] : memref<128x512xbf16, #tpu.memory_space<vmem>>, vector<128x512xbf16>
    %cst_260 = arith.constant dense<0.000000e+00> : vector<8x512xf32>
    %508 = tpu.matmul %506, %507, %cst_260 {dimension_numbers = #tpu.dot_dimension_numbers<[1], [0], [0], [1], [0, 0, 1, 1], [], []>} : vector<8x128xbf16>, vector<128x512xbf16>, vector<8x512xf32> -> vector<8x512xf32>
    %509 = arith.addf %505, %508 : vector<8x512xf32>
    %c0_261 = arith.constant 0 : index
    %c0_262 = arith.constant 0 : index
    %510 = vector.load %arg4[%c0_261, %c0_262] : memref<1x512xf32, #tpu.memory_space<vmem>>, vector<1x512xf32>
    %511 = vector.broadcast %510 : vector<1x512xf32> to vector<8x512xf32>
    %512 = arith.addf %509, %511 : vector<8x512xf32>
    %513 = vector.extract_strided_slice %512 {offsets = [0, 0], sizes = [8, 128], strides = [1, 1]} : vector<8x512xf32> to vector<8x128xf32>
    %514 = arith.negf %513 : vector<8x128xf32>
    %515 = math.exp %514 : vector<8x128xf32>
    %cst_263 = arith.constant 1.000000e+00 : f32
    %516 = vector.broadcast %cst_263 : f32 to vector<8x128xf32>
    %517 = arith.addf %516, %515 : vector<8x128xf32>
    %518 = arith.divf %516, %517 : vector<8x128xf32>
    %519 = vector.extract_strided_slice %512 {offsets = [0, 128], sizes = [8, 128], strides = [1, 1]} : vector<8x512xf32> to vector<8x128xf32>
    %520 = arith.negf %519 : vector<8x128xf32>
    %521 = math.exp %520 : vector<8x128xf32>
    %cst_264 = arith.constant 1.000000e+00 : f32
    %522 = vector.broadcast %cst_264 : f32 to vector<8x128xf32>
    %523 = arith.addf %522, %521 : vector<8x128xf32>
    %524 = arith.divf %522, %523 : vector<8x128xf32>
    %525 = vector.extract_strided_slice %512 {offsets = [0, 256], sizes = [8, 128], strides = [1, 1]} : vector<8x512xf32> to vector<8x128xf32>
    %526 = math.tanh %525 : vector<8x128xf32>
    %527 = vector.extract_strided_slice %512 {offsets = [0, 384], sizes = [8, 128], strides = [1, 1]} : vector<8x512xf32> to vector<8x128xf32>
    %528 = arith.negf %527 : vector<8x128xf32>
    %529 = math.exp %528 : vector<8x128xf32>
    %cst_265 = arith.constant 1.000000e+00 : f32
    %530 = vector.broadcast %cst_265 : f32 to vector<8x128xf32>
    %531 = arith.addf %530, %529 : vector<8x128xf32>
    %532 = arith.divf %530, %531 : vector<8x128xf32>
    %533 = arith.mulf %524, %501 : vector<8x128xf32>
    %534 = arith.mulf %518, %526 : vector<8x128xf32>
    %535 = arith.addf %533, %534 : vector<8x128xf32>
    %536 = math.tanh %535 : vector<8x128xf32>
    %537 = arith.mulf %532, %536 : vector<8x128xf32>
    %538 = arith.truncf %537 : vector<8x128xf32> to vector<8x128xbf16>
    %c0_266 = arith.constant 0 : index
    %c0_267 = arith.constant 0 : index
    %539 = vector.load %arg5[%c0_266, %c0_267] : memref<128x512xbf16, #tpu.memory_space<vmem>>, vector<128x512xbf16>
    %cst_268 = arith.constant dense<0.000000e+00> : vector<8x512xf32>
    %540 = tpu.matmul %538, %539, %cst_268 {dimension_numbers = #tpu.dot_dimension_numbers<[1], [0], [0], [1], [0, 0, 1, 1], [], []>} : vector<8x128xbf16>, vector<128x512xbf16>, vector<8x512xf32> -> vector<8x512xf32>
    %541 = arith.truncf %502 : vector<8x128xf32> to vector<8x128xbf16>
    %c0_269 = arith.constant 0 : index
    %c0_270 = arith.constant 0 : index
    %542 = vector.load %arg6[%c0_269, %c0_270] : memref<128x512xbf16, #tpu.memory_space<vmem>>, vector<128x512xbf16>
    %cst_271 = arith.constant dense<0.000000e+00> : vector<8x512xf32>
    %543 = tpu.matmul %541, %542, %cst_271 {dimension_numbers = #tpu.dot_dimension_numbers<[1], [0], [0], [1], [0, 0, 1, 1], [], []>} : vector<8x128xbf16>, vector<128x512xbf16>, vector<8x512xf32> -> vector<8x512xf32>
    %544 = arith.addf %540, %543 : vector<8x512xf32>
    %c0_272 = arith.constant 0 : index
    %c0_273 = arith.constant 0 : index
    %545 = vector.load %arg7[%c0_272, %c0_273] : memref<1x512xf32, #tpu.memory_space<vmem>>, vector<1x512xf32>
    %546 = vector.broadcast %545 : vector<1x512xf32> to vector<8x512xf32>
    %547 = arith.addf %544, %546 : vector<8x512xf32>
    %548 = vector.extract_strided_slice %547 {offsets = [0, 0], sizes = [8, 128], strides = [1, 1]} : vector<8x512xf32> to vector<8x128xf32>
    %549 = arith.negf %548 : vector<8x128xf32>
    %550 = math.exp %549 : vector<8x128xf32>
    %cst_274 = arith.constant 1.000000e+00 : f32
    %551 = vector.broadcast %cst_274 : f32 to vector<8x128xf32>
    %552 = arith.addf %551, %550 : vector<8x128xf32>
    %553 = arith.divf %551, %552 : vector<8x128xf32>
    %554 = vector.extract_strided_slice %547 {offsets = [0, 128], sizes = [8, 128], strides = [1, 1]} : vector<8x512xf32> to vector<8x128xf32>
    %555 = arith.negf %554 : vector<8x128xf32>
    %556 = math.exp %555 : vector<8x128xf32>
    %cst_275 = arith.constant 1.000000e+00 : f32
    %557 = vector.broadcast %cst_275 : f32 to vector<8x128xf32>
    %558 = arith.addf %557, %556 : vector<8x128xf32>
    %559 = arith.divf %557, %558 : vector<8x128xf32>
    %560 = vector.extract_strided_slice %547 {offsets = [0, 256], sizes = [8, 128], strides = [1, 1]} : vector<8x512xf32> to vector<8x128xf32>
    %561 = math.tanh %560 : vector<8x128xf32>
    %562 = vector.extract_strided_slice %547 {offsets = [0, 384], sizes = [8, 128], strides = [1, 1]} : vector<8x512xf32> to vector<8x128xf32>
    %563 = arith.negf %562 : vector<8x128xf32>
    %564 = math.exp %563 : vector<8x128xf32>
    %cst_276 = arith.constant 1.000000e+00 : f32
    %565 = vector.broadcast %cst_276 : f32 to vector<8x128xf32>
    %566 = arith.addf %565, %564 : vector<8x128xf32>
    %567 = arith.divf %565, %566 : vector<8x128xf32>
    %568 = arith.mulf %559, %503 : vector<8x128xf32>
    %569 = arith.mulf %553, %561 : vector<8x128xf32>
    %570 = arith.addf %568, %569 : vector<8x128xf32>
    %571 = math.tanh %570 : vector<8x128xf32>
    %572 = arith.mulf %567, %571 : vector<8x128xf32>
    %c0_277 = arith.constant 0 : index
    %c0_278 = arith.constant 0 : index
    %573 = vector.load %arg18[%c0_277, %c0_278] : memref<8x128xf32, #tpu.memory_space<vmem>>, vector<8x128xf32>
    tpu.vector_store %arg18[%c0_277, %c0_278], %537 {strides = array<i32>} : memref<8x128xf32, #tpu.memory_space<vmem>>, vector<8x128xf32>,
    %c0_279 = arith.constant 0 : index
    %c0_280 = arith.constant 0 : index
    %574 = vector.load %arg19[%c0_279, %c0_280] : memref<8x128xf32, #tpu.memory_space<vmem>>, vector<8x128xf32>
    tpu.vector_store %arg19[%c0_279, %c0_280], %535 {strides = array<i32>} : memref<8x128xf32, #tpu.memory_space<vmem>>, vector<8x128xf32>,
    %c0_281 = arith.constant 0 : index
    %c0_282 = arith.constant 0 : index
    %575 = vector.load %arg20[%c0_281, %c0_282] : memref<8x128xf32, #tpu.memory_space<vmem>>, vector<8x128xf32>
    tpu.vector_store %arg20[%c0_281, %c0_282], %572 {strides = array<i32>} : memref<8x128xf32, #tpu.memory_space<vmem>>, vector<8x128xf32>,
    %c0_283 = arith.constant 0 : index
    %c0_284 = arith.constant 0 : index
    %576 = vector.load %arg21[%c0_283, %c0_284] : memref<8x128xf32, #tpu.memory_space<vmem>>, vector<8x128xf32>
    tpu.vector_store %arg21[%c0_283, %c0_284], %570 {strides = array<i32>} : memref<8x128xf32, #tpu.memory_space<vmem>>, vector<8x128xf32>,
    %577 = arith.index_cast %499 : i32 to index
    %c0_285 = arith.constant 0 : index
    %578 = vector.load %arg12[%577, %c0_285] : memref<64x128xf32, #tpu.memory_space<vmem>>, vector<8x128xf32>
    tpu.vector_store %arg12[%577, %c0_285], %572 {strides = array<i32>} : memref<64x128xf32, #tpu.memory_space<vmem>>, vector<8x128xf32>,
    %c7_i32 = arith.constant 7 : i32
    %c8_i32_286 = arith.constant 8 : i32
    %579 = arith.muli %c7_i32, %c8_i32_286 : i32
    %580 = tpu.assume_multiple %579, 8 : i32
    %c0_287 = arith.constant 0 : index
    %c0_288 = arith.constant 0 : index
    %581 = vector.load %arg18[%c0_287, %c0_288] : memref<8x128xf32, #tpu.memory_space<vmem>>, vector<8x128xf32>
    %c0_289 = arith.constant 0 : index
    %c0_290 = arith.constant 0 : index
    %582 = vector.load %arg19[%c0_289, %c0_290] : memref<8x128xf32, #tpu.memory_space<vmem>>, vector<8x128xf32>
    %c0_291 = arith.constant 0 : index
    %c0_292 = arith.constant 0 : index
    %583 = vector.load %arg20[%c0_291, %c0_292] : memref<8x128xf32, #tpu.memory_space<vmem>>, vector<8x128xf32>
    %c0_293 = arith.constant 0 : index
    %c0_294 = arith.constant 0 : index
    %584 = vector.load %arg21[%c0_293, %c0_294] : memref<8x128xf32, #tpu.memory_space<vmem>>, vector<8x128xf32>
    %585 = arith.index_cast %580 : i32 to index
    %c0_295 = arith.constant 0 : index
    %586 = vector.load %arg17[%585, %c0_295] : memref<64x512xf32, #tpu.memory_space<vmem>>, vector<8x512xf32>
    %587 = arith.truncf %581 : vector<8x128xf32> to vector<8x128xbf16>
    %c0_296 = arith.constant 0 : index
    %c0_297 = arith.constant 0 : index
    %588 = vector.load %arg3[%c0_296, %c0_297] : memref<128x512xbf16, #tpu.memory_space<vmem>>, vector<128x512xbf16>
    %cst_298 = arith.constant dense<0.000000e+00> : vector<8x512xf32>
    %589 = tpu.matmul %587, %588, %cst_298 {dimension_numbers = #tpu.dot_dimension_numbers<[1], [0], [0], [1], [0, 0, 1, 1], [], []>} : vector<8x128xbf16>, vector<128x512xbf16>, vector<8x512xf32> -> vector<8x512xf32>
    %590 = arith.addf %586, %589 : vector<8x512xf32>
    %c0_299 = arith.constant 0 : index
    %c0_300 = arith.constant 0 : index
    %591 = vector.load %arg4[%c0_299, %c0_300] : memref<1x512xf32, #tpu.memory_space<vmem>>, vector<1x512xf32>
    %592 = vector.broadcast %591 : vector<1x512xf32> to vector<8x512xf32>
    %593 = arith.addf %590, %592 : vector<8x512xf32>
    %594 = vector.extract_strided_slice %593 {offsets = [0, 0], sizes = [8, 128], strides = [1, 1]} : vector<8x512xf32> to vector<8x128xf32>
    %595 = arith.negf %594 : vector<8x128xf32>
    %596 = math.exp %595 : vector<8x128xf32>
    %cst_301 = arith.constant 1.000000e+00 : f32
    %597 = vector.broadcast %cst_301 : f32 to vector<8x128xf32>
    %598 = arith.addf %597, %596 : vector<8x128xf32>
    %599 = arith.divf %597, %598 : vector<8x128xf32>
    %600 = vector.extract_strided_slice %593 {offsets = [0, 128], sizes = [8, 128], strides = [1, 1]} : vector<8x512xf32> to vector<8x128xf32>
    %601 = arith.negf %600 : vector<8x128xf32>
    %602 = math.exp %601 : vector<8x128xf32>
    %cst_302 = arith.constant 1.000000e+00 : f32
    %603 = vector.broadcast %cst_302 : f32 to vector<8x128xf32>
    %604 = arith.addf %603, %602 : vector<8x128xf32>
    %605 = arith.divf %603, %604 : vector<8x128xf32>
    %606 = vector.extract_strided_slice %593 {offsets = [0, 256], sizes = [8, 128], strides = [1, 1]} : vector<8x512xf32> to vector<8x128xf32>
    %607 = math.tanh %606 : vector<8x128xf32>
    %608 = vector.extract_strided_slice %593 {offsets = [0, 384], sizes = [8, 128], strides = [1, 1]} : vector<8x512xf32> to vector<8x128xf32>
    %609 = arith.negf %608 : vector<8x128xf32>
    %610 = math.exp %609 : vector<8x128xf32>
    %cst_303 = arith.constant 1.000000e+00 : f32
    %611 = vector.broadcast %cst_303 : f32 to vector<8x128xf32>
    %612 = arith.addf %611, %610 : vector<8x128xf32>
    %613 = arith.divf %611, %612 : vector<8x128xf32>
    %614 = arith.mulf %605, %582 : vector<8x128xf32>
    %615 = arith.mulf %599, %607 : vector<8x128xf32>
    %616 = arith.addf %614, %615 : vector<8x128xf32>
    %617 = math.tanh %616 : vector<8x128xf32>
    %618 = arith.mulf %613, %617 : vector<8x128xf32>
    %619 = arith.truncf %618 : vector<8x128xf32> to vector<8x128xbf16>
    %c0_304 = arith.constant 0 : index
    %c0_305 = arith.constant 0 : index
    %620 = vector.load %arg5[%c0_304, %c0_305] : memref<128x512xbf16, #tpu.memory_space<vmem>>, vector<128x512xbf16>
    %cst_306 = arith.constant dense<0.000000e+00> : vector<8x512xf32>
    %621 = tpu.matmul %619, %620, %cst_306 {dimension_numbers = #tpu.dot_dimension_numbers<[1], [0], [0], [1], [0, 0, 1, 1], [], []>} : vector<8x128xbf16>, vector<128x512xbf16>, vector<8x512xf32> -> vector<8x512xf32>
    %622 = arith.truncf %583 : vector<8x128xf32> to vector<8x128xbf16>
    %c0_307 = arith.constant 0 : index
    %c0_308 = arith.constant 0 : index
    %623 = vector.load %arg6[%c0_307, %c0_308] : memref<128x512xbf16, #tpu.memory_space<vmem>>, vector<128x512xbf16>
    %cst_309 = arith.constant dense<0.000000e+00> : vector<8x512xf32>
    %624 = tpu.matmul %622, %623, %cst_309 {dimension_numbers = #tpu.dot_dimension_numbers<[1], [0], [0], [1], [0, 0, 1, 1], [], []>} : vector<8x128xbf16>, vector<128x512xbf16>, vector<8x512xf32> -> vector<8x512xf32>
    %625 = arith.addf %621, %624 : vector<8x512xf32>
    %c0_310 = arith.constant 0 : index
    %c0_311 = arith.constant 0 : index
    %626 = vector.load %arg7[%c0_310, %c0_311] : memref<1x512xf32, #tpu.memory_space<vmem>>, vector<1x512xf32>
    %627 = vector.broadcast %626 : vector<1x512xf32> to vector<8x512xf32>
    %628 = arith.addf %625, %627 : vector<8x512xf32>
    %629 = vector.extract_strided_slice %628 {offsets = [0, 0], sizes = [8, 128], strides = [1, 1]} : vector<8x512xf32> to vector<8x128xf32>
    %630 = arith.negf %629 : vector<8x128xf32>
    %631 = math.exp %630 : vector<8x128xf32>
    %cst_312 = arith.constant 1.000000e+00 : f32
    %632 = vector.broadcast %cst_312 : f32 to vector<8x128xf32>
    %633 = arith.addf %632, %631 : vector<8x128xf32>
    %634 = arith.divf %632, %633 : vector<8x128xf32>
    %635 = vector.extract_strided_slice %628 {offsets = [0, 128], sizes = [8, 128], strides = [1, 1]} : vector<8x512xf32> to vector<8x128xf32>
    %636 = arith.negf %635 : vector<8x128xf32>
    %637 = math.exp %636 : vector<8x128xf32>
    %cst_313 = arith.constant 1.000000e+00 : f32
    %638 = vector.broadcast %cst_313 : f32 to vector<8x128xf32>
    %639 = arith.addf %638, %637 : vector<8x128xf32>
    %640 = arith.divf %638, %639 : vector<8x128xf32>
    %641 = vector.extract_strided_slice %628 {offsets = [0, 256], sizes = [8, 128], strides = [1, 1]} : vector<8x512xf32> to vector<8x128xf32>
    %642 = math.tanh %641 : vector<8x128xf32>
    %643 = vector.extract_strided_slice %628 {offsets = [0, 384], sizes = [8, 128], strides = [1, 1]} : vector<8x512xf32> to vector<8x128xf32>
    %644 = arith.negf %643 : vector<8x128xf32>
    %645 = math.exp %644 : vector<8x128xf32>
    %cst_314 = arith.constant 1.000000e+00 : f32
    %646 = vector.broadcast %cst_314 : f32 to vector<8x128xf32>
    %647 = arith.addf %646, %645 : vector<8x128xf32>
    %648 = arith.divf %646, %647 : vector<8x128xf32>
    %649 = arith.mulf %640, %584 : vector<8x128xf32>
    %650 = arith.mulf %634, %642 : vector<8x128xf32>
    %651 = arith.addf %649, %650 : vector<8x128xf32>
    %652 = math.tanh %651 : vector<8x128xf32>
    %653 = arith.mulf %648, %652 : vector<8x128xf32>
    %c0_315 = arith.constant 0 : index
    %c0_316 = arith.constant 0 : index
    %654 = vector.load %arg18[%c0_315, %c0_316] : memref<8x128xf32, #tpu.memory_space<vmem>>, vector<8x128xf32>
    tpu.vector_store %arg18[%c0_315, %c0_316], %618 {strides = array<i32>} : memref<8x128xf32, #tpu.memory_space<vmem>>, vector<8x128xf32>,
    %c0_317 = arith.constant 0 : index
    %c0_318 = arith.constant 0 : index
    %655 = vector.load %arg19[%c0_317, %c0_318] : memref<8x128xf32, #tpu.memory_space<vmem>>, vector<8x128xf32>
    tpu.vector_store %arg19[%c0_317, %c0_318], %616 {strides = array<i32>} : memref<8x128xf32, #tpu.memory_space<vmem>>, vector<8x128xf32>,
    %c0_319 = arith.constant 0 : index
    %c0_320 = arith.constant 0 : index
    %656 = vector.load %arg20[%c0_319, %c0_320] : memref<8x128xf32, #tpu.memory_space<vmem>>, vector<8x128xf32>
    tpu.vector_store %arg20[%c0_319, %c0_320], %653 {strides = array<i32>} : memref<8x128xf32, #tpu.memory_space<vmem>>, vector<8x128xf32>,
    %c0_321 = arith.constant 0 : index
    %c0_322 = arith.constant 0 : index
    %657 = vector.load %arg21[%c0_321, %c0_322] : memref<8x128xf32, #tpu.memory_space<vmem>>, vector<8x128xf32>
    tpu.vector_store %arg21[%c0_321, %c0_322], %651 {strides = array<i32>} : memref<8x128xf32, #tpu.memory_space<vmem>>, vector<8x128xf32>,
    %658 = arith.index_cast %580 : i32 to index
    %c0_323 = arith.constant 0 : index
    %659 = vector.load %arg12[%658, %c0_323] : memref<64x128xf32, #tpu.memory_space<vmem>>, vector<8x128xf32>
    tpu.vector_store %arg12[%658, %c0_323], %653 {strides = array<i32>} : memref<64x128xf32, #tpu.memory_space<vmem>>, vector<8x128xf32>,
    %c8_i32_324 = arith.constant 8 : i32
    %c0_325 = arith.constant 0 : index
    %c0_326 = arith.constant 0 : index
    %660 = vector.load %arg18[%c0_325, %c0_326] : memref<8x128xf32, #tpu.memory_space<vmem>>, vector<8x128xf32>
    %c0_327 = arith.constant 0 : index
    %c0_328 = arith.constant 0 : index
    %661 = vector.load %arg13[%c0_327, %c0_328] : memref<8x128xf32, #tpu.memory_space<vmem>>, vector<8x128xf32>
    tpu.vector_store %arg13[%c0_327, %c0_328], %660 {strides = array<i32>} : memref<8x128xf32, #tpu.memory_space<vmem>>, vector<8x128xf32>,
    %c0_329 = arith.constant 0 : index
    %c0_330 = arith.constant 0 : index
    %662 = vector.load %arg19[%c0_329, %c0_330] : memref<8x128xf32, #tpu.memory_space<vmem>>, vector<8x128xf32>
    %c0_331 = arith.constant 0 : index
    %c0_332 = arith.constant 0 : index
    %663 = vector.load %arg14[%c0_331, %c0_332] : memref<8x128xf32, #tpu.memory_space<vmem>>, vector<8x128xf32>
    tpu.vector_store %arg14[%c0_331, %c0_332], %662 {strides = array<i32>} : memref<8x128xf32, #tpu.memory_space<vmem>>, vector<8x128xf32>,
    %c0_333 = arith.constant 0 : index
    %c0_334 = arith.constant 0 : index
    %664 = vector.load %arg20[%c0_333, %c0_334] : memref<8x128xf32, #tpu.memory_space<vmem>>, vector<8x128xf32>
    %c0_335 = arith.constant 0 : index
    %c0_336 = arith.constant 0 : index
    %665 = vector.load %arg15[%c0_335, %c0_336] : memref<8x128xf32, #tpu.memory_space<vmem>>, vector<8x128xf32>
    tpu.vector_store %arg15[%c0_335, %c0_336], %664 {strides = array<i32>} : memref<8x128xf32, #tpu.memory_space<vmem>>, vector<8x128xf32>,
    %c0_337 = arith.constant 0 : index
    %c0_338 = arith.constant 0 : index
    %666 = vector.load %arg21[%c0_337, %c0_338] : memref<8x128xf32, #tpu.memory_space<vmem>>, vector<8x128xf32>
    %c0_339 = arith.constant 0 : index
    %c0_340 = arith.constant 0 : index
    %667 = vector.load %arg16[%c0_339, %c0_340] : memref<8x128xf32, #tpu.memory_space<vmem>>, vector<8x128xf32>
    tpu.vector_store %arg16[%c0_339, %c0_340], %666 {strides = array<i32>} : memref<8x128xf32, #tpu.memory_space<vmem>>, vector<8x128xf32>,
    return
  }
  func.func @transform_0(%arg0: i32) -> (i32, i32) {
    %c0_i32 = arith.constant 0 : i32
    %c0_i32_0 = arith.constant 0 : i32
    %c0_i32_1 = arith.constant 0 : i32
    return %c0_i32, %c0_i32_0 : i32, i32
  }
  func.func @transform_1(%arg0: i32) -> (i32, i32) {
    %c0_i32 = arith.constant 0 : i32
    %c0_i32_0 = arith.constant 0 : i32
    %c0_i32_1 = arith.constant 0 : i32
    return %c0_i32, %c0_i32_0 : i32, i32
  }
  func.func @transform_2(%arg0: i32) -> (i32, i32) {
    %c0_i32 = arith.constant 0 : i32
    %c0_i32_0 = arith.constant 0 : i32
    %c0_i32_1 = arith.constant 0 : i32
    return %c0_i32, %c0_i32_0 : i32, i32
  }
  func.func @transform_3(%arg0: i32) -> (i32, i32) {
    %c0_i32 = arith.constant 0 : i32
    %c0_i32_0 = arith.constant 0 : i32
    %c0_i32_1 = arith.constant 0 : i32
    return %c0_i32, %c0_i32_0 : i32, i32
  }
  func.func @transform_4(%arg0: i32) -> (i32, i32) {
    %c0_i32 = arith.constant 0 : i32
    %c0_i32_0 = arith.constant 0 : i32
    %c0_i32_1 = arith.constant 0 : i32
    return %c0_i32, %c0_i32_0 : i32, i32
  }
  func.func @transform_5(%arg0: i32) -> (i32, i32) {
    %c0_i32 = arith.constant 0 : i32
    %c0_i32_0 = arith.constant 0 : i32
    %c0_i32_1 = arith.constant 0 : i32
    return %c0_i32, %c0_i32_0 : i32, i32
  }
  func.func @transform_6(%arg0: i32) -> (i32, i32) {
    %c0_i32 = arith.constant 0 : i32
    %c0_i32_0 = arith.constant 0 : i32
    %c0_i32_1 = arith.constant 0 : i32
    return %c0_i32, %c0_i32_0 : i32, i32
  }
  func.func @transform_7(%arg0: i32) -> (i32, i32) {
    %c0_i32 = arith.constant 0 : i32
    %c0_i32_0 = arith.constant 0 : i32
    %c0_i32_1 = arith.constant 0 : i32
    return %c0_i32, %c0_i32_0 : i32, i32
  }
  func.func @transform_8(%arg0: i32) -> (i32, i32) {
    %c0_i32 = arith.constant 0 : i32
    %c0_i32_0 = arith.constant 0 : i32
    %c0_i32_1 = arith.constant 0 : i32
    return %c0_i32, %c0_i32_0 : i32, i32
  }
  func.func @transform_9(%arg0: i32) -> (i32, i32) {
    %c0_i32 = arith.constant 0 : i32
    %c0_i32_0 = arith.constant 0 : i32
    %c0_i32_1 = arith.constant 0 : i32
    return %c0_i32, %c0_i32_0 : i32, i32
  }
  func.func @transform_10(%arg0: i32) -> (i32, i32) {
    %c0_i32 = arith.constant 0 : i32
    %c0_i32_0 = arith.constant 0 : i32
    %c0_i32_1 = arith.constant 0 : i32
    return %c0_i32, %c0_i32_0 : i32, i32
  }
  func.func @transform_11(%arg0: i32) -> (i32, i32) {
    %c0_i32 = arith.constant 0 : i32
    %c0_i32_0 = arith.constant 0 : i32
    %c0_i32_1 = arith.constant 0 : i32
    return %c0_i32, %c0_i32_0 : i32, i32
  }
  func.func @transform_12(%arg0: i32) -> (i32, i32) {
    %c0_i32 = arith.constant 0 : i32
    %c0_i32_0 = arith.constant 0 : i32
    %c0_i32_1 = arith.constant 0 : i32
    return %c0_i32, %c0_i32_0 : i32, i32
  }
  func.func @transform_13(%arg0: i32) -> (i32, i32) {
    %c0_i32 = arith.constant 0 : i32
    %c0_i32_0 = arith.constant 0 : i32
    %c0_i32_1 = arith.constant 0 : i32
    return %c0_i32, %c0_i32_0 : i32, i32
  }
  func.func @transform_14(%arg0: i32) -> (i32, i32) {
    %c0_i32 = arith.constant 0 : i32
    %c0_i32_0 = arith.constant 0 : i32
    %c0_i32_1 = arith.constant 0 : i32
    return %c0_i32, %c0_i32_0 : i32, i32
  }
  func.func @transform_15(%arg0: i32) -> (i32, i32) {
    %c0_i32 = arith.constant 0 : i32
    %c0_i32_0 = arith.constant 0 : i32
    %c0_i32_1 = arith.constant 0 : i32
    return %c0_i32, %c0_i32_0 : i32, i32
  }
}

</mosaic_0001>

<llo_original>
// kernel: rnnlm_forward.3
$region0: #{rnnlm_forward.3}
  #allocation0 [shape = 'u32[]', space=smem, size = 0x4, offset = 0x4, fixed_abs, tag = 'smem constant byte address 0x4 - core index']
  #allocation1 [shape = 'u32[144,128]{1,0:T(1,128)}', space=vmem, size = 0x12000, scoped, tag = 'internal scratch']
  %s0 = inlined_call_operand.vmem [shape: bf16[32,128], index: 0, kind: input, shape index: {}]
  %s1 = inlined_call_operand.vmem [shape: bf16[128,256], index: 1, kind: input, shape index: {}]
  %s2 = inlined_call_operand.vmem [shape: f32[1,256], index: 2, kind: input, shape index: {}]
  %s3 = inlined_call_operand.vmem [shape: f32[32,256], index: 3, kind: output, shape index: {}]
  %s4 = sld [smem:[#allocation0]]
  $region120: #{rnnlm_forward.3} parent=0
    _
  %s6 = ssub.s32 1, %s4
  %s7 = scalar_select 0, %s6, %s4
  $region1: #{rnnlm_forward.3} parent=0
    #allocation2 [shape = 'u8[65536]{0}', space=vmem, size = 0x10000, scoped, tag = 'input window, operand 1']
    #allocation3 [shape = 'u8[32768]{0}', space=vmem, size = 0x8000, scoped, tag = 'output window, operand 0']
    loop: start=0, step=1, limit=4
    $region2: #{rnnlm_forward.3} parent=1 // loop_pre_header
      _
    $region3: #{rnnlm_forward.3} parent=1 // loop_header
      %s9 = sphi 0, %s13
      %p10 = scmp.ge.s32.totalorder %s9, 4
      %s16 = sphi 0, %s28
      %s17 = sphi 0, %s24
      %s18 = sphi 0, %s16
      %s19 = sphi 0, %s17
      %s20 = sphi 0, %s18
      %s21 = sphi 0, %s19
      %s31 = sphi 0, %s33
      %s34 = sphi 0, %s31
      %s35 = sphi 0, %s34
      %s51 = sphi 0, %s35
      %s57 = sphi 0, %s59
      %s60 = sphi 0, %s57
      %s61 = sphi 0, %s60
      %s77 = sphi 0, %s61
      %s83 = sphi 0, %s85
      %s86 = sphi 0, %s83
      %s87 = sphi 0, %s86
      %s103 = sphi 0, %s87
      %s111 = sphi 0, %s113
      %s114 = sphi 0, %s111
      %s115 = sphi 0, %s114
      %s131 = sphi 0, %s115
    $region4: #{rnnlm_forward.3} parent=1 // loop_header_branch
      %12 = sbr.rel (%p10) target = $region8
    $region5: #{rnnlm_forward.3} parent=1 // loop_body
      %s14 = ssub.s32 %s9, 1
      %s15 = ssub.s32 %s9, 2
      %s22 = sadd.s32 1, %s17
      %p23 = scmp.ge.s32.totalorder %s22, 2
      %s24 = scalar_select %p23, 0, %s22
      %s25 = sadd.s32 1, %s16
      %s26 = scalar_select %p23, %s25, %s16
      %p27 = scmp.ge.s32.totalorder %s26, 1
      %s28 = scalar_select %p27, 0, %s26
      %s29 = ssub.s32 %s16, %s28
      %p30 = scmp.eq.s32.totalorder %s29, 0
      %s32 = sadd.s32 %s31, 1
      %s33 = scalar_select %p30, %s31, %s32
      %p36 = pneg %p30
      %p37 = scmp.eq.s32.totalorder %s9, 1
      %p38 = por %p36, %p37
      %p39 = scmp.ne.s32.totalorder %s31, %s34
      %p40 = scmp.eq.s32.totalorder %s9, 0
      %p41 = por %p39, %p40
      %p42 = scmp.ne.s32.totalorder %s31, %s34
      %p43 = scmp.eq.s32.totalorder %s14, 1
      %p44 = por %p42, %p43
      %p45 = scmp.ne.s32.totalorder %s34, %s35
      %p46 = scmp.eq.s32.totalorder %s14, 0
      %p47 = por %p45, %p46
      %p48 = scmp.ne.s32.totalorder %s34, %s35
      %p49 = scmp.eq.s32.totalorder %s15, 1
      %p50 = por %p48, %p49
      %p52 = scmp.ne.s32.totalorder %s35, %s51
      %p53 = scmp.eq.s32.totalorder %s15, 0
      %p54 = por %p52, %p53
      %s55 = ssub.s32 %s17, %s24
      %p56 = scmp.eq.s32.totalorder %s55, 0
      %s58 = sadd.s32 %s57, 1
      %s59 = scalar_select %p56, %s57, %s58
      %p62 = pneg %p56
      %p63 = scmp.eq.s32.totalorder %s9, 1
      %p64 = por %p62, %p63
      %p65 = scmp.ne.s32.totalorder %s57, %s60
      %p66 = scmp.eq.s32.totalorder %s9, 0
      %p67 = por %p65, %p66
      %p68 = scmp.ne.s32.totalorder %s57, %s60
      %p69 = scmp.eq.s32.totalorder %s14, 1
      %p70 = por %p68, %p69
      %p71 = scmp.ne.s32.totalorder %s60, %s61
      %p72 = scmp.eq.s32.totalorder %s14, 0
      %p73 = por %p71, %p72
      %p74 = scmp.ne.s32.totalorder %s60, %s61
      %p75 = scmp.eq.s32.totalorder %s15, 1
      %p76 = por %p74, %p75
      %p78 = scmp.ne.s32.totalorder %s61, %s77
      %p79 = scmp.eq.s32.totalorder %s15, 0
      %p80 = por %p78, %p79
      %s81 = ssub.s32 %s17, %s24
      %p82 = scmp.eq.s32.totalorder %s81, 0
      %s84 = sadd.s32 %s83, 1
      %s85 = scalar_select %p82, %s83, %s84
      %p88 = pneg %p82
      %p89 = scmp.eq.s32.totalorder %s9, 1
      %p90 = por %p88, %p89
      %p91 = scmp.ne.s32.totalorder %s83, %s86
      %p92 = scmp.eq.s32.totalorder %s9, 0
      %p93 = por %p91, %p92
      %p94 = scmp.ne.s32.totalorder %s83, %s86
      %p95 = scmp.eq.s32.totalorder %s14, 1
      %p96 = por %p94, %p95
      %p97 = scmp.ne.s32.totalorder %s86, %s87
      %p98 = scmp.eq.s32.totalorder %s14, 0
      %p99 = por %p97, %p98
      %p100 = scmp.ne.s32.totalorder %s86, %s87
      %p101 = scmp.eq.s32.totalorder %s15, 1
      %p102 = por %p100, %p101
      %p104 = scmp.ne.s32.totalorder %s87, %s103
      %p105 = scmp.eq.s32.totalorder %s15, 0
      %p106 = por %p104, %p105
      %s107 = ssub.s32 %s16, %s28
      %s108 = ssub.s32 %s17, %s24
      %s109 = sor.u32 %s107, %s108
      %p110 = scmp.eq.s32.totalorder %s109, 0
      %s112 = sadd.s32 %s111, 1
      %s113 = scalar_select %p110, %s111, %s112
      %p116 = pneg %p110
      %p117 = scmp.eq.s32.totalorder %s9, 1
      %p118 = por %p116, %p117
      %p119 = scmp.ne.s32.totalorder %s111, %s114
      %p120 = scmp.eq.s32.totalorder %s9, 0
      %p121 = por %p119, %p120
      %p122 = scmp.ne.s32.totalorder %s111, %s114
      %p123 = scmp.eq.s32.totalorder %s14, 1
      %p124 = por %p122, %p123
      %p125 = scmp.ne.s32.totalorder %s114, %s115
      %p126 = scmp.eq.s32.totalorder %s14, 0
      %p127 = por %p125, %p126
      %p128 = scmp.ne.s32.totalorder %s114, %s115
      %p129 = scmp.eq.s32.totalorder %s15, 1
      %p130 = por %p128, %p129
      %p132 = scmp.ne.s32.totalorder %s115, %s131
      %p133 = scmp.eq.s32.totalorder %s15, 0
      %p134 = por %p132, %p133
      %p135 = scmp.le.s32.totalorder 1, %s9
      %p136 = scmp.lt.s32.totalorder %s9, 3
      %p137 = pnand %p135, %p136
      %p138 = pneg %p137
      // Predicated region
      $region9: #{rnnlm_forward.3} parent=5 // pred_check
        _
      $region10: #{rnnlm_forward.3} parent=5 // pred_check_branch
        %140 = sbr.rel (%p137) target = $region12
      $region11: #{rnnlm_forward.3} parent=5 // pred_region
        %s141 = ssub.s32 %s9, 1
        // Predicated region
        $region13: #{rnnlm_forward.3} parent=11 // pred_check
          %p142 = pneg %p47
        $region14: #{rnnlm_forward.3} parent=11 // pred_check_branch
          %144 = sbr.rel (%p142) target = $region16
        $region15: #{rnnlm_forward.3} parent=11 // pred_region
          %s145 = smul.u32 4, %s18
          %p146 = scmp.lt.s32.totalorder %s145, 3
          %s147 = scalar_select %p146, %s145, 3
          %s148 = smul.addr %s147, 4
          %s149 = scalar_lea.vmem %s0, %s148
          %s150 = smul.u32 4, %s18
        $region16: #{rnnlm_forward.3} parent=11 // pred_fallthru
          _
      $region12: #{rnnlm_forward.3} parent=5 // pred_fallthru
        _
      %p151 = scmp.lt.s32.totalorder %s9, 2
      // Predicated region
      $region17: #{rnnlm_forward.3} parent=5 // pred_check
        %p152 = pneg %p151
      $region18: #{rnnlm_forward.3} parent=5 // pred_check_branch
        %154 = sbr.rel (%p152) target = $region20
      $region19: #{rnnlm_forward.3} parent=5 // pred_region
        // Predicated region
        $region21: #{rnnlm_forward.3} parent=19 // pred_check
          %p155 = pneg %p67
        $region22: #{rnnlm_forward.3} parent=19 // pred_check_branch
          %157 = sbr.rel (%p155) target = $region24
        $region23: #{rnnlm_forward.3} parent=19 // pred_region
          %s158 = sand.u32 %s57, 1
          %s159 = sand.u32 %s57, 1
          %s160 = smul.addr %s159, 64
          %s161 = scalar_lea.vmem [#allocation2], %s160
          %s162 = smul.addr %s17, 4
          %s163 = scalar_lea.vmem %s1, %s162
          // Predicated region
          $region25: #{rnnlm_forward.3} parent=23 // pred_check
            _
          $region26: #{rnnlm_forward.3} parent=23 // pred_check_branch
            %165 = sbr.rel (0) target = $region28
          $region27: #{rnnlm_forward.3} parent=23 // pred_region
            // Predicated region
            $region29: #{rnnlm_forward.3} parent=27 // pred_check
              _
            $region30: #{rnnlm_forward.3} parent=27 // pred_check_branch
              %167 = sbr.rel target = $region32
            $region31: #{rnnlm_forward.3} parent=27 // pred_region
              // Predicated region
              $region44: #{rnnlm_forward.3} parent=31 // pred_check
                _
              $region45: #{rnnlm_forward.3} parent=31 // pred_check_branch
                %212 = sbr.rel (0) target = $region47
              $region46: #{rnnlm_forward.3} parent=31 // pred_region
                loop: start=0, step=1, limit=1
                $region48: #{rnnlm_forward.3} parent=46 // loop_pre_header
                  _
                $region49: #{rnnlm_forward.3} parent=46 // loop_header
                  %s214 = sphi 0, %s218
                  %p215 = scmp.ge.s32.totalorder %s214, 1
                  %s219 = sphi %s163, %s163
                  %s220 = sphi %s161, %s161
                $region50: #{rnnlm_forward.3} parent=46 // loop_header_branch
                  %217 = sbr.rel (%p215) target = $region54
                $region51: #{rnnlm_forward.3} parent=46 // loop_body
                  _
                $region52: #{rnnlm_forward.3} parent=46 // loop_footer
                  %s218 = sadd.s32 1, %s214
                $region53: #{rnnlm_forward.3} parent=46 // loop_footer_branch
                  %213 = sbr.rel target = $region49
                $region54: #{rnnlm_forward.3} parent=46 // loop_exit
                  _
                loop: start=0, step=1, limit=1
                $region55: #{rnnlm_forward.3} parent=46 // loop_pre_header
                  _
                $region56: #{rnnlm_forward.3} parent=46 // loop_header
                  %s223 = sphi 0, %s227
                  %p224 = scmp.ge.s32.totalorder %s223, 1
                  %s228 = sphi %s163, %s163
                  %s229 = sphi %s161, %s161
                $region57: #{rnnlm_forward.3} parent=46 // loop_header_branch
                  %226 = sbr.rel (%p224) target = $region61
                $region58: #{rnnlm_forward.3} parent=46 // loop_body
                  %v230 = vld [vmem:[%s228] sm:$0xf]
                  %231 = vst [vmem:[%s229] sm:$0xf] %v230
                  %v232 = vld [vmem:[%s228 + $0x8] sm:$0xf]
                  %233 = vst [vmem:[%s229 + $0x4] sm:$0xf] %v232
                  %v234 = vld [vmem:[%s228 + $0x10] sm:$0xf]
                  %235 = vst [vmem:[%s229 + $0x8] sm:$0xf] %v234
                  %v236 = vld [vmem:[%s228 + $0x18] sm:$0xf]
                  %237 = vst [vmem:[%s229 + $0xc] sm:$0xf] %v236
                  %v238 = vld [vmem:[%s228 + $0x20] sm:$0xf]
                  %239 = vst [vmem:[%s229 + $0x10] sm:$0xf] %v238
                  %v240 = vld [vmem:[%s228 + $0x28] sm:$0xf]
                  %241 = vst [vmem:[%s229 + $0x14] sm:$0xf] %v240
                  %v242 = vld [vmem:[%s228 + $0x30] sm:$0xf]
                  %243 = vst [vmem:[%s229 + $0x18] sm:$0xf] %v242
                  %v244 = vld [vmem:[%s228 + $0x38] sm:$0xf]
                  %245 = vst [vmem:[%s229 + $0x1c] sm:$0xf] %v244
                  %v246 = vld [vmem:[%s228 + $0x40] sm:$0xf]
                  %247 = vst [vmem:[%s229 + $0x20] sm:$0xf] %v246
                  %v248 = vld [vmem:[%s228 + $0x48] sm:$0xf]
                  %249 = vst [vmem:[%s229 + $0x24] sm:$0xf] %v248
                  %v250 = vld [vmem:[%s228 + $0x50] sm:$0xf]
                  %251 = vst [vmem:[%s229 + $0x28] sm:$0xf] %v250
                  %v252 = vld [vmem:[%s228 + $0x58] sm:$0xf]
                  %253 = vst [vmem:[%s229 + $0x2c] sm:$0xf] %v252
                  %v254 = vld [vmem:[%s228 + $0x60] sm:$0xf]
                  %255 = vst [vmem:[%s229 + $0x30] sm:$0xf] %v254
                  %v256 = vld [vmem:[%s228 + $0x68] sm:$0xf]
                  %257 = vst [vmem:[%s229 + $0x34] sm:$0xf] %v256
                  %v258 = vld [vmem:[%s228 + $0x70] sm:$0xf]
                  %259 = vst [vmem:[%s229 + $0x38] sm:$0xf] %v258
                  %v260 = vld [vmem:[%s228 + $0x78] sm:$0xf]
                  %261 = vst [vmem:[%s229 + $0x3c] sm:$0xf] %v260
                $region59: #{rnnlm_forward.3} parent=46 // loop_footer
                  %s227 = sadd.s32 1, %s223
                $region60: #{rnnlm_forward.3} parent=46 // loop_footer_branch
                  %222 = sbr.rel target = $region56
                $region61: #{rnnlm_forward.3} parent=46 // loop_exit
                  _
              $region47: #{rnnlm_forward.3} parent=31 // pred_fallthru
                _
            $region32: #{rnnlm_forward.3} parent=27 // pred_fallthru
              _
            // Predicated region
            $region33: #{rnnlm_forward.3} parent=27 // pred_check
              _
            $region34: #{rnnlm_forward.3} parent=27 // pred_check_branch
              %169 = sbr.rel (0) target = $region36
            $region35: #{rnnlm_forward.3} parent=27 // pred_region
              loop: start=0, step=1, limit=1
              $region37: #{rnnlm_forward.3} parent=35 // loop_pre_header
                _
              $region38: #{rnnlm_forward.3} parent=35 // loop_header
                %s172 = sphi 0, %s176
                %p173 = scmp.ge.s32.totalorder %s172, 1
                %s177 = sphi %s163, %s163
                %s178 = sphi %s161, %s161
              $region39: #{rnnlm_forward.3} parent=35 // loop_header_branch
                %175 = sbr.rel (%p173) target = $region43
              $region40: #{rnnlm_forward.3} parent=35 // loop_body
                %v179 = vld [vmem:[%s177] sm:$0xf]
                %180 = vst [vmem:[%s178] sm:$0xf] %v179
                %v181 = vld [vmem:[%s177 + $0x8] sm:$0xf]
                %182 = vst [vmem:[%s178 + $0x4] sm:$0xf] %v181
                %v183 = vld [vmem:[%s177 + $0x10] sm:$0xf]
                %184 = vst [vmem:[%s178 + $0x8] sm:$0xf] %v183
                %v185 = vld [vmem:[%s177 + $0x18] sm:$0xf]
                %186 = vst [vmem:[%s178 + $0xc] sm:$0xf] %v185
                %v187 = vld [vmem:[%s177 + $0x20] sm:$0xf]
                %188 = vst [vmem:[%s178 + $0x10] sm:$0xf] %v187
                %v189 = vld [vmem:[%s177 + $0x28] sm:$0xf]
                %190 = vst [vmem:[%s178 + $0x14] sm:$0xf] %v189
                %v191 = vld [vmem:[%s177 + $0x30] sm:$0xf]
                %192 = vst [vmem:[%s178 + $0x18] sm:$0xf] %v191
                %v193 = vld [vmem:[%s177 + $0x38] sm:$0xf]
                %194 = vst [vmem:[%s178 + $0x1c] sm:$0xf] %v193
                %v195 = vld [vmem:[%s177 + $0x40] sm:$0xf]
                %196 = vst [vmem:[%s178 + $0x20] sm:$0xf] %v195
                %v197 = vld [vmem:[%s177 + $0x48] sm:$0xf]
                %198 = vst [vmem:[%s178 + $0x24] sm:$0xf] %v197
                %v199 = vld [vmem:[%s177 + $0x50] sm:$0xf]
                %200 = vst [vmem:[%s178 + $0x28] sm:$0xf] %v199
                %v201 = vld [vmem:[%s177 + $0x58] sm:$0xf]
                %202 = vst [vmem:[%s178 + $0x2c] sm:$0xf] %v201
                %v203 = vld [vmem:[%s177 + $0x60] sm:$0xf]
                %204 = vst [vmem:[%s178 + $0x30] sm:$0xf] %v203
                %v205 = vld [vmem:[%s177 + $0x68] sm:$0xf]
                %206 = vst [vmem:[%s178 + $0x34] sm:$0xf] %v205
                %v207 = vld [vmem:[%s177 + $0x70] sm:$0xf]
                %208 = vst [vmem:[%s178 + $0x38] sm:$0xf] %v207
                %v209 = vld [vmem:[%s177 + $0x78] sm:$0xf]
                %210 = vst [vmem:[%s178 + $0x3c] sm:$0xf] %v209
              $region41: #{rnnlm_forward.3} parent=35 // loop_footer
                %s176 = sadd.s32 1, %s172
              $region42: #{rnnlm_forward.3} parent=35 // loop_footer_branch
                %171 = sbr.rel target = $region38
              $region43: #{rnnlm_forward.3} parent=35 // loop_exit
                _
            $region36: #{rnnlm_forward.3} parent=27 // pred_fallthru
              _
          $region28: #{rnnlm_forward.3} parent=23 // pred_fallthru
            _
          %262 = vnop
        $region24: #{rnnlm_forward.3} parent=19 // pred_fallthru
          _
        // Predicated region
        $region62: #{rnnlm_forward.3} parent=19 // pred_check
          %p263 = pneg %p93
        $region63: #{rnnlm_forward.3} parent=19 // pred_check_branch
          %265 = sbr.rel (%p263) target = $region65
        $region64: #{rnnlm_forward.3} parent=19 // pred_region
          %p266 = scmp.lt.s32.totalorder %s17, 1
          %s267 = scalar_select %p266, %s17, 1
          %s268 = scalar_lea.vmem %s2, %s267
        $region65: #{rnnlm_forward.3} parent=19 // pred_fallthru
          _
      $region20: #{rnnlm_forward.3} parent=5 // pred_fallthru
        _
      %p269 = scmp.le.s32.totalorder 1, %s9
      %p270 = scmp.lt.s32.totalorder %s9, 3
      %p271 = pnand %p269, %p270
      %p272 = pneg %p271
      // Predicated region
      $region66: #{rnnlm_forward.3} parent=5 // pred_check
        _
      $region67: #{rnnlm_forward.3} parent=5 // pred_check_branch
        %274 = sbr.rel (%p271) target = $region69
      $region68: #{rnnlm_forward.3} parent=5 // pred_region
        %s275 = ssub.s32 %s9, 1
        %s276 = sand.u32 %s60, 1
        %s277 = sand.u32 %s60, 1
        %s278 = smul.addr %s277, 64
        %s279 = scalar_lea.vmem [#allocation2], %s278
        // Predicated region
        $region70: #{rnnlm_forward.3} parent=68 // pred_check
          %p280 = pneg %p73
        $region71: #{rnnlm_forward.3} parent=68 // pred_check_branch
          %282 = sbr.rel (%p280) target = $region73
        $region72: #{rnnlm_forward.3} parent=68 // pred_region
          _
        $region73: #{rnnlm_forward.3} parent=68 // pred_fallthru
          _
        %s283 = smul.u32 4, %s18
        %p284 = scmp.lt.s32.totalorder %s283, 3
        %s285 = scalar_select %p284, %s283, 3
        %s286 = smul.addr %s285, 4
        %s287 = scalar_lea.vmem %s0, %s286
        %p288 = pneg %p47
        %p289 = pneg %p44
        %s290 = sand.u32 %s60, 1
        %s291 = sand.u32 %s60, 1
        %s292 = smul.addr %s291, 64
        %s293 = scalar_lea.vmem [#allocation2], %s292
        %p294 = pneg %p73
        %p295 = pneg %p70
        %p296 = scmp.lt.s32.totalorder %s19, 1
        %s297 = scalar_select %p296, %s19, 1
        %s298 = scalar_lea.vmem %s2, %s297
        %p299 = pneg %p99
        %p300 = pneg %p96
        %p301 = pneg %p127
        %p302 = pneg %p124
        %s303 = sand.u32 %s114, 1
        %s304 = sand.u32 %s114, 1
        %s305 = smul.addr %s304, 32
        %s306 = scalar_lea.vmem [#allocation3], %s305
        %s307 = smul.u32 4, %s18
        %p308 = scmp.lt.s32.totalorder %s307, 3
        %s309 = scalar_select %p308, %s307, 3
        %s310 = smul.addr %s309, 4
        %s311 = scalar_lea.vmem %s0, %s310
        %s312 = smul.u32 4, %s18
        %p313 = scmp.lt.s32.totalorder %s19, 1
        %s314 = scalar_select %p313, %s19, 1
        %s315 = scalar_lea.vmem %s2, %s314
        %s316 = smul.u32 4, %s18
        %v318 = vld [vmem:[%s311] sm:$0xf]
        %v319 = vld [vmem:[%s311 + $0x4] sm:$0xf]
        %v320 = vld [vmem:[%s311 + $0x8] sm:$0xf]
        %v321 = vld [vmem:[%s311 + $0xc] sm:$0xf]
        %v322 = vld [vmem:[%s279] sm:$0xf]
        %v323 = vld [vmem:[%s279 + $0x4] sm:$0xf]
        %v324 = vld [vmem:[%s279 + $0x8] sm:$0xf]
        %v325 = vld [vmem:[%s279 + $0xc] sm:$0xf]
        %v326 = vld [vmem:[%s279 + $0x10] sm:$0xf]
        %v327 = vld [vmem:[%s279 + $0x14] sm:$0xf]
        %v328 = vld [vmem:[%s279 + $0x18] sm:$0xf]
        %v329 = vld [vmem:[%s279 + $0x1c] sm:$0xf]
        %v330 = vld [vmem:[%s279 + $0x20] sm:$0xf]
        %v331 = vld [vmem:[%s279 + $0x24] sm:$0xf]
        %v332 = vld [vmem:[%s279 + $0x28] sm:$0xf]
        %v333 = vld [vmem:[%s279 + $0x2c] sm:$0xf]
        %v334 = vld [vmem:[%s279 + $0x30] sm:$0xf]
        %v335 = vld [vmem:[%s279 + $0x34] sm:$0xf]
        %v336 = vld [vmem:[%s279 + $0x38] sm:$0xf]
        %v337 = vld [vmem:[%s279 + $0x3c] sm:$0xf]
        %v338 = vld [vmem:[%s315] sm:$0x1]
        %v340 = vlaneseq
        %v341 = vshrl.u32 %v340, 7
        %v342 = vsub.s32 0, %v341
        %v343 = vrot.slane %v338, %v342
        %v349 = vunpack.c.l.b16 %v318
        %v350 = vunpack.c.l.b16 %v319
        %v351 = vunpack.c.l.b16 %v320
        %v352 = vunpack.c.l.b16 %v321
        %v353 = vpack.c.b16 %v350, %v349
        %v354 = vpack.c.b16 %v352, %v351
        %v373 = vunpack.c.l.b16 %v322
        %v374 = vunpack.c.l.b16 %v323
        %v375 = vunpack.c.l.b16 %v324
        %v376 = vunpack.c.l.b16 %v325
        %v377 = vunpack.c.l.b16 %v326
        %v378 = vunpack.c.l.b16 %v327
        %v379 = vunpack.c.l.b16 %v328
        %v380 = vunpack.c.l.b16 %v329
        %v381 = vunpack.c.l.b16 %v330
        %v382 = vunpack.c.l.b16 %v331
        %v383 = vunpack.c.l.b16 %v332
        %v384 = vunpack.c.l.b16 %v333
        %v385 = vunpack.c.l.b16 %v334
        %v386 = vunpack.c.l.b16 %v335
        %v387 = vunpack.c.l.b16 %v336
        %v388 = vunpack.c.l.b16 %v337
        %v389 = vpack.c.b16 %v374, %v373
        %v390 = vpack.c.b16 %v376, %v375
        %v391 = vpack.c.b16 %v378, %v377
        %v392 = vpack.c.b16 %v380, %v379
        %v393 = vpack.c.b16 %v382, %v381
        %v394 = vpack.c.b16 %v384, %v383
        %v395 = vpack.c.b16 %v386, %v385
        %v396 = vpack.c.b16 %v388, %v387
        %405 = vmatprep.subr.bf16.mxu0 0
        %406 = vmatpush1.bf16.msra.mxu0 %v389
        %407 = vmatprep.subr.bf16.mxu0 0
        %408 = vmatpush1.bf16.msra.mxu0 %v390
        %409 = vmatprep.subr.bf16.mxu0 0
        %410 = vmatpush1.bf16.msra.mxu0 %v391
        %411 = vmatprep.subr.bf16.mxu0 0
        %412 = vmatpush1.bf16.msra.mxu0 %v392
        %413 = vmatprep.subr.bf16.mxu0 0
        %414 = vmatpush1.bf16.msra.mxu0 %v393
        %415 = vmatprep.subr.bf16.mxu0 0
        %416 = vmatpush1.bf16.msra.mxu0 %v394
        %417 = vmatprep.subr.bf16.mxu0 0
        %418 = vmatpush1.bf16.msra.mxu0 %v395
        %419 = vmatprep.subr.bf16.mxu0 0
        %420 = vmatpush1.bf16.msra.mxu0 %v396
        %421 = vmatprep.subr.bf16.mxu0 0
        %422 = vmatpush1.bf16.msra.mxu0 0
        %423 = vmatprep.subr.bf16.mxu0 0
        %424 = vmatpush1.bf16.msra.mxu0 0
        %425 = vmatprep.subr.bf16.mxu0 0
        %426 = vmatpush1.bf16.msra.mxu0 0
        %427 = vmatprep.subr.bf16.mxu0 0
        %428 = vmatpush1.bf16.msra.mxu0 0
        %429 = vmatprep.subr.bf16.mxu0 0
        %430 = vmatpush1.bf16.msra.mxu0 0
        %431 = vmatprep.subr.bf16.mxu0 0
        %432 = vmatpush1.bf16.msra.mxu0 0
        %433 = vmatprep.subr.bf16.mxu0 0
        %434 = vmatpush1.bf16.msra.mxu0 0
        %435 = vmatprep.subr.bf16.mxu0 0
        %436 = vmatpush1.bf16.msra.mxu0 0
        %437 = vmatprep.mubr.bf16.mxu0 0
        %438 = vmatmul.mubr.bf16.gmra.mrb[0].mxu0 %v353
        %v439 = vpop.f32.mrb[0].mxu0
        %v440 = vadd.f32 %v343, %v439
        %v441 = vpop.f32.mrb[0].mxu0
        %v442 = vpop.f32.mrb[0].mxu0
        %v443 = vadd.f32 %v343, %v442
        %v444 = vpop.f32.mrb[0].mxu0
        %445 = vmatprep.mubr.bf16.mxu0 0
        %446 = vmatmul.mubr.bf16.gmra.mrb[0].mxu0 %v354
        %v447 = vpop.f32.mrb[0].mxu0
        %v448 = vadd.f32 %v343, %v447
        %v449 = vpop.f32.mrb[0].mxu0
        %v450 = vpop.f32.mrb[0].mxu0
        %v451 = vadd.f32 %v343, %v450
        %v452 = vpop.f32.mrb[0].mxu0
        %453 = vdwg.mxu0
        %454 = vst [vmem:[%s306] sm:$0xff] %v440
        %455 = vst [vmem:[%s306 + $0x8] sm:$0xff] %v443
        %456 = vst [vmem:[%s306 + $0x10] sm:$0xff] %v448
        %457 = vst [vmem:[%s306 + $0x18] sm:$0xff] %v451
        %s458 = sand.u32 %s114, 1
        %s459 = sand.u32 %s114, 1
        %s460 = smul.addr %s459, 32
        %s461 = scalar_lea.vmem [#allocation3], %s460
        // Predicated region
        $region74: #{rnnlm_forward.3} parent=68 // pred_check
          %p462 = pneg %p124
        $region75: #{rnnlm_forward.3} parent=68 // pred_check_branch
          %464 = sbr.rel (%p462) target = $region77
        $region76: #{rnnlm_forward.3} parent=68 // pred_region
          %s465 = smul.u32 4, %s18
          %s466 = smul.addr %s465, 2
          %s467 = sadd.s32 %s19, %s466
          %s468 = smul.addr %s467, 8
          %s469 = scalar_lea.vmem %s3, %s468
          // Predicated region
          $region78: #{rnnlm_forward.3} parent=76 // pred_check
            _
          $region79: #{rnnlm_forward.3} parent=76 // pred_check_branch
            %471 = sbr.rel (0) target = $region81
          $region80: #{rnnlm_forward.3} parent=76 // pred_region
            // Predicated region
            $region82: #{rnnlm_forward.3} parent=80 // pred_check
              _
            $region83: #{rnnlm_forward.3} parent=80 // pred_check_branch
              %473 = sbr.rel (0) target = $region85
            $region84: #{rnnlm_forward.3} parent=80 // pred_region
              // Predicated region
              $region97: #{rnnlm_forward.3} parent=84 // pred_check
                _
              $region98: #{rnnlm_forward.3} parent=84 // pred_check_branch
                %494 = sbr.rel (0) target = $region100
              $region99: #{rnnlm_forward.3} parent=84 // pred_region
                loop: start=0, step=1, limit=1
                $region101: #{rnnlm_forward.3} parent=99 // loop_pre_header
                  _
                $region102: #{rnnlm_forward.3} parent=99 // loop_header
                  %s496 = sphi 0, %s500
                  %p497 = scmp.ge.s32.totalorder %s496, 1
                  %s501 = sphi %s461, %s461
                  %s502 = sphi %s469, %s469
                $region103: #{rnnlm_forward.3} parent=99 // loop_header_branch
                  %499 = sbr.rel (%p497) target = $region107
                $region104: #{rnnlm_forward.3} parent=99 // loop_body
                  %v503 = vld [vmem:[%s501] sm:$0xff]
                  %504 = vst [vmem:[%s502] sm:$0xff] %v503
                  %v505 = vld [vmem:[%s501 + $0x8] sm:$0xff]
                  %506 = vst [vmem:[%s502 + $0x10] sm:$0xff] %v505
                  %v507 = vld [vmem:[%s501 + $0x10] sm:$0xff]
                  %508 = vst [vmem:[%s502 + $0x20] sm:$0xff] %v507
                  %v509 = vld [vmem:[%s501 + $0x18] sm:$0xff]
                  %510 = vst [vmem:[%s502 + $0x30] sm:$0xff] %v509
                $region105: #{rnnlm_forward.3} parent=99 // loop_footer
                  %s500 = sadd.s32 1, %s496
                $region106: #{rnnlm_forward.3} parent=99 // loop_footer_branch
                  %495 = sbr.rel target = $region102
                $region107: #{rnnlm_forward.3} parent=99 // loop_exit
                  _
              $region100: #{rnnlm_forward.3} parent=84 // pred_fallthru
                _
              // Predicated region
              $region108: #{rnnlm_forward.3} parent=84 // pred_check
                _
              $region109: #{rnnlm_forward.3} parent=84 // pred_check_branch
                %512 = sbr.rel target = $region111
              $region110: #{rnnlm_forward.3} parent=84 // pred_region
                _
              $region111: #{rnnlm_forward.3} parent=84 // pred_fallthru
                _
            $region85: #{rnnlm_forward.3} parent=80 // pred_fallthru
              _
            // Predicated region
            $region86: #{rnnlm_forward.3} parent=80 // pred_check
              _
            $region87: #{rnnlm_forward.3} parent=80 // pred_check_branch
              %475 = sbr.rel target = $region89
            $region88: #{rnnlm_forward.3} parent=80 // pred_region
              loop: start=0, step=1, limit=1
              $region90: #{rnnlm_forward.3} parent=88 // loop_pre_header
                _
              $region91: #{rnnlm_forward.3} parent=88 // loop_header
                %s478 = sphi 0, %s482
                %p479 = scmp.ge.s32.totalorder %s478, 1
                %s483 = sphi %s461, %s461
                %s484 = sphi %s469, %s469
              $region92: #{rnnlm_forward.3} parent=88 // loop_header_branch
                %481 = sbr.rel (%p479) target = $region96
              $region93: #{rnnlm_forward.3} parent=88 // loop_body
                %v485 = vld [vmem:[%s483] sm:$0xff]
                %486 = vst [vmem:[%s484] sm:$0xff] %v485
                %v487 = vld [vmem:[%s483 + $0x8] sm:$0xff]
                %488 = vst [vmem:[%s484 + $0x10] sm:$0xff] %v487
                %v489 = vld [vmem:[%s483 + $0x10] sm:$0xff]
                %490 = vst [vmem:[%s484 + $0x20] sm:$0xff] %v489
                %v491 = vld [vmem:[%s483 + $0x18] sm:$0xff]
                %492 = vst [vmem:[%s484 + $0x30] sm:$0xff] %v491
              $region94: #{rnnlm_forward.3} parent=88 // loop_footer
                %s482 = sadd.s32 1, %s478
              $region95: #{rnnlm_forward.3} parent=88 // loop_footer_branch
                %477 = sbr.rel target = $region91
              $region96: #{rnnlm_forward.3} parent=88 // loop_exit
                _
            $region89: #{rnnlm_forward.3} parent=80 // pred_fallthru
              _
          $region81: #{rnnlm_forward.3} parent=76 // pred_fallthru
            _
          %513 = vnop
        $region77: #{rnnlm_forward.3} parent=68 // pred_fallthru
          _
      $region69: #{rnnlm_forward.3} parent=5 // pred_fallthru
        _
      %p514 = scmp.le.s32.totalorder 2, %s9
      // Predicated region
      $region112: #{rnnlm_forward.3} parent=5 // pred_check
        %p515 = pneg %p514
      $region113: #{rnnlm_forward.3} parent=5 // pred_check_branch
        %517 = sbr.rel (%p515) target = $region115
      $region114: #{rnnlm_forward.3} parent=5 // pred_region
        %s518 = ssub.s32 %s9, 2
        // Predicated region
        $region116: #{rnnlm_forward.3} parent=114 // pred_check
          %p519 = pneg %p130
        $region117: #{rnnlm_forward.3} parent=114 // pred_check_branch
          %521 = sbr.rel (%p519) target = $region119
        $region118: #{rnnlm_forward.3} parent=114 // pred_region
          %s522 = sand.u32 %s115, 1
          %s523 = sand.u32 %s115, 1
          %s524 = smul.addr %s523, 32
          %s525 = scalar_lea.vmem [#allocation3], %s524
        $region119: #{rnnlm_forward.3} parent=114 // pred_fallthru
          _
      $region115: #{rnnlm_forward.3} parent=5 // pred_fallthru
        _
    $region6: #{rnnlm_forward.3} parent=1 // loop_footer
      %s13 = sadd.s32 1, %s9
    $region7: #{rnnlm_forward.3} parent=1 // loop_footer_branch
      %8 = sbr.rel target = $region3
    $region8: #{rnnlm_forward.3} parent=1 // loop_exit
      _

// kernel: rnnlm_forward.2
$region0: #{rnnlm_forward.2}
  #allocation0 [shape = 'u32[]', space=smem, size = 0x4, offset = 0x4, fixed_abs, tag = 'smem constant byte address 0x4 - core index']
  #allocation1 [shape = 'u32[144,128]{1,0:T(1,128)}', space=vmem, size = 0x12000, scoped, tag = 'internal scratch']
  #allocation2 [shape = 'f32[64,512]{1,0:T(8,128)}', space=vmem, size = 0x20000, scoped, tag = 'scratch operand']
  #allocation3 [shape = 'f32[8,128]{1,0:T(8,128)}', space=vmem, size = 0x1000, scoped, tag = 'scratch operand']
  #allocation4 [shape = 'f32[8,128]{1,0:T(8,128)}', space=vmem, size = 0x1000, scoped, tag = 'scratch operand']
  #allocation5 [shape = 'f32[8,128]{1,0:T(8,128)}', space=vmem, size = 0x1000, scoped, tag = 'scratch operand']
  #allocation6 [shape = 'f32[8,128]{1,0:T(8,128)}', space=vmem, size = 0x1000, scoped, tag = 'scratch operand']
  %s0 = inlined_call_operand.vmem [shape: bf16[64,128], index: 0, kind: input, shape index: {}]
  %s1 = inlined_call_operand.vmem [shape: bf16[128,512], index: 1, kind: input, shape index: {}]
  %s2 = inlined_call_operand.hbm [shape: bf16[128,512], index: 2, kind: input, shape index: {}]
  %s3 = inlined_call_operand.vmem [shape: f32[1,512], index: 3, kind: input, shape index: {}]
  %s4 = inlined_call_operand.hbm [shape: bf16[128,512], index: 4, kind: input, shape index: {}]
  %s5 = inlined_call_operand.hbm [shape: bf16[128,512], index: 5, kind: input, shape index: {}]
  %s6 = inlined_call_operand.vmem [shape: f32[1,512], index: 6, kind: input, shape index: {}]
  %s7 = inlined_call_operand.vmem [shape: f32[8,128], index: 7, kind: input, shape index: {}]
  %s8 = inlined_call_operand.vmem [shape: f32[8,128], index: 8, kind: input, shape index: {}]
  %s9 = inlined_call_operand.vmem [shape: f32[8,128], index: 9, kind: input, shape index: {}]
  %s10 = inlined_call_operand.vmem [shape: f32[8,128], index: 10, kind: input, shape index: {}]
  %s11 = inlined_call_operand.vmem [shape: f32[64,128], index: 11, kind: output, shape index: {0}]
  %s12 = inlined_call_operand.vmem [shape: f32[8,128], index: 12, kind: output, shape index: {1}]
  %s13 = inlined_call_operand.vmem [shape: f32[8,128], index: 13, kind: output, shape index: {2}]
  %s14 = inlined_call_operand.vmem [shape: f32[8,128], index: 14, kind: output, shape index: {3}]
  %s15 = inlined_call_operand.vmem [shape: f32[8,128], index: 15, kind: output, shape index: {4}]
  %16 = xla_tuple %s11, %s12, %s13, %s14, %s15
  %s17 = sld [smem:[#allocation0]]
  $region98: #{rnnlm_forward.2} parent=0
    _
  %s19 = ssub.s32 1, %s17
  %s20 = scalar_select 0, %s19, %s17
  $region1: #{rnnlm_forward.2} parent=0
    #allocation7 [shape = 'u8[131072]{0}', space=vmem, size = 0x20000, scoped, tag = 'input window, operand 2, single buffered']
    #allocation8 [shape = 's32[1]{0}', space=sflag, size = 0x4, scoped, tag = 'scoped memory for rnnlm_forward.2']
    #allocation9 [shape = 'u8[131072]{0}', space=vmem, size = 0x20000, scoped, tag = 'input window, operand 4, single buffered']
    #allocation10 [shape = 's32[1]{0}', space=sflag, size = 0x4, scoped, tag = 'scoped memory for rnnlm_forward.2']
    #allocation11 [shape = 'u8[131072]{0}', space=vmem, size = 0x20000, scoped, tag = 'input window, operand 5, single buffered']
    %21 = vsyncpa [#allocation8], 0
    %22 = vsyncpa [#allocation10], 0
    // Predicated region
    $region2: #{rnnlm_forward.2} parent=1 // pred_check
      _
    $region3: #{rnnlm_forward.2} parent=1 // pred_check_branch
      %24 = sbr.rel (0) target = $region5
    $region4: #{rnnlm_forward.2} parent=1 // pred_region
      _
    $region5: #{rnnlm_forward.2} parent=1 // pred_fallthru
      _
    // Predicated region
    $region6: #{rnnlm_forward.2} parent=1 // pred_check
      _
    $region7: #{rnnlm_forward.2} parent=1 // pred_check_branch
      %26 = sbr.rel (0) target = $region9
    $region8: #{rnnlm_forward.2} parent=1 // pred_region
      _
    $region9: #{rnnlm_forward.2} parent=1 // pred_fallthru
      _
    // Predicated region
    $region10: #{rnnlm_forward.2} parent=1 // pred_check
      _
    $region11: #{rnnlm_forward.2} parent=1 // pred_check_branch
      %28 = sbr.rel (0) target = $region13
    $region12: #{rnnlm_forward.2} parent=1 // pred_region
      %s30 = ssub.s32 4096, 4096
      %31 = vsyncadd [#allocation8], %s30
      %s32 = sshll.u32 [#allocation7], 4
      %s33 = int_to_ptr.vmem [resolvable:$true] %s32
      %38 = dma.hbm_to_vmem [thread:$0]  %s2, 4096, %s33, [#allocation8], 256, 256, 16
    $region13: #{rnnlm_forward.2} parent=1 // pred_fallthru
      _
    // Predicated region
    $region14: #{rnnlm_forward.2} parent=1 // pred_check
      _
    $region15: #{rnnlm_forward.2} parent=1 // pred_check_branch
      %40 = sbr.rel (0) target = $region17
    $region16: #{rnnlm_forward.2} parent=1 // pred_region
      _
    $region17: #{rnnlm_forward.2} parent=1 // pred_fallthru
      _
    // Predicated region
    $region18: #{rnnlm_forward.2} parent=1 // pred_check
      _
    $region19: #{rnnlm_forward.2} parent=1 // pred_check_branch
      %42 = sbr.rel (0) target = $region21
    $region20: #{rnnlm_forward.2} parent=1 // pred_region
      %s44 = ssub.s32 4096, 4096
      %45 = vsyncadd [#allocation10], %s44
      %s46 = sshll.u32 [#allocation9], 4
      %s47 = int_to_ptr.vmem [resolvable:$true] %s46
      %52 = dma.hbm_to_vmem [thread:$0]  %s4, 4096, %s47, [#allocation10], 256, 256, 16
    $region21: #{rnnlm_forward.2} parent=1 // pred_fallthru
      _
    // Predicated region
    $region22: #{rnnlm_forward.2} parent=1 // pred_check
      _
    $region23: #{rnnlm_forward.2} parent=1 // pred_check_branch
      %54 = sbr.rel (0) target = $region25
    $region24: #{rnnlm_forward.2} parent=1 // pred_region
      %s56 = ssub.s32 4096, 4096
      %57 = vsyncadd [#allocation10], %s56
      %s58 = sshll.u32 [#allocation11], 4
      %s59 = int_to_ptr.vmem [resolvable:$true] %s58
      %64 = dma.hbm_to_vmem [thread:$0]  %s5, 4096, %s59, [#allocation10], 256, 256, 16
    $region25: #{rnnlm_forward.2} parent=1 // pred_fallthru
      _
    // Predicated region
    $region26: #{rnnlm_forward.2} parent=1 // pred_check
      _
    $region27: #{rnnlm_forward.2} parent=1 // pred_check_branch
      %66 = sbr.rel (0) target = $region29
    $region28: #{rnnlm_forward.2} parent=1 // pred_region
      _
    $region29: #{rnnlm_forward.2} parent=1 // pred_fallthru
      _
    // Predicated region
    $region30: #{rnnlm_forward.2} parent=1 // pred_check
      _
    $region31: #{rnnlm_forward.2} parent=1 // pred_check_branch
      %68 = sbr.rel (0) target = $region33
    $region32: #{rnnlm_forward.2} parent=1 // pred_region
      _
    $region33: #{rnnlm_forward.2} parent=1 // pred_fallthru
      _
    // Predicated region
    $region34: #{rnnlm_forward.2} parent=1 // pred_check
      _
    $region35: #{rnnlm_forward.2} parent=1 // pred_check_branch
      %70 = sbr.rel (0) target = $region37
    $region36: #{rnnlm_forward.2} parent=1 // pred_region
      _
    $region37: #{rnnlm_forward.2} parent=1 // pred_fallthru
      _
    // Predicated region
    $region38: #{rnnlm_forward.2} parent=1 // pred_check
      _
    $region39: #{rnnlm_forward.2} parent=1 // pred_check_branch
      %72 = sbr.rel (0) target = $region41
    $region40: #{rnnlm_forward.2} parent=1 // pred_region
      _
    $region41: #{rnnlm_forward.2} parent=1 // pred_fallthru
      _
    // Predicated region
    $region42: #{rnnlm_forward.2} parent=1 // pred_check
      _
    $region43: #{rnnlm_forward.2} parent=1 // pred_check_branch
      %74 = sbr.rel (0) target = $region45
    $region44: #{rnnlm_forward.2} parent=1 // pred_region
      _
    $region45: #{rnnlm_forward.2} parent=1 // pred_fallthru
      _
    // Predicated region
    $region46: #{rnnlm_forward.2} parent=1 // pred_check
      _
    $region47: #{rnnlm_forward.2} parent=1 // pred_check_branch
      %76 = sbr.rel (0) target = $region49
    $region48: #{rnnlm_forward.2} parent=1 // pred_region
      %77 = dma.done [#allocation8], 4096
    $region49: #{rnnlm_forward.2} parent=1 // pred_fallthru
      _
    // Predicated region
    $region50: #{rnnlm_forward.2} parent=1 // pred_check
      _
    $region51: #{rnnlm_forward.2} parent=1 // pred_check_branch
      %79 = sbr.rel (0) target = $region53
    $region52: #{rnnlm_forward.2} parent=1 // pred_region
      %80 = dma.done [#allocation10], 4096
    $region53: #{rnnlm_forward.2} parent=1 // pred_fallthru
      _
    // Predicated region
    $region54: #{rnnlm_forward.2} parent=1 // pred_check
      _
    $region55: #{rnnlm_forward.2} parent=1 // pred_check_branch
      %82 = sbr.rel (0) target = $region57
    $region56: #{rnnlm_forward.2} parent=1 // pred_region
      %83 = dma.done [#allocation10], 4096
    $region57: #{rnnlm_forward.2} parent=1 // pred_fallthru
      _
    %v85 = vld [vmem:[%s0] sm:$0xf]
    %v86 = vld [vmem:[%s0 + $0x4] sm:$0xf]
    %v87 = vld [vmem:[%s0 + $0x8] sm:$0xf]
    %v88 = vld [vmem:[%s0 + $0xc] sm:$0xf]
    %v89 = vld [vmem:[%s0 + $0x10] sm:$0xf]
    %v90 = vld [vmem:[%s0 + $0x14] sm:$0xf]
    %v91 = vld [vmem:[%s0 + $0x18] sm:$0xf]
    %v92 = vld [vmem:[%s0 + $0x1c] sm:$0xf]
    %v93 = vld [vmem:[%s1] sm:$0xff]
    %v94 = vld [vmem:[%s1 + $0x8] sm:$0xff]
    %v95 = vld [vmem:[%s1 + $0x10] sm:$0xff]
    %v96 = vld [vmem:[%s1 + $0x18] sm:$0xff]
    %v97 = vld [vmem:[%s1 + $0x20] sm:$0xff]
    %v98 = vld [vmem:[%s1 + $0x28] sm:$0xff]
    %v99 = vld [vmem:[%s1 + $0x30] sm:$0xff]
    %v100 = vld [vmem:[%s1 + $0x38] sm:$0xff]
    %v101 = vld [vmem:[%s1 + $0x40] sm:$0xff]
    %v102 = vld [vmem:[%s1 + $0x48] sm:$0xff]
    %v103 = vld [vmem:[%s1 + $0x50] sm:$0xff]
    %v104 = vld [vmem:[%s1 + $0x58] sm:$0xff]
    %v105 = vld [vmem:[%s1 + $0x60] sm:$0xff]
    %v106 = vld [vmem:[%s1 + $0x68] sm:$0xff]
    %v107 = vld [vmem:[%s1 + $0x70] sm:$0xff]
    %v108 = vld [vmem:[%s1 + $0x78] sm:$0xff]
    %v109 = vld [vmem:[%s1 + $0x80] sm:$0xff]
    %v110 = vld [vmem:[%s1 + $0x88] sm:$0xff]
    %v111 = vld [vmem:[%s1 + $0x90] sm:$0xff]
    %v112 = vld [vmem:[%s1 + $0x98] sm:$0xff]
    %v113 = vld [vmem:[%s1 + $0xa0] sm:$0xff]
    %v114 = vld [vmem:[%s1 + $0xa8] sm:$0xff]
    %v115 = vld [vmem:[%s1 + $0xb0] sm:$0xff]
    %v116 = vld [vmem:[%s1 + $0xb8] sm:$0xff]
    %v117 = vld [vmem:[%s1 + $0xc0] sm:$0xff]
    %v118 = vld [vmem:[%s1 + $0xc8] sm:$0xff]
    %v119 = vld [vmem:[%s1 + $0xd0] sm:$0xff]
    %v120 = vld [vmem:[%s1 + $0xd8] sm:$0xff]
    %v121 = vld [vmem:[%s1 + $0xe0] sm:$0xff]
    %v122 = vld [vmem:[%s1 + $0xe8] sm:$0xff]
    %v123 = vld [vmem:[%s1 + $0xf0] sm:$0xff]
    %v124 = vld [vmem:[%s1 + $0xf8] sm:$0xff]
    %v133 = vunpack.c.l.b16 %v85
    %v134 = vunpack.c.l.b16 %v86
    %v135 = vunpack.c.l.b16 %v87
    %v136 = vunpack.c.l.b16 %v88
    %v137 = vunpack.c.l.b16 %v89
    %v138 = vunpack.c.l.b16 %v90
    %v139 = vunpack.c.l.b16 %v91
    %v140 = vunpack.c.l.b16 %v92
    %v141 = vpack.c.b16 %v134, %v133
    %v142 = vpack.c.b16 %v136, %v135
    %v143 = vpack.c.b16 %v138, %v137
    %v144 = vpack.c.b16 %v140, %v139
    %v181 = vunpack.c.l.b16 %v93
    %v182 = vunpack.c.h.b16 %v93
    %v183 = vunpack.c.l.b16 %v94
    %v184 = vunpack.c.h.b16 %v94
    %v185 = vunpack.c.l.b16 %v95
    %v186 = vunpack.c.h.b16 %v95
    %v187 = vunpack.c.l.b16 %v96
    %v188 = vunpack.c.h.b16 %v96
    %v189 = vunpack.c.l.b16 %v97
    %v190 = vunpack.c.h.b16 %v97
    %v191 = vunpack.c.l.b16 %v98
    %v192 = vunpack.c.h.b16 %v98
    %v193 = vunpack.c.l.b16 %v99
    %v194 = vunpack.c.h.b16 %v99
    %v195 = vunpack.c.l.b16 %v100
    %v196 = vunpack.c.h.b16 %v100
    %v197 = vunpack.c.l.b16 %v101
    %v198 = vunpack.c.h.b16 %v101
    %v199 = vunpack.c.l.b16 %v102
    %v200 = vunpack.c.h.b16 %v102
    %v201 = vunpack.c.l.b16 %v103
    %v202 = vunpack.c.h.b16 %v103
    %v203 = vunpack.c.l.b16 %v104
    %v204 = vunpack.c.h.b16 %v104
    %v205 = vunpack.c.l.b16 %v105
    %v206 = vunpack.c.h.b16 %v105
    %v207 = vunpack.c.l.b16 %v106
    %v208 = vunpack.c.h.b16 %v106
    %v209 = vunpack.c.l.b16 %v107
    %v210 = vunpack.c.h.b16 %v107
    %v211 = vunpack.c.l.b16 %v108
    %v212 = vunpack.c.h.b16 %v108
    %v213 = vunpack.c.l.b16 %v109
    %v214 = vunpack.c.h.b16 %v109
    %v215 = vunpack.c.l.b16 %v110
    %v216 = vunpack.c.h.b16 %v110
    %v217 = vunpack.c.l.b16 %v111
    %v218 = vunpack.c.h.b16 %v111
    %v219 = vunpack.c.l.b16 %v112
    %v220 = vunpack.c.h.b16 %v112
    %v221 = vunpack.c.l.b16 %v113
    %v222 = vunpack.c.h.b16 %v113
    %v223 = vunpack.c.l.b16 %v114
    %v224 = vunpack.c.h.b16 %v114
    %v225 = vunpack.c.l.b16 %v115
    %v226 = vunpack.c.h.b16 %v115
    %v227 = vunpack.c.l.b16 %v116
    %v228 = vunpack.c.h.b16 %v116
    %v229 = vunpack.c.l.b16 %v117
    %v230 = vunpack.c.h.b16 %v117
    %v231 = vunpack.c.l.b16 %v118
    %v232 = vunpack.c.h.b16 %v118
    %v233 = vunpack.c.l.b16 %v119
    %v234 = vunpack.c.h.b16 %v119
    %v235 = vunpack.c.l.b16 %v120
    %v236 = vunpack.c.h.b16 %v120
    %v237 = vunpack.c.l.b16 %v121
    %v238 = vunpack.c.h.b16 %v121
    %v239 = vunpack.c.l.b16 %v122
    %v240 = vunpack.c.h.b16 %v122
    %v241 = vunpack.c.l.b16 %v123
    %v242 = vunpack.c.h.b16 %v123
    %v243 = vunpack.c.l.b16 %v124
    %v244 = vunpack.c.h.b16 %v124
    %v245 = vpack.c.b16 %v185, %v181
    %v246 = vpack.c.b16 %v186, %v182
    %v247 = vpack.c.b16 %v187, %v183
    %v248 = vpack.c.b16 %v188, %v184
    %v249 = vpack.c.b16 %v193, %v189
    %v250 = vpack.c.b16 %v194, %v190
    %v251 = vpack.c.b16 %v195, %v191
    %v252 = vpack.c.b16 %v196, %v192
    %v253 = vpack.c.b16 %v201, %v197
    %v254 = vpack.c.b16 %v202, %v198
    %v255 = vpack.c.b16 %v203, %v199
    %v256 = vpack.c.b16 %v204, %v200
    %v257 = vpack.c.b16 %v209, %v205
    %v258 = vpack.c.b16 %v210, %v206
    %v259 = vpack.c.b16 %v211, %v207
    %v260 = vpack.c.b16 %v212, %v208
    %v261 = vpack.c.b16 %v217, %v213
    %v262 = vpack.c.b16 %v218, %v214
    %v263 = vpack.c.b16 %v219, %v215
    %v264 = vpack.c.b16 %v220, %v216
    %v265 = vpack.c.b16 %v225, %v221
    %v266 = vpack.c.b16 %v226, %v222
    %v267 = vpack.c.b16 %v227, %v223
    %v268 = vpack.c.b16 %v228, %v224
    %v269 = vpack.c.b16 %v233, %v229
    %v270 = vpack.c.b16 %v234, %v230
    %v271 = vpack.c.b16 %v235, %v231
    %v272 = vpack.c.b16 %v236, %v232
    %v273 = vpack.c.b16 %v241, %v237
    %v274 = vpack.c.b16 %v242, %v238
    %v275 = vpack.c.b16 %v243, %v239
    %v276 = vpack.c.b16 %v244, %v240
    %309 = vmatprep.subr.bf16.mxu0 %v246
    %310 = vmatpush1.bf16.msra.mxu0 %v245
    %311 = vmatprep.subr.bf16.mxu0 %v250
    %312 = vmatpush1.bf16.msra.mxu0 %v249
    %313 = vmatprep.subr.bf16.mxu0 %v254
    %314 = vmatpush1.bf16.msra.mxu0 %v253
    %315 = vmatprep.subr.bf16.mxu0 %v258
    %316 = vmatpush1.bf16.msra.mxu0 %v257
    %317 = vmatprep.subr.bf16.mxu0 %v262
    %318 = vmatpush1.bf16.msra.mxu0 %v261
    %319 = vmatprep.subr.bf16.mxu0 %v266
    %320 = vmatpush1.bf16.msra.mxu0 %v265
    %321 = vmatprep.subr.bf16.mxu0 %v270
    %322 = vmatpush1.bf16.msra.mxu0 %v269
    %323 = vmatprep.subr.bf16.mxu0 %v274
    %324 = vmatpush1.bf16.msra.mxu0 %v273
    %325 = vmatprep.subr.bf16.mxu0 0
    %326 = vmatpush1.bf16.msra.mxu0 0
    %327 = vmatprep.subr.bf16.mxu0 0
    %328 = vmatpush1.bf16.msra.mxu0 0
    %329 = vmatprep.subr.bf16.mxu0 0
    %330 = vmatpush1.bf16.msra.mxu0 0
    %331 = vmatprep.subr.bf16.mxu0 0
    %332 = vmatpush1.bf16.msra.mxu0 0
    %333 = vmatprep.subr.bf16.mxu0 0
    %334 = vmatpush1.bf16.msra.mxu0 0
    %335 = vmatprep.subr.bf16.mxu0 0
    %336 = vmatpush1.bf16.msra.mxu0 0
    %337 = vmatprep.subr.bf16.mxu0 0
    %338 = vmatpush1.bf16.msra.mxu0 0
    %339 = vmatprep.subr.bf16.mxu0 0
    %340 = vmatpush1.bf16.msra.mxu0 0
    %341 = vmatprep.mubr.bf16.mxu0 0
    %342 = vmatmul.mubr.bf16.gmra.mrb[0].mxu0 %v141
    %v343 = vpop.f32.mrb[0].mxu0
    %v344 = vadd.f32 0.0, %v343
    %v345 = vpop.f32.mrb[0].mxu0
    %v346 = vadd.f32 0.0, %v345
    %v347 = vpop.f32.mrb[0].mxu0
    %v348 = vadd.f32 0.0, %v347
    %v349 = vpop.f32.mrb[0].mxu0
    %v350 = vadd.f32 0.0, %v349
    %351 = vmatprep.mubr.bf16.mxu0 0
    %352 = vmatmul.mubr.bf16.gmra.mrb[0].mxu0 %v142
    %v353 = vpop.f32.mrb[0].mxu0
    %v354 = vadd.f32 0.0, %v353
    %v355 = vpop.f32.mrb[0].mxu0
    %v356 = vadd.f32 0.0, %v355
    %v357 = vpop.f32.mrb[0].mxu0
    %v358 = vadd.f32 0.0, %v357
    %v359 = vpop.f32.mrb[0].mxu0
    %v360 = vadd.f32 0.0, %v359
    %361 = vmatprep.mubr.bf16.mxu0 0
    %362 = vmatmul.mubr.bf16.gmra.mrb[0].mxu0 %v143
    %v363 = vpop.f32.mrb[0].mxu0
    %v364 = vadd.f32 0.0, %v363
    %v365 = vpop.f32.mrb[0].mxu0
    %v366 = vadd.f32 0.0, %v365
    %v367 = vpop.f32.mrb[0].mxu0
    %v368 = vadd.f32 0.0, %v367
    %v369 = vpop.f32.mrb[0].mxu0
    %v370 = vadd.f32 0.0, %v369
    %371 = vmatprep.mubr.bf16.mxu0 0
    %372 = vmatmul.mubr.bf16.gmra.mrb[0].mxu0 %v144
    %v373 = vpop.f32.mrb[0].mxu0
    %v374 = vadd.f32 0.0, %v373
    %v375 = vpop.f32.mrb[0].mxu0
    %v376 = vadd.f32 0.0, %v375
    %v377 = vpop.f32.mrb[0].mxu0
    %v378 = vadd.f32 0.0, %v377
    %v379 = vpop.f32.mrb[0].mxu0
    %v380 = vadd.f32 0.0, %v379
    %381 = vdwg.mxu0
    %382 = vmatprep.subr.bf16.mxu0 %v248
    %383 = vmatpush1.bf16.msra.mxu0 %v247
    %384 = vmatprep.subr.bf16.mxu0 %v252
    %385 = vmatpush1.bf16.msra.mxu0 %v251
    %386 = vmatprep.subr.bf16.mxu0 %v256
    %387 = vmatpush1.bf16.msra.mxu0 %v255
    %388 = vmatprep.subr.bf16.mxu0 %v260
    %389 = vmatpush1.bf16.msra.mxu0 %v259
    %390 = vmatprep.subr.bf16.mxu0 %v264
    %391 = vmatpush1.bf16.msra.mxu0 %v263
    %392 = vmatprep.subr.bf16.mxu0 %v268
    %393 = vmatpush1.bf16.msra.mxu0 %v267
    %394 = vmatprep.subr.bf16.mxu0 %v272
    %395 = vmatpush1.bf16.msra.mxu0 %v271
    %396 = vmatprep.subr.bf16.mxu0 %v276
    %397 = vmatpush1.bf16.msra.mxu0 %v275
    %398 = vmatprep.subr.bf16.mxu0 0
    %399 = vmatpush1.bf16.msra.mxu0 0
    %400 = vmatprep.subr.bf16.mxu0 0
    %401 = vmatpush1.bf16.msra.mxu0 0
    %402 = vmatprep.subr.bf16.mxu0 0
    %403 = vmatpush1.bf16.msra.mxu0 0
    %404 = vmatprep.subr.bf16.mxu0 0
    %405 = vmatpush1.bf16.msra.mxu0 0
    %406 = vmatprep.subr.bf16.mxu0 0
    %407 = vmatpush1.bf16.msra.mxu0 0
    %408 = vmatprep.subr.bf16.mxu0 0
    %409 = vmatpush1.bf16.msra.mxu0 0
    %410 = vmatprep.subr.bf16.mxu0 0
    %411 = vmatpush1.bf16.msra.mxu0 0
    %412 = vmatprep.subr.bf16.mxu0 0
    %413 = vmatpush1.bf16.msra.mxu0 0
    %414 = vmatprep.mubr.bf16.mxu0 0
    %415 = vmatmul.mubr.bf16.gmra.mrb[0].mxu0 %v141
    %v416 = vpop.f32.mrb[0].mxu0
    %v417 = vadd.f32 0.0, %v416
    %v418 = vpop.f32.mrb[0].mxu0
    %v419 = vadd.f32 0.0, %v418
    %v420 = vpop.f32.mrb[0].mxu0
    %v421 = vadd.f32 0.0, %v420
    %v422 = vpop.f32.mrb[0].mxu0
    %v423 = vadd.f32 0.0, %v422
    %424 = vmatprep.mubr.bf16.mxu0 0
    %425 = vmatmul.mubr.bf16.gmra.mrb[0].mxu0 %v142
    %v426 = vpop.f32.mrb[0].mxu0
    %v427 = vadd.f32 0.0, %v426
    %v428 = vpop.f32.mrb[0].mxu0
    %v429 = vadd.f32 0.0, %v428
    %v430 = vpop.f32.mrb[0].mxu0
    %v431 = vadd.f32 0.0, %v430
    %v432 = vpop.f32.mrb[0].mxu0
    %v433 = vadd.f32 0.0, %v432
    %434 = vmatprep.mubr.bf16.mxu0 0
    %435 = vmatmul.mubr.bf16.gmra.mrb[0].mxu0 %v143
    %v436 = vpop.f32.mrb[0].mxu0
    %v437 = vadd.f32 0.0, %v436
    %v438 = vpop.f32.mrb[0].mxu0
    %v439 = vadd.f32 0.0, %v438
    %v440 = vpop.f32.mrb[0].mxu0
    %v441 = vadd.f32 0.0, %v440
    %v442 = vpop.f32.mrb[0].mxu0
    %v443 = vadd.f32 0.0, %v442
    %444 = vmatprep.mubr.bf16.mxu0 0
    %445 = vmatmul.mubr.bf16.gmra.mrb[0].mxu0 %v144
    %v446 = vpop.f32.mrb[0].mxu0
    %v447 = vadd.f32 0.0, %v446
    %v448 = vpop.f32.mrb[0].mxu0
    %v449 = vadd.f32 0.0, %v448
    %v450 = vpop.f32.mrb[0].mxu0
    %v451 = vadd.f32 0.0, %v450
    %v452 = vpop.f32.mrb[0].mxu0
    %v453 = vadd.f32 0.0, %v452
    %454 = vdwg.mxu0
    %455 = vst [vmem:[#allocation2] sm:$0xff] %v344
    %456 = vst [vmem:[#allocation2 + $0x8] sm:$0xff] %v346
    %457 = vst [vmem:[#allocation2 + $0x10] sm:$0xff] %v417
    %458 = vst [vmem:[#allocation2 + $0x18] sm:$0xff] %v419
    %459 = vst [vmem:[#allocation2 + $0x20] sm:$0xff] %v348
    %460 = vst [vmem:[#allocation2 + $0x28] sm:$0xff] %v350
    %461 = vst [vmem:[#allocation2 + $0x30] sm:$0xff] %v421
    %462 = vst [vmem:[#allocation2 + $0x38] sm:$0xff] %v423
    %463 = vst [vmem:[#allocation2 + $0x40] sm:$0xff] %v354
    %464 = vst [vmem:[#allocation2 + $0x48] sm:$0xff] %v356
    %465 = vst [vmem:[#allocation2 + $0x50] sm:$0xff] %v427
    %466 = vst [vmem:[#allocation2 + $0x58] sm:$0xff] %v429
    %467 = vst [vmem:[#allocation2 + $0x60] sm:$0xff] %v358
    %468 = vst [vmem:[#allocation2 + $0x68] sm:$0xff] %v360
    %469 = vst [vmem:[#allocation2 + $0x70] sm:$0xff] %v431
    %470 = vst [vmem:[#allocation2 + $0x78] sm:$0xff] %v433
    %471 = vst [vmem:[#allocation2 + $0x80] sm:$0xff] %v364
    %472 = vst [vmem:[#allocation2 + $0x88] sm:$0xff] %v366
    %473 = vst [vmem:[#allocation2 + $0x90] sm:$0xff] %v437
    %474 = vst [vmem:[#allocation2 + $0x98] sm:$0xff] %v439
    %475 = vst [vmem:[#allocation2 + $0xa0] sm:$0xff] %v368
    %476 = vst [vmem:[#allocation2 + $0xa8] sm:$0xff] %v370
    %477 = vst [vmem:[#allocation2 + $0xb0] sm:$0xff] %v441
    %478 = vst [vmem:[#allocation2 + $0xb8] sm:$0xff] %v443
    %479 = vst [vmem:[#allocation2 + $0xc0] sm:$0xff] %v374
    %480 = vst [vmem:[#allocation2 + $0xc8] sm:$0xff] %v376
    %481 = vst [vmem:[#allocation2 + $0xd0] sm:$0xff] %v447
    %482 = vst [vmem:[#allocation2 + $0xd8] sm:$0xff] %v449
    %483 = vst [vmem:[#allocation2 + $0xe0] sm:$0xff] %v378
    %484 = vst [vmem:[#allocation2 + $0xe8] sm:$0xff] %v380
    %485 = vst [vmem:[#allocation2 + $0xf0] sm:$0xff] %v451
    %486 = vst [vmem:[#allocation2 + $0xf8] sm:$0xff] %v453
    %v487 = vld [vmem:[%s7] sm:$0xff]
    %488 = vst [vmem:[#allocation3] sm:$0xff] %v487
    %v489 = vld [vmem:[%s8] sm:$0xff]
    %490 = vst [vmem:[#allocation4] sm:$0xff] %v489
    %v491 = vld [vmem:[%s9] sm:$0xff]
    %492 = vst [vmem:[#allocation5] sm:$0xff] %v491
    %v493 = vld [vmem:[%s10] sm:$0xff]
    %494 = vst [vmem:[#allocation6] sm:$0xff] %v493
    %v495 = vld [vmem:[#allocation3] sm:$0xff]
    %v496 = vld [vmem:[#allocation4] sm:$0xff]
    %v497 = vld [vmem:[#allocation5] sm:$0xff]
    %v498 = vld [vmem:[#allocation6] sm:$0xff]
    %s499 = smul.u32 0, 4
    %s500 = smul.addr %s499, 8
    %s501 = scalar_lea.vmem [#allocation2], %s500
    %v502 = vld [vmem:[%s501] sm:$0xff]
    %v503 = vld [vmem:[%s501 + $0x8] sm:$0xff]
    %v504 = vld [vmem:[%s501 + $0x10] sm:$0xff]
    %v505 = vld [vmem:[%s501 + $0x18] sm:$0xff]
    %v506 = vpack.c.bf16 %v495, %v495
    %v507 = vld [vmem:[#allocation7] sm:$0xff]
    %v508 = vld [vmem:[#allocation7 + $0x8] sm:$0xff]
    %v509 = vld [vmem:[#allocation7 + $0x10] sm:$0xff]
    %v510 = vld [vmem:[#allocation7 + $0x18] sm:$0xff]
    %v511 = vld [vmem:[#allocation7 + $0x20] sm:$0xff]
    %v512 = vld [vmem:[#allocation7 + $0x28] sm:$0xff]
    %v513 = vld [vmem:[#allocation7 + $0x30] sm:$0xff]
    %v514 = vld [vmem:[#allocation7 + $0x38] sm:$0xff]
    %v515 = vld [vmem:[#allocation7 + $0x40] sm:$0xff]
    %v516 = vld [vmem:[#allocation7 + $0x48] sm:$0xff]
    %v517 = vld [vmem:[#allocation7 + $0x50] sm:$0xff]
    %v518 = vld [vmem:[#allocation7 + $0x58] sm:$0xff]
    %v519 = vld [vmem:[#allocation7 + $0x60] sm:$0xff]
    %v520 = vld [vmem:[#allocation7 + $0x68] sm:$0xff]
    %v521 = vld [vmem:[#allocation7 + $0x70] sm:$0xff]
    %v522 = vld [vmem:[#allocation7 + $0x78] sm:$0xff]
    %v523 = vld [vmem:[#allocation7 + $0x80] sm:$0xff]
    %v524 = vld [vmem:[#allocation7 + $0x88] sm:$0xff]
    %v525 = vld [vmem:[#allocation7 + $0x90] sm:$0xff]
    %v526 = vld [vmem:[#allocation7 + $0x98] sm:$0xff]
    %v527 = vld [vmem:[#allocation7 + $0xa0] sm:$0xff]
    %v528 = vld [vmem:[#allocation7 + $0xa8] sm:$0xff]
    %v529 = vld [vmem:[#allocation7 + $0xb0] sm:$0xff]
    %v530 = vld [vmem:[#allocation7 + $0xb8] sm:$0xff]
    %v531 = vld [vmem:[#allocation7 + $0xc0] sm:$0xff]
    %v532 = vld [vmem:[#allocation7 + $0xc8] sm:$0xff]
    %v533 = vld [vmem:[#allocation7 + $0xd0] sm:$0xff]
    %v534 = vld [vmem:[#allocation7 + $0xd8] sm:$0xff]
    %v535 = vld [vmem:[#allocation7 + $0xe0] sm:$0xff]
    %v536 = vld [vmem:[#allocation7 + $0xe8] sm:$0xff]
    %v537 = vld [vmem:[#allocation7 + $0xf0] sm:$0xff]
    %v538 = vld [vmem:[#allocation7 + $0xf8] sm:$0xff]
    %v571 = vunpack.c.l.b16 %v507
    %v572 = vunpack.c.h.b16 %v507
    %v573 = vunpack.c.l.b16 %v508
    %v574 = vunpack.c.h.b16 %v508
    %v575 = vunpack.c.l.b16 %v509
    %v576 = vunpack.c.h.b16 %v509
    %v577 = vunpack.c.l.b16 %v510
    %v578 = vunpack.c.h.b16 %v510
    %v579 = vunpack.c.l.b16 %v511
    %v580 = vunpack.c.h.b16 %v511
    %v581 = vunpack.c.l.b16 %v512
    %v582 = vunpack.c.h.b16 %v512
    %v583 = vunpack.c.l.b16 %v513
    %v584 = vunpack.c.h.b16 %v513
    %v585 = vunpack.c.l.b16 %v514
    %v586 = vunpack.c.h.b16 %v514
    %v587 = vunpack.c.l.b16 %v515
    %v588 = vunpack.c.h.b16 %v515
    %v589 = vunpack.c.l.b16 %v516
    %v590 = vunpack.c.h.b16 %v516
    %v591 = vunpack.c.l.b16 %v517
    %v592 = vunpack.c.h.b16 %v517
    %v593 = vunpack.c.l.b16 %v518
    %v594 = vunpack.c.h.b16 %v518
    %v595 = vunpack.c.l.b16 %v519
    %v596 = vunpack.c.h.b16 %v519
    %v597 = vunpack.c.l.b16 %v520
    %v598 = vunpack.c.h.b16 %v520
    %v599 = vunpack.c.l.b16 %v521
    %v600 = vunpack.c.h.b16 %v521
    %v601 = vunpack.c.l.b16 %v522
    %v602 = vunpack.c.h.b16 %v522
    %v603 = vunpack.c.l.b16 %v523
    %v604 = vunpack.c.h.b16 %v523
    %v605 = vunpack.c.l.b16 %v524
    %v606 = vunpack.c.h.b16 %v524
    %v607 = vunpack.c.l.b16 %v525
    %v608 = vunpack.c.h.b16 %v525
    %v609 = vunpack.c.l.b16 %v526
    %v610 = vunpack.c.h.b16 %v526
    %v611 = vunpack.c.l.b16 %v527
    %v612 = vunpack.c.h.b16 %v527
    %v613 = vunpack.c.l.b16 %v528
    %v614 = vunpack.c.h.b16 %v528
    %v615 = vunpack.c.l.b16 %v529
    %v616 = vunpack.c.h.b16 %v529
    %v617 = vunpack.c.l.b16 %v530
    %v618 = vunpack.c.h.b16 %v530
    %v619 = vunpack.c.l.b16 %v531
    %v620 = vunpack.c.h.b16 %v531
    %v621 = vunpack.c.l.b16 %v532
    %v622 = vunpack.c.h.b16 %v532
    %v623 = vunpack.c.l.b16 %v533
    %v624 = vunpack.c.h.b16 %v533
    %v625 = vunpack.c.l.b16 %v534
    %v626 = vunpack.c.h.b16 %v534
    %v627 = vunpack.c.l.b16 %v535
    %v628 = vunpack.c.h.b16 %v535
    %v629 = vunpack.c.l.b16 %v536
    %v630 = vunpack.c.h.b16 %v536
    %v631 = vunpack.c.l.b16 %v537
    %v632 = vunpack.c.h.b16 %v537
    %v633 = vunpack.c.l.b16 %v538
    %v634 = vunpack.c.h.b16 %v538
    %v635 = vpack.c.b16 %v575, %v571
    %v636 = vpack.c.b16 %v576, %v572
    %v637 = vpack.c.b16 %v577, %v573
    %v638 = vpack.c.b16 %v578, %v574
    %v639 = vpack.c.b16 %v583, %v579
    %v640 = vpack.c.b16 %v584, %v580
    %v641 = vpack.c.b16 %v585, %v581
    %v642 = vpack.c.b16 %v586, %v582
    %v643 = vpack.c.b16 %v591, %v587
    %v644 = vpack.c.b16 %v592, %v588
    %v645 = vpack.c.b16 %v593, %v589
    %v646 = vpack.c.b16 %v594, %v590
    %v647 = vpack.c.b16 %v599, %v595
    %v648 = vpack.c.b16 %v600, %v596
    %v649 = vpack.c.b16 %v601, %v597
    %v650 = vpack.c.b16 %v602, %v598
    %v651 = vpack.c.b16 %v607, %v603
    %v652 = vpack.c.b16 %v608, %v604
    %v653 = vpack.c.b16 %v609, %v605
    %v654 = vpack.c.b16 %v610, %v606
    %v655 = vpack.c.b16 %v615, %v611
    %v656 = vpack.c.b16 %v616, %v612
    %v657 = vpack.c.b16 %v617, %v613
    %v658 = vpack.c.b16 %v618, %v614
    %v659 = vpack.c.b16 %v623, %v619
    %v660 = vpack.c.b16 %v624, %v620
    %v661 = vpack.c.b16 %v625, %v621
    %v662 = vpack.c.b16 %v626, %v622
    %v663 = vpack.c.b16 %v631, %v627
    %v664 = vpack.c.b16 %v632, %v628
    %v665 = vpack.c.b16 %v633, %v629
    %v666 = vpack.c.b16 %v634, %v630
    %699 = vmatprep.subr.bf16.mxu0 %v636
    %700 = vmatpush1.bf16.msra.mxu0 %v635
    %701 = vmatprep.subr.bf16.mxu0 %v640
    %702 = vmatpush1.bf16.msra.mxu0 %v639
    %703 = vmatprep.subr.bf16.mxu0 %v644
    %704 = vmatpush1.bf16.msra.mxu0 %v643
    %705 = vmatprep.subr.bf16.mxu0 %v648
    %706 = vmatpush1.bf16.msra.mxu0 %v647
    %707 = vmatprep.subr.bf16.mxu0 %v652
    %708 = vmatpush1.bf16.msra.mxu0 %v651
    %709 = vmatprep.subr.bf16.mxu0 %v656
    %710 = vmatpush1.bf16.msra.mxu0 %v655
    %711 = vmatprep.subr.bf16.mxu0 %v660
    %712 = vmatpush1.bf16.msra.mxu0 %v659
    %713 = vmatprep.subr.bf16.mxu0 %v664
    %714 = vmatpush1.bf16.msra.mxu0 %v663
    %715 = vmatprep.subr.bf16.mxu0 0
    %716 = vmatpush1.bf16.msra.mxu0 0
    %717 = vmatprep.subr.bf16.mxu0 0
    %718 = vmatpush1.bf16.msra.mxu0 0
    %719 = vmatprep.subr.bf16.mxu0 0
    %720 = vmatpush1.bf16.msra.mxu0 0
    %721 = vmatprep.subr.bf16.mxu0 0
    %722 = vmatpush1.bf16.msra.mxu0 0
    %723 = vmatprep.subr.bf16.mxu0 0
    %724 = vmatpush1.bf16.msra.mxu0 0
    %725 = vmatprep.subr.bf16.mxu0 0
    %726 = vmatpush1.bf16.msra.mxu0 0
    %727 = vmatprep.subr.bf16.mxu0 0
    %728 = vmatpush1.bf16.msra.mxu0 0
    %729 = vmatprep.subr.bf16.mxu0 0
    %730 = vmatpush1.bf16.msra.mxu0 0
    %731 = vmatprep.mubr.bf16.mxu0 0
    %732 = vmatmul.mubr.bf16.gmra.mrb[0].mxu0 %v506
    %v733 = vpop.f32.mrb[0].mxu0
    %v734 = vadd.f32 0.0, %v733
    %v735 = vpop.f32.mrb[0].mxu0
    %v736 = vadd.f32 0.0, %v735
    %v737 = vpop.f32.mrb[0].mxu0
    %v738 = vpop.f32.mrb[0].mxu0
    %739 = vdwg.mxu0
    %740 = vmatprep.subr.bf16.mxu0 %v638
    %741 = vmatpush1.bf16.msra.mxu0 %v637
    %742 = vmatprep.subr.bf16.mxu0 %v642
    %743 = vmatpush1.bf16.msra.mxu0 %v641
    %744 = vmatprep.subr.bf16.mxu0 %v646
    %745 = vmatpush1.bf16.msra.mxu0 %v645
    %746 = vmatprep.subr.bf16.mxu0 %v650
    %747 = vmatpush1.bf16.msra.mxu0 %v649
    %748 = vmatprep.subr.bf16.mxu0 %v654
    %749 = vmatpush1.bf16.msra.mxu0 %v653
    %750 = vmatprep.subr.bf16.mxu0 %v658
    %751 = vmatpush1.bf16.msra.mxu0 %v657
    %752 = vmatprep.subr.bf16.mxu0 %v662
    %753 = vmatpush1.bf16.msra.mxu0 %v661
    %754 = vmatprep.subr.bf16.mxu0 %v666
    %755 = vmatpush1.bf16.msra.mxu0 %v665
    %756 = vmatprep.subr.bf16.mxu0 0
    %757 = vmatpush1.bf16.msra.mxu0 0
    %758 = vmatprep.subr.bf16.mxu0 0
    %759 = vmatpush1.bf16.msra.mxu0 0
    %760 = vmatprep.subr.bf16.mxu0 0
    %761 = vmatpush1.bf16.msra.mxu0 0
    %762 = vmatprep.subr.bf16.mxu0 0
    %763 = vmatpush1.bf16.msra.mxu0 0
    %764 = vmatprep.subr.bf16.mxu0 0
    %765 = vmatpush1.bf16.msra.mxu0 0
    %766 = vmatprep.subr.bf16.mxu0 0
    %767 = vmatpush1.bf16.msra.mxu0 0
    %768 = vmatprep.subr.bf16.mxu0 0
    %769 = vmatpush1.bf16.msra.mxu0 0
    %770 = vmatprep.subr.bf16.mxu0 0
    %771 = vmatpush1.bf16.msra.mxu0 0
    %772 = vmatprep.mubr.bf16.mxu0 0
    %773 = vmatmul.mubr.bf16.gmra.mrb[0].mxu0 %v506
    %v774 = vpop.f32.mrb[0].mxu0
    %v775 = vadd.f32 0.0, %v774
    %v776 = vpop.f32.mrb[0].mxu0
    %v777 = vadd.f32 0.0, %v776
    %v778 = vpop.f32.mrb[0].mxu0
    %v779 = vpop.f32.mrb[0].mxu0
    %780 = vdwg.mxu0
    %v781 = vadd.f32 %v502, %v734
    %v782 = vadd.f32 %v503, %v736
    %v783 = vadd.f32 %v504, %v775
    %v784 = vadd.f32 %v505, %v777
    %v785 = vld [vmem:[%s3] sm:$0xf]
    %v787 = vlaneseq
    %v788 = vshrl.u32 %v787, 7
    %v789 = vsub.s32 0, %v788
    %v790 = vrot.slane %v785, %v789
    %v791 = vlaneseq
    %v792 = vshrl.u32 %v791, 7
    %v793 = vsub.s32 1, %v792
    %v794 = vrot.slane %v785, %v793
    %v795 = vlaneseq
    %v796 = vshrl.u32 %v795, 7
    %v797 = vsub.s32 2, %v796
    %v798 = vrot.slane %v785, %v797
    %v799 = vlaneseq
    %v800 = vshrl.u32 %v799, 7
    %v801 = vsub.s32 3, %v800
    %v802 = vrot.slane %v785, %v801
    %v807 = vadd.f32 %v781, %v790
    %v808 = vadd.f32 %v782, %v794
    %v809 = vadd.f32 %v783, %v798
    %v810 = vadd.f32 %v784, %v802
    %v811 = vxor.u32 %v807, 2147483648
    %v812 = vmul.f32 %v811, 1.442695
    %v813 = vpow.pop %v812
    %v814 = vadd.f32 %v813, 1.0
    %v815 = vrcp.pop %v814
    %v816 = vmul.f32 1.0, %v815
    %v817 = vxor.u32 %v808, 2147483648
    %v818 = vmul.f32 %v817, 1.442695
    %v819 = vpow.pop %v818
    %v820 = vadd.f32 %v819, 1.0
    %v821 = vrcp.pop %v820
    %v822 = vmul.f32 1.0, %v821
    %v823 = vtanh.pop %v809
    %v824 = vxor.u32 %v810, 2147483648
    %v825 = vmul.f32 %v824, 1.442695
    %v826 = vpow.pop %v825
    %v827 = vadd.f32 %v826, 1.0
    %v828 = vrcp.pop %v827
    %v829 = vmul.f32 1.0, %v828
    %v830 = vmul.f32 %v822, %v496
    %v831 = vmul.f32 %v816, %v823
    %v832 = vadd.f32 %v830, %v831
    %v833 = vtanh.pop %v832
    %v834 = vmul.f32 %v829, %v833
    %v835 = vpack.c.bf16 %v834, %v834
    %v836 = vld [vmem:[#allocation9] sm:$0xff]
    %v837 = vld [vmem:[#allocation9 + $0x8] sm:$0xff]
    %v838 = vld [vmem:[#allocation9 + $0x10] sm:$0xff]
    %v839 = vld [vmem:[#allocation9 + $0x18] sm:$0xff]
    %v840 = vld [vmem:[#allocation9 + $0x20] sm:$0xff]
    %v841 = vld [vmem:[#allocation9 + $0x28] sm:$0xff]
    %v842 = vld [vmem:[#allocation9 + $0x30] sm:$0xff]
    %v843 = vld [vmem:[#allocation9 + $0x38] sm:$0xff]
    %v844 = vld [vmem:[#allocation9 + $0x40] sm:$0xff]
    %v845 = vld [vmem:[#allocation9 + $0x48] sm:$0xff]
    %v846 = vld [vmem:[#allocation9 + $0x50] sm:$0xff]
    %v847 = vld [vmem:[#allocation9 + $0x58] sm:$0xff]
    %v848 = vld [vmem:[#allocation9 + $0x60] sm:$0xff]
    %v849 = vld [vmem:[#allocation9 + $0x68] sm:$0xff]
    %v850 = vld [vmem:[#allocation9 + $0x70] sm:$0xff]
    %v851 = vld [vmem:[#allocation9 + $0x78] sm:$0xff]
    %v852 = vld [vmem:[#allocation9 + $0x80] sm:$0xff]
    %v853 = vld [vmem:[#allocation9 + $0x88] sm:$0xff]
    %v854 = vld [vmem:[#allocation9 + $0x90] sm:$0xff]
    %v855 = vld [vmem:[#allocation9 + $0x98] sm:$0xff]
    %v856 = vld [vmem:[#allocation9 + $0xa0] sm:$0xff]
    %v857 = vld [vmem:[#allocation9 + $0xa8] sm:$0xff]
    %v858 = vld [vmem:[#allocation9 + $0xb0] sm:$0xff]
    %v859 = vld [vmem:[#allocation9 + $0xb8] sm:$0xff]
    %v860 = vld [vmem:[#allocation9 + $0xc0] sm:$0xff]
    %v861 = vld [vmem:[#allocation9 + $0xc8] sm:$0xff]
    %v862 = vld [vmem:[#allocation9 + $0xd0] sm:$0xff]
    %v863 = vld [vmem:[#allocation9 + $0xd8] sm:$0xff]
    %v864 = vld [vmem:[#allocation9 + $0xe0] sm:$0xff]
    %v865 = vld [vmem:[#allocation9 + $0xe8] sm:$0xff]
    %v866 = vld [vmem:[#allocation9 + $0xf0] sm:$0xff]
    %v867 = vld [vmem:[#allocation9 + $0xf8] sm:$0xff]
    %v868 = vpack.c.bf16 %v497, %v497
    %v869 = vld [vmem:[#allocation11] sm:$0xff]
    %v870 = vld [vmem:[#allocation11 + $0x8] sm:$0xff]
    %v871 = vld [vmem:[#allocation11 + $0x10] sm:$0xff]
    %v872 = vld [vmem:[#allocation11 + $0x18] sm:$0xff]
    %v873 = vld [vmem:[#allocation11 + $0x20] sm:$0xff]
    %v874 = vld [vmem:[#allocation11 + $0x28] sm:$0xff]
    %v875 = vld [vmem:[#allocation11 + $0x30] sm:$0xff]
    %v876 = vld [vmem:[#allocation11 + $0x38] sm:$0xff]
    %v877 = vld [vmem:[#allocation11 + $0x40] sm:$0xff]
    %v878 = vld [vmem:[#allocation11 + $0x48] sm:$0xff]
    %v879 = vld [vmem:[#allocation11 + $0x50] sm:$0xff]
    %v880 = vld [vmem:[#allocation11 + $0x58] sm:$0xff]
    %v881 = vld [vmem:[#allocation11 + $0x60] sm:$0xff]
    %v882 = vld [vmem:[#allocation11 + $0x68] sm:$0xff]
    %v883 = vld [vmem:[#allocation11 + $0x70] sm:$0xff]
    %v884 = vld [vmem:[#allocation11 + $0x78] sm:$0xff]
    %v885 = vld [vmem:[#allocation11 + $0x80] sm:$0xff]
    %v886 = vld [vmem:[#allocation11 + $0x88] sm:$0xff]
    %v887 = vld [vmem:[#allocation11 + $0x90] sm:$0xff]
    %v888 = vld [vmem:[#allocation11 + $0x98] sm:$0xff]
    %v889 = vld [vmem:[#allocation11 + $0xa0] sm:$0xff]
    %v890 = vld [vmem:[#allocation11 + $0xa8] sm:$0xff]
    %v891 = vld [vmem:[#allocation11 + $0xb0] sm:$0xff]
    %v892 = vld [vmem:[#allocation11 + $0xb8] sm:$0xff]
    %v893 = vld [vmem:[#allocation11 + $0xc0] sm:$0xff]
    %v894 = vld [vmem:[#allocation11 + $0xc8] sm:$0xff]
    %v895 = vld [vmem:[#allocation11 + $0xd0] sm:$0xff]
    %v896 = vld [vmem:[#allocation11 + $0xd8] sm:$0xff]
    %v897 = vld [vmem:[#allocation11 + $0xe0] sm:$0xff]
    %v898 = vld [vmem:[#allocation11 + $0xe8] sm:$0xff]
    %v899 = vld [vmem:[#allocation11 + $0xf0] sm:$0xff]
    %v900 = vld [vmem:[#allocation11 + $0xf8] sm:$0xff]
    %v933 = vunpack.c.l.b16 %v869
    %v934 = vunpack.c.h.b16 %v869
    %v935 = vunpack.c.l.b16 %v870
    %v936 = vunpack.c.h.b16 %v870
    %v937 = vunpack.c.l.b16 %v871
    %v938 = vunpack.c.h.b16 %v871
    %v939 = vunpack.c.l.b16 %v872
    %v940 = vunpack.c.h.b16 %v872
    %v941 = vunpack.c.l.b16 %v873
    %v942 = vunpack.c.h.b16 %v873
    %v943 = vunpack.c.l.b16 %v874
    %v944 = vunpack.c.h.b16 %v874
    %v945 = vunpack.c.l.b16 %v875
    %v946 = vunpack.c.h.b16 %v875
    %v947 = vunpack.c.l.b16 %v876
    %v948 = vunpack.c.h.b16 %v876
    %v949 = vunpack.c.l.b16 %v877
    %v950 = vunpack.c.h.b16 %v877
    %v951 = vunpack.c.l.b16 %v878
    %v952 = vunpack.c.h.b16 %v878
    %v953 = vunpack.c.l.b16 %v879
    %v954 = vunpack.c.h.b16 %v879
    %v955 = vunpack.c.l.b16 %v880
    %v956 = vunpack.c.h.b16 %v880
    %v957 = vunpack.c.l.b16 %v881
    %v958 = vunpack.c.h.b16 %v881
    %v959 = vunpack.c.l.b16 %v882
    %v960 = vunpack.c.h.b16 %v882
    %v961 = vunpack.c.l.b16 %v883
    %v962 = vunpack.c.h.b16 %v883
    %v963 = vunpack.c.l.b16 %v884
    %v964 = vunpack.c.h.b16 %v884
    %v965 = vunpack.c.l.b16 %v885
    %v966 = vunpack.c.h.b16 %v885
    %v967 = vunpack.c.l.b16 %v886
    %v968 = vunpack.c.h.b16 %v886
    %v969 = vunpack.c.l.b16 %v887
    %v970 = vunpack.c.h.b16 %v887
    %v971 = vunpack.c.l.b16 %v888
    %v972 = vunpack.c.h.b16 %v888
    %v973 = vunpack.c.l.b16 %v889
    %v974 = vunpack.c.h.b16 %v889
    %v975 = vunpack.c.l.b16 %v890
    %v976 = vunpack.c.h.b16 %v890
    %v977 = vunpack.c.l.b16 %v891
    %v978 = vunpack.c.h.b16 %v891
    %v979 = vunpack.c.l.b16 %v892
    %v980 = vunpack.c.h.b16 %v892
    %v981 = vunpack.c.l.b16 %v893
    %v982 = vunpack.c.h.b16 %v893
    %v983 = vunpack.c.l.b16 %v894
    %v984 = vunpack.c.h.b16 %v894
    %v985 = vunpack.c.l.b16 %v895
    %v986 = vunpack.c.h.b16 %v895
    %v987 = vunpack.c.l.b16 %v896
    %v988 = vunpack.c.h.b16 %v896
    %v989 = vunpack.c.l.b16 %v897
    %v990 = vunpack.c.h.b16 %v897
    %v991 = vunpack.c.l.b16 %v898
    %v992 = vunpack.c.h.b16 %v898
    %v993 = vunpack.c.l.b16 %v899
    %v994 = vunpack.c.h.b16 %v899
    %v995 = vunpack.c.l.b16 %v900
    %v996 = vunpack.c.h.b16 %v900
    %v997 = vpack.c.b16 %v937, %v933
    %v998 = vpack.c.b16 %v938, %v934
    %v999 = vpack.c.b16 %v939, %v935
    %v1000 = vpack.c.b16 %v940, %v936
    %v1001 = vpack.c.b16 %v945, %v941
    %v1002 = vpack.c.b16 %v946, %v942
    %v1003 = vpack.c.b16 %v947, %v943
    %v1004 = vpack.c.b16 %v948, %v944
    %v1005 = vpack.c.b16 %v953, %v949
    %v1006 = vpack.c.b16 %v954, %v950
    %v1007 = vpack.c.b16 %v955, %v951
    %v1008 = vpack.c.b16 %v956, %v952
    %v1009 = vpack.c.b16 %v961, %v957
    %v1010 = vpack.c.b16 %v962, %v958
    %v1011 = vpack.c.b16 %v963, %v959
    %v1012 = vpack.c.b16 %v964, %v960
    %v1013 = vpack.c.b16 %v969, %v965
    %v1014 = vpack.c.b16 %v970, %v966
    %v1015 = vpack.c.b16 %v971, %v967
    %v1016 = vpack.c.b16 %v972, %v968
    %v1017 = vpack.c.b16 %v977, %v973
    %v1018 = vpack.c.b16 %v978, %v974
    %v1019 = vpack.c.b16 %v979, %v975
    %v1020 = vpack.c.b16 %v980, %v976
    %v1021 = vpack.c.b16 %v985, %v981
    %v1022 = vpack.c.b16 %v986, %v982
    %v1023 = vpack.c.b16 %v987, %v983
    %v1024 = vpack.c.b16 %v988, %v984
    %v1025 = vpack.c.b16 %v993, %v989
    %v1026 = vpack.c.b16 %v994, %v990
    %v1027 = vpack.c.b16 %v995, %v991
    %v1028 = vpack.c.b16 %v996, %v992
    %1061 = vmatprep.subr.bf16.mxu0 %v998
    %1062 = vmatpush1.bf16.msra.mxu0 %v997
    %1063 = vmatprep.subr.bf16.mxu0 %v1002
    %1064 = vmatpush1.bf16.msra.mxu0 %v1001
    %1065 = vmatprep.subr.bf16.mxu0 %v1006
    %1066 = vmatpush1.bf16.msra.mxu0 %v1005
    %1067 = vmatprep.subr.bf16.mxu0 %v1010
    %1068 = vmatpush1.bf16.msra.mxu0 %v1009
    %1069 = vmatprep.subr.bf16.mxu0 %v1014
    %1070 = vmatpush1.bf16.msra.mxu0 %v1013
    %1071 = vmatprep.subr.bf16.mxu0 %v1018
    %1072 = vmatpush1.bf16.msra.mxu0 %v1017
    %1073 = vmatprep.subr.bf16.mxu0 %v1022
    %1074 = vmatpush1.bf16.msra.mxu0 %v1021
    %1075 = vmatprep.subr.bf16.mxu0 %v1026
    %1076 = vmatpush1.bf16.msra.mxu0 %v1025
    %1077 = vmatprep.subr.bf16.mxu0 0
    %1078 = vmatpush1.bf16.msra.mxu0 0
    %1079 = vmatprep.subr.bf16.mxu0 0
    %1080 = vmatpush1.bf16.msra.mxu0 0
    %1081 = vmatprep.subr.bf16.mxu0 0
    %1082 = vmatpush1.bf16.msra.mxu0 0
    %1083 = vmatprep.subr.bf16.mxu0 0
    %1084 = vmatpush1.bf16.msra.mxu0 0
    %1085 = vmatprep.subr.bf16.mxu0 0
    %1086 = vmatpush1.bf16.msra.mxu0 0
    %1087 = vmatprep.subr.bf16.mxu0 0
    %1088 = vmatpush1.bf16.msra.mxu0 0
    %1089 = vmatprep.subr.bf16.mxu0 0
    %1090 = vmatpush1.bf16.msra.mxu0 0
    %1091 = vmatprep.subr.bf16.mxu0 0
    %1092 = vmatpush1.bf16.msra.mxu0 0
    %1093 = vmatprep.mubr.bf16.mxu0 0
    %1094 = vmatmul.mubr.bf16.gmra.mrb[0].mxu0 %v868
    %v1095 = vpop.f32.mrb[0].mxu0
    %v1096 = vadd.f32 0.0, %v1095
    %v1097 = vpop.f32.mrb[0].mxu0
    %v1098 = vadd.f32 0.0, %v1097
    %v1099 = vpop.f32.mrb[0].mxu0
    %v1100 = vpop.f32.mrb[0].mxu0
    %1101 = vdwg.mxu0
    %1102 = vmatprep.subr.bf16.mxu0 %v1000
    %1103 = vmatpush1.bf16.msra.mxu0 %v999
    %1104 = vmatprep.subr.bf16.mxu0 %v1004
    %1105 = vmatpush1.bf16.msra.mxu0 %v1003
    %1106 = vmatprep.subr.bf16.mxu0 %v1008
    %1107 = vmatpush1.bf16.msra.mxu0 %v1007
    %1108 = vmatprep.subr.bf16.mxu0 %v1012
    %1109 = vmatpush1.bf16.msra.mxu0 %v1011
    %1110 = vmatprep.subr.bf16.mxu0 %v1016
    %1111 = vmatpush1.bf16.msra.mxu0 %v1015
    %1112 = vmatprep.subr.bf16.mxu0 %v1020
    %1113 = vmatpush1.bf16.msra.mxu0 %v1019
    %1114 = vmatprep.subr.bf16.mxu0 %v1024
    %1115 = vmatpush1.bf16.msra.mxu0 %v1023
    %1116 = vmatprep.subr.bf16.mxu0 %v1028
    %1117 = vmatpush1.bf16.msra.mxu0 %v1027
    %1118 = vmatprep.subr.bf16.mxu0 0
    %1119 = vmatpush1.bf16.msra.mxu0 0
    %1120 = vmatprep.subr.bf16.mxu0 0
    %1121 = vmatpush1.bf16.msra.mxu0 0
    %1122 = vmatprep.subr.bf16.mxu0 0
    %1123 = vmatpush1.bf16.msra.mxu0 0
    %1124 = vmatprep.subr.bf16.mxu0 0
    %1125 = vmatpush1.bf16.msra.mxu0 0
    %1126 = vmatprep.subr.bf16.mxu0 0
    %1127 = vmatpush1.bf16.msra.mxu0 0
    %1128 = vmatprep.subr.bf16.mxu0 0
    %1129 = vmatpush1.bf16.msra.mxu0 0
    %1130 = vmatprep.subr.bf16.mxu0 0
    %1131 = vmatpush1.bf16.msra.mxu0 0
    %1132 = vmatprep.subr.bf16.mxu0 0
    %1133 = vmatpush1.bf16.msra.mxu0 0
    %1134 = vmatprep.mubr.bf16.mxu0 0
    %1135 = vmatmul.mubr.bf16.gmra.mrb[0].mxu0 %v868
    %v1136 = vpop.f32.mrb[0].mxu0
    %v1137 = vadd.f32 0.0, %v1136
    %v1138 = vpop.f32.mrb[0].mxu0
    %v1139 = vadd.f32 0.0, %v1138
    %v1140 = vpop.f32.mrb[0].mxu0
    %v1141 = vpop.f32.mrb[0].mxu0
    %1142 = vdwg.mxu0
    %v1175 = vunpack.c.l.b16 %v836
    %v1176 = vunpack.c.h.b16 %v836
    %v1177 = vunpack.c.l.b16 %v837
    %v1178 = vunpack.c.h.b16 %v837
    %v1179 = vunpack.c.l.b16 %v838
    %v1180 = vunpack.c.h.b16 %v838
    %v1181 = vunpack.c.l.b16 %v839
    %v1182 = vunpack.c.h.b16 %v839
    %v1183 = vunpack.c.l.b16 %v840
    %v1184 = vunpack.c.h.b16 %v840
    %v1185 = vunpack.c.l.b16 %v841
    %v1186 = vunpack.c.h.b16 %v841
    %v1187 = vunpack.c.l.b16 %v842
    %v1188 = vunpack.c.h.b16 %v842
    %v1189 = vunpack.c.l.b16 %v843
    %v1190 = vunpack.c.h.b16 %v843
    %v1191 = vunpack.c.l.b16 %v844
    %v1192 = vunpack.c.h.b16 %v844
    %v1193 = vunpack.c.l.b16 %v845
    %v1194 = vunpack.c.h.b16 %v845
    %v1195 = vunpack.c.l.b16 %v846
    %v1196 = vunpack.c.h.b16 %v846
    %v1197 = vunpack.c.l.b16 %v847
    %v1198 = vunpack.c.h.b16 %v847
    %v1199 = vunpack.c.l.b16 %v848
    %v1200 = vunpack.c.h.b16 %v848
    %v1201 = vunpack.c.l.b16 %v849
    %v1202 = vunpack.c.h.b16 %v849
    %v1203 = vunpack.c.l.b16 %v850
    %v1204 = vunpack.c.h.b16 %v850
    %v1205 = vunpack.c.l.b16 %v851
    %v1206 = vunpack.c.h.b16 %v851
    %v1207 = vunpack.c.l.b16 %v852
    %v1208 = vunpack.c.h.b16 %v852
    %v1209 = vunpack.c.l.b16 %v853
    %v1210 = vunpack.c.h.b16 %v853
    %v1211 = vunpack.c.l.b16 %v854
    %v1212 = vunpack.c.h.b16 %v854
    %v1213 = vunpack.c.l.b16 %v855
    %v1214 = vunpack.c.h.b16 %v855
    %v1215 = vunpack.c.l.b16 %v856
    %v1216 = vunpack.c.h.b16 %v856
    %v1217 = vunpack.c.l.b16 %v857
    %v1218 = vunpack.c.h.b16 %v857
    %v1219 = vunpack.c.l.b16 %v858
    %v1220 = vunpack.c.h.b16 %v858
    %v1221 = vunpack.c.l.b16 %v859
    %v1222 = vunpack.c.h.b16 %v859
    %v1223 = vunpack.c.l.b16 %v860
    %v1224 = vunpack.c.h.b16 %v860
    %v1225 = vunpack.c.l.b16 %v861
    %v1226 = vunpack.c.h.b16 %v861
    %v1227 = vunpack.c.l.b16 %v862
    %v1228 = vunpack.c.h.b16 %v862
    %v1229 = vunpack.c.l.b16 %v863
    %v1230 = vunpack.c.h.b16 %v863
    %v1231 = vunpack.c.l.b16 %v864
    %v1232 = vunpack.c.h.b16 %v864
    %v1233 = vunpack.c.l.b16 %v865
    %v1234 = vunpack.c.h.b16 %v865
    %v1235 = vunpack.c.l.b16 %v866
    %v1236 = vunpack.c.h.b16 %v866
    %v1237 = vunpack.c.l.b16 %v867
    %v1238 = vunpack.c.h.b16 %v867
    %v1239 = vpack.c.b16 %v1179, %v1175
    %v1240 = vpack.c.b16 %v1180, %v1176
    %v1241 = vpack.c.b16 %v1181, %v1177
    %v1242 = vpack.c.b16 %v1182, %v1178
    %v1243 = vpack.c.b16 %v1187, %v1183
    %v1244 = vpack.c.b16 %v1188, %v1184
    %v1245 = vpack.c.b16 %v1189, %v1185
    %v1246 = vpack.c.b16 %v1190, %v1186
    %v1247 = vpack.c.b16 %v1195, %v1191
    %v1248 = vpack.c.b16 %v1196, %v1192
    %v1249 = vpack.c.b16 %v1197, %v1193
    %v1250 = vpack.c.b16 %v1198, %v1194
    %v1251 = vpack.c.b16 %v1203, %v1199
    %v1252 = vpack.c.b16 %v1204, %v1200
    %v1253 = vpack.c.b16 %v1205, %v1201
    %v1254 = vpack.c.b16 %v1206, %v1202
    %v1255 = vpack.c.b16 %v1211, %v1207
    %v1256 = vpack.c.b16 %v1212, %v1208
    %v1257 = vpack.c.b16 %v1213, %v1209
    %v1258 = vpack.c.b16 %v1214, %v1210
    %v1259 = vpack.c.b16 %v1219, %v1215
    %v1260 = vpack.c.b16 %v1220, %v1216
    %v1261 = vpack.c.b16 %v1221, %v1217
    %v1262 = vpack.c.b16 %v1222, %v1218
    %v1263 = vpack.c.b16 %v1227, %v1223
    %v1264 = vpack.c.b16 %v1228, %v1224
    %v1265 = vpack.c.b16 %v1229, %v1225
    %v1266 = vpack.c.b16 %v1230, %v1226
    %v1267 = vpack.c.b16 %v1235, %v1231
    %v1268 = vpack.c.b16 %v1236, %v1232
    %v1269 = vpack.c.b16 %v1237, %v1233
    %v1270 = vpack.c.b16 %v1238, %v1234
    %1303 = vmatprep.subr.bf16.mxu0 %v1240
    %1304 = vmatpush1.bf16.msra.mxu0 %v1239
    %1305 = vmatprep.subr.bf16.mxu0 %v1244
    %1306 = vmatpush1.bf16.msra.mxu0 %v1243
    %1307 = vmatprep.subr.bf16.mxu0 %v1248
    %1308 = vmatpush1.bf16.msra.mxu0 %v1247
    %1309 = vmatprep.subr.bf16.mxu0 %v1252
    %1310 = vmatpush1.bf16.msra.mxu0 %v1251
    %1311 = vmatprep.subr.bf16.mxu0 %v1256
    %1312 = vmatpush1.bf16.msra.mxu0 %v1255
    %1313 = vmatprep.subr.bf16.mxu0 %v1260
    %1314 = vmatpush1.bf16.msra.mxu0 %v1259
    %1315 = vmatprep.subr.bf16.mxu0 %v1264
    %1316 = vmatpush1.bf16.msra.mxu0 %v1263
    %1317 = vmatprep.subr.bf16.mxu0 %v1268
    %1318 = vmatpush1.bf16.msra.mxu0 %v1267
    %1319 = vmatprep.subr.bf16.mxu0 0
    %1320 = vmatpush1.bf16.msra.mxu0 0
    %1321 = vmatprep.subr.bf16.mxu0 0
    %1322 = vmatpush1.bf16.msra.mxu0 0
    %1323 = vmatprep.subr.bf16.mxu0 0
    %1324 = vmatpush1.bf16.msra.mxu0 0
    %1325 = vmatprep.subr.bf16.mxu0 0
    %1326 = vmatpush1.bf16.msra.mxu0 0
    %1327 = vmatprep.subr.bf16.mxu0 0
    %1328 = vmatpush1.bf16.msra.mxu0 0
    %1329 = vmatprep.subr.bf16.mxu0 0
    %1330 = vmatpush1.bf16.msra.mxu0 0
    %1331 = vmatprep.subr.bf16.mxu0 0
    %1332 = vmatpush1.bf16.msra.mxu0 0
    %1333 = vmatprep.subr.bf16.mxu0 0
    %1334 = vmatpush1.bf16.msra.mxu0 0
    %1335 = vmatprep.mubr.bf16.mxu0 0
    %1336 = vmatmul.mubr.bf16.gmra.mrb[0].mxu0 %v835
    %v1337 = vpop.f32.mrb[0].mxu0
    %v1338 = vadd.f32 %v1096, %v1337
    %v1339 = vpop.f32.mrb[0].mxu0
    %v1340 = vadd.f32 %v1098, %v1339
    %v1341 = vpop.f32.mrb[0].mxu0
    %v1342 = vpop.f32.mrb[0].mxu0
    %1343 = vdwg.mxu0
    %1344 = vmatprep.subr.bf16.mxu0 %v1242
    %1345 = vmatpush1.bf16.msra.mxu0 %v1241
    %1346 = vmatprep.subr.bf16.mxu0 %v1246
    %1347 = vmatpush1.bf16.msra.mxu0 %v1245
    %1348 = vmatprep.subr.bf16.mxu0 %v1250
    %1349 = vmatpush1.bf16.msra.mxu0 %v1249
    %1350 = vmatprep.subr.bf16.mxu0 %v1254
    %1351 = vmatpush1.bf16.msra.mxu0 %v1253
    %1352 = vmatprep.subr.bf16.mxu0 %v1258
    %1353 = vmatpush1.bf16.msra.mxu0 %v1257
    %1354 = vmatprep.subr.bf16.mxu0 %v1262
    %1355 = vmatpush1.bf16.msra.mxu0 %v1261
    %1356 = vmatprep.subr.bf16.mxu0 %v1266
    %1357 = vmatpush1.bf16.msra.mxu0 %v1265
    %1358 = vmatprep.subr.bf16.mxu0 %v1270
    %1359 = vmatpush1.bf16.msra.mxu0 %v1269
    %1360 = vmatprep.subr.bf16.mxu0 0
    %1361 = vmatpush1.bf16.msra.mxu0 0
    %1362 = vmatprep.subr.bf16.mxu0 0
    %1363 = vmatpush1.bf16.msra.mxu0 0
    %1364 = vmatprep.subr.bf16.mxu0 0
    %1365 = vmatpush1.bf16.msra.mxu0 0
    %1366 = vmatprep.subr.bf16.mxu0 0
    %1367 = vmatpush1.bf16.msra.mxu0 0
    %1368 = vmatprep.subr.bf16.mxu0 0
    %1369 = vmatpush1.bf16.msra.mxu0 0
    %1370 = vmatprep.subr.bf16.mxu0 0
    %1371 = vmatpush1.bf16.msra.mxu0 0
    %1372 = vmatprep.subr.bf16.mxu0 0
    %1373 = vmatpush1.bf16.msra.mxu0 0
    %1374 = vmatprep.subr.bf16.mxu0 0
    %1375 = vmatpush1.bf16.msra.mxu0 0
    %1376 = vmatprep.mubr.bf16.mxu0 0
    %1377 = vmatmul.mubr.bf16.gmra.mrb[0].mxu0 %v835
    %v1378 = vpop.f32.mrb[0].mxu0
    %v1379 = vadd.f32 %v1137, %v1378
    %v1380 = vpop.f32.mrb[0].mxu0
    %v1381 = vadd.f32 %v1139, %v1380
    %v1382 = vpop.f32.mrb[0].mxu0
    %v1383 = vpop.f32.mrb[0].mxu0
    %1384 = vdwg.mxu0
    %v1385 = vld [vmem:[%s6] sm:$0xf]
    %v1387 = vlaneseq
    %v1388 = vshrl.u32 %v1387, 7
    %v1389 = vsub.s32 0, %v1388
    %v1390 = vrot.slane %v1385, %v1389
    %v1391 = vlaneseq
    %v1392 = vshrl.u32 %v1391, 7
    %v1393 = vsub.s32 1, %v1392
    %v1394 = vrot.slane %v1385, %v1393
    %v1395 = vlaneseq
    %v1396 = vshrl.u32 %v1395, 7
    %v1397 = vsub.s32 2, %v1396
    %v1398 = vrot.slane %v1385, %v1397
    %v1399 = vlaneseq
    %v1400 = vshrl.u32 %v1399, 7
    %v1401 = vsub.s32 3, %v1400
    %v1402 = vrot.slane %v1385, %v1401
    %v1407 = vadd.f32 %v1338, %v1390
    %v1408 = vadd.f32 %v1340, %v1394
    %v1409 = vadd.f32 %v1379, %v1398
    %v1410 = vadd.f32 %v1381, %v1402
    %v1411 = vxor.u32 %v1407, 2147483648
    %v1412 = vmul.f32 %v1411, 1.442695
    %v1413 = vpow.pop %v1412
    %v1414 = vadd.f32 %v1413, 1.0
    %v1415 = vrcp.pop %v1414
    %v1416 = vmul.f32 1.0, %v1415
    %v1417 = vxor.u32 %v1408, 2147483648
    %v1418 = vmul.f32 %v1417, 1.442695
    %v1419 = vpow.pop %v1418
    %v1420 = vadd.f32 %v1419, 1.0
    %v1421 = vrcp.pop %v1420
    %v1422 = vmul.f32 1.0, %v1421
    %v1423 = vtanh.pop %v1409
    %v1424 = vxor.u32 %v1410, 2147483648
    %v1425 = vmul.f32 %v1424, 1.442695
    %v1426 = vpow.pop %v1425
    %v1427 = vadd.f32 %v1426, 1.0
    %v1428 = vrcp.pop %v1427
    %v1429 = vmul.f32 1.0, %v1428
    %v1430 = vmul.f32 %v1422, %v498
    %v1431 = vmul.f32 %v1416, %v1423
    %v1432 = vadd.f32 %v1430, %v1431
    %v1433 = vtanh.pop %v1432
    %v1434 = vmul.f32 %v1429, %v1433
    %1435 = vst [vmem:[#allocation3] sm:$0xff] %v834
    %1436 = vst [vmem:[#allocation4] sm:$0xff] %v832
    %1437 = vst [vmem:[#allocation5] sm:$0xff] %v1434
    %1438 = vst [vmem:[#allocation6] sm:$0xff] %v1432
    %1439 = vst [vmem:[%s11] sm:$0xff] %v1434
    %v1440 = vld [vmem:[#allocation3] sm:$0xff]
    %v1441 = vld [vmem:[#allocation4] sm:$0xff]
    %v1442 = vld [vmem:[#allocation5] sm:$0xff]
    %v1443 = vld [vmem:[#allocation6] sm:$0xff]
    %s1444 = smul.u32 1, 4
    %s1445 = smul.addr %s1444, 8
    %s1446 = scalar_lea.vmem [#allocation2], %s1445
    %v1447 = vld [vmem:[%s1446] sm:$0xff]
    %v1448 = vld [vmem:[%s1446 + $0x8] sm:$0xff]
    %v1449 = vld [vmem:[%s1446 + $0x10] sm:$0xff]
    %v1450 = vld [vmem:[%s1446 + $0x18] sm:$0xff]
    %v1451 = vpack.c.bf16 %v1440, %v1440
    %v1452 = vld [vmem:[#allocation7] sm:$0xff]
    %v1453 = vld [vmem:[#allocation7 + $0x8] sm:$0xff]
    %v1454 = vld [vmem:[#allocation7 + $0x10] sm:$0xff]
    %v1455 = vld [vmem:[#allocation7 + $0x18] sm:$0xff]
    %v1456 = vld [vmem:[#allocation7 + $0x20] sm:$0xff]
    %v1457 = vld [vmem:[#allocation7 + $0x28] sm:$0xff]
    %v1458 = vld [vmem:[#allocation7 + $0x30] sm:$0xff]
    %v1459 = vld [vmem:[#allocation7 + $0x38] sm:$0xff]
    %v1460 = vld [vmem:[#allocation7 + $0x40] sm:$0xff]
    %v1461 = vld [vmem:[#allocation7 + $0x48] sm:$0xff]
    %v1462 = vld [vmem:[#allocation7 + $0x50] sm:$0xff]
    %v1463 = vld [vmem:[#allocation7 + $0x58] sm:$0xff]
    %v1464 = vld [vmem:[#allocation7 + $0x60] sm:$0xff]
    %v1465 = vld [vmem:[#allocation7 + $0x68] sm:$0xff]
    %v1466 = vld [vmem:[#allocation7 + $0x70] sm:$0xff]
    %v1467 = vld [vmem:[#allocation7 + $0x78] sm:$0xff]
    %v1468 = vld [vmem:[#allocation7 + $0x80] sm:$0xff]
    %v1469 = vld [vmem:[#allocation7 + $0x88] sm:$0xff]
    %v1470 = vld [vmem:[#allocation7 + $0x90] sm:$0xff]
    %v1471 = vld [vmem:[#allocation7 + $0x98] sm:$0xff]
    %v1472 = vld [vmem:[#allocation7 + $0xa0] sm:$0xff]
    %v1473 = vld [vmem:[#allocation7 + $0xa8] sm:$0xff]
    %v1474 = vld [vmem:[#allocation7 + $0xb0] sm:$0xff]
    %v1475 = vld [vmem:[#allocation7 + $0xb8] sm:$0xff]
    %v1476 = vld [vmem:[#allocation7 + $0xc0] sm:$0xff]
    %v1477 = vld [vmem:[#allocation7 + $0xc8] sm:$0xff]
    %v1478 = vld [vmem:[#allocation7 + $0xd0] sm:$0xff]
    %v1479 = vld [vmem:[#allocation7 + $0xd8] sm:$0xff]
    %v1480 = vld [vmem:[#allocation7 + $0xe0] sm:$0xff]
    %v1481 = vld [vmem:[#allocation7 + $0xe8] sm:$0xff]
    %v1482 = vld [vmem:[#allocation7 + $0xf0] sm:$0xff]
    %v1483 = vld [vmem:[#allocation7 + $0xf8] sm:$0xff]
    %v1516 = vunpack.c.l.b16 %v1452
    %v1517 = vunpack.c.h.b16 %v1452
    %v1518 = vunpack.c.l.b16 %v1453
    %v1519 = vunpack.c.h.b16 %v1453
    %v1520 = vunpack.c.l.b16 %v1454
    %v1521 = vunpack.c.h.b16 %v1454
    %v1522 = vunpack.c.l.b16 %v1455
    %v1523 = vunpack.c.h.b16 %v1455
    %v1524 = vunpack.c.l.b16 %v1456
    %v1525 = vunpack.c.h.b16 %v1456
    %v1526 = vunpack.c.l.b16 %v1457
    %v1527 = vunpack.c.h.b16 %v1457
    %v1528 = vunpack.c.l.b16 %v1458
    %v1529 = vunpack.c.h.b16 %v1458
    %v1530 = vunpack.c.l.b16 %v1459
    %v1531 = vunpack.c.h.b16 %v1459
    %v1532 = vunpack.c.l.b16 %v1460
    %v1533 = vunpack.c.h.b16 %v1460
    %v1534 = vunpack.c.l.b16 %v1461
    %v1535 = vunpack.c.h.b16 %v1461
    %v1536 = vunpack.c.l.b16 %v1462
    %v1537 = vunpack.c.h.b16 %v1462
    %v1538 = vunpack.c.l.b16 %v1463
    %v1539 = vunpack.c.h.b16 %v1463
    %v1540 = vunpack.c.l.b16 %v1464
    %v1541 = vunpack.c.h.b16 %v1464
    %v1542 = vunpack.c.l.b16 %v1465
    %v1543 = vunpack.c.h.b16 %v1465
    %v1544 = vunpack.c.l.b16 %v1466
    %v1545 = vunpack.c.h.b16 %v1466
    %v1546 = vunpack.c.l.b16 %v1467
    %v1547 = vunpack.c.h.b16 %v1467
    %v1548 = vunpack.c.l.b16 %v1468
    %v1549 = vunpack.c.h.b16 %v1468
    %v1550 = vunpack.c.l.b16 %v1469
    %v1551 = vunpack.c.h.b16 %v1469
    %v1552 = vunpack.c.l.b16 %v1470
    %v1553 = vunpack.c.h.b16 %v1470
    %v1554 = vunpack.c.l.b16 %v1471
    %v1555 = vunpack.c.h.b16 %v1471
    %v1556 = vunpack.c.l.b16 %v1472
    %v1557 = vunpack.c.h.b16 %v1472
    %v1558 = vunpack.c.l.b16 %v1473
    %v1559 = vunpack.c.h.b16 %v1473
    %v1560 = vunpack.c.l.b16 %v1474
    %v1561 = vunpack.c.h.b16 %v1474
    %v1562 = vunpack.c.l.b16 %v1475
    %v1563 = vunpack.c.h.b16 %v1475
    %v1564 = vunpack.c.l.b16 %v1476
    %v1565 = vunpack.c.h.b16 %v1476
    %v1566 = vunpack.c.l.b16 %v1477
    %v1567 = vunpack.c.h.b16 %v1477
    %v1568 = vunpack.c.l.b16 %v1478
    %v1569 = vunpack.c.h.b16 %v1478
    %v1570 = vunpack.c.l.b16 %v1479
    %v1571 = vunpack.c.h.b16 %v1479
    %v1572 = vunpack.c.l.b16 %v1480
    %v1573 = vunpack.c.h.b16 %v1480
    %v1574 = vunpack.c.l.b16 %v1481
    %v1575 = vunpack.c.h.b16 %v1481
    %v1576 = vunpack.c.l.b16 %v1482
    %v1577 = vunpack.c.h.b16 %v1482
    %v1578 = vunpack.c.l.b16 %v1483
    %v1579 = vunpack.c.h.b16 %v1483
    %v1580 = vpack.c.b16 %v1520, %v1516
    %v1581 = vpack.c.b16 %v1521, %v1517
    %v1582 = vpack.c.b16 %v1522, %v1518
    %v1583 = vpack.c.b16 %v1523, %v1519
    %v1584 = vpack.c.b16 %v1528, %v1524
    %v1585 = vpack.c.b16 %v1529, %v1525
    %v1586 = vpack.c.b16 %v1530, %v1526
    %v1587 = vpack.c.b16 %v1531, %v1527
    %v1588 = vpack.c.b16 %v1536, %v1532
    %v1589 = vpack.c.b16 %v1537, %v1533
    %v1590 = vpack.c.b16 %v1538, %v1534
    %v1591 = vpack.c.b16 %v1539, %v1535
    %v1592 = vpack.c.b16 %v1544, %v1540
    %v1593 = vpack.c.b16 %v1545, %v1541
    %v1594 = vpack.c.b16 %v1546, %v1542
    %v1595 = vpack.c.b16 %v1547, %v1543
    %v1596 = vpack.c.b16 %v1552, %v1548
    %v1597 = vpack.c.b16 %v1553, %v1549
    %v1598 = vpack.c.b16 %v1554, %v1550
    %v1599 = vpack.c.b16 %v1555, %v1551
    %v1600 = vpack.c.b16 %v1560, %v1556
    %v1601 = vpack.c.b16 %v1561, %v1557
    %v1602 = vpack.c.b16 %v1562, %v1558
    %v1603 = vpack.c.b16 %v1563, %v1559
    %v1604 = vpack.c.b16 %v1568, %v1564
    %v1605 = vpack.c.b16 %v1569, %v1565
    %v1606 = vpack.c.b16 %v1570, %v1566
    %v1607 = vpack.c.b16 %v1571, %v1567
    %v1608 = vpack.c.b16 %v1576, %v1572
    %v1609 = vpack.c.b16 %v1577, %v1573
    %v1610 = vpack.c.b16 %v1578, %v1574
    %v1611 = vpack.c.b16 %v1579, %v1575
    %1644 = vmatprep.subr.bf16.mxu0 %v1581
    %1645 = vmatpush1.bf16.msra.mxu0 %v1580
    %1646 = vmatprep.subr.bf16.mxu0 %v1585
    %1647 = vmatpush1.bf16.msra.mxu0 %v1584
    %1648 = vmatprep.subr.bf16.mxu0 %v1589
    %1649 = vmatpush1.bf16.msra.mxu0 %v1588
    %1650 = vmatprep.subr.bf16.mxu0 %v1593
    %1651 = vmatpush1.bf16.msra.mxu0 %v1592
    %1652 = vmatprep.subr.bf16.mxu0 %v1597
    %1653 = vmatpush1.bf16.msra.mxu0 %v1596
    %1654 = vmatprep.subr.bf16.mxu0 %v1601
    %1655 = vmatpush1.bf16.msra.mxu0 %v1600
    %1656 = vmatprep.subr.bf16.mxu0 %v1605
    %1657 = vmatpush1.bf16.msra.mxu0 %v1604
    %1658 = vmatprep.subr.bf16.mxu0 %v1609
    %1659 = vmatpush1.bf16.msra.mxu0 %v1608
    %1660 = vmatprep.subr.bf16.mxu0 0
    %1661 = vmatpush1.bf16.msra.mxu0 0
    %1662 = vmatprep.subr.bf16.mxu0 0
    %1663 = vmatpush1.bf16.msra.mxu0 0
    %1664 = vmatprep.subr.bf16.mxu0 0
    %1665 = vmatpush1.bf16.msra.mxu0 0
    %1666 = vmatprep.subr.bf16.mxu0 0
    %1667 = vmatpush1.bf16.msra.mxu0 0
    %1668 = vmatprep.subr.bf16.mxu0 0
    %1669 = vmatpush1.bf16.msra.mxu0 0
    %1670 = vmatprep.subr.bf16.mxu0 0
    %1671 = vmatpush1.bf16.msra.mxu0 0
    %1672 = vmatprep.subr.bf16.mxu0 0
    %1673 = vmatpush1.bf16.msra.mxu0 0
    %1674 = vmatprep.subr.bf16.mxu0 0
    %1675 = vmatpush1.bf16.msra.mxu0 0
    %1676 = vmatprep.mubr.bf16.mxu0 0
    %1677 = vmatmul.mubr.bf16.gmra.mrb[0].mxu0 %v1451
    %v1678 = vpop.f32.mrb[0].mxu0
    %v1679 = vadd.f32 0.0, %v1678
    %v1680 = vpop.f32.mrb[0].mxu0
    %v1681 = vadd.f32 0.0, %v1680
    %v1682 = vpop.f32.mrb[0].mxu0
    %v1683 = vpop.f32.mrb[0].mxu0
    %1684 = vdwg.mxu0
    %1685 = vmatprep.subr.bf16.mxu0 %v1583
    %1686 = vmatpush1.bf16.msra.mxu0 %v1582
    %1687 = vmatprep.subr.bf16.mxu0 %v1587
    %1688 = vmatpush1.bf16.msra.mxu0 %v1586
    %1689 = vmatprep.subr.bf16.mxu0 %v1591
    %1690 = vmatpush1.bf16.msra.mxu0 %v1590
    %1691 = vmatprep.subr.bf16.mxu0 %v1595
    %1692 = vmatpush1.bf16.msra.mxu0 %v1594
    %1693 = vmatprep.subr.bf16.mxu0 %v1599
    %1694 = vmatpush1.bf16.msra.mxu0 %v1598
    %1695 = vmatprep.subr.bf16.mxu0 %v1603
    %1696 = vmatpush1.bf16.msra.mxu0 %v1602
    %1697 = vmatprep.subr.bf16.mxu0 %v1607
    %1698 = vmatpush1.bf16.msra.mxu0 %v1606
    %1699 = vmatprep.subr.bf16.mxu0 %v1611
    %1700 = vmatpush1.bf16.msra.mxu0 %v1610
    %1701 = vmatprep.subr.bf16.mxu0 0
    %1702 = vmatpush1.bf16.msra.mxu0 0
    %1703 = vmatprep.subr.bf16.mxu0 0
    %1704 = vmatpush1.bf16.msra.mxu0 0
    %1705 = vmatprep.subr.bf16.mxu0 0
    %1706 = vmatpush1.bf16.msra.mxu0 0
    %1707 = vmatprep.subr.bf16.mxu0 0
    %1708 = vmatpush1.bf16.msra.mxu0 0
    %1709 = vmatprep.subr.bf16.mxu0 0
    %1710 = vmatpush1.bf16.msra.mxu0 0
    %1711 = vmatprep.subr.bf16.mxu0 0
    %1712 = vmatpush1.bf16.msra.mxu0 0
    %1713 = vmatprep.subr.bf16.mxu0 0
    %1714 = vmatpush1.bf16.msra.mxu0 0
    %1715 = vmatprep.subr.bf16.mxu0 0
    %1716 = vmatpush1.bf16.msra.mxu0 0
    %1717 = vmatprep.mubr.bf16.mxu0 0
    %1718 = vmatmul.mubr.bf16.gmra.mrb[0].mxu0 %v1451
    %v1719 = vpop.f32.mrb[0].mxu0
    %v1720 = vadd.f32 0.0, %v1719
    %v1721 = vpop.f32.mrb[0].mxu0
    %v1722 = vadd.f32 0.0, %v1721
    %v1723 = vpop.f32.mrb[0].mxu0
    %v1724 = vpop.f32.mrb[0].mxu0
    %1725 = vdwg.mxu0
    %v1726 = vadd.f32 %v1447, %v1679
    %v1727 = vadd.f32 %v1448, %v1681
    %v1728 = vadd.f32 %v1449, %v1720
    %v1729 = vadd.f32 %v1450, %v1722
    %v1730 = vld [vmem:[%s3] sm:$0xf]
    %v1732 = vlaneseq
    %v1733 = vshrl.u32 %v1732, 7
    %v1734 = vsub.s32 0, %v1733
    %v1735 = vrot.slane %v1730, %v1734
    %v1736 = vlaneseq
    %v1737 = vshrl.u32 %v1736, 7
    %v1738 = vsub.s32 1, %v1737
    %v1739 = vrot.slane %v1730, %v1738
    %v1740 = vlaneseq
    %v1741 = vshrl.u32 %v1740, 7
    %v1742 = vsub.s32 2, %v1741
    %v1743 = vrot.slane %v1730, %v1742
    %v1744 = vlaneseq
    %v1745 = vshrl.u32 %v1744, 7
    %v1746 = vsub.s32 3, %v1745
    %v1747 = vrot.slane %v1730, %v1746
    %v1752 = vadd.f32 %v1726, %v1735
    %v1753 = vadd.f32 %v1727, %v1739
    %v1754 = vadd.f32 %v1728, %v1743
    %v1755 = vadd.f32 %v1729, %v1747
    %v1756 = vxor.u32 %v1752, 2147483648
    %v1757 = vmul.f32 %v1756, 1.442695
    %v1758 = vpow.pop %v1757
    %v1759 = vadd.f32 %v1758, 1.0
    %v1760 = vrcp.pop %v1759
    %v1761 = vmul.f32 1.0, %v1760
    %v1762 = vxor.u32 %v1753, 2147483648
    %v1763 = vmul.f32 %v1762, 1.442695
    %v1764 = vpow.pop %v1763
    %v1765 = vadd.f32 %v1764, 1.0
    %v1766 = vrcp.pop %v1765
    %v1767 = vmul.f32 1.0, %v1766
    %v1768 = vtanh.pop %v1754
    %v1769 = vxor.u32 %v1755, 2147483648
    %v1770 = vmul.f32 %v1769, 1.442695
    %v1771 = vpow.pop %v1770
    %v1772 = vadd.f32 %v1771, 1.0
    %v1773 = vrcp.pop %v1772
    %v1774 = vmul.f32 1.0, %v1773
    %v1775 = vmul.f32 %v1767, %v1441
    %v1776 = vmul.f32 %v1761, %v1768
    %v1777 = vadd.f32 %v1775, %v1776
    %v1778 = vtanh.pop %v1777
    %v1779 = vmul.f32 %v1774, %v1778
    %v1780 = vpack.c.bf16 %v1779, %v1779
    %v1781 = vld [vmem:[#allocation9] sm:$0xff]
    %v1782 = vld [vmem:[#allocation9 + $0x8] sm:$0xff]
    %v1783 = vld [vmem:[#allocation9 + $0x10] sm:$0xff]
    %v1784 = vld [vmem:[#allocation9 + $0x18] sm:$0xff]
    %v1785 = vld [vmem:[#allocation9 + $0x20] sm:$0xff]
    %v1786 = vld [vmem:[#allocation9 + $0x28] sm:$0xff]
    %v1787 = vld [vmem:[#allocation9 + $0x30] sm:$0xff]
    %v1788 = vld [vmem:[#allocation9 + $0x38] sm:$0xff]
    %v1789 = vld [vmem:[#allocation9 + $0x40] sm:$0xff]
    %v1790 = vld [vmem:[#allocation9 + $0x48] sm:$0xff]
    %v1791 = vld [vmem:[#allocation9 + $0x50] sm:$0xff]
    %v1792 = vld [vmem:[#allocation9 + $0x58] sm:$0xff]
    %v1793 = vld [vmem:[#allocation9 + $0x60] sm:$0xff]
    %v1794 = vld [vmem:[#allocation9 + $0x68] sm:$0xff]
    %v1795 = vld [vmem:[#allocation9 + $0x70] sm:$0xff]
    %v1796 = vld [vmem:[#allocation9 + $0x78] sm:$0xff]
    %v1797 = vld [vmem:[#allocation9 + $0x80] sm:$0xff]
    %v1798 = vld [vmem:[#allocation9 + $0x88] sm:$0xff]
    %v1799 = vld [vmem:[#allocation9 + $0x90] sm:$0xff]
    %v1800 = vld [vmem:[#allocation9 + $0x98] sm:$0xff]
    %v1801 = vld [vmem:[#allocation9 + $0xa0] sm:$0xff]
    %v1802 = vld [vmem:[#allocation9 + $0xa8] sm:$0xff]
    %v1803 = vld [vmem:[#allocation9 + $0xb0] sm:$0xff]
    %v1804 = vld [vmem:[#allocation9 + $0xb8] sm:$0xff]
    %v1805 = vld [vmem:[#allocation9 + $0xc0] sm:$0xff]
    %v1806 = vld [vmem:[#allocation9 + $0xc8] sm:$0xff]
    %v1807 = vld [vmem:[#allocation9 + $0xd0] sm:$0xff]
    %v1808 = vld [vmem:[#allocation9 + $0xd8] sm:$0xff]
    %v1809 = vld [vmem:[#allocation9 + $0xe0] sm:$0xff]
    %v1810 = vld [vmem:[#allocation9 + $0xe8] sm:$0xff]
    %v1811 = vld [vmem:[#allocation9 + $0xf0] sm:$0xff]
    %v1812 = vld [vmem:[#allocation9 + $0xf8] sm:$0xff]
    %v1813 = vpack.c.bf16 %v1442, %v1442
    %v1814 = vld [vmem:[#allocation11] sm:$0xff]
    %v1815 = vld [vmem:[#allocation11 + $0x8] sm:$0xff]
    %v1816 = vld [vmem:[#allocation11 + $0x10] sm:$0xff]
    %v1817 = vld [vmem:[#allocation11 + $0x18] sm:$0xff]
    %v1818 = vld [vmem:[#allocation11 + $0x20] sm:$0xff]
    %v1819 = vld [vmem:[#allocation11 + $0x28] sm:$0xff]
    %v1820 = vld [vmem:[#allocation11 + $0x30] sm:$0xff]
    %v1821 = vld [vmem:[#allocation11 + $0x38] sm:$0xff]
    %v1822 = vld [vmem:[#allocation11 + $0x40] sm:$0xff]
    %v1823 = vld [vmem:[#allocation11 + $0x48] sm:$0xff]
    %v1824 = vld [vmem:[#allocation11 + $0x50] sm:$0xff]
    %v1825 = vld [vmem:[#allocation11 + $0x58] sm:$0xff]
    %v1826 = vld [vmem:[#allocation11 + $0x60] sm:$0xff]
    %v1827 = vld [vmem:[#allocation11 + $0x68] sm:$0xff]
    %v1828 = vld [vmem:[#allocation11 + $0x70] sm:$0xff]
    %v1829 = vld [vmem:[#allocation11 + $0x78] sm:$0xff]
    %v1830 = vld [vmem:[#allocation11 + $0x80] sm:$0xff]
    %v1831 = vld [vmem:[#allocation11 + $0x88] sm:$0xff]
    %v1832 = vld [vmem:[#allocation11 + $0x90] sm:$0xff]
    %v1833 = vld [vmem:[#allocation11 + $0x98] sm:$0xff]
    %v1834 = vld [vmem:[#allocation11 + $0xa0] sm:$0xff]
    %v1835 = vld [vmem:[#allocation11 + $0xa8] sm:$0xff]
    %v1836 = vld [vmem:[#allocation11 + $0xb0] sm:$0xff]
    %v1837 = vld [vmem:[#allocation11 + $0xb8] sm:$0xff]
    %v1838 = vld [vmem:[#allocation11 + $0xc0] sm:$0xff]
    %v1839 = vld [vmem:[#allocation11 + $0xc8] sm:$0xff]
    %v1840 = vld [vmem:[#allocation11 + $0xd0] sm:$0xff]
    %v1841 = vld [vmem:[#allocation11 + $0xd8] sm:$0xff]
    %v1842 = vld [vmem:[#allocation11 + $0xe0] sm:$0xff]
    %v1843 = vld [vmem:[#allocation11 + $0xe8] sm:$0xff]
    %v1844 = vld [vmem:[#allocation11 + $0xf0] sm:$0xff]
    %v1845 = vld [vmem:[#allocation11 + $0xf8] sm:$0xff]
    %v1878 = vunpack.c.l.b16 %v1814
    %v1879 = vunpack.c.h.b16 %v1814
    %v1880 = vunpack.c.l.b16 %v1815
    %v1881 = vunpack.c.h.b16 %v1815
    %v1882 = vunpack.c.l.b16 %v1816
    %v1883 = vunpack.c.h.b16 %v1816
    %v1884 = vunpack.c.l.b16 %v1817
    %v1885 = vunpack.c.h.b16 %v1817
    %v1886 = vunpack.c.l.b16 %v1818
    %v1887 = vunpack.c.h.b16 %v1818
    %v1888 = vunpack.c.l.b16 %v1819
    %v1889 = vunpack.c.h.b16 %v1819
    %v1890 = vunpack.c.l.b16 %v1820
    %v1891 = vunpack.c.h.b16 %v1820
    %v1892 = vunpack.c.l.b16 %v1821
    %v1893 = vunpack.c.h.b16 %v1821
    %v1894 = vunpack.c.l.b16 %v1822
    %v1895 = vunpack.c.h.b16 %v1822
    %v1896 = vunpack.c.l.b16 %v1823
    %v1897 = vunpack.c.h.b16 %v1823
    %v1898 = vunpack.c.l.b16 %v1824
    %v1899 = vunpack.c.h.b16 %v1824
    %v1900 = vunpack.c.l.b16 %v1825
    %v1901 = vunpack.c.h.b16 %v1825
    %v1902 = vunpack.c.l.b16 %v1826
    %v1903 = vunpack.c.h.b16 %v1826
    %v1904 = vunpack.c.l.b16 %v1827
    %v1905 = vunpack.c.h.b16 %v1827
    %v1906 = vunpack.c.l.b16 %v1828
    %v1907 = vunpack.c.h.b16 %v1828
    %v1908 = vunpack.c.l.b16 %v1829
    %v1909 = vunpack.c.h.b16 %v1829
    %v1910 = vunpack.c.l.b16 %v1830
    %v1911 = vunpack.c.h.b16 %v1830
    %v1912 = vunpack.c.l.b16 %v1831
    %v1913 = vunpack.c.h.b16 %v1831
    %v1914 = vunpack.c.l.b16 %v1832
    %v1915 = vunpack.c.h.b16 %v1832
    %v1916 = vunpack.c.l.b16 %v1833
    %v1917 = vunpack.c.h.b16 %v1833
    %v1918 = vunpack.c.l.b16 %v1834
    %v1919 = vunpack.c.h.b16 %v1834
    %v1920 = vunpack.c.l.b16 %v1835
    %v1921 = vunpack.c.h.b16 %v1835
    %v1922 = vunpack.c.l.b16 %v1836
    %v1923 = vunpack.c.h.b16 %v1836
    %v1924 = vunpack.c.l.b16 %v1837
    %v1925 = vunpack.c.h.b16 %v1837
    %v1926 = vunpack.c.l.b16 %v1838
    %v1927 = vunpack.c.h.b16 %v1838
    %v1928 = vunpack.c.l.b16 %v1839
    %v1929 = vunpack.c.h.b16 %v1839
    %v1930 = vunpack.c.l.b16 %v1840
    %v1931 = vunpack.c.h.b16 %v1840
    %v1932 = vunpack.c.l.b16 %v1841
    %v1933 = vunpack.c.h.b16 %v1841
    %v1934 = vunpack.c.l.b16 %v1842
    %v1935 = vunpack.c.h.b16 %v1842
    %v1936 = vunpack.c.l.b16 %v1843
    %v1937 = vunpack.c.h.b16 %v1843
    %v1938 = vunpack.c.l.b16 %v1844
    %v1939 = vunpack.c.h.b16 %v1844
    %v1940 = vunpack.c.l.b16 %v1845
    %v1941 = vunpack.c.h.b16 %v1845
    %v1942 = vpack.c.b16 %v1882, %v1878
    %v1943 = vpack.c.b16 %v1883, %v1879
    %v1944 = vpack.c.b16 %v1884, %v1880
    %v1945 = vpack.c.b16 %v1885, %v1881
    %v1946 = vpack.c.b16 %v1890, %v1886
    %v1947 = vpack.c.b16 %v1891, %v1887
    %v1948 = vpack.c.b16 %v1892, %v1888
    %v1949 = vpack.c.b16 %v1893, %v1889
    %v1950 = vpack.c.b16 %v1898, %v1894
    %v1951 = vpack.c.b16 %v1899, %v1895
    %v1952 = vpack.c.b16 %v1900, %v1896
    %v1953 = vpack.c.b16 %v1901, %v1897
    %v1954 = vpack.c.b16 %v1906, %v1902
    %v1955 = vpack.c.b16 %v1907, %v1903
    %v1956 = vpack.c.b16 %v1908, %v1904
    %v1957 = vpack.c.b16 %v1909, %v1905
    %v1958 = vpack.c.b16 %v1914, %v1910
    %v1959 = vpack.c.b16 %v1915, %v1911
    %v1960 = vpack.c.b16 %v1916, %v1912
    %v1961 = vpack.c.b16 %v1917, %v1913
    %v1962 = vpack.c.b16 %v1922, %v1918
    %v1963 = vpack.c.b16 %v1923, %v1919
    %v1964 = vpack.c.b16 %v1924, %v1920
    %v1965 = vpack.c.b16 %v1925, %v1921
    %v1966 = vpack.c.b16 %v1930, %v1926
    %v1967 = vpack.c.b16 %v1931, %v1927
    %v1968 = vpack.c.b16 %v1932, %v1928
    %v1969 = vpack.c.b16 %v1933, %v1929
    %v1970 = vpack.c.b16 %v1938, %v1934
    %v1971 = vpack.c.b16 %v1939, %v1935
    %v1972 = vpack.c.b16 %v1940, %v1936
    %v1973 = vpack.c.b16 %v1941, %v1937
    %2006 = vmatprep.subr.bf16.mxu0 %v1943
    %2007 = vmatpush1.bf16.msra.mxu0 %v1942
    %2008 = vmatprep.subr.bf16.mxu0 %v1947
    %2009 = vmatpush1.bf16.msra.mxu0 %v1946
    %2010 = vmatprep.subr.bf16.mxu0 %v1951
    %2011 = vmatpush1.bf16.msra.mxu0 %v1950
    %2012 = vmatprep.subr.bf16.mxu0 %v1955
    %2013 = vmatpush1.bf16.msra.mxu0 %v1954
    %2014 = vmatprep.subr.bf16.mxu0 %v1959
    %2015 = vmatpush1.bf16.msra.mxu0 %v1958
    %2016 = vmatprep.subr.bf16.mxu0 %v1963
    %2017 = vmatpush1.bf16.msra.mxu0 %v1962
    %2018 = vmatprep.subr.bf16.mxu0 %v1967
    %2019 = vmatpush1.bf16.msra.mxu0 %v1966
    %2020 = vmatprep.subr.bf16.mxu0 %v1971
    %2021 = vmatpush1.bf16.msra.mxu0 %v1970
    %2022 = vmatprep.subr.bf16.mxu0 0
    %2023 = vmatpush1.bf16.msra.mxu0 0
    %2024 = vmatprep.subr.bf16.mxu0 0
    %2025 = vmatpush1.bf16.msra.mxu0 0
    %2026 = vmatprep.subr.bf16.mxu0 0
    %2027 = vmatpush1.bf16.msra.mxu0 0
    %2028 = vmatprep.subr.bf16.mxu0 0
    %2029 = vmatpush1.bf16.msra.mxu0 0
    %2030 = vmatprep.subr.bf16.mxu0 0
    %2031 = vmatpush1.bf16.msra.mxu0 0
    %2032 = vmatprep.subr.bf16.mxu0 0
    %2033 = vmatpush1.bf16.msra.mxu0 0
    %2034 = vmatprep.subr.bf16.mxu0 0
    %2035 = vmatpush1.bf16.msra.mxu0 0
    %2036 = vmatprep.subr.bf16.mxu0 0
    %2037 = vmatpush1.bf16.msra.mxu0 0
    %2038 = vmatprep.mubr.bf16.mxu0 0
    %2039 = vmatmul.mubr.bf16.gmra.mrb[0].mxu0 %v1813
    %v2040 = vpop.f32.mrb[0].mxu0
    %v2041 = vadd.f32 0.0, %v2040
    %v2042 = vpop.f32.mrb[0].mxu0
    %v2043 = vadd.f32 0.0, %v2042
    %v2044 = vpop.f32.mrb[0].mxu0
    %v2045 = vpop.f32.mrb[0].mxu0
    %2046 = vdwg.mxu0
    %2047 = vmatprep.subr.bf16.mxu0 %v1945
    %2048 = vmatpush1.bf16.msra.mxu0 %v1944
    %2049 = vmatprep.subr.bf16.mxu0 %v1949
    %2050 = vmatpush1.bf16.msra.mxu0 %v1948
    %2051 = vmatprep.subr.bf16.mxu0 %v1953
    %2052 = vmatpush1.bf16.msra.mxu0 %v1952
    %2053 = vmatprep.subr.bf16.mxu0 %v1957
    %2054 = vmatpush1.bf16.msra.mxu0 %v1956
    %2055 = vmatprep.subr.bf16.mxu0 %v1961
    %2056 = vmatpush1.bf16.msra.mxu0 %v1960
    %2057 = vmatprep.subr.bf16.mxu0 %v1965
    %2058 = vmatpush1.bf16.msra.mxu0 %v1964
    %2059 = vmatprep.subr.bf16.mxu0 %v1969
    %2060 = vmatpush1.bf16.msra.mxu0 %v1968
    %2061 = vmatprep.subr.bf16.mxu0 %v1973
    %2062 = vmatpush1.bf16.msra.mxu0 %v1972
    %2063 = vmatprep.subr.bf16.mxu0 0
    %2064 = vmatpush1.bf16.msra.mxu0 0
    %2065 = vmatprep.subr.bf16.mxu0 0
    %2066 = vmatpush1.bf16.msra.mxu0 0
    %2067 = vmatprep.subr.bf16.mxu0 0
    %2068 = vmatpush1.bf16.msra.mxu0 0
    %2069 = vmatprep.subr.bf16.mxu0 0
    %2070 = vmatpush1.bf16.msra.mxu0 0
    %2071 = vmatprep.subr.bf16.mxu0 0
    %2072 = vmatpush1.bf16.msra.mxu0 0
    %2073 = vmatprep.subr.bf16.mxu0 0
    %2074 = vmatpush1.bf16.msra.mxu0 0
    %2075 = vmatprep.subr.bf16.mxu0 0
    %2076 = vmatpush1.bf16.msra.mxu0 0
    %2077 = vmatprep.subr.bf16.mxu0 0
    %2078 = vmatpush1.bf16.msra.mxu0 0
    %2079 = vmatprep.mubr.bf16.mxu0 0
    %2080 = vmatmul.mubr.bf16.gmra.mrb[0].mxu0 %v1813
    %v2081 = vpop.f32.mrb[0].mxu0
    %v2082 = vadd.f32 0.0, %v2081
    %v2083 = vpop.f32.mrb[0].mxu0
    %v2084 = vadd.f32 0.0, %v2083
    %v2085 = vpop.f32.mrb[0].mxu0
    %v2086 = vpop.f32.mrb[0].mxu0
    %2087 = vdwg.mxu0
    %v2120 = vunpack.c.l.b16 %v1781
    %v2121 = vunpack.c.h.b16 %v1781
    %v2122 = vunpack.c.l.b16 %v1782
    %v2123 = vunpack.c.h.b16 %v1782
    %v2124 = vunpack.c.l.b16 %v1783
    %v2125 = vunpack.c.h.b16 %v1783
    %v2126 = vunpack.c.l.b16 %v1784
    %v2127 = vunpack.c.h.b16 %v1784
    %v2128 = vunpack.c.l.b16 %v1785
    %v2129 = vunpack.c.h.b16 %v1785
    %v2130 = vunpack.c.l.b16 %v1786
    %v2131 = vunpack.c.h.b16 %v1786
    %v2132 = vunpack.c.l.b16 %v1787
    %v2133 = vunpack.c.h.b16 %v1787
    %v2134 = vunpack.c.l.b16 %v1788
    %v2135 = vunpack.c.h.b16 %v1788
    %v2136 = vunpack.c.l.b16 %v1789
    %v2137 = vunpack.c.h.b16 %v1789
    %v2138 = vunpack.c.l.b16 %v1790
    %v2139 = vunpack.c.h.b16 %v1790
    %v2140 = vunpack.c.l.b16 %v1791
    %v2141 = vunpack.c.h.b16 %v1791
    %v2142 = vunpack.c.l.b16 %v1792
    %v2143 = vunpack.c.h.b16 %v1792
    %v2144 = vunpack.c.l.b16 %v1793
    %v2145 = vunpack.c.h.b16 %v1793
    %v2146 = vunpack.c.l.b16 %v1794
    %v2147 = vunpack.c.h.b16 %v1794
    %v2148 = vunpack.c.l.b16 %v1795
    %v2149 = vunpack.c.h.b16 %v1795
    %v2150 = vunpack.c.l.b16 %v1796
    %v2151 = vunpack.c.h.b16 %v1796
    %v2152 = vunpack.c.l.b16 %v1797
    %v2153 = vunpack.c.h.b16 %v1797
    %v2154 = vunpack.c.l.b16 %v1798
    %v2155 = vunpack.c.h.b16 %v1798
    %v2156 = vunpack.c.l.b16 %v1799
    %v2157 = vunpack.c.h.b16 %v1799
    %v2158 = vunpack.c.l.b16 %v1800
    %v2159 = vunpack.c.h.b16 %v1800
    %v2160 = vunpack.c.l.b16 %v1801
    %v2161 = vunpack.c.h.b16 %v1801
    %v2162 = vunpack.c.l.b16 %v1802
    %v2163 = vunpack.c.h.b16 %v1802
    %v2164 = vunpack.c.l.b16 %v1803
    %v2165 = vunpack.c.h.b16 %v1803
    %v2166 = vunpack.c.l.b16 %v1804
    %v2167 = vunpack.c.h.b16 %v1804
    %v2168 = vunpack.c.l.b16 %v1805
    %v2169 = vunpack.c.h.b16 %v1805
    %v2170 = vunpack.c.l.b16 %v1806
    %v2171 = vunpack.c.h.b16 %v1806
    %v2172 = vunpack.c.l.b16 %v1807
    %v2173 = vunpack.c.h.b16 %v1807
    %v2174 = vunpack.c.l.b16 %v1808
    %v2175 = vunpack.c.h.b16 %v1808
    %v2176 = vunpack.c.l.b16 %v1809
    %v2177 = vunpack.c.h.b16 %v1809
    %v2178 = vunpack.c.l.b16 %v1810
    %v2179 = vunpack.c.h.b16 %v1810
    %v2180 = vunpack.c.l.b16 %v1811
    %v2181 = vunpack.c.h.b16 %v1811
    %v2182 = vunpack.c.l.b16 %v1812
    %v2183 = vunpack.c.h.b16 %v1812
    %v2184 = vpack.c.b16 %v2124, %v2120
    %v2185 = vpack.c.b16 %v2125, %v2121
    %v2186 = vpack.c.b16 %v2126, %v2122
    %v2187 = vpack.c.b16 %v2127, %v2123
    %v2188 = vpack.c.b16 %v2132, %v2128
    %v2189 = vpack.c.b16 %v2133, %v2129
    %v2190 = vpack.c.b16 %v2134, %v2130
    %v2191 = vpack.c.b16 %v2135, %v2131
    %v2192 = vpack.c.b16 %v2140, %v2136
    %v2193 = vpack.c.b16 %v2141, %v2137
    %v2194 = vpack.c.b16 %v2142, %v2138
    %v2195 = vpack.c.b16 %v2143, %v2139
    %v2196 = vpack.c.b16 %v2148, %v2144
    %v2197 = vpack.c.b16 %v2149, %v2145
    %v2198 = vpack.c.b16 %v2150, %v2146
    %v2199 = vpack.c.b16 %v2151, %v2147
    %v2200 = vpack.c.b16 %v2156, %v2152
    %v2201 = vpack.c.b16 %v2157, %v2153
    %v2202 = vpack.c.b16 %v2158, %v2154
    %v2203 = vpack.c.b16 %v2159, %v2155
    %v2204 = vpack.c.b16 %v2164, %v2160
    %v2205 = vpack.c.b16 %v2165, %v2161
    %v2206 = vpack.c.b16 %v2166, %v2162
    %v2207 = vpack.c.b16 %v2167, %v2163
    %v2208 = vpack.c.b16 %v2172, %v2168
    %v2209 = vpack.c.b16 %v2173, %v2169
    %v2210 = vpack.c.b16 %v2174, %v2170
    %v2211 = vpack.c.b16 %v2175, %v2171
    %v2212 = vpack.c.b16 %v2180, %v2176
    %v2213 = vpack.c.b16 %v2181, %v2177
    %v2214 = vpack.c.b16 %v2182, %v2178
    %v2215 = vpack.c.b16 %v2183, %v2179
    %2248 = vmatprep.subr.bf16.mxu0 %v2185
    %2249 = vmatpush1.bf16.msra.mxu0 %v2184
    %2250 = vmatprep.subr.bf16.mxu0 %v2189
    %2251 = vmatpush1.bf16.msra.mxu0 %v2188
    %2252 = vmatprep.subr.bf16.mxu0 %v2193
    %2253 = vmatpush1.bf16.msra.mxu0 %v2192
    %2254 = vmatprep.subr.bf16.mxu0 %v2197
    %2255 = vmatpush1.bf16.msra.mxu0 %v2196
    %2256 = vmatprep.subr.bf16.mxu0 %v2201
    %2257 = vmatpush1.bf16.msra.mxu0 %v2200
    %2258 = vmatprep.subr.bf16.mxu0 %v2205
    %2259 = vmatpush1.bf16.msra.mxu0 %v2204
    %2260 = vmatprep.subr.bf16.mxu0 %v2209
    %2261 = vmatpush1.bf16.msra.mxu0 %v2208
    %2262 = vmatprep.subr.bf16.mxu0 %v2213
    %2263 = vmatpush1.bf16.msra.mxu0 %v2212
    %2264 = vmatprep.subr.bf16.mxu0 0
    %2265 = vmatpush1.bf16.msra.mxu0 0
    %2266 = vmatprep.subr.bf16.mxu0 0
    %2267 = vmatpush1.bf16.msra.mxu0 0
    %2268 = vmatprep.subr.bf16.mxu0 0
    %2269 = vmatpush1.bf16.msra.mxu0 0
    %2270 = vmatprep.subr.bf16.mxu0 0
    %2271 = vmatpush1.bf16.msra.mxu0 0
    %2272 = vmatprep.subr.bf16.mxu0 0
    %2273 = vmatpush1.bf16.msra.mxu0 0
    %2274 = vmatprep.subr.bf16.mxu0 0
    %2275 = vmatpush1.bf16.msra.mxu0 0
    %2276 = vmatprep.subr.bf16.mxu0 0
    %2277 = vmatpush1.bf16.msra.mxu0 0
    %2278 = vmatprep.subr.bf16.mxu0 0
    %2279 = vmatpush1.bf16.msra.mxu0 0
    %2280 = vmatprep.mubr.bf16.mxu0 0
    %2281 = vmatmul.mubr.bf16.gmra.mrb[0].mxu0 %v1780
    %v2282 = vpop.f32.mrb[0].mxu0
    %v2283 = vadd.f32 %v2041, %v2282
    %v2284 = vpop.f32.mrb[0].mxu0
    %v2285 = vadd.f32 %v2043, %v2284
    %v2286 = vpop.f32.mrb[0].mxu0
    %v2287 = vpop.f32.mrb[0].mxu0
    %2288 = vdwg.mxu0
    %2289 = vmatprep.subr.bf16.mxu0 %v2187
    %2290 = vmatpush1.bf16.msra.mxu0 %v2186
    %2291 = vmatprep.subr.bf16.mxu0 %v2191
    %2292 = vmatpush1.bf16.msra.mxu0 %v2190
    %2293 = vmatprep.subr.bf16.mxu0 %v2195
    %2294 = vmatpush1.bf16.msra.mxu0 %v2194
    %2295 = vmatprep.subr.bf16.mxu0 %v2199
    %2296 = vmatpush1.bf16.msra.mxu0 %v2198
    %2297 = vmatprep.subr.bf16.mxu0 %v2203
    %2298 = vmatpush1.bf16.msra.mxu0 %v2202
    %2299 = vmatprep.subr.bf16.mxu0 %v2207
    %2300 = vmatpush1.bf16.msra.mxu0 %v2206
    %2301 = vmatprep.subr.bf16.mxu0 %v2211
    %2302 = vmatpush1.bf16.msra.mxu0 %v2210
    %2303 = vmatprep.subr.bf16.mxu0 %v2215
    %2304 = vmatpush1.bf16.msra.mxu0 %v2214
    %2305 = vmatprep.subr.bf16.mxu0 0
    %2306 = vmatpush1.bf16.msra.mxu0 0
    %2307 = vmatprep.subr.bf16.mxu0 0
    %2308 = vmatpush1.bf16.msra.mxu0 0
    %2309 = vmatprep.subr.bf16.mxu0 0
    %2310 = vmatpush1.bf16.msra.mxu0 0
    %2311 = vmatprep.subr.bf16.mxu0 0
    %2312 = vmatpush1.bf16.msra.mxu0 0
    %2313 = vmatprep.subr.bf16.mxu0 0
    %2314 = vmatpush1.bf16.msra.mxu0 0
    %2315 = vmatprep.subr.bf16.mxu0 0
    %2316 = vmatpush1.bf16.msra.mxu0 0
    %2317 = vmatprep.subr.bf16.mxu0 0
    %2318 = vmatpush1.bf16.msra.mxu0 0
    %2319 = vmatprep.subr.bf16.mxu0 0
    %2320 = vmatpush1.bf16.msra.mxu0 0
    %2321 = vmatprep.mubr.bf16.mxu0 0
    %2322 = vmatmul.mubr.bf16.gmra.mrb[0].mxu0 %v1780
    %v2323 = vpop.f32.mrb[0].mxu0
    %v2324 = vadd.f32 %v2082, %v2323
    %v2325 = vpop.f32.mrb[0].mxu0
    %v2326 = vadd.f32 %v2084, %v2325
    %v2327 = vpop.f32.mrb[0].mxu0
    %v2328 = vpop.f32.mrb[0].mxu0
    %2329 = vdwg.mxu0
    %v2330 = vld [vmem:[%s6] sm:$0xf]
    %v2332 = vlaneseq
    %v2333 = vshrl.u32 %v2332, 7
    %v2334 = vsub.s32 0, %v2333
    %v2335 = vrot.slane %v2330, %v2334
    %v2336 = vlaneseq
    %v2337 = vshrl.u32 %v2336, 7
    %v2338 = vsub.s32 1, %v2337
    %v2339 = vrot.slane %v2330, %v2338
    %v2340 = vlaneseq
    %v2341 = vshrl.u32 %v2340, 7
    %v2342 = vsub.s32 2, %v2341
    %v2343 = vrot.slane %v2330, %v2342
    %v2344 = vlaneseq
    %v2345 = vshrl.u32 %v2344, 7
    %v2346 = vsub.s32 3, %v2345
    %v2347 = vrot.slane %v2330, %v2346
    %v2352 = vadd.f32 %v2283, %v2335
    %v2353 = vadd.f32 %v2285, %v2339
    %v2354 = vadd.f32 %v2324, %v2343
    %v2355 = vadd.f32 %v2326, %v2347
    %v2356 = vxor.u32 %v2352, 2147483648
    %v2357 = vmul.f32 %v2356, 1.442695
    %v2358 = vpow.pop %v2357
    %v2359 = vadd.f32 %v2358, 1.0
    %v2360 = vrcp.pop %v2359
    %v2361 = vmul.f32 1.0, %v2360
    %v2362 = vxor.u32 %v2353, 2147483648
    %v2363 = vmul.f32 %v2362, 1.442695
    %v2364 = vpow.pop %v2363
    %v2365 = vadd.f32 %v2364, 1.0
    %v2366 = vrcp.pop %v2365
    %v2367 = vmul.f32 1.0, %v2366
    %v2368 = vtanh.pop %v2354
    %v2369 = vxor.u32 %v2355, 2147483648
    %v2370 = vmul.f32 %v2369, 1.442695
    %v2371 = vpow.pop %v2370
    %v2372 = vadd.f32 %v2371, 1.0
    %v2373 = vrcp.pop %v2372
    %v2374 = vmul.f32 1.0, %v2373
    %v2375 = vmul.f32 %v2367, %v1443
    %v2376 = vmul.f32 %v2361, %v2368
    %v2377 = vadd.f32 %v2375, %v2376
    %v2378 = vtanh.pop %v2377
    %v2379 = vmul.f32 %v2374, %v2378
    %2380 = vst [vmem:[#allocation3] sm:$0xff] %v1779
    %2381 = vst [vmem:[#allocation4] sm:$0xff] %v1777
    %2382 = vst [vmem:[#allocation5] sm:$0xff] %v2379
    %2383 = vst [vmem:[#allocation6] sm:$0xff] %v2377
    %s2384 = scalar_lea.vmem %s11, 8
    %2385 = vst [vmem:[%s2384] sm:$0xff] %v2379
    %v2386 = vld [vmem:[#allocation3] sm:$0xff]
    %v2387 = vld [vmem:[#allocation4] sm:$0xff]
    %v2388 = vld [vmem:[#allocation5] sm:$0xff]
    %v2389 = vld [vmem:[#allocation6] sm:$0xff]
    %s2390 = smul.u32 2, 4
    %s2391 = smul.addr %s2390, 8
    %s2392 = scalar_lea.vmem [#allocation2], %s2391
    %v2393 = vld [vmem:[%s2392] sm:$0xff]
    %v2394 = vld [vmem:[%s2392 + $0x8] sm:$0xff]
    %v2395 = vld [vmem:[%s2392 + $0x10] sm:$0xff]
    %v2396 = vld [vmem:[%s2392 + $0x18] sm:$0xff]
    %v2397 = vpack.c.bf16 %v2386, %v2386
    %v2398 = vld [vmem:[#allocation7] sm:$0xff]
    %v2399 = vld [vmem:[#allocation7 + $0x8] sm:$0xff]
    %v2400 = vld [vmem:[#allocation7 + $0x10] sm:$0xff]
    %v2401 = vld [vmem:[#allocation7 + $0x18] sm:$0xff]
    %v2402 = vld [vmem:[#allocation7 + $0x20] sm:$0xff]
    %v2403 = vld [vmem:[#allocation7 + $0x28] sm:$0xff]
    %v2404 = vld [vmem:[#allocation7 + $0x30] sm:$0xff]
    %v2405 = vld [vmem:[#allocation7 + $0x38] sm:$0xff]
    %v2406 = vld [vmem:[#allocation7 + $0x40] sm:$0xff]
    %v2407 = vld [vmem:[#allocation7 + $0x48] sm:$0xff]
    %v2408 = vld [vmem:[#allocation7 + $0x50] sm:$0xff]
    %v2409 = vld [vmem:[#allocation7 + $0x58] sm:$0xff]
    %v2410 = vld [vmem:[#allocation7 + $0x60] sm:$0xff]
    %v2411 = vld [vmem:[#allocation7 + $0x68] sm:$0xff]
    %v2412 = vld [vmem:[#allocation7 + $0x70] sm:$0xff]
    %v2413 = vld [vmem:[#allocation7 + $0x78] sm:$0xff]
    %v2414 = vld [vmem:[#allocation7 + $0x80] sm:$0xff]
    %v2415 = vld [vmem:[#allocation7 + $0x88] sm:$0xff]
    %v2416 = vld [vmem:[#allocation7 + $0x90] sm:$0xff]
    %v2417 = vld [vmem:[#allocation7 + $0x98] sm:$0xff]
    %v2418 = vld [vmem:[#allocation7 + $0xa0] sm:$0xff]
    %v2419 = vld [vmem:[#allocation7 + $0xa8] sm:$0xff]
    %v2420 = vld [vmem:[#allocation7 + $0xb0] sm:$0xff]
    %v2421 = vld [vmem:[#allocation7 + $0xb8] sm:$0xff]
    %v2422 = vld [vmem:[#allocation7 + $0xc0] sm:$0xff]
    %v2423 = vld [vmem:[#allocation7 + $0xc8] sm:$0xff]
    %v2424 = vld [vmem:[#allocation7 + $0xd0] sm:$0xff]
    %v2425 = vld [vmem:[#allocation7 + $0xd8] sm:$0xff]
    %v2426 = vld [vmem:[#allocation7 + $0xe0] sm:$0xff]
    %v2427 = vld [vmem:[#allocation7 + $0xe8] sm:$0xff]
    %v2428 = vld [vmem:[#allocation7 + $0xf0] sm:$0xff]
    %v2429 = vld [vmem:[#allocation7 + $0xf8] sm:$0xff]
    %v2462 = vunpack.c.l.b16 %v2398
    %v2463 = vunpack.c.h.b16 %v2398
    %v2464 = vunpack.c.l.b16 %v2399
    %v2465 = vunpack.c.h.b16 %v2399
    %v2466 = vunpack.c.l.b16 %v2400
    %v2467 = vunpack.c.h.b16 %v2400
    %v2468 = vunpack.c.l.b16 %v2401
    %v2469 = vunpack.c.h.b16 %v2401
    %v2470 = vunpack.c.l.b16 %v2402
    %v2471 = vunpack.c.h.b16 %v2402
    %v2472 = vunpack.c.l.b16 %v2403
    %v2473 = vunpack.c.h.b16 %v2403
    %v2474 = vunpack.c.l.b16 %v2404
    %v2475 = vunpack.c.h.b16 %v2404
    %v2476 = vunpack.c.l.b16 %v2405
    %v2477 = vunpack.c.h.b16 %v2405
    %v2478 = vunpack.c.l.b16 %v2406
    %v2479 = vunpack.c.h.b16 %v2406
    %v2480 = vunpack.c.l.b16 %v2407
    %v2481 = vunpack.c.h.b16 %v2407
    %v2482 = vunpack.c.l.b16 %v2408
    %v2483 = vunpack.c.h.b16 %v2408
    %v2484 = vunpack.c.l.b16 %v2409
    %v2485 = vunpack.c.h.b16 %v2409
    %v2486 = vunpack.c.l.b16 %v2410
    %v2487 = vunpack.c.h.b16 %v2410
    %v2488 = vunpack.c.l.b16 %v2411
    %v2489 = vunpack.c.h.b16 %v2411
    %v2490 = vunpack.c.l.b16 %v2412
    %v2491 = vunpack.c.h.b16 %v2412
    %v2492 = vunpack.c.l.b16 %v2413
    %v2493 = vunpack.c.h.b16 %v2413
    %v2494 = vunpack.c.l.b16 %v2414
    %v2495 = vunpack.c.h.b16 %v2414
    %v2496 = vunpack.c.l.b16 %v2415
    %v2497 = vunpack.c.h.b16 %v2415
    %v2498 = vunpack.c.l.b16 %v2416
    %v2499 = vunpack.c.h.b16 %v2416
    %v2500 = vunpack.c.l.b16 %v2417
    %v2501 = vunpack.c.h.b16 %v2417
    %v2502 = vunpack.c.l.b16 %v2418
    %v2503 = vunpack.c.h.b16 %v2418
    %v2504 = vunpack.c.l.b16 %v2419
    %v2505 = vunpack.c.h.b16 %v2419
    %v2506 = vunpack.c.l.b16 %v2420
    %v2507 = vunpack.c.h.b16 %v2420
    %v2508 = vunpack.c.l.b16 %v2421
    %v2509 = vunpack.c.h.b16 %v2421
    %v2510 = vunpack.c.l.b16 %v2422
    %v2511 = vunpack.c.h.b16 %v2422
    %v2512 = vunpack.c.l.b16 %v2423
    %v2513 = vunpack.c.h.b16 %v2423
    %v2514 = vunpack.c.l.b16 %v2424
    %v2515 = vunpack.c.h.b16 %v2424
    %v2516 = vunpack.c.l.b16 %v2425
    %v2517 = vunpack.c.h.b16 %v2425
    %v2518 = vunpack.c.l.b16 %v2426
    %v2519 = vunpack.c.h.b16 %v2426
    %v2520 = vunpack.c.l.b16 %v2427
    %v2521 = vunpack.c.h.b16 %v2427
    %v2522 = vunpack.c.l.b16 %v2428
    %v2523 = vunpack.c.h.b16 %v2428
    %v2524 = vunpack.c.l.b16 %v2429
    %v2525 = vunpack.c.h.b16 %v2429
    %v2526 = vpack.c.b16 %v2466, %v2462
    %v2527 = vpack.c.b16 %v2467, %v2463
    %v2528 = vpack.c.b16 %v2468, %v2464
    %v2529 = vpack.c.b16 %v2469, %v2465
    %v2530 = vpack.c.b16 %v2474, %v2470
    %v2531 = vpack.c.b16 %v2475, %v2471
    %v2532 = vpack.c.b16 %v2476, %v2472
    %v2533 = vpack.c.b16 %v2477, %v2473
    %v2534 = vpack.c.b16 %v2482, %v2478
    %v2535 = vpack.c.b16 %v2483, %v2479
    %v2536 = vpack.c.b16 %v2484, %v2480
    %v2537 = vpack.c.b16 %v2485, %v2481
    %v2538 = vpack.c.b16 %v2490, %v2486
    %v2539 = vpack.c.b16 %v2491, %v2487
    %v2540 = vpack.c.b16 %v2492, %v2488
    %v2541 = vpack.c.b16 %v2493, %v2489
    %v2542 = vpack.c.b16 %v2498, %v2494
    %v2543 = vpack.c.b16 %v2499, %v2495
    %v2544 = vpack.c.b16 %v2500, %v2496
    %v2545 = vpack.c.b16 %v2501, %v2497
    %v2546 = vpack.c.b16 %v2506, %v2502
    %v2547 = vpack.c.b16 %v2507, %v2503
    %v2548 = vpack.c.b16 %v2508, %v2504
    %v2549 = vpack.c.b16 %v2509, %v2505
    %v2550 = vpack.c.b16 %v2514, %v2510
    %v2551 = vpack.c.b16 %v2515, %v2511
    %v2552 = vpack.c.b16 %v2516, %v2512
    %v2553 = vpack.c.b16 %v2517, %v2513
    %v2554 = vpack.c.b16 %v2522, %v2518
    %v2555 = vpack.c.b16 %v2523, %v2519
    %v2556 = vpack.c.b16 %v2524, %v2520
    %v2557 = vpack.c.b16 %v2525, %v2521
    %2590 = vmatprep.subr.bf16.mxu0 %v2527
    %2591 = vmatpush1.bf16.msra.mxu0 %v2526
    %2592 = vmatprep.subr.bf16.mxu0 %v2531
    %2593 = vmatpush1.bf16.msra.mxu0 %v2530
    %2594 = vmatprep.subr.bf16.mxu0 %v2535
    %2595 = vmatpush1.bf16.msra.mxu0 %v2534
    %2596 = vmatprep.subr.bf16.mxu0 %v2539
    %2597 = vmatpush1.bf16.msra.mxu0 %v2538
    %2598 = vmatprep.subr.bf16.mxu0 %v2543
    %2599 = vmatpush1.bf16.msra.mxu0 %v2542
    %2600 = vmatprep.subr.bf16.mxu0 %v2547
    %2601 = vmatpush1.bf16.msra.mxu0 %v2546
    %2602 = vmatprep.subr.bf16.mxu0 %v2551
    %2603 = vmatpush1.bf16.msra.mxu0 %v2550
    %2604 = vmatprep.subr.bf16.mxu0 %v2555
    %2605 = vmatpush1.bf16.msra.mxu0 %v2554
    %2606 = vmatprep.subr.bf16.mxu0 0
    %2607 = vmatpush1.bf16.msra.mxu0 0
    %2608 = vmatprep.subr.bf16.mxu0 0
    %2609 = vmatpush1.bf16.msra.mxu0 0
    %2610 = vmatprep.subr.bf16.mxu0 0
    %2611 = vmatpush1.bf16.msra.mxu0 0
    %2612 = vmatprep.subr.bf16.mxu0 0
    %2613 = vmatpush1.bf16.msra.mxu0 0
    %2614 = vmatprep.subr.bf16.mxu0 0
    %2615 = vmatpush1.bf16.msra.mxu0 0
    %2616 = vmatprep.subr.bf16.mxu0 0
    %2617 = vmatpush1.bf16.msra.mxu0 0
    %2618 = vmatprep.subr.bf16.mxu0 0
    %2619 = vmatpush1.bf16.msra.mxu0 0
    %2620 = vmatprep.subr.bf16.mxu0 0
    %2621 = vmatpush1.bf16.msra.mxu0 0
    %2622 = vmatprep.mubr.bf16.mxu0 0
    %2623 = vmatmul.mubr.bf16.gmra.mrb[0].mxu0 %v2397
    %v2624 = vpop.f32.mrb[0].mxu0
    %v2625 = vadd.f32 0.0, %v2624
    %v2626 = vpop.f32.mrb[0].mxu0
    %v2627 = vadd.f32 0.0, %v2626
    %v2628 = vpop.f32.mrb[0].mxu0
    %v2629 = vpop.f32.mrb[0].mxu0
    %2630 = vdwg.mxu0
    %2631 = vmatprep.subr.bf16.mxu0 %v2529
    %2632 = vmatpush1.bf16.msra.mxu0 %v2528
    %2633 = vmatprep.subr.bf16.mxu0 %v2533
    %2634 = vmatpush1.bf16.msra.mxu0 %v2532
    %2635 = vmatprep.subr.bf16.mxu0 %v2537
    %2636 = vmatpush1.bf16.msra.mxu0 %v2536
    %2637 = vmatprep.subr.bf16.mxu0 %v2541
    %2638 = vmatpush1.bf16.msra.mxu0 %v2540
    %2639 = vmatprep.subr.bf16.mxu0 %v2545
    %2640 = vmatpush1.bf16.msra.mxu0 %v2544
    %2641 = vmatprep.subr.bf16.mxu0 %v2549
    %2642 = vmatpush1.bf16.msra.mxu0 %v2548
    %2643 = vmatprep.subr.bf16.mxu0 %v2553
    %2644 = vmatpush1.bf16.msra.mxu0 %v2552
    %2645 = vmatprep.subr.bf16.mxu0 %v2557
    %2646 = vmatpush1.bf16.msra.mxu0 %v2556
    %2647 = vmatprep.subr.bf16.mxu0 0
    %2648 = vmatpush1.bf16.msra.mxu0 0
    %2649 = vmatprep.subr.bf16.mxu0 0
    %2650 = vmatpush1.bf16.msra.mxu0 0
    %2651 = vmatprep.subr.bf16.mxu0 0
    %2652 = vmatpush1.bf16.msra.mxu0 0
    %2653 = vmatprep.subr.bf16.mxu0 0
    %2654 = vmatpush1.bf16.msra.mxu0 0
    %2655 = vmatprep.subr.bf16.mxu0 0
    %2656 = vmatpush1.bf16.msra.mxu0 0
    %2657 = vmatprep.subr.bf16.mxu0 0
    %2658 = vmatpush1.bf16.msra.mxu0 0
    %2659 = vmatprep.subr.bf16.mxu0 0
    %2660 = vmatpush1.bf16.msra.mxu0 0
    %2661 = vmatprep.subr.bf16.mxu0 0
    %2662 = vmatpush1.bf16.msra.mxu0 0
    %2663 = vmatprep.mubr.bf16.mxu0 0
    %2664 = vmatmul.mubr.bf16.gmra.mrb[0].mxu0 %v2397
    %v2665 = vpop.f32.mrb[0].mxu0
    %v2666 = vadd.f32 0.0, %v2665
    %v2667 = vpop.f32.mrb[0].mxu0
    %v2668 = vadd.f32 0.0, %v2667
    %v2669 = vpop.f32.mrb[0].mxu0
    %v2670 = vpop.f32.mrb[0].mxu0
    %2671 = vdwg.mxu0
    %v2672 = vadd.f32 %v2393, %v2625
    %v2673 = vadd.f32 %v2394, %v2627
    %v2674 = vadd.f32 %v2395, %v2666
    %v2675 = vadd.f32 %v2396, %v2668
    %v2676 = vld [vmem:[%s3] sm:$0xf]
    %v2678 = vlaneseq
    %v2679 = vshrl.u32 %v2678, 7
    %v2680 = vsub.s32 0, %v2679
    %v2681 = vrot.slane %v2676, %v2680
    %v2682 = vlaneseq
    %v2683 = vshrl.u32 %v2682, 7
    %v2684 = vsub.s32 1, %v2683
    %v2685 = vrot.slane %v2676, %v2684
    %v2686 = vlaneseq
    %v2687 = vshrl.u32 %v2686, 7
    %v2688 = vsub.s32 2, %v2687
    %v2689 = vrot.slane %v2676, %v2688
    %v2690 = vlaneseq
    %v2691 = vshrl.u32 %v2690, 7
    %v2692 = vsub.s32 3, %v2691
    %v2693 = vrot.slane %v2676, %v2692
    %v2698 = vadd.f32 %v2672, %v2681
    %v2699 = vadd.f32 %v2673, %v2685
    %v2700 = vadd.f32 %v2674, %v2689
    %v2701 = vadd.f32 %v2675, %v2693
    %v2702 = vxor.u32 %v2698, 2147483648
    %v2703 = vmul.f32 %v2702, 1.442695
    %v2704 = vpow.pop %v2703
    %v2705 = vadd.f32 %v2704, 1.0
    %v2706 = vrcp.pop %v2705
    %v2707 = vmul.f32 1.0, %v2706
    %v2708 = vxor.u32 %v2699, 2147483648
    %v2709 = vmul.f32 %v2708, 1.442695
    %v2710 = vpow.pop %v2709
    %v2711 = vadd.f32 %v2710, 1.0
    %v2712 = vrcp.pop %v2711
    %v2713 = vmul.f32 1.0, %v2712
    %v2714 = vtanh.pop %v2700
    %v2715 = vxor.u32 %v2701, 2147483648
    %v2716 = vmul.f32 %v2715, 1.442695
    %v2717 = vpow.pop %v2716
    %v2718 = vadd.f32 %v2717, 1.0
    %v2719 = vrcp.pop %v2718
    %v2720 = vmul.f32 1.0, %v2719
    %v2721 = vmul.f32 %v2713, %v2387
    %v2722 = vmul.f32 %v2707, %v2714
    %v2723 = vadd.f32 %v2721, %v2722
    %v2724 = vtanh.pop %v2723
    %v2725 = vmul.f32 %v2720, %v2724
    %v2726 = vpack.c.bf16 %v2725, %v2725
    %v2727 = vld [vmem:[#allocation9] sm:$0xff]
    %v2728 = vld [vmem:[#allocation9 + $0x8] sm:$0xff]
    %v2729 = vld [vmem:[#allocation9 + $0x10] sm:$0xff]
    %v2730 = vld [vmem:[#allocation9 + $0x18] sm:$0xff]
    %v2731 = vld [vmem:[#allocation9 + $0x20] sm:$0xff]
    %v2732 = vld [vmem:[#allocation9 + $0x28] sm:$0xff]
    %v2733 = vld [vmem:[#allocation9 + $0x30] sm:$0xff]
    %v2734 = vld [vmem:[#allocation9 + $0x38] sm:$0xff]
    %v2735 = vld [vmem:[#allocation9 + $0x40] sm:$0xff]
    %v2736 = vld [vmem:[#allocation9 + $0x48] sm:$0xff]
    %v2737 = vld [vmem:[#allocation9 + $0x50] sm:$0xff]
    %v2738 = vld [vmem:[#allocation9 + $0x58] sm:$0xff]
    %v2739 = vld [vmem:[#allocation9 + $0x60] sm:$0xff]
    %v2740 = vld [vmem:[#allocation9 + $0x68] sm:$0xff]
    %v2741 = vld [vmem:[#allocation9 + $0x70] sm:$0xff]
    %v2742 = vld [vmem:[#allocation9 + $0x78] sm:$0xff]
    %v2743 = vld [vmem:[#allocation9 + $0x80] sm:$0xff]
    %v2744 = vld [vmem:[#allocation9 + $0x88] sm:$0xff]
    %v2745 = vld [vmem:[#allocation9 + $0x90] sm:$0xff]
    %v2746 = vld [vmem:[#allocation9 + $0x98] sm:$0xff]
    %v2747 = vld [vmem:[#allocation9 + $0xa0] sm:$0xff]
    %v2748 = vld [vmem:[#allocation9 + $0xa8] sm:$0xff]
    %v2749 = vld [vmem:[#allocation9 + $0xb0] sm:$0xff]
    %v2750 = vld [vmem:[#allocation9 + $0xb8] sm:$0xff]
    %v2751 = vld [vmem:[#allocation9 + $0xc0] sm:$0xff]
    %v2752 = vld [vmem:[#allocation9 + $0xc8] sm:$0xff]
    %v2753 = vld [vmem:[#allocation9 + $0xd0] sm:$0xff]
    %v2754 = vld [vmem:[#allocation9 + $0xd8] sm:$0xff]
    %v2755 = vld [vmem:[#allocation9 + $0xe0] sm:$0xff]
    %v2756 = vld [vmem:[#allocation9 + $0xe8] sm:$0xff]
    %v2757 = vld [vmem:[#allocation9 + $0xf0] sm:$0xff]
    %v2758 = vld [vmem:[#allocation9 + $0xf8] sm:$0xff]
    %v2759 = vpack.c.bf16 %v2388, %v2388
    %v2760 = vld [vmem:[#allocation11] sm:$0xff]
    %v2761 = vld [vmem:[#allocation11 + $0x8] sm:$0xff]
    %v2762 = vld [vmem:[#allocation11 + $0x10] sm:$0xff]
    %v2763 = vld [vmem:[#allocation11 + $0x18] sm:$0xff]
    %v2764 = vld [vmem:[#allocation11 + $0x20] sm:$0xff]
    %v2765 = vld [vmem:[#allocation11 + $0x28] sm:$0xff]
    %v2766 = vld [vmem:[#allocation11 + $0x30] sm:$0xff]
    %v2767 = vld [vmem:[#allocation11 + $0x38] sm:$0xff]
    %v2768 = vld [vmem:[#allocation11 + $0x40] sm:$0xff]
    %v2769 = vld [vmem:[#allocation11 + $0x48] sm:$0xff]
    %v2770 = vld [vmem:[#allocation11 + $0x50] sm:$0xff]
    %v2771 = vld [vmem:[#allocation11 + $0x58] sm:$0xff]
    %v2772 = vld [vmem:[#allocation11 + $0x60] sm:$0xff]
    %v2773 = vld [vmem:[#allocation11 + $0x68] sm:$0xff]
    %v2774 = vld [vmem:[#allocation11 + $0x70] sm:$0xff]
    %v2775 = vld [vmem:[#allocation11 + $0x78] sm:$0xff]
    %v2776 = vld [vmem:[#allocation11 + $0x80] sm:$0xff]
    %v2777 = vld [vmem:[#allocation11 + $0x88] sm:$0xff]
    %v2778 = vld [vmem:[#allocation11 + $0x90] sm:$0xff]
    %v2779 = vld [vmem:[#allocation11 + $0x98] sm:$0xff]
    %v2780 = vld [vmem:[#allocation11 + $0xa0] sm:$0xff]
    %v2781 = vld [vmem:[#allocation11 + $0xa8] sm:$0xff]
    %v2782 = vld [vmem:[#allocation11 + $0xb0] sm:$0xff]
    %v2783 = vld [vmem:[#allocation11 + $0xb8] sm:$0xff]
    %v2784 = vld [vmem:[#allocation11 + $0xc0] sm:$0xff]
    %v2785 = vld [vmem:[#allocation11 + $0xc8] sm:$0xff]
    %v2786 = vld [vmem:[#allocation11 + $0xd0] sm:$0xff]
    %v2787 = vld [vmem:[#allocation11 + $0xd8] sm:$0xff]
    %v2788 = vld [vmem:[#allocation11 + $0xe0] sm:$0xff]
    %v2789 = vld [vmem:[#allocation11 + $0xe8] sm:$0xff]
    %v2790 = vld [vmem:[#allocation11 + $0xf0] sm:$0xff]
    %v2791 = vld [vmem:[#allocation11 + $0xf8] sm:$0xff]
    %v2824 = vunpack.c.l.b16 %v2760
    %v2825 = vunpack.c.h.b16 %v2760
    %v2826 = vunpack.c.l.b16 %v2761
    %v2827 = vunpack.c.h.b16 %v2761
    %v2828 = vunpack.c.l.b16 %v2762
    %v2829 = vunpack.c.h.b16 %v2762
    %v2830 = vunpack.c.l.b16 %v2763
    %v2831 = vunpack.c.h.b16 %v2763
    %v2832 = vunpack.c.l.b16 %v2764
    %v2833 = vunpack.c.h.b16 %v2764
    %v2834 = vunpack.c.l.b16 %v2765
    %v2835 = vunpack.c.h.b16 %v2765
    %v2836 = vunpack.c.l.b16 %v2766
    %v2837 = vunpack.c.h.b16 %v2766
    %v2838 = vunpack.c.l.b16 %v2767
    %v2839 = vunpack.c.h.b16 %v2767
    %v2840 = vunpack.c.l.b16 %v2768
    %v2841 = vunpack.c.h.b16 %v2768
    %v2842 = vunpack.c.l.b16 %v2769
    %v2843 = vunpack.c.h.b16 %v2769
    %v2844 = vunpack.c.l.b16 %v2770
    %v2845 = vunpack.c.h.b16 %v2770
    %v2846 = vunpack.c.l.b16 %v2771
    %v2847 = vunpack.c.h.b16 %v2771
    %v2848 = vunpack.c.l.b16 %v2772
    %v2849 = vunpack.c.h.b16 %v2772
    %v2850 = vunpack.c.l.b16 %v2773
    %v2851 = vunpack.c.h.b16 %v2773
    %v2852 = vunpack.c.l.b16 %v2774
    %v2853 = vunpack.c.h.b16 %v2774
    %v2854 = vunpack.c.l.b16 %v2775
    %v2855 = vunpack.c.h.b16 %v2775
    %v2856 = vunpack.c.l.b16 %v2776
    %v2857 = vunpack.c.h.b16 %v2776
    %v2858 = vunpack.c.l.b16 %v2777
    %v2859 = vunpack.c.h.b16 %v2777
    %v2860 = vunpack.c.l.b16 %v2778
    %v2861 = vunpack.c.h.b16 %v2778
    %v2862 = vunpack.c.l.b16 %v2779
    %v2863 = vunpack.c.h.b16 %v2779
    %v2864 = vunpack.c.l.b16 %v2780
    %v2865 = vunpack.c.h.b16 %v2780
    %v2866 = vunpack.c.l.b16 %v2781
    %v2867 = vunpack.c.h.b16 %v2781
    %v2868 = vunpack.c.l.b16 %v2782
    %v2869 = vunpack.c.h.b16 %v2782
    %v2870 = vunpack.c.l.b16 %v2783
    %v2871 = vunpack.c.h.b16 %v2783
    %v2872 = vunpack.c.l.b16 %v2784
    %v2873 = vunpack.c.h.b16 %v2784
    %v2874 = vunpack.c.l.b16 %v2785
    %v2875 = vunpack.c.h.b16 %v2785
    %v2876 = vunpack.c.l.b16 %v2786
    %v2877 = vunpack.c.h.b16 %v2786
    %v2878 = vunpack.c.l.b16 %v2787
    %v2879 = vunpack.c.h.b16 %v2787
    %v2880 = vunpack.c.l.b16 %v2788
    %v2881 = vunpack.c.h.b16 %v2788
    %v2882 = vunpack.c.l.b16 %v2789
    %v2883 = vunpack.c.h.b16 %v2789
    %v2884 = vunpack.c.l.b16 %v2790
    %v2885 = vunpack.c.h.b16 %v2790
    %v2886 = vunpack.c.l.b16 %v2791
    %v2887 = vunpack.c.h.b16 %v2791
    %v2888 = vpack.c.b16 %v2828, %v2824
    %v2889 = vpack.c.b16 %v2829, %v2825
    %v2890 = vpack.c.b16 %v2830, %v2826
    %v2891 = vpack.c.b16 %v2831, %v2827
    %v2892 = vpack.c.b16 %v2836, %v2832
    %v2893 = vpack.c.b16 %v2837, %v2833
    %v2894 = vpack.c.b16 %v2838, %v2834
    %v2895 = vpack.c.b16 %v2839, %v2835
    %v2896 = vpack.c.b16 %v2844, %v2840
    %v2897 = vpack.c.b16 %v2845, %v2841
    %v2898 = vpack.c.b16 %v2846, %v2842
    %v2899 = vpack.c.b16 %v2847, %v2843
    %v2900 = vpack.c.b16 %v2852, %v2848
    %v2901 = vpack.c.b16 %v2853, %v2849
    %v2902 = vpack.c.b16 %v2854, %v2850
    %v2903 = vpack.c.b16 %v2855, %v2851
    %v2904 = vpack.c.b16 %v2860, %v2856
    %v2905 = vpack.c.b16 %v2861, %v2857
    %v2906 = vpack.c.b16 %v2862, %v2858
    %v2907 = vpack.c.b16 %v2863, %v2859
    %v2908 = vpack.c.b16 %v2868, %v2864
    %v2909 = vpack.c.b16 %v2869, %v2865
    %v2910 = vpack.c.b16 %v2870, %v2866
    %v2911 = vpack.c.b16 %v2871, %v2867
    %v2912 = vpack.c.b16 %v2876, %v2872
    %v2913 = vpack.c.b16 %v2877, %v2873
    %v2914 = vpack.c.b16 %v2878, %v2874
    %v2915 = vpack.c.b16 %v2879, %v2875
    %v2916 = vpack.c.b16 %v2884, %v2880
    %v2917 = vpack.c.b16 %v2885, %v2881
    %v2918 = vpack.c.b16 %v2886, %v2882
    %v2919 = vpack.c.b16 %v2887, %v2883
    %2952 = vmatprep.subr.bf16.mxu0 %v2889
    %2953 = vmatpush1.bf16.msra.mxu0 %v2888
    %2954 = vmatprep.subr.bf16.mxu0 %v2893
    %2955 = vmatpush1.bf16.msra.mxu0 %v2892
    %2956 = vmatprep.subr.bf16.mxu0 %v2897
    %2957 = vmatpush1.bf16.msra.mxu0 %v2896
    %2958 = vmatprep.subr.bf16.mxu0 %v2901
    %2959 = vmatpush1.bf16.msra.mxu0 %v2900
    %2960 = vmatprep.subr.bf16.mxu0 %v2905
    %2961 = vmatpush1.bf16.msra.mxu0 %v2904
    %2962 = vmatprep.subr.bf16.mxu0 %v2909
    %2963 = vmatpush1.bf16.msra.mxu0 %v2908
    %2964 = vmatprep.subr.bf16.mxu0 %v2913
    %2965 = vmatpush1.bf16.msra.mxu0 %v2912
    %2966 = vmatprep.subr.bf16.mxu0 %v2917
    %2967 = vmatpush1.bf16.msra.mxu0 %v2916
    %2968 = vmatprep.subr.bf16.mxu0 0
    %2969 = vmatpush1.bf16.msra.mxu0 0
    %2970 = vmatprep.subr.bf16.mxu0 0
    %2971 = vmatpush1.bf16.msra.mxu0 0
    %2972 = vmatprep.subr.bf16.mxu0 0
    %2973 = vmatpush1.bf16.msra.mxu0 0
    %2974 = vmatprep.subr.bf16.mxu0 0
    %2975 = vmatpush1.bf16.msra.mxu0 0
    %2976 = vmatprep.subr.bf16.mxu0 0
    %2977 = vmatpush1.bf16.msra.mxu0 0
    %2978 = vmatprep.subr.bf16.mxu0 0
    %2979 = vmatpush1.bf16.msra.mxu0 0
    %2980 = vmatprep.subr.bf16.mxu0 0
    %2981 = vmatpush1.bf16.msra.mxu0 0
    %2982 = vmatprep.subr.bf16.mxu0 0
    %2983 = vmatpush1.bf16.msra.mxu0 0
    %2984 = vmatprep.mubr.bf16.mxu0 0
    %2985 = vmatmul.mubr.bf16.gmra.mrb[0].mxu0 %v2759
    %v2986 = vpop.f32.mrb[0].mxu0
    %v2987 = vadd.f32 0.0, %v2986
    %v2988 = vpop.f32.mrb[0].mxu0
    %v2989 = vadd.f32 0.0, %v2988
    %v2990 = vpop.f32.mrb[0].mxu0
    %v2991 = vpop.f32.mrb[0].mxu0
    %2992 = vdwg.mxu0
    %2993 = vmatprep.subr.bf16.mxu0 %v2891
    %2994 = vmatpush1.bf16.msra.mxu0 %v2890
    %2995 = vmatprep.subr.bf16.mxu0 %v2895
    %2996 = vmatpush1.bf16.msra.mxu0 %v2894
    %2997 = vmatprep.subr.bf16.mxu0 %v2899
    %2998 = vmatpush1.bf16.msra.mxu0 %v2898
    %2999 = vmatprep.subr.bf16.mxu0 %v2903
    %3000 = vmatpush1.bf16.msra.mxu0 %v2902
    %3001 = vmatprep.subr.bf16.mxu0 %v2907
    %3002 = vmatpush1.bf16.msra.mxu0 %v2906
    %3003 = vmatprep.subr.bf16.mxu0 %v2911
    %3004 = vmatpush1.bf16.msra.mxu0 %v2910
    %3005 = vmatprep.subr.bf16.mxu0 %v2915
    %3006 = vmatpush1.bf16.msra.mxu0 %v2914
    %3007 = vmatprep.subr.bf16.mxu0 %v2919
    %3008 = vmatpush1.bf16.msra.mxu0 %v2918
    %3009 = vmatprep.subr.bf16.mxu0 0
    %3010 = vmatpush1.bf16.msra.mxu0 0
    %3011 = vmatprep.subr.bf16.mxu0 0
    %3012 = vmatpush1.bf16.msra.mxu0 0
    %3013 = vmatprep.subr.bf16.mxu0 0
    %3014 = vmatpush1.bf16.msra.mxu0 0
    %3015 = vmatprep.subr.bf16.mxu0 0
    %3016 = vmatpush1.bf16.msra.mxu0 0
    %3017 = vmatprep.subr.bf16.mxu0 0
    %3018 = vmatpush1.bf16.msra.mxu0 0
    %3019 = vmatprep.subr.bf16.mxu0 0
    %3020 = vmatpush1.bf16.msra.mxu0 0
    %3021 = vmatprep.subr.bf16.mxu0 0
    %3022 = vmatpush1.bf16.msra.mxu0 0
    %3023 = vmatprep.subr.bf16.mxu0 0
    %3024 = vmatpush1.bf16.msra.mxu0 0
    %3025 = vmatprep.mubr.bf16.mxu0 0
    %3026 = vmatmul.mubr.bf16.gmra.mrb[0].mxu0 %v2759
    %v3027 = vpop.f32.mrb[0].mxu0
    %v3028 = vadd.f32 0.0, %v3027
    %v3029 = vpop.f32.mrb[0].mxu0
    %v3030 = vadd.f32 0.0, %v3029
    %v3031 = vpop.f32.mrb[0].mxu0
    %v3032 = vpop.f32.mrb[0].mxu0
    %3033 = vdwg.mxu0
    %v3066 = vunpack.c.l.b16 %v2727
    %v3067 = vunpack.c.h.b16 %v2727
    %v3068 = vunpack.c.l.b16 %v2728
    %v3069 = vunpack.c.h.b16 %v2728
    %v3070 = vunpack.c.l.b16 %v2729
    %v3071 = vunpack.c.h.b16 %v2729
    %v3072 = vunpack.c.l.b16 %v2730
    %v3073 = vunpack.c.h.b16 %v2730
    %v3074 = vunpack.c.l.b16 %v2731
    %v3075 = vunpack.c.h.b16 %v2731
    %v3076 = vunpack.c.l.b16 %v2732
    %v3077 = vunpack.c.h.b16 %v2732
    %v3078 = vunpack.c.l.b16 %v2733
    %v3079 = vunpack.c.h.b16 %v2733
    %v3080 = vunpack.c.l.b16 %v2734
    %v3081 = vunpack.c.h.b16 %v2734
    %v3082 = vunpack.c.l.b16 %v2735
    %v3083 = vunpack.c.h.b16 %v2735
    %v3084 = vunpack.c.l.b16 %v2736
    %v3085 = vunpack.c.h.b16 %v2736
    %v3086 = vunpack.c.l.b16 %v2737
    %v3087 = vunpack.c.h.b16 %v2737
    %v3088 = vunpack.c.l.b16 %v2738
    %v3089 = vunpack.c.h.b16 %v2738
    %v3090 = vunpack.c.l.b16 %v2739
    %v3091 = vunpack.c.h.b16 %v2739
    %v3092 = vunpack.c.l.b16 %v2740
    %v3093 = vunpack.c.h.b16 %v2740
    %v3094 = vunpack.c.l.b16 %v2741
    %v3095 = vunpack.c.h.b16 %v2741
    %v3096 = vunpack.c.l.b16 %v2742
    %v3097 = vunpack.c.h.b16 %v2742
    %v3098 = vunpack.c.l.b16 %v2743
    %v3099 = vunpack.c.h.b16 %v2743
    %v3100 = vunpack.c.l.b16 %v2744
    %v3101 = vunpack.c.h.b16 %v2744
    %v3102 = vunpack.c.l.b16 %v2745
    %v3103 = vunpack.c.h.b16 %v2745
    %v3104 = vunpack.c.l.b16 %v2746
    %v3105 = vunpack.c.h.b16 %v2746
    %v3106 = vunpack.c.l.b16 %v2747
    %v3107 = vunpack.c.h.b16 %v2747
    %v3108 = vunpack.c.l.b16 %v2748
    %v3109 = vunpack.c.h.b16 %v2748
    %v3110 = vunpack.c.l.b16 %v2749
    %v3111 = vunpack.c.h.b16 %v2749
    %v3112 = vunpack.c.l.b16 %v2750
    %v3113 = vunpack.c.h.b16 %v2750
    %v3114 = vunpack.c.l.b16 %v2751
    %v3115 = vunpack.c.h.b16 %v2751
    %v3116 = vunpack.c.l.b16 %v2752
    %v3117 = vunpack.c.h.b16 %v2752
    %v3118 = vunpack.c.l.b16 %v2753
    %v3119 = vunpack.c.h.b16 %v2753
    %v3120 = vunpack.c.l.b16 %v2754
    %v3121 = vunpack.c.h.b16 %v2754
    %v3122 = vunpack.c.l.b16 %v2755
    %v3123 = vunpack.c.h.b16 %v2755
    %v3124 = vunpack.c.l.b16 %v2756
    %v3125 = vunpack.c.h.b16 %v2756
    %v3126 = vunpack.c.l.b16 %v2757
    %v3127 = vunpack.c.h.b16 %v2757
    %v3128 = vunpack.c.l.b16 %v2758
    %v3129 = vunpack.c.h.b16 %v2758
    %v3130 = vpack.c.b16 %v3070, %v3066
    %v3131 = vpack.c.b16 %v3071, %v3067
    %v3132 = vpack.c.b16 %v3072, %v3068
    %v3133 = vpack.c.b16 %v3073, %v3069
    %v3134 = vpack.c.b16 %v3078, %v3074
    %v3135 = vpack.c.b16 %v3079, %v3075
    %v3136 = vpack.c.b16 %v3080, %v3076
    %v3137 = vpack.c.b16 %v3081, %v3077
    %v3138 = vpack.c.b16 %v3086, %v3082
    %v3139 = vpack.c.b16 %v3087, %v3083
    %v3140 = vpack.c.b16 %v3088, %v3084
    %v3141 = vpack.c.b16 %v3089, %v3085
    %v3142 = vpack.c.b16 %v3094, %v3090
    %v3143 = vpack.c.b16 %v3095, %v3091
    %v3144 = vpack.c.b16 %v3096, %v3092
    %v3145 = vpack.c.b16 %v3097, %v3093
    %v3146 = vpack.c.b16 %v3102, %v3098
    %v3147 = vpack.c.b16 %v3103, %v3099
    %v3148 = vpack.c.b16 %v3104, %v3100
    %v3149 = vpack.c.b16 %v3105, %v3101
    %v3150 = vpack.c.b16 %v3110, %v3106
    %v3151 = vpack.c.b16 %v3111, %v3107
    %v3152 = vpack.c.b16 %v3112, %v3108
    %v3153 = vpack.c.b16 %v3113, %v3109
    %v3154 = vpack.c.b16 %v3118, %v3114
    %v3155 = vpack.c.b16 %v3119, %v3115
    %v3156 = vpack.c.b16 %v3120, %v3116
    %v3157 = vpack.c.b16 %v3121, %v3117
    %v3158 = vpack.c.b16 %v3126, %v3122
    %v3159 = vpack.c.b16 %v3127, %v3123
    %v3160 = vpack.c.b16 %v3128, %v3124
    %v3161 = vpack.c.b16 %v3129, %v3125
    %3194 = vmatprep.subr.bf16.mxu0 %v3131
    %3195 = vmatpush1.bf16.msra.mxu0 %v3130
    %3196 = vmatprep.subr.bf16.mxu0 %v3135
    %3197 = vmatpush1.bf16.msra.mxu0 %v3134
    %3198 = vmatprep.subr.bf16.mxu0 %v3139
    %3199 = vmatpush1.bf16.msra.mxu0 %v3138
    %3200 = vmatprep.subr.bf16.mxu0 %v3143
    %3201 = vmatpush1.bf16.msra.mxu0 %v3142
    %3202 = vmatprep.subr.bf16.mxu0 %v3147
    %3203 = vmatpush1.bf16.msra.mxu0 %v3146
    %3204 = vmatprep.subr.bf16.mxu0 %v3151
    %3205 = vmatpush1.bf16.msra.mxu0 %v3150
    %3206 = vmatprep.subr.bf16.mxu0 %v3155
    %3207 = vmatpush1.bf16.msra.mxu0 %v3154
    %3208 = vmatprep.subr.bf16.mxu0 %v3159
    %3209 = vmatpush1.bf16.msra.mxu0 %v3158
    %3210 = vmatprep.subr.bf16.mxu0 0
    %3211 = vmatpush1.bf16.msra.mxu0 0
    %3212 = vmatprep.subr.bf16.mxu0 0
    %3213 = vmatpush1.bf16.msra.mxu0 0
    %3214 = vmatprep.subr.bf16.mxu0 0
    %3215 = vmatpush1.bf16.msra.mxu0 0
    %3216 = vmatprep.subr.bf16.mxu0 0
    %3217 = vmatpush1.bf16.msra.mxu0 0
    %3218 = vmatprep.subr.bf16.mxu0 0
    %3219 = vmatpush1.bf16.msra.mxu0 0
    %3220 = vmatprep.subr.bf16.mxu0 0
    %3221 = vmatpush1.bf16.msra.mxu0 0
    %3222 = vmatprep.subr.bf16.mxu0 0
    %3223 = vmatpush1.bf16.msra.mxu0 0
    %3224 = vmatprep.subr.bf16.mxu0 0
    %3225 = vmatpush1.bf16.msra.mxu0 0
    %3226 = vmatprep.mubr.bf16.mxu0 0
    %3227 = vmatmul.mubr.bf16.gmra.mrb[0].mxu0 %v2726
    %v3228 = vpop.f32.mrb[0].mxu0
    %v3229 = vadd.f32 %v2987, %v3228
    %v3230 = vpop.f32.mrb[0].mxu0
    %v3231 = vadd.f32 %v2989, %v3230
    %v3232 = vpop.f32.mrb[0].mxu0
    %v3233 = vpop.f32.mrb[0].mxu0
    %3234 = vdwg.mxu0
    %3235 = vmatprep.subr.bf16.mxu0 %v3133
    %3236 = vmatpush1.bf16.msra.mxu0 %v3132
    %3237 = vmatprep.subr.bf16.mxu0 %v3137
    %3238 = vmatpush1.bf16.msra.mxu0 %v3136
    %3239 = vmatprep.subr.bf16.mxu0 %v3141
    %3240 = vmatpush1.bf16.msra.mxu0 %v3140
    %3241 = vmatprep.subr.bf16.mxu0 %v3145
    %3242 = vmatpush1.bf16.msra.mxu0 %v3144
    %3243 = vmatprep.subr.bf16.mxu0 %v3149
    %3244 = vmatpush1.bf16.msra.mxu0 %v3148
    %3245 = vmatprep.subr.bf16.mxu0 %v3153
    %3246 = vmatpush1.bf16.msra.mxu0 %v3152
    %3247 = vmatprep.subr.bf16.mxu0 %v3157
    %3248 = vmatpush1.bf16.msra.mxu0 %v3156
    %3249 = vmatprep.subr.bf16.mxu0 %v3161
    %3250 = vmatpush1.bf16.msra.mxu0 %v3160
    %3251 = vmatprep.subr.bf16.mxu0 0
    %3252 = vmatpush1.bf16.msra.mxu0 0
    %3253 = vmatprep.subr.bf16.mxu0 0
    %3254 = vmatpush1.bf16.msra.mxu0 0
    %3255 = vmatprep.subr.bf16.mxu0 0
    %3256 = vmatpush1.bf16.msra.mxu0 0
    %3257 = vmatprep.subr.bf16.mxu0 0
    %3258 = vmatpush1.bf16.msra.mxu0 0
    %3259 = vmatprep.subr.bf16.mxu0 0
    %3260 = vmatpush1.bf16.msra.mxu0 0
    %3261 = vmatprep.subr.bf16.mxu0 0
    %3262 = vmatpush1.bf16.msra.mxu0 0
    %3263 = vmatprep.subr.bf16.mxu0 0
    %3264 = vmatpush1.bf16.msra.mxu0 0
    %3265 = vmatprep.subr.bf16.mxu0 0
    %3266 = vmatpush1.bf16.msra.mxu0 0
    %3267 = vmatprep.mubr.bf16.mxu0 0
    %3268 = vmatmul.mubr.bf16.gmra.mrb[0].mxu0 %v2726
    %v3269 = vpop.f32.mrb[0].mxu0
    %v3270 = vadd.f32 %v3028, %v3269
    %v3271 = vpop.f32.mrb[0].mxu0
    %v3272 = vadd.f32 %v3030, %v3271
    %v3273 = vpop.f32.mrb[0].mxu0
    %v3274 = vpop.f32.mrb[0].mxu0
    %3275 = vdwg.mxu0
    %v3276 = vld [vmem:[%s6] sm:$0xf]
    %v3278 = vlaneseq
    %v3279 = vshrl.u32 %v3278, 7
    %v3280 = vsub.s32 0, %v3279
    %v3281 = vrot.slane %v3276, %v3280
    %v3282 = vlaneseq
    %v3283 = vshrl.u32 %v3282, 7
    %v3284 = vsub.s32 1, %v3283
    %v3285 = vrot.slane %v3276, %v3284
    %v3286 = vlaneseq
    %v3287 = vshrl.u32 %v3286, 7
    %v3288 = vsub.s32 2, %v3287
    %v3289 = vrot.slane %v3276, %v3288
    %v3290 = vlaneseq
    %v3291 = vshrl.u32 %v3290, 7
    %v3292 = vsub.s32 3, %v3291
    %v3293 = vrot.slane %v3276, %v3292
    %v3298 = vadd.f32 %v3229, %v3281
    %v3299 = vadd.f32 %v3231, %v3285
    %v3300 = vadd.f32 %v3270, %v3289
    %v3301 = vadd.f32 %v3272, %v3293
    %v3302 = vxor.u32 %v3298, 2147483648
    %v3303 = vmul.f32 %v3302, 1.442695
    %v3304 = vpow.pop %v3303
    %v3305 = vadd.f32 %v3304, 1.0
    %v3306 = vrcp.pop %v3305
    %v3307 = vmul.f32 1.0, %v3306
    %v3308 = vxor.u32 %v3299, 2147483648
    %v3309 = vmul.f32 %v3308, 1.442695
    %v3310 = vpow.pop %v3309
    %v3311 = vadd.f32 %v3310, 1.0
    %v3312 = vrcp.pop %v3311
    %v3313 = vmul.f32 1.0, %v3312
    %v3314 = vtanh.pop %v3300
    %v3315 = vxor.u32 %v3301, 2147483648
    %v3316 = vmul.f32 %v3315, 1.442695
    %v3317 = vpow.pop %v3316
    %v3318 = vadd.f32 %v3317, 1.0
    %v3319 = vrcp.pop %v3318
    %v3320 = vmul.f32 1.0, %v3319
    %v3321 = vmul.f32 %v3313, %v2389
    %v3322 = vmul.f32 %v3307, %v3314
    %v3323 = vadd.f32 %v3321, %v3322
    %v3324 = vtanh.pop %v3323
    %v3325 = vmul.f32 %v3320, %v3324
    %3326 = vst [vmem:[#allocation3] sm:$0xff] %v2725
    %3327 = vst [vmem:[#allocation4] sm:$0xff] %v2723
    %3328 = vst [vmem:[#allocation5] sm:$0xff] %v3325
    %3329 = vst [vmem:[#allocation6] sm:$0xff] %v3323
    %s3330 = scalar_lea.vmem %s11, 16
    %3331 = vst [vmem:[%s3330] sm:$0xff] %v3325
    %v3332 = vld [vmem:[#allocation3] sm:$0xff]
    %v3333 = vld [vmem:[#allocation4] sm:$0xff]
    %v3334 = vld [vmem:[#allocation5] sm:$0xff]
    %v3335 = vld [vmem:[#allocation6] sm:$0xff]
    %s3336 = smul.u32 3, 4
    %s3337 = smul.addr %s3336, 8
    %s3338 = scalar_lea.vmem [#allocation2], %s3337
    %v3339 = vld [vmem:[%s3338] sm:$0xff]
    %v3340 = vld [vmem:[%s3338 + $0x8] sm:$0xff]
    %v3341 = vld [vmem:[%s3338 + $0x10] sm:$0xff]
    %v3342 = vld [vmem:[%s3338 + $0x18] sm:$0xff]
    %v3343 = vpack.c.bf16 %v3332, %v3332
    %v3344 = vld [vmem:[#allocation7] sm:$0xff]
    %v3345 = vld [vmem:[#allocation7 + $0x8] sm:$0xff]
    %v3346 = vld [vmem:[#allocation7 + $0x10] sm:$0xff]
    %v3347 = vld [vmem:[#allocation7 + $0x18] sm:$0xff]
    %v3348 = vld [vmem:[#allocation7 + $0x20] sm:$0xff]
    %v3349 = vld [vmem:[#allocation7 + $0x28] sm:$0xff]
    %v3350 = vld [vmem:[#allocation7 + $0x30] sm:$0xff]
    %v3351 = vld [vmem:[#allocation7 + $0x38] sm:$0xff]
    %v3352 = vld [vmem:[#allocation7 + $0x40] sm:$0xff]
    %v3353 = vld [vmem:[#allocation7 + $0x48] sm:$0xff]
    %v3354 = vld [vmem:[#allocation7 + $0x50] sm:$0xff]
    %v3355 = vld [vmem:[#allocation7 + $0x58] sm:$0xff]
    %v3356 = vld [vmem:[#allocation7 + $0x60] sm:$0xff]
    %v3357 = vld [vmem:[#allocation7 + $0x68] sm:$0xff]
    %v3358 = vld [vmem:[#allocation7 + $0x70] sm:$0xff]
    %v3359 = vld [vmem:[#allocation7 + $0x78] sm:$0xff]
    %v3360 = vld [vmem:[#allocation7 + $0x80] sm:$0xff]
    %v3361 = vld [vmem:[#allocation7 + $0x88] sm:$0xff]
    %v3362 = vld [vmem:[#allocation7 + $0x90] sm:$0xff]
    %v3363 = vld [vmem:[#allocation7 + $0x98] sm:$0xff]
    %v3364 = vld [vmem:[#allocation7 + $0xa0] sm:$0xff]
    %v3365 = vld [vmem:[#allocation7 + $0xa8] sm:$0xff]
    %v3366 = vld [vmem:[#allocation7 + $0xb0] sm:$0xff]
    %v3367 = vld [vmem:[#allocation7 + $0xb8] sm:$0xff]
    %v3368 = vld [vmem:[#allocation7 + $0xc0] sm:$0xff]
    %v3369 = vld [vmem:[#allocation7 + $0xc8] sm:$0xff]
    %v3370 = vld [vmem:[#allocation7 + $0xd0] sm:$0xff]
    %v3371 = vld [vmem:[#allocation7 + $0xd8] sm:$0xff]
    %v3372 = vld [vmem:[#allocation7 + $0xe0] sm:$0xff]
    %v3373 = vld [vmem:[#allocation7 + $0xe8] sm:$0xff]
    %v3374 = vld [vmem:[#allocation7 + $0xf0] sm:$0xff]
    %v3375 = vld [vmem:[#allocation7 + $0xf8] sm:$0xff]
    %v3408 = vunpack.c.l.b16 %v3344
    %v3409 = vunpack.c.h.b16 %v3344
    %v3410 = vunpack.c.l.b16 %v3345
    %v3411 = vunpack.c.h.b16 %v3345
    %v3412 = vunpack.c.l.b16 %v3346
    %v3413 = vunpack.c.h.b16 %v3346
    %v3414 = vunpack.c.l.b16 %v3347
    %v3415 = vunpack.c.h.b16 %v3347
    %v3416 = vunpack.c.l.b16 %v3348
    %v3417 = vunpack.c.h.b16 %v3348
    %v3418 = vunpack.c.l.b16 %v3349
    %v3419 = vunpack.c.h.b16 %v3349
    %v3420 = vunpack.c.l.b16 %v3350
    %v3421 = vunpack.c.h.b16 %v3350
    %v3422 = vunpack.c.l.b16 %v3351
    %v3423 = vunpack.c.h.b16 %v3351
    %v3424 = vunpack.c.l.b16 %v3352
    %v3425 = vunpack.c.h.b16 %v3352
    %v3426 = vunpack.c.l.b16 %v3353
    %v3427 = vunpack.c.h.b16 %v3353
    %v3428 = vunpack.c.l.b16 %v3354
    %v3429 = vunpack.c.h.b16 %v3354
    %v3430 = vunpack.c.l.b16 %v3355
    %v3431 = vunpack.c.h.b16 %v3355
    %v3432 = vunpack.c.l.b16 %v3356
    %v3433 = vunpack.c.h.b16 %v3356
    %v3434 = vunpack.c.l.b16 %v3357
    %v3435 = vunpack.c.h.b16 %v3357
    %v3436 = vunpack.c.l.b16 %v3358
    %v3437 = vunpack.c.h.b16 %v3358
    %v3438 = vunpack.c.l.b16 %v3359
    %v3439 = vunpack.c.h.b16 %v3359
    %v3440 = vunpack.c.l.b16 %v3360
    %v3441 = vunpack.c.h.b16 %v3360
    %v3442 = vunpack.c.l.b16 %v3361
    %v3443 = vunpack.c.h.b16 %v3361
    %v3444 = vunpack.c.l.b16 %v3362
    %v3445 = vunpack.c.h.b16 %v3362
    %v3446 = vunpack.c.l.b16 %v3363
    %v3447 = vunpack.c.h.b16 %v3363
    %v3448 = vunpack.c.l.b16 %v3364
    %v3449 = vunpack.c.h.b16 %v3364
    %v3450 = vunpack.c.l.b16 %v3365
    %v3451 = vunpack.c.h.b16 %v3365
    %v3452 = vunpack.c.l.b16 %v3366
    %v3453 = vunpack.c.h.b16 %v3366
    %v3454 = vunpack.c.l.b16 %v3367
    %v3455 = vunpack.c.h.b16 %v3367
    %v3456 = vunpack.c.l.b16 %v3368
    %v3457 = vunpack.c.h.b16 %v3368
    %v3458 = vunpack.c.l.b16 %v3369
    %v3459 = vunpack.c.h.b16 %v3369
    %v3460 = vunpack.c.l.b16 %v3370
    %v3461 = vunpack.c.h.b16 %v3370
    %v3462 = vunpack.c.l.b16 %v3371
    %v3463 = vunpack.c.h.b16 %v3371
    %v3464 = vunpack.c.l.b16 %v3372
    %v3465 = vunpack.c.h.b16 %v3372
    %v3466 = vunpack.c.l.b16 %v3373
    %v3467 = vunpack.c.h.b16 %v3373
    %v3468 = vunpack.c.l.b16 %v3374
    %v3469 = vunpack.c.h.b16 %v3374
    %v3470 = vunpack.c.l.b16 %v3375
    %v3471 = vunpack.c.h.b16 %v3375
    %v3472 = vpack.c.b16 %v3412, %v3408
    %v3473 = vpack.c.b16 %v3413, %v3409
    %v3474 = vpack.c.b16 %v3414, %v3410
    %v3475 = vpack.c.b16 %v3415, %v3411
    %v3476 = vpack.c.b16 %v3420, %v3416
    %v3477 = vpack.c.b16 %v3421, %v3417
    %v3478 = vpack.c.b16 %v3422, %v3418
    %v3479 = vpack.c.b16 %v3423, %v3419
    %v3480 = vpack.c.b16 %v3428, %v3424
    %v3481 = vpack.c.b16 %v3429, %v3425
    %v3482 = vpack.c.b16 %v3430, %v3426
    %v3483 = vpack.c.b16 %v3431, %v3427
    %v3484 = vpack.c.b16 %v3436, %v3432
    %v3485 = vpack.c.b16 %v3437, %v3433
    %v3486 = vpack.c.b16 %v3438, %v3434
    %v3487 = vpack.c.b16 %v3439, %v3435
    %v3488 = vpack.c.b16 %v3444, %v3440
    %v3489 = vpack.c.b16 %v3445, %v3441
    %v3490 = vpack.c.b16 %v3446, %v3442
    %v3491 = vpack.c.b16 %v3447, %v3443
    %v3492 = vpack.c.b16 %v3452, %v3448
    %v3493 = vpack.c.b16 %v3453, %v3449
    %v3494 = vpack.c.b16 %v3454, %v3450
    %v3495 = vpack.c.b16 %v3455, %v3451
    %v3496 = vpack.c.b16 %v3460, %v3456
    %v3497 = vpack.c.b16 %v3461, %v3457
    %v3498 = vpack.c.b16 %v3462, %v3458
    %v3499 = vpack.c.b16 %v3463, %v3459
    %v3500 = vpack.c.b16 %v3468, %v3464
    %v3501 = vpack.c.b16 %v3469, %v3465
    %v3502 = vpack.c.b16 %v3470, %v3466
    %v3503 = vpack.c.b16 %v3471, %v3467
    %3536 = vmatprep.subr.bf16.mxu0 %v3473
    %3537 = vmatpush1.bf16.msra.mxu0 %v3472
    %3538 = vmatprep.subr.bf16.mxu0 %v3477
    %3539 = vmatpush1.bf16.msra.mxu0 %v3476
    %3540 = vmatprep.subr.bf16.mxu0 %v3481
    %3541 = vmatpush1.bf16.msra.mxu0 %v3480
    %3542 = vmatprep.subr.bf16.mxu0 %v3485
    %3543 = vmatpush1.bf16.msra.mxu0 %v3484
    %3544 = vmatprep.subr.bf16.mxu0 %v3489
    %3545 = vmatpush1.bf16.msra.mxu0 %v3488
    %3546 = vmatprep.subr.bf16.mxu0 %v3493
    %3547 = vmatpush1.bf16.msra.mxu0 %v3492
    %3548 = vmatprep.subr.bf16.mxu0 %v3497
    %3549 = vmatpush1.bf16.msra.mxu0 %v3496
    %3550 = vmatprep.subr.bf16.mxu0 %v3501
    %3551 = vmatpush1.bf16.msra.mxu0 %v3500
    %3552 = vmatprep.subr.bf16.mxu0 0
    %3553 = vmatpush1.bf16.msra.mxu0 0
    %3554 = vmatprep.subr.bf16.mxu0 0
    %3555 = vmatpush1.bf16.msra.mxu0 0
    %3556 = vmatprep.subr.bf16.mxu0 0
    %3557 = vmatpush1.bf16.msra.mxu0 0
    %3558 = vmatprep.subr.bf16.mxu0 0
    %3559 = vmatpush1.bf16.msra.mxu0 0
    %3560 = vmatprep.subr.bf16.mxu0 0
    %3561 = vmatpush1.bf16.msra.mxu0 0
    %3562 = vmatprep.subr.bf16.mxu0 0
    %3563 = vmatpush1.bf16.msra.mxu0 0
    %3564 = vmatprep.subr.bf16.mxu0 0
    %3565 = vmatpush1.bf16.msra.mxu0 0
    %3566 = vmatprep.subr.bf16.mxu0 0
    %3567 = vmatpush1.bf16.msra.mxu0 0
    %3568 = vmatprep.mubr.bf16.mxu0 0
    %3569 = vmatmul.mubr.bf16.gmra.mrb[0].mxu0 %v3343
    %v3570 = vpop.f32.mrb[0].mxu0
    %v3571 = vadd.f32 0.0, %v3570
    %v3572 = vpop.f32.mrb[0].mxu0
    %v3573 = vadd.f32 0.0, %v3572
    %v3574 = vpop.f32.mrb[0].mxu0
    %v3575 = vpop.f32.mrb[0].mxu0
    %3576 = vdwg.mxu0
    %3577 = vmatprep.subr.bf16.mxu0 %v3475
    %3578 = vmatpush1.bf16.msra.mxu0 %v3474
    %3579 = vmatprep.subr.bf16.mxu0 %v3479
    %3580 = vmatpush1.bf16.msra.mxu0 %v3478
    %3581 = vmatprep.subr.bf16.mxu0 %v3483
    %3582 = vmatpush1.bf16.msra.mxu0 %v3482
    %3583 = vmatprep.subr.bf16.mxu0 %v3487
    %3584 = vmatpush1.bf16.msra.mxu0 %v3486
    %3585 = vmatprep.subr.bf16.mxu0 %v3491
    %3586 = vmatpush1.bf16.msra.mxu0 %v3490
    %3587 = vmatprep.subr.bf16.mxu0 %v3495
    %3588 = vmatpush1.bf16.msra.mxu0 %v3494
    %3589 = vmatprep.subr.bf16.mxu0 %v3499
    %3590 = vmatpush1.bf16.msra.mxu0 %v3498
    %3591 = vmatprep.subr.bf16.mxu0 %v3503
    %3592 = vmatpush1.bf16.msra.mxu0 %v3502
    %3593 = vmatprep.subr.bf16.mxu0 0
    %3594 = vmatpush1.bf16.msra.mxu0 0
    %3595 = vmatprep.subr.bf16.mxu0 0
    %3596 = vmatpush1.bf16.msra.mxu0 0
    %3597 = vmatprep.subr.bf16.mxu0 0
    %3598 = vmatpush1.bf16.msra.mxu0 0
    %3599 = vmatprep.subr.bf16.mxu0 0
    %3600 = vmatpush1.bf16.msra.mxu0 0
    %3601 = vmatprep.subr.bf16.mxu0 0
    %3602 = vmatpush1.bf16.msra.mxu0 0
    %3603 = vmatprep.subr.bf16.mxu0 0
    %3604 = vmatpush1.bf16.msra.mxu0 0
    %3605 = vmatprep.subr.bf16.mxu0 0
    %3606 = vmatpush1.bf16.msra.mxu0 0
    %3607 = vmatprep.subr.bf16.mxu0 0
    %3608 = vmatpush1.bf16.msra.mxu0 0
    %3609 = vmatprep.mubr.bf16.mxu0 0
    %3610 = vmatmul.mubr.bf16.gmra.mrb[0].mxu0 %v3343
    %v3611 = vpop.f32.mrb[0].mxu0
    %v3612 = vadd.f32 0.0, %v3611
    %v3613 = vpop.f32.mrb[0].mxu0
    %v3614 = vadd.f32 0.0, %v3613
    %v3615 = vpop.f32.mrb[0].mxu0
    %v3616 = vpop.f32.mrb[0].mxu0
    %3617 = vdwg.mxu0
    %v3618 = vadd.f32 %v3339, %v3571
    %v3619 = vadd.f32 %v3340, %v3573
    %v3620 = vadd.f32 %v3341, %v3612
    %v3621 = vadd.f32 %v3342, %v3614
    %v3622 = vld [vmem:[%s3] sm:$0xf]
    %v3624 = vlaneseq
    %v3625 = vshrl.u32 %v3624, 7
    %v3626 = vsub.s32 0, %v3625
    %v3627 = vrot.slane %v3622, %v3626
    %v3628 = vlaneseq
    %v3629 = vshrl.u32 %v3628, 7
    %v3630 = vsub.s32 1, %v3629
    %v3631 = vrot.slane %v3622, %v3630
    %v3632 = vlaneseq
    %v3633 = vshrl.u32 %v3632, 7
    %v3634 = vsub.s32 2, %v3633
    %v3635 = vrot.slane %v3622, %v3634
    %v3636 = vlaneseq
    %v3637 = vshrl.u32 %v3636, 7
    %v3638 = vsub.s32 3, %v3637
    %v3639 = vrot.slane %v3622, %v3638
    %v3644 = vadd.f32 %v3618, %v3627
    %v3645 = vadd.f32 %v3619, %v3631
    %v3646 = vadd.f32 %v3620, %v3635
    %v3647 = vadd.f32 %v3621, %v3639
    %v3648 = vxor.u32 %v3644, 2147483648
    %v3649 = vmul.f32 %v3648, 1.442695
    %v3650 = vpow.pop %v3649
    %v3651 = vadd.f32 %v3650, 1.0
    %v3652 = vrcp.pop %v3651
    %v3653 = vmul.f32 1.0, %v3652
    %v3654 = vxor.u32 %v3645, 2147483648
    %v3655 = vmul.f32 %v3654, 1.442695
    %v3656 = vpow.pop %v3655
    %v3657 = vadd.f32 %v3656, 1.0
    %v3658 = vrcp.pop %v3657
    %v3659 = vmul.f32 1.0, %v3658
    %v3660 = vtanh.pop %v3646
    %v3661 = vxor.u32 %v3647, 2147483648
    %v3662 = vmul.f32 %v3661, 1.442695
    %v3663 = vpow.pop %v3662
    %v3664 = vadd.f32 %v3663, 1.0
    %v3665 = vrcp.pop %v3664
    %v3666 = vmul.f32 1.0, %v3665
    %v3667 = vmul.f32 %v3659, %v3333
    %v3668 = vmul.f32 %v3653, %v3660
    %v3669 = vadd.f32 %v3667, %v3668
    %v3670 = vtanh.pop %v3669
    %v3671 = vmul.f32 %v3666, %v3670
    %v3672 = vpack.c.bf16 %v3671, %v3671
    %v3673 = vld [vmem:[#allocation9] sm:$0xff]
    %v3674 = vld [vmem:[#allocation9 + $0x8] sm:$0xff]
    %v3675 = vld [vmem:[#allocation9 + $0x10] sm:$0xff]
    %v3676 = vld [vmem:[#allocation9 + $0x18] sm:$0xff]
    %v3677 = vld [vmem:[#allocation9 + $0x20] sm:$0xff]
    %v3678 = vld [vmem:[#allocation9 + $0x28] sm:$0xff]
    %v3679 = vld [vmem:[#allocation9 + $0x30] sm:$0xff]
    %v3680 = vld [vmem:[#allocation9 + $0x38] sm:$0xff]
    %v3681 = vld [vmem:[#allocation9 + $0x40] sm:$0xff]
    %v3682 = vld [vmem:[#allocation9 + $0x48] sm:$0xff]
    %v3683 = vld [vmem:[#allocation9 + $0x50] sm:$0xff]
    %v3684 = vld [vmem:[#allocation9 + $0x58] sm:$0xff]
    %v3685 = vld [vmem:[#allocation9 + $0x60] sm:$0xff]
    %v3686 = vld [vmem:[#allocation9 + $0x68] sm:$0xff]
    %v3687 = vld [vmem:[#allocation9 + $0x70] sm:$0xff]
    %v3688 = vld [vmem:[#allocation9 + $0x78] sm:$0xff]
    %v3689 = vld [vmem:[#allocation9 + $0x80] sm:$0xff]
    %v3690 = vld [vmem:[#allocation9 + $0x88] sm:$0xff]
    %v3691 = vld [vmem:[#allocation9 + $0x90] sm:$0xff]
    %v3692 = vld [vmem:[#allocation9 + $0x98] sm:$0xff]
    %v3693 = vld [vmem:[#allocation9 + $0xa0] sm:$0xff]
    %v3694 = vld [vmem:[#allocation9 + $0xa8] sm:$0xff]
    %v3695 = vld [vmem:[#allocation9 + $0xb0] sm:$0xff]
    %v3696 = vld [vmem:[#allocation9 + $0xb8] sm:$0xff]
    %v3697 = vld [vmem:[#allocation9 + $0xc0] sm:$0xff]
    %v3698 = vld [vmem:[#allocation9 + $0xc8] sm:$0xff]
    %v3699 = vld [vmem:[#allocation9 + $0xd0] sm:$0xff]
    %v3700 = vld [vmem:[#allocation9 + $0xd8] sm:$0xff]
    %v3701 = vld [vmem:[#allocation9 + $0xe0] sm:$0xff]
    %v3702 = vld [vmem:[#allocation9 + $0xe8] sm:$0xff]
    %v3703 = vld [vmem:[#allocation9 + $0xf0] sm:$0xff]
    %v3704 = vld [vmem:[#allocation9 + $0xf8] sm:$0xff]
    %v3705 = vpack.c.bf16 %v3334, %v3334
    %v3706 = vld [vmem:[#allocation11] sm:$0xff]
    %v3707 = vld [vmem:[#allocation11 + $0x8] sm:$0xff]
    %v3708 = vld [vmem:[#allocation11 + $0x10] sm:$0xff]
    %v3709 = vld [vmem:[#allocation11 + $0x18] sm:$0xff]
    %v3710 = vld [vmem:[#allocation11 + $0x20] sm:$0xff]
    %v3711 = vld [vmem:[#allocation11 + $0x28] sm:$0xff]
    %v3712 = vld [vmem:[#allocation11 + $0x30] sm:$0xff]
    %v3713 = vld [vmem:[#allocation11 + $0x38] sm:$0xff]
    %v3714 = vld [vmem:[#allocation11 + $0x40] sm:$0xff]
    %v3715 = vld [vmem:[#allocation11 + $0x48] sm:$0xff]
    %v3716 = vld [vmem:[#allocation11 + $0x50] sm:$0xff]
    %v3717 = vld [vmem:[#allocation11 + $0x58] sm:$0xff]
    %v3718 = vld [vmem:[#allocation11 + $0x60] sm:$0xff]
    %v3719 = vld [vmem:[#allocation11 + $0x68] sm:$0xff]
    %v3720 = vld [vmem:[#allocation11 + $0x70] sm:$0xff]
    %v3721 = vld [vmem:[#allocation11 + $0x78] sm:$0xff]
    %v3722 = vld [vmem:[#allocation11 + $0x80] sm:$0xff]
    %v3723 = vld [vmem:[#allocation11 + $0x88] sm:$0xff]
    %v3724 = vld [vmem:[#allocation11 + $0x90] sm:$0xff]
    %v3725 = vld [vmem:[#allocation11 + $0x98] sm:$0xff]
    %v3726 = vld [vmem:[#allocation11 + $0xa0] sm:$0xff]
    %v3727 = vld [vmem:[#allocation11 + $0xa8] sm:$0xff]
    %v3728 = vld [vmem:[#allocation11 + $0xb0] sm:$0xff]
    %v3729 = vld [vmem:[#allocation11 + $0xb8] sm:$0xff]
    %v3730 = vld [vmem:[#allocation11 + $0xc0] sm:$0xff]
    %v3731 = vld [vmem:[#allocation11 + $0xc8] sm:$0xff]
    %v3732 = vld [vmem:[#allocation11 + $0xd0] sm:$0xff]
    %v3733 = vld [vmem:[#allocation11 + $0xd8] sm:$0xff]
    %v3734 = vld [vmem:[#allocation11 + $0xe0] sm:$0xff]
    %v3735 = vld [vmem:[#allocation11 + $0xe8] sm:$0xff]
    %v3736 = vld [vmem:[#allocation11 + $0xf0] sm:$0xff]
    %v3737 = vld [vmem:[#allocation11 + $0xf8] sm:$0xff]
    %v3770 = vunpack.c.l.b16 %v3706
    %v3771 = vunpack.c.h.b16 %v3706
    %v3772 = vunpack.c.l.b16 %v3707
    %v3773 = vunpack.c.h.b16 %v3707
    %v3774 = vunpack.c.l.b16 %v3708
    %v3775 = vunpack.c.h.b16 %v3708
    %v3776 = vunpack.c.l.b16 %v3709
    %v3777 = vunpack.c.h.b16 %v3709
    %v3778 = vunpack.c.l.b16 %v3710
    %v3779 = vunpack.c.h.b16 %v3710
    %v3780 = vunpack.c.l.b16 %v3711
    %v3781 = vunpack.c.h.b16 %v3711
    %v3782 = vunpack.c.l.b16 %v3712
    %v3783 = vunpack.c.h.b16 %v3712
    %v3784 = vunpack.c.l.b16 %v3713
    %v3785 = vunpack.c.h.b16 %v3713
    %v3786 = vunpack.c.l.b16 %v3714
    %v3787 = vunpack.c.h.b16 %v3714
    %v3788 = vunpack.c.l.b16 %v3715
    %v3789 = vunpack.c.h.b16 %v3715
    %v3790 = vunpack.c.l.b16 %v3716
    %v3791 = vunpack.c.h.b16 %v3716
    %v3792 = vunpack.c.l.b16 %v3717
    %v3793 = vunpack.c.h.b16 %v3717
    %v3794 = vunpack.c.l.b16 %v3718
    %v3795 = vunpack.c.h.b16 %v3718
    %v3796 = vunpack.c.l.b16 %v3719
    %v3797 = vunpack.c.h.b16 %v3719
    %v3798 = vunpack.c.l.b16 %v3720
    %v3799 = vunpack.c.h.b16 %v3720
    %v3800 = vunpack.c.l.b16 %v3721
    %v3801 = vunpack.c.h.b16 %v3721
    %v3802 = vunpack.c.l.b16 %v3722
    %v3803 = vunpack.c.h.b16 %v3722
    %v3804 = vunpack.c.l.b16 %v3723
    %v3805 = vunpack.c.h.b16 %v3723
    %v3806 = vunpack.c.l.b16 %v3724
    %v3807 = vunpack.c.h.b16 %v3724
    %v3808 = vunpack.c.l.b16 %v3725
    %v3809 = vunpack.c.h.b16 %v3725
    %v3810 = vunpack.c.l.b16 %v3726
    %v3811 = vunpack.c.h.b16 %v3726
    %v3812 = vunpack.c.l.b16 %v3727
    %v3813 = vunpack.c.h.b16 %v3727
    %v3814 = vunpack.c.l.b16 %v3728
    %v3815 = vunpack.c.h.b16 %v3728
    %v3816 = vunpack.c.l.b16 %v3729
    %v3817 = vunpack.c.h.b16 %v3729
    %v3818 = vunpack.c.l.b16 %v3730
    %v3819 = vunpack.c.h.b16 %v3730
    %v3820 = vunpack.c.l.b16 %v3731
    %v3821 = vunpack.c.h.b16 %v3731
    %v3822 = vunpack.c.l.b16 %v3732
    %v3823 = vunpack.c.h.b16 %v3732
    %v3824 = vunpack.c.l.b16 %v3733
    %v3825 = vunpack.c.h.b16 %v3733
    %v3826 = vunpack.c.l.b16 %v3734
    %v3827 = vunpack.c.h.b16 %v3734
    %v3828 = vunpack.c.l.b16 %v3735
    %v3829 = vunpack.c.h.b16 %v3735
    %v3830 = vunpack.c.l.b16 %v3736
    %v3831 = vunpack.c.h.b16 %v3736
    %v3832 = vunpack.c.l.b16 %v3737
    %v3833 = vunpack.c.h.b16 %v3737
    %v3834 = vpack.c.b16 %v3774, %v3770
    %v3835 = vpack.c.b16 %v3775, %v3771
    %v3836 = vpack.c.b16 %v3776, %v3772
    %v3837 = vpack.c.b16 %v3777, %v3773
    %v3838 = vpack.c.b16 %v3782, %v3778
    %v3839 = vpack.c.b16 %v3783, %v3779
    %v3840 = vpack.c.b16 %v3784, %v3780
    %v3841 = vpack.c.b16 %v3785, %v3781
    %v3842 = vpack.c.b16 %v3790, %v3786
    %v3843 = vpack.c.b16 %v3791, %v3787
    %v3844 = vpack.c.b16 %v3792, %v3788
    %v3845 = vpack.c.b16 %v3793, %v3789
    %v3846 = vpack.c.b16 %v3798, %v3794
    %v3847 = vpack.c.b16 %v3799, %v3795
    %v3848 = vpack.c.b16 %v3800, %v3796
    %v3849 = vpack.c.b16 %v3801, %v3797
    %v3850 = vpack.c.b16 %v3806, %v3802
    %v3851 = vpack.c.b16 %v3807, %v3803
    %v3852 = vpack.c.b16 %v3808, %v3804
    %v3853 = vpack.c.b16 %v3809, %v3805
    %v3854 = vpack.c.b16 %v3814, %v3810
    %v3855 = vpack.c.b16 %v3815, %v3811
    %v3856 = vpack.c.b16 %v3816, %v3812
    %v3857 = vpack.c.b16 %v3817, %v3813
    %v3858 = vpack.c.b16 %v3822, %v3818
    %v3859 = vpack.c.b16 %v3823, %v3819
    %v3860 = vpack.c.b16 %v3824, %v3820
    %v3861 = vpack.c.b16 %v3825, %v3821
    %v3862 = vpack.c.b16 %v3830, %v3826
    %v3863 = vpack.c.b16 %v3831, %v3827
    %v3864 = vpack.c.b16 %v3832, %v3828
    %v3865 = vpack.c.b16 %v3833, %v3829
    %3898 = vmatprep.subr.bf16.mxu0 %v3835
    %3899 = vmatpush1.bf16.msra.mxu0 %v3834
    %3900 = vmatprep.subr.bf16.mxu0 %v3839
    %3901 = vmatpush1.bf16.msra.mxu0 %v3838
    %3902 = vmatprep.subr.bf16.mxu0 %v3843
    %3903 = vmatpush1.bf16.msra.mxu0 %v3842
    %3904 = vmatprep.subr.bf16.mxu0 %v3847
    %3905 = vmatpush1.bf16.msra.mxu0 %v3846
    %3906 = vmatprep.subr.bf16.mxu0 %v3851
    %3907 = vmatpush1.bf16.msra.mxu0 %v3850
    %3908 = vmatprep.subr.bf16.mxu0 %v3855
    %3909 = vmatpush1.bf16.msra.mxu0 %v3854
    %3910 = vmatprep.subr.bf16.mxu0 %v3859
    %3911 = vmatpush1.bf16.msra.mxu0 %v3858
    %3912 = vmatprep.subr.bf16.mxu0 %v3863
    %3913 = vmatpush1.bf16.msra.mxu0 %v3862
    %3914 = vmatprep.subr.bf16.mxu0 0
    %3915 = vmatpush1.bf16.msra.mxu0 0
    %3916 = vmatprep.subr.bf16.mxu0 0
    %3917 = vmatpush1.bf16.msra.mxu0 0
    %3918 = vmatprep.subr.bf16.mxu0 0
    %3919 = vmatpush1.bf16.msra.mxu0 0
    %3920 = vmatprep.subr.bf16.mxu0 0
    %3921 = vmatpush1.bf16.msra.mxu0 0
    %3922 = vmatprep.subr.bf16.mxu0 0
    %3923 = vmatpush1.bf16.msra.mxu0 0
    %3924 = vmatprep.subr.bf16.mxu0 0
    %3925 = vmatpush1.bf16.msra.mxu0 0
    %3926 = vmatprep.subr.bf16.mxu0 0
    %3927 = vmatpush1.bf16.msra.mxu0 0
    %3928 = vmatprep.subr.bf16.mxu0 0
    %3929 = vmatpush1.bf16.msra.mxu0 0
    %3930 = vmatprep.mubr.bf16.mxu0 0
    %3931 = vmatmul.mubr.bf16.gmra.mrb[0].mxu0 %v3705
    %v3932 = vpop.f32.mrb[0].mxu0
    %v3933 = vadd.f32 0.0, %v3932
    %v3934 = vpop.f32.mrb[0].mxu0
    %v3935 = vadd.f32 0.0, %v3934
    %v3936 = vpop.f32.mrb[0].mxu0
    %v3937 = vpop.f32.mrb[0].mxu0
    %3938 = vdwg.mxu0
    %3939 = vmatprep.subr.bf16.mxu0 %v3837
    %3940 = vmatpush1.bf16.msra.mxu0 %v3836
    %3941 = vmatprep.subr.bf16.mxu0 %v3841
    %3942 = vmatpush1.bf16.msra.mxu0 %v3840
    %3943 = vmatprep.subr.bf16.mxu0 %v3845
    %3944 = vmatpush1.bf16.msra.mxu0 %v3844
    %3945 = vmatprep.subr.bf16.mxu0 %v3849
    %3946 = vmatpush1.bf16.msra.mxu0 %v3848
    %3947 = vmatprep.subr.bf16.mxu0 %v3853
    %3948 = vmatpush1.bf16.msra.mxu0 %v3852
    %3949 = vmatprep.subr.bf16.mxu0 %v3857
    %3950 = vmatpush1.bf16.msra.mxu0 %v3856
    %3951 = vmatprep.subr.bf16.mxu0 %v3861
    %3952 = vmatpush1.bf16.msra.mxu0 %v3860
    %3953 = vmatprep.subr.bf16.mxu0 %v3865
    %3954 = vmatpush1.bf16.msra.mxu0 %v3864
    %3955 = vmatprep.subr.bf16.mxu0 0
    %3956 = vmatpush1.bf16.msra.mxu0 0
    %3957 = vmatprep.subr.bf16.mxu0 0
    %3958 = vmatpush1.bf16.msra.mxu0 0
    %3959 = vmatprep.subr.bf16.mxu0 0
    %3960 = vmatpush1.bf16.msra.mxu0 0
    %3961 = vmatprep.subr.bf16.mxu0 0
    %3962 = vmatpush1.bf16.msra.mxu0 0
    %3963 = vmatprep.subr.bf16.mxu0 0
    %3964 = vmatpush1.bf16.msra.mxu0 0
    %3965 = vmatprep.subr.bf16.mxu0 0
    %3966 = vmatpush1.bf16.msra.mxu0 0
    %3967 = vmatprep.subr.bf16.mxu0 0
    %3968 = vmatpush1.bf16.msra.mxu0 0
    %3969 = vmatprep.subr.bf16.mxu0 0
    %3970 = vmatpush1.bf16.msra.mxu0 0
    %3971 = vmatprep.mubr.bf16.mxu0 0
    %3972 = vmatmul.mubr.bf16.gmra.mrb[0].mxu0 %v3705
    %v3973 = vpop.f32.mrb[0].mxu0
    %v3974 = vadd.f32 0.0, %v3973
    %v3975 = vpop.f32.mrb[0].mxu0
    %v3976 = vadd.f32 0.0, %v3975
    %v3977 = vpop.f32.mrb[0].mxu0
    %v3978 = vpop.f32.mrb[0].mxu0
    %3979 = vdwg.mxu0
    %v4012 = vunpack.c.l.b16 %v3673
    %v4013 = vunpack.c.h.b16 %v3673
    %v4014 = vunpack.c.l.b16 %v3674
    %v4015 = vunpack.c.h.b16 %v3674
    %v4016 = vunpack.c.l.b16 %v3675
    %v4017 = vunpack.c.h.b16 %v3675
    %v4018 = vunpack.c.l.b16 %v3676
    %v4019 = vunpack.c.h.b16 %v3676
    %v4020 = vunpack.c.l.b16 %v3677
    %v4021 = vunpack.c.h.b16 %v3677
    %v4022 = vunpack.c.l.b16 %v3678
    %v4023 = vunpack.c.h.b16 %v3678
    %v4024 = vunpack.c.l.b16 %v3679
    %v4025 = vunpack.c.h.b16 %v3679
    %v4026 = vunpack.c.l.b16 %v3680
    %v4027 = vunpack.c.h.b16 %v3680
    %v4028 = vunpack.c.l.b16 %v3681
    %v4029 = vunpack.c.h.b16 %v3681
    %v4030 = vunpack.c.l.b16 %v3682
    %v4031 = vunpack.c.h.b16 %v3682
    %v4032 = vunpack.c.l.b16 %v3683
    %v4033 = vunpack.c.h.b16 %v3683
    %v4034 = vunpack.c.l.b16 %v3684
    %v4035 = vunpack.c.h.b16 %v3684
    %v4036 = vunpack.c.l.b16 %v3685
    %v4037 = vunpack.c.h.b16 %v3685
    %v4038 = vunpack.c.l.b16 %v3686
    %v4039 = vunpack.c.h.b16 %v3686
    %v4040 = vunpack.c.l.b16 %v3687
    %v4041 = vunpack.c.h.b16 %v3687
    %v4042 = vunpack.c.l.b16 %v3688
    %v4043 = vunpack.c.h.b16 %v3688
    %v4044 = vunpack.c.l.b16 %v3689
    %v4045 = vunpack.c.h.b16 %v3689
    %v4046 = vunpack.c.l.b16 %v3690
    %v4047 = vunpack.c.h.b16 %v3690
    %v4048 = vunpack.c.l.b16 %v3691
    %v4049 = vunpack.c.h.b16 %v3691
    %v4050 = vunpack.c.l.b16 %v3692
    %v4051 = vunpack.c.h.b16 %v3692
    %v4052 = vunpack.c.l.b16 %v3693
    %v4053 = vunpack.c.h.b16 %v3693
    %v4054 = vunpack.c.l.b16 %v3694
    %v4055 = vunpack.c.h.b16 %v3694
    %v4056 = vunpack.c.l.b16 %v3695
    %v4057 = vunpack.c.h.b16 %v3695
    %v4058 = vunpack.c.l.b16 %v3696
    %v4059 = vunpack.c.h.b16 %v3696
    %v4060 = vunpack.c.l.b16 %v3697
    %v4061 = vunpack.c.h.b16 %v3697
    %v4062 = vunpack.c.l.b16 %v3698
    %v4063 = vunpack.c.h.b16 %v3698
    %v4064 = vunpack.c.l.b16 %v3699
    %v4065 = vunpack.c.h.b16 %v3699
    %v4066 = vunpack.c.l.b16 %v3700
    %v4067 = vunpack.c.h.b16 %v3700
    %v4068 = vunpack.c.l.b16 %v3701
    %v4069 = vunpack.c.h.b16 %v3701
    %v4070 = vunpack.c.l.b16 %v3702
    %v4071 = vunpack.c.h.b16 %v3702
    %v4072 = vunpack.c.l.b16 %v3703
    %v4073 = vunpack.c.h.b16 %v3703
    %v4074 = vunpack.c.l.b16 %v3704
    %v4075 = vunpack.c.h.b16 %v3704
    %v4076 = vpack.c.b16 %v4016, %v4012
    %v4077 = vpack.c.b16 %v4017, %v4013
    %v4078 = vpack.c.b16 %v4018, %v4014
    %v4079 = vpack.c.b16 %v4019, %v4015
    %v4080 = vpack.c.b16 %v4024, %v4020
    %v4081 = vpack.c.b16 %v4025, %v4021
    %v4082 = vpack.c.b16 %v4026, %v4022
    %v4083 = vpack.c.b16 %v4027, %v4023
    %v4084 = vpack.c.b16 %v4032, %v4028
    %v4085 = vpack.c.b16 %v4033, %v4029
    %v4086 = vpack.c.b16 %v4034, %v4030
    %v4087 = vpack.c.b16 %v4035, %v4031
    %v4088 = vpack.c.b16 %v4040, %v4036
    %v4089 = vpack.c.b16 %v4041, %v4037
    %v4090 = vpack.c.b16 %v4042, %v4038
    %v4091 = vpack.c.b16 %v4043, %v4039
    %v4092 = vpack.c.b16 %v4048, %v4044
    %v4093 = vpack.c.b16 %v4049, %v4045
    %v4094 = vpack.c.b16 %v4050, %v4046
    %v4095 = vpack.c.b16 %v4051, %v4047
    %v4096 = vpack.c.b16 %v4056, %v4052
    %v4097 = vpack.c.b16 %v4057, %v4053
    %v4098 = vpack.c.b16 %v4058, %v4054
    %v4099 = vpack.c.b16 %v4059, %v4055
    %v4100 = vpack.c.b16 %v4064, %v4060
    %v4101 = vpack.c.b16 %v4065, %v4061
    %v4102 = vpack.c.b16 %v4066, %v4062
    %v4103 = vpack.c.b16 %v4067, %v4063
    %v4104 = vpack.c.b16 %v4072, %v4068
    %v4105 = vpack.c.b16 %v4073, %v4069
    %v4106 = vpack.c.b16 %v4074, %v4070
    %v4107 = vpack.c.b16 %v4075, %v4071
    %4140 = vmatprep.subr.bf16.mxu0 %v4077
    %4141 = vmatpush1.bf16.msra.mxu0 %v4076
    %4142 = vmatprep.subr.bf16.mxu0 %v4081
    %4143 = vmatpush1.bf16.msra.mxu0 %v4080
    %4144 = vmatprep.subr.bf16.mxu0 %v4085
    %4145 = vmatpush1.bf16.msra.mxu0 %v4084
    %4146 = vmatprep.subr.bf16.mxu0 %v4089
    %4147 = vmatpush1.bf16.msra.mxu0 %v4088
    %4148 = vmatprep.subr.bf16.mxu0 %v4093
    %4149 = vmatpush1.bf16.msra.mxu0 %v4092
    %4150 = vmatprep.subr.bf16.mxu0 %v4097
    %4151 = vmatpush1.bf16.msra.mxu0 %v4096
    %4152 = vmatprep.subr.bf16.mxu0 %v4101
    %4153 = vmatpush1.bf16.msra.mxu0 %v4100
    %4154 = vmatprep.subr.bf16.mxu0 %v4105
    %4155 = vmatpush1.bf16.msra.mxu0 %v4104
    %4156 = vmatprep.subr.bf16.mxu0 0
    %4157 = vmatpush1.bf16.msra.mxu0 0
    %4158 = vmatprep.subr.bf16.mxu0 0
    %4159 = vmatpush1.bf16.msra.mxu0 0
    %4160 = vmatprep.subr.bf16.mxu0 0
    %4161 = vmatpush1.bf16.msra.mxu0 0
    %4162 = vmatprep.subr.bf16.mxu0 0
    %4163 = vmatpush1.bf16.msra.mxu0 0
    %4164 = vmatprep.subr.bf16.mxu0 0
    %4165 = vmatpush1.bf16.msra.mxu0 0
    %4166 = vmatprep.subr.bf16.mxu0 0
    %4167 = vmatpush1.bf16.msra.mxu0 0
    %4168 = vmatprep.subr.bf16.mxu0 0
    %4169 = vmatpush1.bf16.msra.mxu0 0
    %4170 = vmatprep.subr.bf16.mxu0 0
    %4171 = vmatpush1.bf16.msra.mxu0 0
    %4172 = vmatprep.mubr.bf16.mxu0 0
    %4173 = vmatmul.mubr.bf16.gmra.mrb[0].mxu0 %v3672
    %v4174 = vpop.f32.mrb[0].mxu0
    %v4175 = vadd.f32 %v3933, %v4174
    %v4176 = vpop.f32.mrb[0].mxu0
    %v4177 = vadd.f32 %v3935, %v4176
    %v4178 = vpop.f32.mrb[0].mxu0
    %v4179 = vpop.f32.mrb[0].mxu0
    %4180 = vdwg.mxu0
    %4181 = vmatprep.subr.bf16.mxu0 %v4079
    %4182 = vmatpush1.bf16.msra.mxu0 %v4078
    %4183 = vmatprep.subr.bf16.mxu0 %v4083
    %4184 = vmatpush1.bf16.msra.mxu0 %v4082
    %4185 = vmatprep.subr.bf16.mxu0 %v4087
    %4186 = vmatpush1.bf16.msra.mxu0 %v4086
    %4187 = vmatprep.subr.bf16.mxu0 %v4091
    %4188 = vmatpush1.bf16.msra.mxu0 %v4090
    %4189 = vmatprep.subr.bf16.mxu0 %v4095
    %4190 = vmatpush1.bf16.msra.mxu0 %v4094
    %4191 = vmatprep.subr.bf16.mxu0 %v4099
    %4192 = vmatpush1.bf16.msra.mxu0 %v4098
    %4193 = vmatprep.subr.bf16.mxu0 %v4103
    %4194 = vmatpush1.bf16.msra.mxu0 %v4102
    %4195 = vmatprep.subr.bf16.mxu0 %v4107
    %4196 = vmatpush1.bf16.msra.mxu0 %v4106
    %4197 = vmatprep.subr.bf16.mxu0 0
    %4198 = vmatpush1.bf16.msra.mxu0 0
    %4199 = vmatprep.subr.bf16.mxu0 0
    %4200 = vmatpush1.bf16.msra.mxu0 0
    %4201 = vmatprep.subr.bf16.mxu0 0
    %4202 = vmatpush1.bf16.msra.mxu0 0
    %4203 = vmatprep.subr.bf16.mxu0 0
    %4204 = vmatpush1.bf16.msra.mxu0 0
    %4205 = vmatprep.subr.bf16.mxu0 0
    %4206 = vmatpush1.bf16.msra.mxu0 0
    %4207 = vmatprep.subr.bf16.mxu0 0
    %4208 = vmatpush1.bf16.msra.mxu0 0
    %4209 = vmatprep.subr.bf16.mxu0 0
    %4210 = vmatpush1.bf16.msra.mxu0 0
    %4211 = vmatprep.subr.bf16.mxu0 0
    %4212 = vmatpush1.bf16.msra.mxu0 0
    %4213 = vmatprep.mubr.bf16.mxu0 0
    %4214 = vmatmul.mubr.bf16.gmra.mrb[0].mxu0 %v3672
    %v4215 = vpop.f32.mrb[0].mxu0
    %v4216 = vadd.f32 %v3974, %v4215
    %v4217 = vpop.f32.mrb[0].mxu0
    %v4218 = vadd.f32 %v3976, %v4217
    %v4219 = vpop.f32.mrb[0].mxu0
    %v4220 = vpop.f32.mrb[0].mxu0
    %4221 = vdwg.mxu0
    %v4222 = vld [vmem:[%s6] sm:$0xf]
    %v4224 = vlaneseq
    %v4225 = vshrl.u32 %v4224, 7
    %v4226 = vsub.s32 0, %v4225
    %v4227 = vrot.slane %v4222, %v4226
    %v4228 = vlaneseq
    %v4229 = vshrl.u32 %v4228, 7
    %v4230 = vsub.s32 1, %v4229
    %v4231 = vrot.slane %v4222, %v4230
    %v4232 = vlaneseq
    %v4233 = vshrl.u32 %v4232, 7
    %v4234 = vsub.s32 2, %v4233
    %v4235 = vrot.slane %v4222, %v4234
    %v4236 = vlaneseq
    %v4237 = vshrl.u32 %v4236, 7
    %v4238 = vsub.s32 3, %v4237
    %v4239 = vrot.slane %v4222, %v4238
    %v4244 = vadd.f32 %v4175, %v4227
    %v4245 = vadd.f32 %v4177, %v4231
    %v4246 = vadd.f32 %v4216, %v4235
    %v4247 = vadd.f32 %v4218, %v4239
    %v4248 = vxor.u32 %v4244, 2147483648
    %v4249 = vmul.f32 %v4248, 1.442695
    %v4250 = vpow.pop %v4249
    %v4251 = vadd.f32 %v4250, 1.0
    %v4252 = vrcp.pop %v4251
    %v4253 = vmul.f32 1.0, %v4252
    %v4254 = vxor.u32 %v4245, 2147483648
    %v4255 = vmul.f32 %v4254, 1.442695
    %v4256 = vpow.pop %v4255
    %v4257 = vadd.f32 %v4256, 1.0
    %v4258 = vrcp.pop %v4257
    %v4259 = vmul.f32 1.0, %v4258
    %v4260 = vtanh.pop %v4246
    %v4261 = vxor.u32 %v4247, 2147483648
    %v4262 = vmul.f32 %v4261, 1.442695
    %v4263 = vpow.pop %v4262
    %v4264 = vadd.f32 %v4263, 1.0
    %v4265 = vrcp.pop %v4264
    %v4266 = vmul.f32 1.0, %v4265
    %v4267 = vmul.f32 %v4259, %v3335
    %v4268 = vmul.f32 %v4253, %v4260
    %v4269 = vadd.f32 %v4267, %v4268
    %v4270 = vtanh.pop %v4269
    %v4271 = vmul.f32 %v4266, %v4270
    %4272 = vst [vmem:[#allocation3] sm:$0xff] %v3671
    %4273 = vst [vmem:[#allocation4] sm:$0xff] %v3669
    %4274 = vst [vmem:[#allocation5] sm:$0xff] %v4271
    %4275 = vst [vmem:[#allocation6] sm:$0xff] %v4269
    %s4276 = scalar_lea.vmem %s11, 24
    %4277 = vst [vmem:[%s4276] sm:$0xff] %v4271
    %v4278 = vld [vmem:[#allocation3] sm:$0xff]
    %v4279 = vld [vmem:[#allocation4] sm:$0xff]
    %v4280 = vld [vmem:[#allocation5] sm:$0xff]
    %v4281 = vld [vmem:[#allocation6] sm:$0xff]
    %s4282 = smul.u32 4, 4
    %s4283 = smul.addr %s4282, 8
    %s4284 = scalar_lea.vmem [#allocation2], %s4283
    %v4285 = vld [vmem:[%s4284] sm:$0xff]
    %v4286 = vld [vmem:[%s4284 + $0x8] sm:$0xff]
    %v4287 = vld [vmem:[%s4284 + $0x10] sm:$0xff]
    %v4288 = vld [vmem:[%s4284 + $0x18] sm:$0xff]
    %v4289 = vpack.c.bf16 %v4278, %v4278
    %v4290 = vld [vmem:[#allocation7] sm:$0xff]
    %v4291 = vld [vmem:[#allocation7 + $0x8] sm:$0xff]
    %v4292 = vld [vmem:[#allocation7 + $0x10] sm:$0xff]
    %v4293 = vld [vmem:[#allocation7 + $0x18] sm:$0xff]
    %v4294 = vld [vmem:[#allocation7 + $0x20] sm:$0xff]
    %v4295 = vld [vmem:[#allocation7 + $0x28] sm:$0xff]
    %v4296 = vld [vmem:[#allocation7 + $0x30] sm:$0xff]
    %v4297 = vld [vmem:[#allocation7 + $0x38] sm:$0xff]
    %v4298 = vld [vmem:[#allocation7 + $0x40] sm:$0xff]
    %v4299 = vld [vmem:[#allocation7 + $0x48] sm:$0xff]
    %v4300 = vld [vmem:[#allocation7 + $0x50] sm:$0xff]
    %v4301 = vld [vmem:[#allocation7 + $0x58] sm:$0xff]
    %v4302 = vld [vmem:[#allocation7 + $0x60] sm:$0xff]
    %v4303 = vld [vmem:[#allocation7 + $0x68] sm:$0xff]
    %v4304 = vld [vmem:[#allocation7 + $0x70] sm:$0xff]
    %v4305 = vld [vmem:[#allocation7 + $0x78] sm:$0xff]
    %v4306 = vld [vmem:[#allocation7 + $0x80] sm:$0xff]
    %v4307 = vld [vmem:[#allocation7 + $0x88] sm:$0xff]
    %v4308 = vld [vmem:[#allocation7 + $0x90] sm:$0xff]
    %v4309 = vld [vmem:[#allocation7 + $0x98] sm:$0xff]
    %v4310 = vld [vmem:[#allocation7 + $0xa0] sm:$0xff]
    %v4311 = vld [vmem:[#allocation7 + $0xa8] sm:$0xff]
    %v4312 = vld [vmem:[#allocation7 + $0xb0] sm:$0xff]
    %v4313 = vld [vmem:[#allocation7 + $0xb8] sm:$0xff]
    %v4314 = vld [vmem:[#allocation7 + $0xc0] sm:$0xff]
    %v4315 = vld [vmem:[#allocation7 + $0xc8] sm:$0xff]
    %v4316 = vld [vmem:[#allocation7 + $0xd0] sm:$0xff]
    %v4317 = vld [vmem:[#allocation7 + $0xd8] sm:$0xff]
    %v4318 = vld [vmem:[#allocation7 + $0xe0] sm:$0xff]
    %v4319 = vld [vmem:[#allocation7 + $0xe8] sm:$0xff]
    %v4320 = vld [vmem:[#allocation7 + $0xf0] sm:$0xff]
    %v4321 = vld [vmem:[#allocation7 + $0xf8] sm:$0xff]
    %v4354 = vunpack.c.l.b16 %v4290
    %v4355 = vunpack.c.h.b16 %v4290
    %v4356 = vunpack.c.l.b16 %v4291
    %v4357 = vunpack.c.h.b16 %v4291
    %v4358 = vunpack.c.l.b16 %v4292
    %v4359 = vunpack.c.h.b16 %v4292
    %v4360 = vunpack.c.l.b16 %v4293
    %v4361 = vunpack.c.h.b16 %v4293
    %v4362 = vunpack.c.l.b16 %v4294
    %v4363 = vunpack.c.h.b16 %v4294
    %v4364 = vunpack.c.l.b16 %v4295
    %v4365 = vunpack.c.h.b16 %v4295
    %v4366 = vunpack.c.l.b16 %v4296
    %v4367 = vunpack.c.h.b16 %v4296
    %v4368 = vunpack.c.l.b16 %v4297
    %v4369 = vunpack.c.h.b16 %v4297
    %v4370 = vunpack.c.l.b16 %v4298
    %v4371 = vunpack.c.h.b16 %v4298
    %v4372 = vunpack.c.l.b16 %v4299
    %v4373 = vunpack.c.h.b16 %v4299
    %v4374 = vunpack.c.l.b16 %v4300
    %v4375 = vunpack.c.h.b16 %v4300
    %v4376 = vunpack.c.l.b16 %v4301
    %v4377 = vunpack.c.h.b16 %v4301
    %v4378 = vunpack.c.l.b16 %v4302
    %v4379 = vunpack.c.h.b16 %v4302
    %v4380 = vunpack.c.l.b16 %v4303
    %v4381 = vunpack.c.h.b16 %v4303
    %v4382 = vunpack.c.l.b16 %v4304
    %v4383 = vunpack.c.h.b16 %v4304
    %v4384 = vunpack.c.l.b16 %v4305
    %v4385 = vunpack.c.h.b16 %v4305
    %v4386 = vunpack.c.l.b16 %v4306
    %v4387 = vunpack.c.h.b16 %v4306
    %v4388 = vunpack.c.l.b16 %v4307
    %v4389 = vunpack.c.h.b16 %v4307
    %v4390 = vunpack.c.l.b16 %v4308
    %v4391 = vunpack.c.h.b16 %v4308
    %v4392 = vunpack.c.l.b16 %v4309
    %v4393 = vunpack.c.h.b16 %v4309
    %v4394 = vunpack.c.l.b16 %v4310
    %v4395 = vunpack.c.h.b16 %v4310
    %v4396 = vunpack.c.l.b16 %v4311
    %v4397 = vunpack.c.h.b16 %v4311
    %v4398 = vunpack.c.l.b16 %v4312
    %v4399 = vunpack.c.h.b16 %v4312
    %v4400 = vunpack.c.l.b16 %v4313
    %v4401 = vunpack.c.h.b16 %v4313
    %v4402 = vunpack.c.l.b16 %v4314
    %v4403 = vunpack.c.h.b16 %v4314
    %v4404 = vunpack.c.l.b16 %v4315
    %v4405 = vunpack.c.h.b16 %v4315
    %v4406 = vunpack.c.l.b16 %v4316
    %v4407 = vunpack.c.h.b16 %v4316
    %v4408 = vunpack.c.l.b16 %v4317
    %v4409 = vunpack.c.h.b16 %v4317
    %v4410 = vunpack.c.l.b16 %v4318
    %v4411 = vunpack.c.h.b16 %v4318
    %v4412 = vunpack.c.l.b16 %v4319
    %v4413 = vunpack.c.h.b16 %v4319
    %v4414 = vunpack.c.l.b16 %v4320
    %v4415 = vunpack.c.h.b16 %v4320
    %v4416 = vunpack.c.l.b16 %v4321
    %v4417 = vunpack.c.h.b16 %v4321
    %v4418 = vpack.c.b16 %v4358, %v4354
    %v4419 = vpack.c.b16 %v4359, %v4355
    %v4420 = vpack.c.b16 %v4360, %v4356
    %v4421 = vpack.c.b16 %v4361, %v4357
    %v4422 = vpack.c.b16 %v4366, %v4362
    %v4423 = vpack.c.b16 %v4367, %v4363
    %v4424 = vpack.c.b16 %v4368, %v4364
    %v4425 = vpack.c.b16 %v4369, %v4365
    %v4426 = vpack.c.b16 %v4374, %v4370
    %v4427 = vpack.c.b16 %v4375, %v4371
    %v4428 = vpack.c.b16 %v4376, %v4372
    %v4429 = vpack.c.b16 %v4377, %v4373
    %v4430 = vpack.c.b16 %v4382, %v4378
    %v4431 = vpack.c.b16 %v4383, %v4379
    %v4432 = vpack.c.b16 %v4384, %v4380
    %v4433 = vpack.c.b16 %v4385, %v4381
    %v4434 = vpack.c.b16 %v4390, %v4386
    %v4435 = vpack.c.b16 %v4391, %v4387
    %v4436 = vpack.c.b16 %v4392, %v4388
    %v4437 = vpack.c.b16 %v4393, %v4389
    %v4438 = vpack.c.b16 %v4398, %v4394
    %v4439 = vpack.c.b16 %v4399, %v4395
    %v4440 = vpack.c.b16 %v4400, %v4396
    %v4441 = vpack.c.b16 %v4401, %v4397
    %v4442 = vpack.c.b16 %v4406, %v4402
    %v4443 = vpack.c.b16 %v4407, %v4403
    %v4444 = vpack.c.b16 %v4408, %v4404
    %v4445 = vpack.c.b16 %v4409, %v4405
    %v4446 = vpack.c.b16 %v4414, %v4410
    %v4447 = vpack.c.b16 %v4415, %v4411
    %v4448 = vpack.c.b16 %v4416, %v4412
    %v4449 = vpack.c.b16 %v4417, %v4413
    %4482 = vmatprep.subr.bf16.mxu0 %v4419
    %4483 = vmatpush1.bf16.msra.mxu0 %v4418
    %4484 = vmatprep.subr.bf16.mxu0 %v4423
    %4485 = vmatpush1.bf16.msra.mxu0 %v4422
    %4486 = vmatprep.subr.bf16.mxu0 %v4427
    %4487 = vmatpush1.bf16.msra.mxu0 %v4426
    %4488 = vmatprep.subr.bf16.mxu0 %v4431
    %4489 = vmatpush1.bf16.msra.mxu0 %v4430
    %4490 = vmatprep.subr.bf16.mxu0 %v4435
    %4491 = vmatpush1.bf16.msra.mxu0 %v4434
    %4492 = vmatprep.subr.bf16.mxu0 %v4439
    %4493 = vmatpush1.bf16.msra.mxu0 %v4438
    %4494 = vmatprep.subr.bf16.mxu0 %v4443
    %4495 = vmatpush1.bf16.msra.mxu0 %v4442
    %4496 = vmatprep.subr.bf16.mxu0 %v4447
    %4497 = vmatpush1.bf16.msra.mxu0 %v4446
    %4498 = vmatprep.subr.bf16.mxu0 0
    %4499 = vmatpush1.bf16.msra.mxu0 0
    %4500 = vmatprep.subr.bf16.mxu0 0
    %4501 = vmatpush1.bf16.msra.mxu0 0
    %4502 = vmatprep.subr.bf16.mxu0 0
    %4503 = vmatpush1.bf16.msra.mxu0 0
    %4504 = vmatprep.subr.bf16.mxu0 0
    %4505 = vmatpush1.bf16.msra.mxu0 0
    %4506 = vmatprep.subr.bf16.mxu0 0
    %4507 = vmatpush1.bf16.msra.mxu0 0
    %4508 = vmatprep.subr.bf16.mxu0 0
    %4509 = vmatpush1.bf16.msra.mxu0 0
    %4510 = vmatprep.subr.bf16.mxu0 0
    %4511 = vmatpush1.bf16.msra.mxu0 0
    %4512 = vmatprep.subr.bf16.mxu0 0
    %4513 = vmatpush1.bf16.msra.mxu0 0
    %4514 = vmatprep.mubr.bf16.mxu0 0
    %4515 = vmatmul.mubr.bf16.gmra.mrb[0].mxu0 %v4289
    %v4516 = vpop.f32.mrb[0].mxu0
    %v4517 = vadd.f32 0.0, %v4516
    %v4518 = vpop.f32.mrb[0].mxu0
    %v4519 = vadd.f32 0.0, %v4518
    %v4520 = vpop.f32.mrb[0].mxu0
    %v4521 = vpop.f32.mrb[0].mxu0
    %4522 = vdwg.mxu0
    %4523 = vmatprep.subr.bf16.mxu0 %v4421
    %4524 = vmatpush1.bf16.msra.mxu0 %v4420
    %4525 = vmatprep.subr.bf16.mxu0 %v4425
    %4526 = vmatpush1.bf16.msra.mxu0 %v4424
    %4527 = vmatprep.subr.bf16.mxu0 %v4429
    %4528 = vmatpush1.bf16.msra.mxu0 %v4428
    %4529 = vmatprep.subr.bf16.mxu0 %v4433
    %4530 = vmatpush1.bf16.msra.mxu0 %v4432
    %4531 = vmatprep.subr.bf16.mxu0 %v4437
    %4532 = vmatpush1.bf16.msra.mxu0 %v4436
    %4533 = vmatprep.subr.bf16.mxu0 %v4441
    %4534 = vmatpush1.bf16.msra.mxu0 %v4440
    %4535 = vmatprep.subr.bf16.mxu0 %v4445
    %4536 = vmatpush1.bf16.msra.mxu0 %v4444
    %4537 = vmatprep.subr.bf16.mxu0 %v4449
    %4538 = vmatpush1.bf16.msra.mxu0 %v4448
    %4539 = vmatprep.subr.bf16.mxu0 0
    %4540 = vmatpush1.bf16.msra.mxu0 0
    %4541 = vmatprep.subr.bf16.mxu0 0
    %4542 = vmatpush1.bf16.msra.mxu0 0
    %4543 = vmatprep.subr.bf16.mxu0 0
    %4544 = vmatpush1.bf16.msra.mxu0 0
    %4545 = vmatprep.subr.bf16.mxu0 0
    %4546 = vmatpush1.bf16.msra.mxu0 0
    %4547 = vmatprep.subr.bf16.mxu0 0
    %4548 = vmatpush1.bf16.msra.mxu0 0
    %4549 = vmatprep.subr.bf16.mxu0 0
    %4550 = vmatpush1.bf16.msra.mxu0 0
    %4551 = vmatprep.subr.bf16.mxu0 0
    %4552 = vmatpush1.bf16.msra.mxu0 0
    %4553 = vmatprep.subr.bf16.mxu0 0
    %4554 = vmatpush1.bf16.msra.mxu0 0
    %4555 = vmatprep.mubr.bf16.mxu0 0
    %4556 = vmatmul.mubr.bf16.gmra.mrb[0].mxu0 %v4289
    %v4557 = vpop.f32.mrb[0].mxu0
    %v4558 = vadd.f32 0.0, %v4557
    %v4559 = vpop.f32.mrb[0].mxu0
    %v4560 = vadd.f32 0.0, %v4559
    %v4561 = vpop.f32.mrb[0].mxu0
    %v4562 = vpop.f32.mrb[0].mxu0
    %4563 = vdwg.mxu0
    %v4564 = vadd.f32 %v4285, %v4517
    %v4565 = vadd.f32 %v4286, %v4519
    %v4566 = vadd.f32 %v4287, %v4558
    %v4567 = vadd.f32 %v4288, %v4560
    %v4568 = vld [vmem:[%s3] sm:$0xf]
    %v4570 = vlaneseq
    %v4571 = vshrl.u32 %v4570, 7
    %v4572 = vsub.s32 0, %v4571
    %v4573 = vrot.slane %v4568, %v4572
    %v4574 = vlaneseq
    %v4575 = vshrl.u32 %v4574, 7
    %v4576 = vsub.s32 1, %v4575
    %v4577 = vrot.slane %v4568, %v4576
    %v4578 = vlaneseq
    %v4579 = vshrl.u32 %v4578, 7
    %v4580 = vsub.s32 2, %v4579
    %v4581 = vrot.slane %v4568, %v4580
    %v4582 = vlaneseq
    %v4583 = vshrl.u32 %v4582, 7
    %v4584 = vsub.s32 3, %v4583
    %v4585 = vrot.slane %v4568, %v4584
    %v4590 = vadd.f32 %v4564, %v4573
    %v4591 = vadd.f32 %v4565, %v4577
    %v4592 = vadd.f32 %v4566, %v4581
    %v4593 = vadd.f32 %v4567, %v4585
    %v4594 = vxor.u32 %v4590, 2147483648
    %v4595 = vmul.f32 %v4594, 1.442695
    %v4596 = vpow.pop %v4595
    %v4597 = vadd.f32 %v4596, 1.0
    %v4598 = vrcp.pop %v4597
    %v4599 = vmul.f32 1.0, %v4598
    %v4600 = vxor.u32 %v4591, 2147483648
    %v4601 = vmul.f32 %v4600, 1.442695
    %v4602 = vpow.pop %v4601
    %v4603 = vadd.f32 %v4602, 1.0
    %v4604 = vrcp.pop %v4603
    %v4605 = vmul.f32 1.0, %v4604
    %v4606 = vtanh.pop %v4592
    %v4607 = vxor.u32 %v4593, 2147483648
    %v4608 = vmul.f32 %v4607, 1.442695
    %v4609 = vpow.pop %v4608
    %v4610 = vadd.f32 %v4609, 1.0
    %v4611 = vrcp.pop %v4610
    %v4612 = vmul.f32 1.0, %v4611
    %v4613 = vmul.f32 %v4605, %v4279
    %v4614 = vmul.f32 %v4599, %v4606
    %v4615 = vadd.f32 %v4613, %v4614
    %v4616 = vtanh.pop %v4615
    %v4617 = vmul.f32 %v4612, %v4616
    %v4618 = vpack.c.bf16 %v4617, %v4617
    %v4619 = vld [vmem:[#allocation9] sm:$0xff]
    %v4620 = vld [vmem:[#allocation9 + $0x8] sm:$0xff]
    %v4621 = vld [vmem:[#allocation9 + $0x10] sm:$0xff]
    %v4622 = vld [vmem:[#allocation9 + $0x18] sm:$0xff]
    %v4623 = vld [vmem:[#allocation9 + $0x20] sm:$0xff]
    %v4624 = vld [vmem:[#allocation9 + $0x28] sm:$0xff]
    %v4625 = vld [vmem:[#allocation9 + $0x30] sm:$0xff]
    %v4626 = vld [vmem:[#allocation9 + $0x38] sm:$0xff]
    %v4627 = vld [vmem:[#allocation9 + $0x40] sm:$0xff]
    %v4628 = vld [vmem:[#allocation9 + $0x48] sm:$0xff]
    %v4629 = vld [vmem:[#allocation9 + $0x50] sm:$0xff]
    %v4630 = vld [vmem:[#allocation9 + $0x58] sm:$0xff]
    %v4631 = vld [vmem:[#allocation9 + $0x60] sm:$0xff]
    %v4632 = vld [vmem:[#allocation9 + $0x68] sm:$0xff]
    %v4633 = vld [vmem:[#allocation9 + $0x70] sm:$0xff]
    %v4634 = vld [vmem:[#allocation9 + $0x78] sm:$0xff]
    %v4635 = vld [vmem:[#allocation9 + $0x80] sm:$0xff]
    %v4636 = vld [vmem:[#allocation9 + $0x88] sm:$0xff]
    %v4637 = vld [vmem:[#allocation9 + $0x90] sm:$0xff]
    %v4638 = vld [vmem:[#allocation9 + $0x98] sm:$0xff]
    %v4639 = vld [vmem:[#allocation9 + $0xa0] sm:$0xff]
    %v4640 = vld [vmem:[#allocation9 + $0xa8] sm:$0xff]
    %v4641 = vld [vmem:[#allocation9 + $0xb0] sm:$0xff]
    %v4642 = vld [vmem:[#allocation9 + $0xb8] sm:$0xff]
    %v4643 = vld [vmem:[#allocation9 + $0xc0] sm:$0xff]
    %v4644 = vld [vmem:[#allocation9 + $0xc8] sm:$0xff]
    %v4645 = vld [vmem:[#allocation9 + $0xd0] sm:$0xff]
    %v4646 = vld [vmem:[#allocation9 + $0xd8] sm:$0xff]
    %v4647 = vld [vmem:[#allocation9 + $0xe0] sm:$0xff]
    %v4648 = vld [vmem:[#allocation9 + $0xe8] sm:$0xff]
    %v4649 = vld [vmem:[#allocation9 + $0xf0] sm:$0xff]
    %v4650 = vld [vmem:[#allocation9 + $0xf8] sm:$0xff]
    %v4651 = vpack.c.bf16 %v4280, %v4280
    %v4652 = vld [vmem:[#allocation11] sm:$0xff]
    %v4653 = vld [vmem:[#allocation11 + $0x8] sm:$0xff]
    %v4654 = vld [vmem:[#allocation11 + $0x10] sm:$0xff]
    %v4655 = vld [vmem:[#allocation11 + $0x18] sm:$0xff]
    %v4656 = vld [vmem:[#allocation11 + $0x20] sm:$0xff]
    %v4657 = vld [vmem:[#allocation11 + $0x28] sm:$0xff]
    %v4658 = vld [vmem:[#allocation11 + $0x30] sm:$0xff]
    %v4659 = vld [vmem:[#allocation11 + $0x38] sm:$0xff]
    %v4660 = vld [vmem:[#allocation11 + $0x40] sm:$0xff]
    %v4661 = vld [vmem:[#allocation11 + $0x48] sm:$0xff]
    %v4662 = vld [vmem:[#allocation11 + $0x50] sm:$0xff]
    %v4663 = vld [vmem:[#allocation11 + $0x58] sm:$0xff]
    %v4664 = vld [vmem:[#allocation11 + $0x60] sm:$0xff]
    %v4665 = vld [vmem:[#allocation11 + $0x68] sm:$0xff]
    %v4666 = vld [vmem:[#allocation11 + $0x70] sm:$0xff]
    %v4667 = vld [vmem:[#allocation11 + $0x78] sm:$0xff]
    %v4668 = vld [vmem:[#allocation11 + $0x80] sm:$0xff]
    %v4669 = vld [vmem:[#allocation11 + $0x88] sm:$0xff]
    %v4670 = vld [vmem:[#allocation11 + $0x90] sm:$0xff]
    %v4671 = vld [vmem:[#allocation11 + $0x98] sm:$0xff]
    %v4672 = vld [vmem:[#allocation11 + $0xa0] sm:$0xff]
    %v4673 = vld [vmem:[#allocation11 + $0xa8] sm:$0xff]
    %v4674 = vld [vmem:[#allocation11 + $0xb0] sm:$0xff]
    %v4675 = vld [vmem:[#allocation11 + $0xb8] sm:$0xff]
    %v4676 = vld [vmem:[#allocation11 + $0xc0] sm:$0xff]
    %v4677 = vld [vmem:[#allocation11 + $0xc8] sm:$0xff]
    %v4678 = vld [vmem:[#allocation11 + $0xd0] sm:$0xff]
    %v4679 = vld [vmem:[#allocation11 + $0xd8] sm:$0xff]
    %v4680 = vld [vmem:[#allocation11 + $0xe0] sm:$0xff]
    %v4681 = vld [vmem:[#allocation11 + $0xe8] sm:$0xff]
    %v4682 = vld [vmem:[#allocation11 + $0xf0] sm:$0xff]
    %v4683 = vld [vmem:[#allocation11 + $0xf8] sm:$0xff]
    %v4716 = vunpack.c.l.b16 %v4652
    %v4717 = vunpack.c.h.b16 %v4652
    %v4718 = vunpack.c.l.b16 %v4653
    %v4719 = vunpack.c.h.b16 %v4653
    %v4720 = vunpack.c.l.b16 %v4654
    %v4721 = vunpack.c.h.b16 %v4654
    %v4722 = vunpack.c.l.b16 %v4655
    %v4723 = vunpack.c.h.b16 %v4655
    %v4724 = vunpack.c.l.b16 %v4656
    %v4725 = vunpack.c.h.b16 %v4656
    %v4726 = vunpack.c.l.b16 %v4657
    %v4727 = vunpack.c.h.b16 %v4657
    %v4728 = vunpack.c.l.b16 %v4658
    %v4729 = vunpack.c.h.b16 %v4658
    %v4730 = vunpack.c.l.b16 %v4659
    %v4731 = vunpack.c.h.b16 %v4659
    %v4732 = vunpack.c.l.b16 %v4660
    %v4733 = vunpack.c.h.b16 %v4660
    %v4734 = vunpack.c.l.b16 %v4661
    %v4735 = vunpack.c.h.b16 %v4661
    %v4736 = vunpack.c.l.b16 %v4662
    %v4737 = vunpack.c.h.b16 %v4662
    %v4738 = vunpack.c.l.b16 %v4663
    %v4739 = vunpack.c.h.b16 %v4663
    %v4740 = vunpack.c.l.b16 %v4664
    %v4741 = vunpack.c.h.b16 %v4664
    %v4742 = vunpack.c.l.b16 %v4665
    %v4743 = vunpack.c.h.b16 %v4665
    %v4744 = vunpack.c.l.b16 %v4666
    %v4745 = vunpack.c.h.b16 %v4666
    %v4746 = vunpack.c.l.b16 %v4667
    %v4747 = vunpack.c.h.b16 %v4667
    %v4748 = vunpack.c.l.b16 %v4668
    %v4749 = vunpack.c.h.b16 %v4668
    %v4750 = vunpack.c.l.b16 %v4669
    %v4751 = vunpack.c.h.b16 %v4669
    %v4752 = vunpack.c.l.b16 %v4670
    %v4753 = vunpack.c.h.b16 %v4670
    %v4754 = vunpack.c.l.b16 %v4671
    %v4755 = vunpack.c.h.b16 %v4671
    %v4756 = vunpack.c.l.b16 %v4672
    %v4757 = vunpack.c.h.b16 %v4672
    %v4758 = vunpack.c.l.b16 %v4673
    %v4759 = vunpack.c.h.b16 %v4673
    %v4760 = vunpack.c.l.b16 %v4674
    %v4761 = vunpack.c.h.b16 %v4674
    %v4762 = vunpack.c.l.b16 %v4675
    %v4763 = vunpack.c.h.b16 %v4675
    %v4764 = vunpack.c.l.b16 %v4676
    %v4765 = vunpack.c.h.b16 %v4676
    %v4766 = vunpack.c.l.b16 %v4677
    %v4767 = vunpack.c.h.b16 %v4677
    %v4768 = vunpack.c.l.b16 %v4678
    %v4769 = vunpack.c.h.b16 %v4678
    %v4770 = vunpack.c.l.b16 %v4679
    %v4771 = vunpack.c.h.b16 %v4679
    %v4772 = vunpack.c.l.b16 %v4680
    %v4773 = vunpack.c.h.b16 %v4680
    %v4774 = vunpack.c.l.b16 %v4681
    %v4775 = vunpack.c.h.b16 %v4681
    %v4776 = vunpack.c.l.b16 %v4682
    %v4777 = vunpack.c.h.b16 %v4682
    %v4778 = vunpack.c.l.b16 %v4683
    %v4779 = vunpack.c.h.b16 %v4683
    %v4780 = vpack.c.b16 %v4720, %v4716
    %v4781 = vpack.c.b16 %v4721, %v4717
    %v4782 = vpack.c.b16 %v4722, %v4718
    %v4783 = vpack.c.b16 %v4723, %v4719
    %v4784 = vpack.c.b16 %v4728, %v4724
    %v4785 = vpack.c.b16 %v4729, %v4725
    %v4786 = vpack.c.b16 %v4730, %v4726
    %v4787 = vpack.c.b16 %v4731, %v4727
    %v4788 = vpack.c.b16 %v4736, %v4732
    %v4789 = vpack.c.b16 %v4737, %v4733
    %v4790 = vpack.c.b16 %v4738, %v4734
    %v4791 = vpack.c.b16 %v4739, %v4735
    %v4792 = vpack.c.b16 %v4744, %v4740
    %v4793 = vpack.c.b16 %v4745, %v4741
    %v4794 = vpack.c.b16 %v4746, %v4742
    %v4795 = vpack.c.b16 %v4747, %v4743
    %v4796 = vpack.c.b16 %v4752, %v4748
    %v4797 = vpack.c.b16 %v4753, %v4749
    %v4798 = vpack.c.b16 %v4754, %v4750
    %v4799 = vpack.c.b16 %v4755, %v4751
    %v4800 = vpack.c.b16 %v4760, %v4756
    %v4801 = vpack.c.b16 %v4761, %v4757
    %v4802 = vpack.c.b16 %v4762, %v4758
    %v4803 = vpack.c.b16 %v4763, %v4759
    %v4804 = vpack.c.b16 %v4768, %v4764
    %v4805 = vpack.c.b16 %v4769, %v4765
    %v4806 = vpack.c.b16 %v4770, %v4766
    %v4807 = vpack.c.b16 %v4771, %v4767
    %v4808 = vpack.c.b16 %v4776, %v4772
    %v4809 = vpack.c.b16 %v4777, %v4773
    %v4810 = vpack.c.b16 %v4778, %v4774
    %v4811 = vpack.c.b16 %v4779, %v4775
    %4844 = vmatprep.subr.bf16.mxu0 %v4781
    %4845 = vmatpush1.bf16.msra.mxu0 %v4780
    %4846 = vmatprep.subr.bf16.mxu0 %v4785
    %4847 = vmatpush1.bf16.msra.mxu0 %v4784
    %4848 = vmatprep.subr.bf16.mxu0 %v4789
    %4849 = vmatpush1.bf16.msra.mxu0 %v4788
    %4850 = vmatprep.subr.bf16.mxu0 %v4793
    %4851 = vmatpush1.bf16.msra.mxu0 %v4792
    %4852 = vmatprep.subr.bf16.mxu0 %v4797
    %4853 = vmatpush1.bf16.msra.mxu0 %v4796
    %4854 = vmatprep.subr.bf16.mxu0 %v4801
    %4855 = vmatpush1.bf16.msra.mxu0 %v4800
    %4856 = vmatprep.subr.bf16.mxu0 %v4805
    %4857 = vmatpush1.bf16.msra.mxu0 %v4804
    %4858 = vmatprep.subr.bf16.mxu0 %v4809
    %4859 = vmatpush1.bf16.msra.mxu0 %v4808
    %4860 = vmatprep.subr.bf16.mxu0 0
    %4861 = vmatpush1.bf16.msra.mxu0 0
    %4862 = vmatprep.subr.bf16.mxu0 0
    %4863 = vmatpush1.bf16.msra.mxu0 0
    %4864 = vmatprep.subr.bf16.mxu0 0
    %4865 = vmatpush1.bf16.msra.mxu0 0
    %4866 = vmatprep.subr.bf16.mxu0 0
    %4867 = vmatpush1.bf16.msra.mxu0 0
    %4868 = vmatprep.subr.bf16.mxu0 0
    %4869 = vmatpush1.bf16.msra.mxu0 0
    %4870 = vmatprep.subr.bf16.mxu0 0
    %4871 = vmatpush1.bf16.msra.mxu0 0
    %4872 = vmatprep.subr.bf16.mxu0 0
    %4873 = vmatpush1.bf16.msra.mxu0 0
    %4874 = vmatprep.subr.bf16.mxu0 0
    %4875 = vmatpush1.bf16.msra.mxu0 0
    %4876 = vmatprep.mubr.bf16.mxu0 0
    %4877 = vmatmul.mubr.bf16.gmra.mrb[0].mxu0 %v4651
    %v4878 = vpop.f32.mrb[0].mxu0
    %v4879 = vadd.f32 0.0, %v4878
    %v4880 = vpop.f32.mrb[0].mxu0
    %v4881 = vadd.f32 0.0, %v4880
    %v4882 = vpop.f32.mrb[0].mxu0
    %v4883 = vpop.f32.mrb[0].mxu0
    %4884 = vdwg.mxu0
    %4885 = vmatprep.subr.bf16.mxu0 %v4783
    %4886 = vmatpush1.bf16.msra.mxu0 %v4782
    %4887 = vmatprep.subr.bf16.mxu0 %v4787
    %4888 = vmatpush1.bf16.msra.mxu0 %v4786
    %4889 = vmatprep.subr.bf16.mxu0 %v4791
    %4890 = vmatpush1.bf16.msra.mxu0 %v4790
    %4891 = vmatprep.subr.bf16.mxu0 %v4795
    %4892 = vmatpush1.bf16.msra.mxu0 %v4794
    %4893 = vmatprep.subr.bf16.mxu0 %v4799
    %4894 = vmatpush1.bf16.msra.mxu0 %v4798
    %4895 = vmatprep.subr.bf16.mxu0 %v4803
    %4896 = vmatpush1.bf16.msra.mxu0 %v4802
    %4897 = vmatprep.subr.bf16.mxu0 %v4807
    %4898 = vmatpush1.bf16.msra.mxu0 %v4806
    %4899 = vmatprep.subr.bf16.mxu0 %v4811
    %4900 = vmatpush1.bf16.msra.mxu0 %v4810
    %4901 = vmatprep.subr.bf16.mxu0 0
    %4902 = vmatpush1.bf16.msra.mxu0 0
    %4903 = vmatprep.subr.bf16.mxu0 0
    %4904 = vmatpush1.bf16.msra.mxu0 0
    %4905 = vmatprep.subr.bf16.mxu0 0
    %4906 = vmatpush1.bf16.msra.mxu0 0
    %4907 = vmatprep.subr.bf16.mxu0 0
    %4908 = vmatpush1.bf16.msra.mxu0 0
    %4909 = vmatprep.subr.bf16.mxu0 0
    %4910 = vmatpush1.bf16.msra.mxu0 0
    %4911 = vmatprep.subr.bf16.mxu0 0
    %4912 = vmatpush1.bf16.msra.mxu0 0
    %4913 = vmatprep.subr.bf16.mxu0 0
    %4914 = vmatpush1.bf16.msra.mxu0 0
    %4915 = vmatprep.subr.bf16.mxu0 0
    %4916 = vmatpush1.bf16.msra.mxu0 0
    %4917 = vmatprep.mubr.bf16.mxu0 0
    %4918 = vmatmul.mubr.bf16.gmra.mrb[0].mxu0 %v4651
    %v4919 = vpop.f32.mrb[0].mxu0
    %v4920 = vadd.f32 0.0, %v4919
    %v4921 = vpop.f32.mrb[0].mxu0
    %v4922 = vadd.f32 0.0, %v4921
    %v4923 = vpop.f32.mrb[0].mxu0
    %v4924 = vpop.f32.mrb[0].mxu0
    %4925 = vdwg.mxu0
    %v4958 = vunpack.c.l.b16 %v4619
    %v4959 = vunpack.c.h.b16 %v4619
    %v4960 = vunpack.c.l.b16 %v4620
    %v4961 = vunpack.c.h.b16 %v4620
    %v4962 = vunpack.c.l.b16 %v4621
    %v4963 = vunpack.c.h.b16 %v4621
    %v4964 = vunpack.c.l.b16 %v4622
    %v4965 = vunpack.c.h.b16 %v4622
    %v4966 = vunpack.c.l.b16 %v4623
    %v4967 = vunpack.c.h.b16 %v4623
    %v4968 = vunpack.c.l.b16 %v4624
    %v4969 = vunpack.c.h.b16 %v4624
    %v4970 = vunpack.c.l.b16 %v4625
    %v4971 = vunpack.c.h.b16 %v4625
    %v4972 = vunpack.c.l.b16 %v4626
    %v4973 = vunpack.c.h.b16 %v4626
    %v4974 = vunpack.c.l.b16 %v4627
    %v4975 = vunpack.c.h.b16 %v4627
    %v4976 = vunpack.c.l.b16 %v4628
    %v4977 = vunpack.c.h.b16 %v4628
    %v4978 = vunpack.c.l.b16 %v4629
    %v4979 = vunpack.c.h.b16 %v4629
    %v4980 = vunpack.c.l.b16 %v4630
    %v4981 = vunpack.c.h.b16 %v4630
    %v4982 = vunpack.c.l.b16 %v4631
    %v4983 = vunpack.c.h.b16 %v4631
    %v4984 = vunpack.c.l.b16 %v4632
    %v4985 = vunpack.c.h.b16 %v4632
    %v4986 = vunpack.c.l.b16 %v4633
    %v4987 = vunpack.c.h.b16 %v4633
    %v4988 = vunpack.c.l.b16 %v4634
    %v4989 = vunpack.c.h.b16 %v4634
    %v4990 = vunpack.c.l.b16 %v4635
    %v4991 = vunpack.c.h.b16 %v4635
    %v4992 = vunpack.c.l.b16 %v4636
    %v4993 = vunpack.c.h.b16 %v4636
    %v4994 = vunpack.c.l.b16 %v4637
    %v4995 = vunpack.c.h.b16 %v4637
    %v4996 = vunpack.c.l.b16 %v4638
    %v4997 = vunpack.c.h.b16 %v4638
    %v4998 = vunpack.c.l.b16 %v4639
    %v4999 = vunpack.c.h.b16 %v4639
    %v5000 = vunpack.c.l.b16 %v4640
    %v5001 = vunpack.c.h.b16 %v4640
    %v5002 = vunpack.c.l.b16 %v4641
    %v5003 = vunpack.c.h.b16 %v4641
    %v5004 = vunpack.c.l.b16 %v4642
    %v5005 = vunpack.c.h.b16 %v4642
    %v5006 = vunpack.c.l.b16 %v4643
    %v5007 = vunpack.c.h.b16 %v4643
    %v5008 = vunpack.c.l.b16 %v4644
    %v5009 = vunpack.c.h.b16 %v4644
    %v5010 = vunpack.c.l.b16 %v4645
    %v5011 = vunpack.c.h.b16 %v4645
    %v5012 = vunpack.c.l.b16 %v4646
    %v5013 = vunpack.c.h.b16 %v4646
    %v5014 = vunpack.c.l.b16 %v4647
    %v5015 = vunpack.c.h.b16 %v4647
    %v5016 = vunpack.c.l.b16 %v4648
    %v5017 = vunpack.c.h.b16 %v4648
    %v5018 = vunpack.c.l.b16 %v4649
    %v5019 = vunpack.c.h.b16 %v4649
    %v5020 = vunpack.c.l.b16 %v4650
    %v5021 = vunpack.c.h.b16 %v4650
    %v5022 = vpack.c.b16 %v4962, %v4958
    %v5023 = vpack.c.b16 %v4963, %v4959
    %v5024 = vpack.c.b16 %v4964, %v4960
    %v5025 = vpack.c.b16 %v4965, %v4961
    %v5026 = vpack.c.b16 %v4970, %v4966
    %v5027 = vpack.c.b16 %v4971, %v4967
    %v5028 = vpack.c.b16 %v4972, %v4968
    %v5029 = vpack.c.b16 %v4973, %v4969
    %v5030 = vpack.c.b16 %v4978, %v4974
    %v5031 = vpack.c.b16 %v4979, %v4975
    %v5032 = vpack.c.b16 %v4980, %v4976
    %v5033 = vpack.c.b16 %v4981, %v4977
    %v5034 = vpack.c.b16 %v4986, %v4982
    %v5035 = vpack.c.b16 %v4987, %v4983
    %v5036 = vpack.c.b16 %v4988, %v4984
    %v5037 = vpack.c.b16 %v4989, %v4985
    %v5038 = vpack.c.b16 %v4994, %v4990
    %v5039 = vpack.c.b16 %v4995, %v4991
    %v5040 = vpack.c.b16 %v4996, %v4992
    %v5041 = vpack.c.b16 %v4997, %v4993
    %v5042 = vpack.c.b16 %v5002, %v4998
    %v5043 = vpack.c.b16 %v5003, %v4999
    %v5044 = vpack.c.b16 %v5004, %v5000
    %v5045 = vpack.c.b16 %v5005, %v5001
    %v5046 = vpack.c.b16 %v5010, %v5006
    %v5047 = vpack.c.b16 %v5011, %v5007
    %v5048 = vpack.c.b16 %v5012, %v5008
    %v5049 = vpack.c.b16 %v5013, %v5009
    %v5050 = vpack.c.b16 %v5018, %v5014
    %v5051 = vpack.c.b16 %v5019, %v5015
    %v5052 = vpack.c.b16 %v5020, %v5016
    %v5053 = vpack.c.b16 %v5021, %v5017
    %5086 = vmatprep.subr.bf16.mxu0 %v5023
    %5087 = vmatpush1.bf16.msra.mxu0 %v5022
    %5088 = vmatprep.subr.bf16.mxu0 %v5027
    %5089 = vmatpush1.bf16.msra.mxu0 %v5026
    %5090 = vmatprep.subr.bf16.mxu0 %v5031
    %5091 = vmatpush1.bf16.msra.mxu0 %v5030
    %5092 = vmatprep.subr.bf16.mxu0 %v5035
    %5093 = vmatpush1.bf16.msra.mxu0 %v5034
    %5094 = vmatprep.subr.bf16.mxu0 %v5039
    %5095 = vmatpush1.bf16.msra.mxu0 %v5038
    %5096 = vmatprep.subr.bf16.mxu0 %v5043
    %5097 = vmatpush1.bf16.msra.mxu0 %v5042
    %5098 = vmatprep.subr.bf16.mxu0 %v5047
    %5099 = vmatpush1.bf16.msra.mxu0 %v5046
    %5100 = vmatprep.subr.bf16.mxu0 %v5051
    %5101 = vmatpush1.bf16.msra.mxu0 %v5050
    %5102 = vmatprep.subr.bf16.mxu0 0
    %5103 = vmatpush1.bf16.msra.mxu0 0
    %5104 = vmatprep.subr.bf16.mxu0 0
    %5105 = vmatpush1.bf16.msra.mxu0 0
    %5106 = vmatprep.subr.bf16.mxu0 0
    %5107 = vmatpush1.bf16.msra.mxu0 0
    %5108 = vmatprep.subr.bf16.mxu0 0
    %5109 = vmatpush1.bf16.msra.mxu0 0
    %5110 = vmatprep.subr.bf16.mxu0 0
    %5111 = vmatpush1.bf16.msra.mxu0 0
    %5112 = vmatprep.subr.bf16.mxu0 0
    %5113 = vmatpush1.bf16.msra.mxu0 0
    %5114 = vmatprep.subr.bf16.mxu0 0
    %5115 = vmatpush1.bf16.msra.mxu0 0
    %5116 = vmatprep.subr.bf16.mxu0 0
    %5117 = vmatpush1.bf16.msra.mxu0 0
    %5118 = vmatprep.mubr.bf16.mxu0 0
    %5119 = vmatmul.mubr.bf16.gmra.mrb[0].mxu0 %v4618
    %v5120 = vpop.f32.mrb[0].mxu0
    %v5121 = vadd.f32 %v4879, %v5120
    %v5122 = vpop.f32.mrb[0].mxu0
    %v5123 = vadd.f32 %v4881, %v5122
    %v5124 = vpop.f32.mrb[0].mxu0
    %v5125 = vpop.f32.mrb[0].mxu0
    %5126 = vdwg.mxu0
    %5127 = vmatprep.subr.bf16.mxu0 %v5025
    %5128 = vmatpush1.bf16.msra.mxu0 %v5024
    %5129 = vmatprep.subr.bf16.mxu0 %v5029
    %5130 = vmatpush1.bf16.msra.mxu0 %v5028
    %5131 = vmatprep.subr.bf16.mxu0 %v5033
    %5132 = vmatpush1.bf16.msra.mxu0 %v5032
    %5133 = vmatprep.subr.bf16.mxu0 %v5037
    %5134 = vmatpush1.bf16.msra.mxu0 %v5036
    %5135 = vmatprep.subr.bf16.mxu0 %v5041
    %5136 = vmatpush1.bf16.msra.mxu0 %v5040
    %5137 = vmatprep.subr.bf16.mxu0 %v5045
    %5138 = vmatpush1.bf16.msra.mxu0 %v5044
    %5139 = vmatprep.subr.bf16.mxu0 %v5049
    %5140 = vmatpush1.bf16.msra.mxu0 %v5048
    %5141 = vmatprep.subr.bf16.mxu0 %v5053
    %5142 = vmatpush1.bf16.msra.mxu0 %v5052
    %5143 = vmatprep.subr.bf16.mxu0 0
    %5144 = vmatpush1.bf16.msra.mxu0 0
    %5145 = vmatprep.subr.bf16.mxu0 0
    %5146 = vmatpush1.bf16.msra.mxu0 0
    %5147 = vmatprep.subr.bf16.mxu0 0
    %5148 = vmatpush1.bf16.msra.mxu0 0
    %5149 = vmatprep.subr.bf16.mxu0 0
    %5150 = vmatpush1.bf16.msra.mxu0 0
    %5151 = vmatprep.subr.bf16.mxu0 0
    %5152 = vmatpush1.bf16.msra.mxu0 0
    %5153 = vmatprep.subr.bf16.mxu0 0
    %5154 = vmatpush1.bf16.msra.mxu0 0
    %5155 = vmatprep.subr.bf16.mxu0 0
    %5156 = vmatpush1.bf16.msra.mxu0 0
    %5157 = vmatprep.subr.bf16.mxu0 0
    %5158 = vmatpush1.bf16.msra.mxu0 0
    %5159 = vmatprep.mubr.bf16.mxu0 0
    %5160 = vmatmul.mubr.bf16.gmra.mrb[0].mxu0 %v4618
    %v5161 = vpop.f32.mrb[0].mxu0
    %v5162 = vadd.f32 %v4920, %v5161
    %v5163 = vpop.f32.mrb[0].mxu0
    %v5164 = vadd.f32 %v4922, %v5163
    %v5165 = vpop.f32.mrb[0].mxu0
    %v5166 = vpop.f32.mrb[0].mxu0
    %5167 = vdwg.mxu0
    %v5168 = vld [vmem:[%s6] sm:$0xf]
    %v5170 = vlaneseq
    %v5171 = vshrl.u32 %v5170, 7
    %v5172 = vsub.s32 0, %v5171
    %v5173 = vrot.slane %v5168, %v5172
    %v5174 = vlaneseq
    %v5175 = vshrl.u32 %v5174, 7
    %v5176 = vsub.s32 1, %v5175
    %v5177 = vrot.slane %v5168, %v5176
    %v5178 = vlaneseq
    %v5179 = vshrl.u32 %v5178, 7
    %v5180 = vsub.s32 2, %v5179
    %v5181 = vrot.slane %v5168, %v5180
    %v5182 = vlaneseq
    %v5183 = vshrl.u32 %v5182, 7
    %v5184 = vsub.s32 3, %v5183
    %v5185 = vrot.slane %v5168, %v5184
    %v5190 = vadd.f32 %v5121, %v5173
    %v5191 = vadd.f32 %v5123, %v5177
    %v5192 = vadd.f32 %v5162, %v5181
    %v5193 = vadd.f32 %v5164, %v5185
    %v5194 = vxor.u32 %v5190, 2147483648
    %v5195 = vmul.f32 %v5194, 1.442695
    %v5196 = vpow.pop %v5195
    %v5197 = vadd.f32 %v5196, 1.0
    %v5198 = vrcp.pop %v5197
    %v5199 = vmul.f32 1.0, %v5198
    %v5200 = vxor.u32 %v5191, 2147483648
    %v5201 = vmul.f32 %v5200, 1.442695
    %v5202 = vpow.pop %v5201
    %v5203 = vadd.f32 %v5202, 1.0
    %v5204 = vrcp.pop %v5203
    %v5205 = vmul.f32 1.0, %v5204
    %v5206 = vtanh.pop %v5192
    %v5207 = vxor.u32 %v5193, 2147483648
    %v5208 = vmul.f32 %v5207, 1.442695
    %v5209 = vpow.pop %v5208
    %v5210 = vadd.f32 %v5209, 1.0
    %v5211 = vrcp.pop %v5210
    %v5212 = vmul.f32 1.0, %v5211
    %v5213 = vmul.f32 %v5205, %v4281
    %v5214 = vmul.f32 %v5199, %v5206
    %v5215 = vadd.f32 %v5213, %v5214
    %v5216 = vtanh.pop %v5215
    %v5217 = vmul.f32 %v5212, %v5216
    %5218 = vst [vmem:[#allocation3] sm:$0xff] %v4617
    %5219 = vst [vmem:[#allocation4] sm:$0xff] %v4615
    %5220 = vst [vmem:[#allocation5] sm:$0xff] %v5217
    %5221 = vst [vmem:[#allocation6] sm:$0xff] %v5215
    %s5222 = scalar_lea.vmem %s11, 32
    %5223 = vst [vmem:[%s5222] sm:$0xff] %v5217
    %v5224 = vld [vmem:[#allocation3] sm:$0xff]
    %v5225 = vld [vmem:[#allocation4] sm:$0xff]
    %v5226 = vld [vmem:[#allocation5] sm:$0xff]
    %v5227 = vld [vmem:[#allocation6] sm:$0xff]
    %s5228 = smul.u32 5, 4
    %s5229 = smul.addr %s5228, 8
    %s5230 = scalar_lea.vmem [#allocation2], %s5229
    %v5231 = vld [vmem:[%s5230] sm:$0xff]
    %v5232 = vld [vmem:[%s5230 + $0x8] sm:$0xff]
    %v5233 = vld [vmem:[%s5230 + $0x10] sm:$0xff]
    %v5234 = vld [vmem:[%s5230 + $0x18] sm:$0xff]
    %v5235 = vpack.c.bf16 %v5224, %v5224
    %v5236 = vld [vmem:[#allocation7] sm:$0xff]
    %v5237 = vld [vmem:[#allocation7 + $0x8] sm:$0xff]
    %v5238 = vld [vmem:[#allocation7 + $0x10] sm:$0xff]
    %v5239 = vld [vmem:[#allocation7 + $0x18] sm:$0xff]
    %v5240 = vld [vmem:[#allocation7 + $0x20] sm:$0xff]
    %v5241 = vld [vmem:[#allocation7 + $0x28] sm:$0xff]
    %v5242 = vld [vmem:[#allocation7 + $0x30] sm:$0xff]
    %v5243 = vld [vmem:[#allocation7 + $0x38] sm:$0xff]
    %v5244 = vld [vmem:[#allocation7 + $0x40] sm:$0xff]
    %v5245 = vld [vmem:[#allocation7 + $0x48] sm:$0xff]
    %v5246 = vld [vmem:[#allocation7 + $0x50] sm:$0xff]
    %v5247 = vld [vmem:[#allocation7 + $0x58] sm:$0xff]
    %v5248 = vld [vmem:[#allocation7 + $0x60] sm:$0xff]
    %v5249 = vld [vmem:[#allocation7 + $0x68] sm:$0xff]
    %v5250 = vld [vmem:[#allocation7 + $0x70] sm:$0xff]
    %v5251 = vld [vmem:[#allocation7 + $0x78] sm:$0xff]
    %v5252 = vld [vmem:[#allocation7 + $0x80] sm:$0xff]
    %v5253 = vld [vmem:[#allocation7 + $0x88] sm:$0xff]
    %v5254 = vld [vmem:[#allocation7 + $0x90] sm:$0xff]
    %v5255 = vld [vmem:[#allocation7 + $0x98] sm:$0xff]
    %v5256 = vld [vmem:[#allocation7 + $0xa0] sm:$0xff]
    %v5257 = vld [vmem:[#allocation7 + $0xa8] sm:$0xff]
    %v5258 = vld [vmem:[#allocation7 + $0xb0] sm:$0xff]
    %v5259 = vld [vmem:[#allocation7 + $0xb8] sm:$0xff]
    %v5260 = vld [vmem:[#allocation7 + $0xc0] sm:$0xff]
    %v5261 = vld [vmem:[#allocation7 + $0xc8] sm:$0xff]
    %v5262 = vld [vmem:[#allocation7 + $0xd0] sm:$0xff]
    %v5263 = vld [vmem:[#allocation7 + $0xd8] sm:$0xff]
    %v5264 = vld [vmem:[#allocation7 + $0xe0] sm:$0xff]
    %v5265 = vld [vmem:[#allocation7 + $0xe8] sm:$0xff]
    %v5266 = vld [vmem:[#allocation7 + $0xf0] sm:$0xff]
    %v5267 = vld [vmem:[#allocation7 + $0xf8] sm:$0xff]
    %v5300 = vunpack.c.l.b16 %v5236
    %v5301 = vunpack.c.h.b16 %v5236
    %v5302 = vunpack.c.l.b16 %v5237
    %v5303 = vunpack.c.h.b16 %v5237
    %v5304 = vunpack.c.l.b16 %v5238
    %v5305 = vunpack.c.h.b16 %v5238
    %v5306 = vunpack.c.l.b16 %v5239
    %v5307 = vunpack.c.h.b16 %v5239
    %v5308 = vunpack.c.l.b16 %v5240
    %v5309 = vunpack.c.h.b16 %v5240
    %v5310 = vunpack.c.l.b16 %v5241
    %v5311 = vunpack.c.h.b16 %v5241
    %v5312 = vunpack.c.l.b16 %v5242
    %v5313 = vunpack.c.h.b16 %v5242
    %v5314 = vunpack.c.l.b16 %v5243
    %v5315 = vunpack.c.h.b16 %v5243
    %v5316 = vunpack.c.l.b16 %v5244
    %v5317 = vunpack.c.h.b16 %v5244
    %v5318 = vunpack.c.l.b16 %v5245
    %v5319 = vunpack.c.h.b16 %v5245
    %v5320 = vunpack.c.l.b16 %v5246
    %v5321 = vunpack.c.h.b16 %v5246
    %v5322 = vunpack.c.l.b16 %v5247
    %v5323 = vunpack.c.h.b16 %v5247
    %v5324 = vunpack.c.l.b16 %v5248
    %v5325 = vunpack.c.h.b16 %v5248
    %v5326 = vunpack.c.l.b16 %v5249
    %v5327 = vunpack.c.h.b16 %v5249
    %v5328 = vunpack.c.l.b16 %v5250
    %v5329 = vunpack.c.h.b16 %v5250
    %v5330 = vunpack.c.l.b16 %v5251
    %v5331 = vunpack.c.h.b16 %v5251
    %v5332 = vunpack.c.l.b16 %v5252
    %v5333 = vunpack.c.h.b16 %v5252
    %v5334 = vunpack.c.l.b16 %v5253
    %v5335 = vunpack.c.h.b16 %v5253
    %v5336 = vunpack.c.l.b16 %v5254
    %v5337 = vunpack.c.h.b16 %v5254
    %v5338 = vunpack.c.l.b16 %v5255
    %v5339 = vunpack.c.h.b16 %v5255
    %v5340 = vunpack.c.l.b16 %v5256
    %v5341 = vunpack.c.h.b16 %v5256
    %v5342 = vunpack.c.l.b16 %v5257
    %v5343 = vunpack.c.h.b16 %v5257
    %v5344 = vunpack.c.l.b16 %v5258
    %v5345 = vunpack.c.h.b16 %v5258
    %v5346 = vunpack.c.l.b16 %v5259
    %v5347 = vunpack.c.h.b16 %v5259
    %v5348 = vunpack.c.l.b16 %v5260
    %v5349 = vunpack.c.h.b16 %v5260
    %v5350 = vunpack.c.l.b16 %v5261
    %v5351 = vunpack.c.h.b16 %v5261
    %v5352 = vunpack.c.l.b16 %v5262
    %v5353 = vunpack.c.h.b16 %v5262
    %v5354 = vunpack.c.l.b16 %v5263
    %v5355 = vunpack.c.h.b16 %v5263
    %v5356 = vunpack.c.l.b16 %v5264
    %v5357 = vunpack.c.h.b16 %v5264
    %v5358 = vunpack.c.l.b16 %v5265
    %v5359 = vunpack.c.h.b16 %v5265
    %v5360 = vunpack.c.l.b16 %v5266
    %v5361 = vunpack.c.h.b16 %v5266
    %v5362 = vunpack.c.l.b16 %v5267
    %v5363 = vunpack.c.h.b16 %v5267
    %v5364 = vpack.c.b16 %v5304, %v5300
    %v5365 = vpack.c.b16 %v5305, %v5301
    %v5366 = vpack.c.b16 %v5306, %v5302
    %v5367 = vpack.c.b16 %v5307, %v5303
    %v5368 = vpack.c.b16 %v5312, %v5308
    %v5369 = vpack.c.b16 %v5313, %v5309
    %v5370 = vpack.c.b16 %v5314, %v5310
    %v5371 = vpack.c.b16 %v5315, %v5311
    %v5372 = vpack.c.b16 %v5320, %v5316
    %v5373 = vpack.c.b16 %v5321, %v5317
    %v5374 = vpack.c.b16 %v5322, %v5318
    %v5375 = vpack.c.b16 %v5323, %v5319
    %v5376 = vpack.c.b16 %v5328, %v5324
    %v5377 = vpack.c.b16 %v5329, %v5325
    %v5378 = vpack.c.b16 %v5330, %v5326
    %v5379 = vpack.c.b16 %v5331, %v5327
    %v5380 = vpack.c.b16 %v5336, %v5332
    %v5381 = vpack.c.b16 %v5337, %v5333
    %v5382 = vpack.c.b16 %v5338, %v5334
    %v5383 = vpack.c.b16 %v5339, %v5335
    %v5384 = vpack.c.b16 %v5344, %v5340
    %v5385 = vpack.c.b16 %v5345, %v5341
    %v5386 = vpack.c.b16 %v5346, %v5342
    %v5387 = vpack.c.b16 %v5347, %v5343
    %v5388 = vpack.c.b16 %v5352, %v5348
    %v5389 = vpack.c.b16 %v5353, %v5349
    %v5390 = vpack.c.b16 %v5354, %v5350
    %v5391 = vpack.c.b16 %v5355, %v5351
    %v5392 = vpack.c.b16 %v5360, %v5356
    %v5393 = vpack.c.b16 %v5361, %v5357
    %v5394 = vpack.c.b16 %v5362, %v5358
    %v5395 = vpack.c.b16 %v5363, %v5359
    %5428 = vmatprep.subr.bf16.mxu0 %v5365
    %5429 = vmatpush1.bf16.msra.mxu0 %v5364
    %5430 = vmatprep.subr.bf16.mxu0 %v5369
    %5431 = vmatpush1.bf16.msra.mxu0 %v5368
    %5432 = vmatprep.subr.bf16.mxu0 %v5373
    %5433 = vmatpush1.bf16.msra.mxu0 %v5372
    %5434 = vmatprep.subr.bf16.mxu0 %v5377
    %5435 = vmatpush1.bf16.msra.mxu0 %v5376
    %5436 = vmatprep.subr.bf16.mxu0 %v5381
    %5437 = vmatpush1.bf16.msra.mxu0 %v5380
    %5438 = vmatprep.subr.bf16.mxu0 %v5385
    %5439 = vmatpush1.bf16.msra.mxu0 %v5384
    %5440 = vmatprep.subr.bf16.mxu0 %v5389
    %5441 = vmatpush1.bf16.msra.mxu0 %v5388
    %5442 = vmatprep.subr.bf16.mxu0 %v5393
    %5443 = vmatpush1.bf16.msra.mxu0 %v5392
    %5444 = vmatprep.subr.bf16.mxu0 0
    %5445 = vmatpush1.bf16.msra.mxu0 0
    %5446 = vmatprep.subr.bf16.mxu0 0
    %5447 = vmatpush1.bf16.msra.mxu0 0
    %5448 = vmatprep.subr.bf16.mxu0 0
    %5449 = vmatpush1.bf16.msra.mxu0 0
    %5450 = vmatprep.subr.bf16.mxu0 0
    %5451 = vmatpush1.bf16.msra.mxu0 0
    %5452 = vmatprep.subr.bf16.mxu0 0
    %5453 = vmatpush1.bf16.msra.mxu0 0
    %5454 = vmatprep.subr.bf16.mxu0 0
    %5455 = vmatpush1.bf16.msra.mxu0 0
    %5456 = vmatprep.subr.bf16.mxu0 0
    %5457 = vmatpush1.bf16.msra.mxu0 0
    %5458 = vmatprep.subr.bf16.mxu0 0
    %5459 = vmatpush1.bf16.msra.mxu0 0
    %5460 = vmatprep.mubr.bf16.mxu0 0
    %5461 = vmatmul.mubr.bf16.gmra.mrb[0].mxu0 %v5235
    %v5462 = vpop.f32.mrb[0].mxu0
    %v5463 = vadd.f32 0.0, %v5462
    %v5464 = vpop.f32.mrb[0].mxu0
    %v5465 = vadd.f32 0.0, %v5464
    %v5466 = vpop.f32.mrb[0].mxu0
    %v5467 = vpop.f32.mrb[0].mxu0
    %5468 = vdwg.mxu0
    %5469 = vmatprep.subr.bf16.mxu0 %v5367
    %5470 = vmatpush1.bf16.msra.mxu0 %v5366
    %5471 = vmatprep.subr.bf16.mxu0 %v5371
    %5472 = vmatpush1.bf16.msra.mxu0 %v5370
    %5473 = vmatprep.subr.bf16.mxu0 %v5375
    %5474 = vmatpush1.bf16.msra.mxu0 %v5374
    %5475 = vmatprep.subr.bf16.mxu0 %v5379
    %5476 = vmatpush1.bf16.msra.mxu0 %v5378
    %5477 = vmatprep.subr.bf16.mxu0 %v5383
    %5478 = vmatpush1.bf16.msra.mxu0 %v5382
    %5479 = vmatprep.subr.bf16.mxu0 %v5387
    %5480 = vmatpush1.bf16.msra.mxu0 %v5386
    %5481 = vmatprep.subr.bf16.mxu0 %v5391
    %5482 = vmatpush1.bf16.msra.mxu0 %v5390
    %5483 = vmatprep.subr.bf16.mxu0 %v5395
    %5484 = vmatpush1.bf16.msra.mxu0 %v5394
    %5485 = vmatprep.subr.bf16.mxu0 0
    %5486 = vmatpush1.bf16.msra.mxu0 0
    %5487 = vmatprep.subr.bf16.mxu0 0
    %5488 = vmatpush1.bf16.msra.mxu0 0
    %5489 = vmatprep.subr.bf16.mxu0 0
    %5490 = vmatpush1.bf16.msra.mxu0 0
    %5491 = vmatprep.subr.bf16.mxu0 0
    %5492 = vmatpush1.bf16.msra.mxu0 0
    %5493 = vmatprep.subr.bf16.mxu0 0
    %5494 = vmatpush1.bf16.msra.mxu0 0
    %5495 = vmatprep.subr.bf16.mxu0 0
    %5496 = vmatpush1.bf16.msra.mxu0 0
    %5497 = vmatprep.subr.bf16.mxu0 0
    %5498 = vmatpush1.bf16.msra.mxu0 0
    %5499 = vmatprep.subr.bf16.mxu0 0
    %5500 = vmatpush1.bf16.msra.mxu0 0
    %5501 = vmatprep.mubr.bf16.mxu0 0
    %5502 = vmatmul.mubr.bf16.gmra.mrb[0].mxu0 %v5235
    %v5503 = vpop.f32.mrb[0].mxu0
    %v5504 = vadd.f32 0.0, %v5503
    %v5505 = vpop.f32.mrb[0].mxu0
    %v5506 = vadd.f32 0.0, %v5505
    %v5507 = vpop.f32.mrb[0].mxu0
    %v5508 = vpop.f32.mrb[0].mxu0
    %5509 = vdwg.mxu0
    %v5510 = vadd.f32 %v5231, %v5463
    %v5511 = vadd.f32 %v5232, %v5465
    %v5512 = vadd.f32 %v5233, %v5504
    %v5513 = vadd.f32 %v5234, %v5506
    %v5514 = vld [vmem:[%s3] sm:$0xf]
    %v5516 = vlaneseq
    %v5517 = vshrl.u32 %v5516, 7
    %v5518 = vsub.s32 0, %v5517
    %v5519 = vrot.slane %v5514, %v5518
    %v5520 = vlaneseq
    %v5521 = vshrl.u32 %v5520, 7
    %v5522 = vsub.s32 1, %v5521
    %v5523 = vrot.slane %v5514, %v5522
    %v5524 = vlaneseq
    %v5525 = vshrl.u32 %v5524, 7
    %v5526 = vsub.s32 2, %v5525
    %v5527 = vrot.slane %v5514, %v5526
    %v5528 = vlaneseq
    %v5529 = vshrl.u32 %v5528, 7
    %v5530 = vsub.s32 3, %v5529
    %v5531 = vrot.slane %v5514, %v5530
    %v5536 = vadd.f32 %v5510, %v5519
    %v5537 = vadd.f32 %v5511, %v5523
    %v5538 = vadd.f32 %v5512, %v5527
    %v5539 = vadd.f32 %v5513, %v5531
    %v5540 = vxor.u32 %v5536, 2147483648
    %v5541 = vmul.f32 %v5540, 1.442695
    %v5542 = vpow.pop %v5541
    %v5543 = vadd.f32 %v5542, 1.0
    %v5544 = vrcp.pop %v5543
    %v5545 = vmul.f32 1.0, %v5544
    %v5546 = vxor.u32 %v5537, 2147483648
    %v5547 = vmul.f32 %v5546, 1.442695
    %v5548 = vpow.pop %v5547
    %v5549 = vadd.f32 %v5548, 1.0
    %v5550 = vrcp.pop %v5549
    %v5551 = vmul.f32 1.0, %v5550
    %v5552 = vtanh.pop %v5538
    %v5553 = vxor.u32 %v5539, 2147483648
    %v5554 = vmul.f32 %v5553, 1.442695
    %v5555 = vpow.pop %v5554
    %v5556 = vadd.f32 %v5555, 1.0
    %v5557 = vrcp.pop %v5556
    %v5558 = vmul.f32 1.0, %v5557
    %v5559 = vmul.f32 %v5551, %v5225
    %v5560 = vmul.f32 %v5545, %v5552
    %v5561 = vadd.f32 %v5559, %v5560
    %v5562 = vtanh.pop %v5561
    %v5563 = vmul.f32 %v5558, %v5562
    %v5564 = vpack.c.bf16 %v5563, %v5563
    %v5565 = vld [vmem:[#allocation9] sm:$0xff]
    %v5566 = vld [vmem:[#allocation9 + $0x8] sm:$0xff]
    %v5567 = vld [vmem:[#allocation9 + $0x10] sm:$0xff]
    %v5568 = vld [vmem:[#allocation9 + $0x18] sm:$0xff]
    %v5569 = vld [vmem:[#allocation9 + $0x20] sm:$0xff]
    %v5570 = vld [vmem:[#allocation9 + $0x28] sm:$0xff]
    %v5571 = vld [vmem:[#allocation9 + $0x30] sm:$0xff]
    %v5572 = vld [vmem:[#allocation9 + $0x38] sm:$0xff]
    %v5573 = vld [vmem:[#allocation9 + $0x40] sm:$0xff]
    %v5574 = vld [vmem:[#allocation9 + $0x48] sm:$0xff]
    %v5575 = vld [vmem:[#allocation9 + $0x50] sm:$0xff]
    %v5576 = vld [vmem:[#allocation9 + $0x58] sm:$0xff]
    %v5577 = vld [vmem:[#allocation9 + $0x60] sm:$0xff]
    %v5578 = vld [vmem:[#allocation9 + $0x68] sm:$0xff]
    %v5579 = vld [vmem:[#allocation9 + $0x70] sm:$0xff]
    %v5580 = vld [vmem:[#allocation9 + $0x78] sm:$0xff]
    %v5581 = vld [vmem:[#allocation9 + $0x80] sm:$0xff]
    %v5582 = vld [vmem:[#allocation9 + $0x88] sm:$0xff]
    %v5583 = vld [vmem:[#allocation9 + $0x90] sm:$0xff]
    %v5584 = vld [vmem:[#allocation9 + $0x98] sm:$0xff]
    %v5585 = vld [vmem:[#allocation9 + $0xa0] sm:$0xff]
    %v5586 = vld [vmem:[#allocation9 + $0xa8] sm:$0xff]
    %v5587 = vld [vmem:[#allocation9 + $0xb0] sm:$0xff]
    %v5588 = vld [vmem:[#allocation9 + $0xb8] sm:$0xff]
    %v5589 = vld [vmem:[#allocation9 + $0xc0] sm:$0xff]
    %v5590 = vld [vmem:[#allocation9 + $0xc8] sm:$0xff]
    %v5591 = vld [vmem:[#allocation9 + $0xd0] sm:$0xff]
    %v5592 = vld [vmem:[#allocation9 + $0xd8] sm:$0xff]
    %v5593 = vld [vmem:[#allocation9 + $0xe0] sm:$0xff]
    %v5594 = vld [vmem:[#allocation9 + $0xe8] sm:$0xff]
    %v5595 = vld [vmem:[#allocation9 + $0xf0] sm:$0xff]
    %v5596 = vld [vmem:[#allocation9 + $0xf8] sm:$0xff]
    %v5597 = vpack.c.bf16 %v5226, %v5226
    %v5598 = vld [vmem:[#allocation11] sm:$0xff]
    %v5599 = vld [vmem:[#allocation11 + $0x8] sm:$0xff]
    %v5600 = vld [vmem:[#allocation11 + $0x10] sm:$0xff]
    %v5601 = vld [vmem:[#allocation11 + $0x18] sm:$0xff]
    %v5602 = vld [vmem:[#allocation11 + $0x20] sm:$0xff]
    %v5603 = vld [vmem:[#allocation11 + $0x28] sm:$0xff]
    %v5604 = vld [vmem:[#allocation11 + $0x30] sm:$0xff]
    %v5605 = vld [vmem:[#allocation11 + $0x38] sm:$0xff]
    %v5606 = vld [vmem:[#allocation11 + $0x40] sm:$0xff]
    %v5607 = vld [vmem:[#allocation11 + $0x48] sm:$0xff]
    %v5608 = vld [vmem:[#allocation11 + $0x50] sm:$0xff]
    %v5609 = vld [vmem:[#allocation11 + $0x58] sm:$0xff]
    %v5610 = vld [vmem:[#allocation11 + $0x60] sm:$0xff]
    %v5611 = vld [vmem:[#allocation11 + $0x68] sm:$0xff]
    %v5612 = vld [vmem:[#allocation11 + $0x70] sm:$0xff]
    %v5613 = vld [vmem:[#allocation11 + $0x78] sm:$0xff]
    %v5614 = vld [vmem:[#allocation11 + $0x80] sm:$0xff]
    %v5615 = vld [vmem:[#allocation11 + $0x88] sm:$0xff]
    %v5616 = vld [vmem:[#allocation11 + $0x90] sm:$0xff]
    %v5617 = vld [vmem:[#allocation11 + $0x98] sm:$0xff]
    %v5618 = vld [vmem:[#allocation11 + $0xa0] sm:$0xff]
    %v5619 = vld [vmem:[#allocation11 + $0xa8] sm:$0xff]
    %v5620 = vld [vmem:[#allocation11 + $0xb0] sm:$0xff]
    %v5621 = vld [vmem:[#allocation11 + $0xb8] sm:$0xff]
    %v5622 = vld [vmem:[#allocation11 + $0xc0] sm:$0xff]
    %v5623 = vld [vmem:[#allocation11 + $0xc8] sm:$0xff]
    %v5624 = vld [vmem:[#allocation11 + $0xd0] sm:$0xff]
    %v5625 = vld [vmem:[#allocation11 + $0xd8] sm:$0xff]
    %v5626 = vld [vmem:[#allocation11 + $0xe0] sm:$0xff]
    %v5627 = vld [vmem:[#allocation11 + $0xe8] sm:$0xff]
    %v5628 = vld [vmem:[#allocation11 + $0xf0] sm:$0xff]
    %v5629 = vld [vmem:[#allocation11 + $0xf8] sm:$0xff]
    %v5662 = vunpack.c.l.b16 %v5598
    %v5663 = vunpack.c.h.b16 %v5598
    %v5664 = vunpack.c.l.b16 %v5599
    %v5665 = vunpack.c.h.b16 %v5599
    %v5666 = vunpack.c.l.b16 %v5600
    %v5667 = vunpack.c.h.b16 %v5600
    %v5668 = vunpack.c.l.b16 %v5601
    %v5669 = vunpack.c.h.b16 %v5601
    %v5670 = vunpack.c.l.b16 %v5602
    %v5671 = vunpack.c.h.b16 %v5602
    %v5672 = vunpack.c.l.b16 %v5603
    %v5673 = vunpack.c.h.b16 %v5603
    %v5674 = vunpack.c.l.b16 %v5604
    %v5675 = vunpack.c.h.b16 %v5604
    %v5676 = vunpack.c.l.b16 %v5605
    %v5677 = vunpack.c.h.b16 %v5605
    %v5678 = vunpack.c.l.b16 %v5606
    %v5679 = vunpack.c.h.b16 %v5606
    %v5680 = vunpack.c.l.b16 %v5607
    %v5681 = vunpack.c.h.b16 %v5607
    %v5682 = vunpack.c.l.b16 %v5608
    %v5683 = vunpack.c.h.b16 %v5608
    %v5684 = vunpack.c.l.b16 %v5609
    %v5685 = vunpack.c.h.b16 %v5609
    %v5686 = vunpack.c.l.b16 %v5610
    %v5687 = vunpack.c.h.b16 %v5610
    %v5688 = vunpack.c.l.b16 %v5611
    %v5689 = vunpack.c.h.b16 %v5611
    %v5690 = vunpack.c.l.b16 %v5612
    %v5691 = vunpack.c.h.b16 %v5612
    %v5692 = vunpack.c.l.b16 %v5613
    %v5693 = vunpack.c.h.b16 %v5613
    %v5694 = vunpack.c.l.b16 %v5614
    %v5695 = vunpack.c.h.b16 %v5614
    %v5696 = vunpack.c.l.b16 %v5615
    %v5697 = vunpack.c.h.b16 %v5615
    %v5698 = vunpack.c.l.b16 %v5616
    %v5699 = vunpack.c.h.b16 %v5616
    %v5700 = vunpack.c.l.b16 %v5617
    %v5701 = vunpack.c.h.b16 %v5617
    %v5702 = vunpack.c.l.b16 %v5618
    %v5703 = vunpack.c.h.b16 %v5618
    %v5704 = vunpack.c.l.b16 %v5619
    %v5705 = vunpack.c.h.b16 %v5619
    %v5706 = vunpack.c.l.b16 %v5620
    %v5707 = vunpack.c.h.b16 %v5620
    %v5708 = vunpack.c.l.b16 %v5621
    %v5709 = vunpack.c.h.b16 %v5621
    %v5710 = vunpack.c.l.b16 %v5622
    %v5711 = vunpack.c.h.b16 %v5622
    %v5712 = vunpack.c.l.b16 %v5623
    %v5713 = vunpack.c.h.b16 %v5623
    %v5714 = vunpack.c.l.b16 %v5624
    %v5715 = vunpack.c.h.b16 %v5624
    %v5716 = vunpack.c.l.b16 %v5625
    %v5717 = vunpack.c.h.b16 %v5625
    %v5718 = vunpack.c.l.b16 %v5626
    %v5719 = vunpack.c.h.b16 %v5626
    %v5720 = vunpack.c.l.b16 %v5627
    %v5721 = vunpack.c.h.b16 %v5627
    %v5722 = vunpack.c.l.b16 %v5628
    %v5723 = vunpack.c.h.b16 %v5628
    %v5724 = vunpack.c.l.b16 %v5629
    %v5725 = vunpack.c.h.b16 %v5629
    %v5726 = vpack.c.b16 %v5666, %v5662
    %v5727 = vpack.c.b16 %v5667, %v5663
    %v5728 = vpack.c.b16 %v5668, %v5664
    %v5729 = vpack.c.b16 %v5669, %v5665
    %v5730 = vpack.c.b16 %v5674, %v5670
    %v5731 = vpack.c.b16 %v5675, %v5671
    %v5732 = vpack.c.b16 %v5676, %v5672
    %v5733 = vpack.c.b16 %v5677, %v5673
    %v5734 = vpack.c.b16 %v5682, %v5678
    %v5735 = vpack.c.b16 %v5683, %v5679
    %v5736 = vpack.c.b16 %v5684, %v5680
    %v5737 = vpack.c.b16 %v5685, %v5681
    %v5738 = vpack.c.b16 %v5690, %v5686
    %v5739 = vpack.c.b16 %v5691, %v5687
    %v5740 = vpack.c.b16 %v5692, %v5688
    %v5741 = vpack.c.b16 %v5693, %v5689
    %v5742 = vpack.c.b16 %v5698, %v5694
    %v5743 = vpack.c.b16 %v5699, %v5695
    %v5744 = vpack.c.b16 %v5700, %v5696
    %v5745 = vpack.c.b16 %v5701, %v5697
    %v5746 = vpack.c.b16 %v5706, %v5702
    %v5747 = vpack.c.b16 %v5707, %v5703
    %v5748 = vpack.c.b16 %v5708, %v5704
    %v5749 = vpack.c.b16 %v5709, %v5705
    %v5750 = vpack.c.b16 %v5714, %v5710
    %v5751 = vpack.c.b16 %v5715, %v5711
    %v5752 = vpack.c.b16 %v5716, %v5712
    %v5753 = vpack.c.b16 %v5717, %v5713
    %v5754 = vpack.c.b16 %v5722, %v5718
    %v5755 = vpack.c.b16 %v5723, %v5719
    %v5756 = vpack.c.b16 %v5724, %v5720
    %v5757 = vpack.c.b16 %v5725, %v5721
    %5790 = vmatprep.subr.bf16.mxu0 %v5727
    %5791 = vmatpush1.bf16.msra.mxu0 %v5726
    %5792 = vmatprep.subr.bf16.mxu0 %v5731
    %5793 = vmatpush1.bf16.msra.mxu0 %v5730
    %5794 = vmatprep.subr.bf16.mxu0 %v5735
    %5795 = vmatpush1.bf16.msra.mxu0 %v5734
    %5796 = vmatprep.subr.bf16.mxu0 %v5739
    %5797 = vmatpush1.bf16.msra.mxu0 %v5738
    %5798 = vmatprep.subr.bf16.mxu0 %v5743
    %5799 = vmatpush1.bf16.msra.mxu0 %v5742
    %5800 = vmatprep.subr.bf16.mxu0 %v5747
    %5801 = vmatpush1.bf16.msra.mxu0 %v5746
    %5802 = vmatprep.subr.bf16.mxu0 %v5751
    %5803 = vmatpush1.bf16.msra.mxu0 %v5750
    %5804 = vmatprep.subr.bf16.mxu0 %v5755
    %5805 = vmatpush1.bf16.msra.mxu0 %v5754
    %5806 = vmatprep.subr.bf16.mxu0 0
    %5807 = vmatpush1.bf16.msra.mxu0 0
    %5808 = vmatprep.subr.bf16.mxu0 0
    %5809 = vmatpush1.bf16.msra.mxu0 0
    %5810 = vmatprep.subr.bf16.mxu0 0
    %5811 = vmatpush1.bf16.msra.mxu0 0
    %5812 = vmatprep.subr.bf16.mxu0 0
    %5813 = vmatpush1.bf16.msra.mxu0 0
    %5814 = vmatprep.subr.bf16.mxu0 0
    %5815 = vmatpush1.bf16.msra.mxu0 0
    %5816 = vmatprep.subr.bf16.mxu0 0
    %5817 = vmatpush1.bf16.msra.mxu0 0
    %5818 = vmatprep.subr.bf16.mxu0 0
    %5819 = vmatpush1.bf16.msra.mxu0 0
    %5820 = vmatprep.subr.bf16.mxu0 0
    %5821 = vmatpush1.bf16.msra.mxu0 0
    %5822 = vmatprep.mubr.bf16.mxu0 0
    %5823 = vmatmul.mubr.bf16.gmra.mrb[0].mxu0 %v5597
    %v5824 = vpop.f32.mrb[0].mxu0
    %v5825 = vadd.f32 0.0, %v5824
    %v5826 = vpop.f32.mrb[0].mxu0
    %v5827 = vadd.f32 0.0, %v5826
    %v5828 = vpop.f32.mrb[0].mxu0
    %v5829 = vpop.f32.mrb[0].mxu0
    %5830 = vdwg.mxu0
    %5831 = vmatprep.subr.bf16.mxu0 %v5729
    %5832 = vmatpush1.bf16.msra.mxu0 %v5728
    %5833 = vmatprep.subr.bf16.mxu0 %v5733
    %5834 = vmatpush1.bf16.msra.mxu0 %v5732
    %5835 = vmatprep.subr.bf16.mxu0 %v5737
    %5836 = vmatpush1.bf16.msra.mxu0 %v5736
    %5837 = vmatprep.subr.bf16.mxu0 %v5741
    %5838 = vmatpush1.bf16.msra.mxu0 %v5740
    %5839 = vmatprep.subr.bf16.mxu0 %v5745
    %5840 = vmatpush1.bf16.msra.mxu0 %v5744
    %5841 = vmatprep.subr.bf16.mxu0 %v5749
    %5842 = vmatpush1.bf16.msra.mxu0 %v5748
    %5843 = vmatprep.subr.bf16.mxu0 %v5753
    %5844 = vmatpush1.bf16.msra.mxu0 %v5752
    %5845 = vmatprep.subr.bf16.mxu0 %v5757
    %5846 = vmatpush1.bf16.msra.mxu0 %v5756
    %5847 = vmatprep.subr.bf16.mxu0 0
    %5848 = vmatpush1.bf16.msra.mxu0 0
    %5849 = vmatprep.subr.bf16.mxu0 0
    %5850 = vmatpush1.bf16.msra.mxu0 0
    %5851 = vmatprep.subr.bf16.mxu0 0
    %5852 = vmatpush1.bf16.msra.mxu0 0
    %5853 = vmatprep.subr.bf16.mxu0 0
    %5854 = vmatpush1.bf16.msra.mxu0 0
    %5855 = vmatprep.subr.bf16.mxu0 0
    %5856 = vmatpush1.bf16.msra.mxu0 0
    %5857 = vmatprep.subr.bf16.mxu0 0
    %5858 = vmatpush1.bf16.msra.mxu0 0
    %5859 = vmatprep.subr.bf16.mxu0 0
    %5860 = vmatpush1.bf16.msra.mxu0 0
    %5861 = vmatprep.subr.bf16.mxu0 0
    %5862 = vmatpush1.bf16.msra.mxu0 0
    %5863 = vmatprep.mubr.bf16.mxu0 0
    %5864 = vmatmul.mubr.bf16.gmra.mrb[0].mxu0 %v5597
    %v5865 = vpop.f32.mrb[0].mxu0
    %v5866 = vadd.f32 0.0, %v5865
    %v5867 = vpop.f32.mrb[0].mxu0
    %v5868 = vadd.f32 0.0, %v5867
    %v5869 = vpop.f32.mrb[0].mxu0
    %v5870 = vpop.f32.mrb[0].mxu0
    %5871 = vdwg.mxu0
    %v5904 = vunpack.c.l.b16 %v5565
    %v5905 = vunpack.c.h.b16 %v5565
    %v5906 = vunpack.c.l.b16 %v5566
    %v5907 = vunpack.c.h.b16 %v5566
    %v5908 = vunpack.c.l.b16 %v5567
    %v5909 = vunpack.c.h.b16 %v5567
    %v5910 = vunpack.c.l.b16 %v5568
    %v5911 = vunpack.c.h.b16 %v5568
    %v5912 = vunpack.c.l.b16 %v5569
    %v5913 = vunpack.c.h.b16 %v5569
    %v5914 = vunpack.c.l.b16 %v5570
    %v5915 = vunpack.c.h.b16 %v5570
    %v5916 = vunpack.c.l.b16 %v5571
    %v5917 = vunpack.c.h.b16 %v5571
    %v5918 = vunpack.c.l.b16 %v5572
    %v5919 = vunpack.c.h.b16 %v5572
    %v5920 = vunpack.c.l.b16 %v5573
    %v5921 = vunpack.c.h.b16 %v5573
    %v5922 = vunpack.c.l.b16 %v5574
    %v5923 = vunpack.c.h.b16 %v5574
    %v5924 = vunpack.c.l.b16 %v5575
    %v5925 = vunpack.c.h.b16 %v5575
    %v5926 = vunpack.c.l.b16 %v5576
    %v5927 = vunpack.c.h.b16 %v5576
    %v5928 = vunpack.c.l.b16 %v5577
    %v5929 = vunpack.c.h.b16 %v5577
    %v5930 = vunpack.c.l.b16 %v5578
    %v5931 = vunpack.c.h.b16 %v5578
    %v5932 = vunpack.c.l.b16 %v5579
    %v5933 = vunpack.c.h.b16 %v5579
    %v5934 = vunpack.c.l.b16 %v5580
    %v5935 = vunpack.c.h.b16 %v5580
    %v5936 = vunpack.c.l.b16 %v5581
    %v5937 = vunpack.c.h.b16 %v5581
    %v5938 = vunpack.c.l.b16 %v5582
    %v5939 = vunpack.c.h.b16 %v5582
    %v5940 = vunpack.c.l.b16 %v5583
    %v5941 = vunpack.c.h.b16 %v5583
    %v5942 = vunpack.c.l.b16 %v5584
    %v5943 = vunpack.c.h.b16 %v5584
    %v5944 = vunpack.c.l.b16 %v5585
    %v5945 = vunpack.c.h.b16 %v5585
    %v5946 = vunpack.c.l.b16 %v5586
    %v5947 = vunpack.c.h.b16 %v5586
    %v5948 = vunpack.c.l.b16 %v5587
    %v5949 = vunpack.c.h.b16 %v5587
    %v5950 = vunpack.c.l.b16 %v5588
    %v5951 = vunpack.c.h.b16 %v5588
    %v5952 = vunpack.c.l.b16 %v5589
    %v5953 = vunpack.c.h.b16 %v5589
    %v5954 = vunpack.c.l.b16 %v5590
    %v5955 = vunpack.c.h.b16 %v5590
    %v5956 = vunpack.c.l.b16 %v5591
    %v5957 = vunpack.c.h.b16 %v5591
    %v5958 = vunpack.c.l.b16 %v5592
    %v5959 = vunpack.c.h.b16 %v5592
    %v5960 = vunpack.c.l.b16 %v5593
    %v5961 = vunpack.c.h.b16 %v5593
    %v5962 = vunpack.c.l.b16 %v5594
    %v5963 = vunpack.c.h.b16 %v5594
    %v5964 = vunpack.c.l.b16 %v5595
    %v5965 = vunpack.c.h.b16 %v5595
    %v5966 = vunpack.c.l.b16 %v5596
    %v5967 = vunpack.c.h.b16 %v5596
    %v5968 = vpack.c.b16 %v5908, %v5904
    %v5969 = vpack.c.b16 %v5909, %v5905
    %v5970 = vpack.c.b16 %v5910, %v5906
    %v5971 = vpack.c.b16 %v5911, %v5907
    %v5972 = vpack.c.b16 %v5916, %v5912
    %v5973 = vpack.c.b16 %v5917, %v5913
    %v5974 = vpack.c.b16 %v5918, %v5914
    %v5975 = vpack.c.b16 %v5919, %v5915
    %v5976 = vpack.c.b16 %v5924, %v5920
    %v5977 = vpack.c.b16 %v5925, %v5921
    %v5978 = vpack.c.b16 %v5926, %v5922
    %v5979 = vpack.c.b16 %v5927, %v5923
    %v5980 = vpack.c.b16 %v5932, %v5928
    %v5981 = vpack.c.b16 %v5933, %v5929
    %v5982 = vpack.c.b16 %v5934, %v5930
    %v5983 = vpack.c.b16 %v5935, %v5931
    %v5984 = vpack.c.b16 %v5940, %v5936
    %v5985 = vpack.c.b16 %v5941, %v5937
    %v5986 = vpack.c.b16 %v5942, %v5938
    %v5987 = vpack.c.b16 %v5943, %v5939
    %v5988 = vpack.c.b16 %v5948, %v5944
    %v5989 = vpack.c.b16 %v5949, %v5945
    %v5990 = vpack.c.b16 %v5950, %v5946
    %v5991 = vpack.c.b16 %v5951, %v5947
    %v5992 = vpack.c.b16 %v5956, %v5952
    %v5993 = vpack.c.b16 %v5957, %v5953
    %v5994 = vpack.c.b16 %v5958, %v5954
    %v5995 = vpack.c.b16 %v5959, %v5955
    %v5996 = vpack.c.b16 %v5964, %v5960
    %v5997 = vpack.c.b16 %v5965, %v5961
    %v5998 = vpack.c.b16 %v5966, %v5962
    %v5999 = vpack.c.b16 %v5967, %v5963
    %6032 = vmatprep.subr.bf16.mxu0 %v5969
    %6033 = vmatpush1.bf16.msra.mxu0 %v5968
    %6034 = vmatprep.subr.bf16.mxu0 %v5973
    %6035 = vmatpush1.bf16.msra.mxu0 %v5972
    %6036 = vmatprep.subr.bf16.mxu0 %v5977
    %6037 = vmatpush1.bf16.msra.mxu0 %v5976
    %6038 = vmatprep.subr.bf16.mxu0 %v5981
    %6039 = vmatpush1.bf16.msra.mxu0 %v5980
    %6040 = vmatprep.subr.bf16.mxu0 %v5985
    %6041 = vmatpush1.bf16.msra.mxu0 %v5984
    %6042 = vmatprep.subr.bf16.mxu0 %v5989
    %6043 = vmatpush1.bf16.msra.mxu0 %v5988
    %6044 = vmatprep.subr.bf16.mxu0 %v5993
    %6045 = vmatpush1.bf16.msra.mxu0 %v5992
    %6046 = vmatprep.subr.bf16.mxu0 %v5997
    %6047 = vmatpush1.bf16.msra.mxu0 %v5996
    %6048 = vmatprep.subr.bf16.mxu0 0
    %6049 = vmatpush1.bf16.msra.mxu0 0
    %6050 = vmatprep.subr.bf16.mxu0 0
    %6051 = vmatpush1.bf16.msra.mxu0 0
    %6052 = vmatprep.subr.bf16.mxu0 0
    %6053 = vmatpush1.bf16.msra.mxu0 0
    %6054 = vmatprep.subr.bf16.mxu0 0
    %6055 = vmatpush1.bf16.msra.mxu0 0
    %6056 = vmatprep.subr.bf16.mxu0 0
    %6057 = vmatpush1.bf16.msra.mxu0 0
    %6058 = vmatprep.subr.bf16.mxu0 0
    %6059 = vmatpush1.bf16.msra.mxu0 0
    %6060 = vmatprep.subr.bf16.mxu0 0
    %6061 = vmatpush1.bf16.msra.mxu0 0
    %6062 = vmatprep.subr.bf16.mxu0 0
    %6063 = vmatpush1.bf16.msra.mxu0 0
    %6064 = vmatprep.mubr.bf16.mxu0 0
    %6065 = vmatmul.mubr.bf16.gmra.mrb[0].mxu0 %v5564
    %v6066 = vpop.f32.mrb[0].mxu0
    %v6067 = vadd.f32 %v5825, %v6066
    %v6068 = vpop.f32.mrb[0].mxu0
    %v6069 = vadd.f32 %v5827, %v6068
    %v6070 = vpop.f32.mrb[0].mxu0
    %v6071 = vpop.f32.mrb[0].mxu0
    %6072 = vdwg.mxu0
    %6073 = vmatprep.subr.bf16.mxu0 %v5971
    %6074 = vmatpush1.bf16.msra.mxu0 %v5970
    %6075 = vmatprep.subr.bf16.mxu0 %v5975
    %6076 = vmatpush1.bf16.msra.mxu0 %v5974
    %6077 = vmatprep.subr.bf16.mxu0 %v5979
    %6078 = vmatpush1.bf16.msra.mxu0 %v5978
    %6079 = vmatprep.subr.bf16.mxu0 %v5983
    %6080 = vmatpush1.bf16.msra.mxu0 %v5982
    %6081 = vmatprep.subr.bf16.mxu0 %v5987
    %6082 = vmatpush1.bf16.msra.mxu0 %v5986
    %6083 = vmatprep.subr.bf16.mxu0 %v5991
    %6084 = vmatpush1.bf16.msra.mxu0 %v5990
    %6085 = vmatprep.subr.bf16.mxu0 %v5995
    %6086 = vmatpush1.bf16.msra.mxu0 %v5994
    %6087 = vmatprep.subr.bf16.mxu0 %v5999
    %6088 = vmatpush1.bf16.msra.mxu0 %v5998
    %6089 = vmatprep.subr.bf16.mxu0 0
    %6090 = vmatpush1.bf16.msra.mxu0 0
    %6091 = vmatprep.subr.bf16.mxu0 0
    %6092 = vmatpush1.bf16.msra.mxu0 0
    %6093 = vmatprep.subr.bf16.mxu0 0
    %6094 = vmatpush1.bf16.msra.mxu0 0
    %6095 = vmatprep.subr.bf16.mxu0 0
    %6096 = vmatpush1.bf16.msra.mxu0 0
    %6097 = vmatprep.subr.bf16.mxu0 0
    %6098 = vmatpush1.bf16.msra.mxu0 0
    %6099 = vmatprep.subr.bf16.mxu0 0
    %6100 = vmatpush1.bf16.msra.mxu0 0
    %6101 = vmatprep.subr.bf16.mxu0 0
    %6102 = vmatpush1.bf16.msra.mxu0 0
    %6103 = vmatprep.subr.bf16.mxu0 0
    %6104 = vmatpush1.bf16.msra.mxu0 0
    %6105 = vmatprep.mubr.bf16.mxu0 0
    %6106 = vmatmul.mubr.bf16.gmra.mrb[0].mxu0 %v5564
    %v6107 = vpop.f32.mrb[0].mxu0
    %v6108 = vadd.f32 %v5866, %v6107
    %v6109 = vpop.f32.mrb[0].mxu0
    %v6110 = vadd.f32 %v5868, %v6109
    %v6111 = vpop.f32.mrb[0].mxu0
    %v6112 = vpop.f32.mrb[0].mxu0
    %6113 = vdwg.mxu0
    %v6114 = vld [vmem:[%s6] sm:$0xf]
    %v6116 = vlaneseq
    %v6117 = vshrl.u32 %v6116, 7
    %v6118 = vsub.s32 0, %v6117
    %v6119 = vrot.slane %v6114, %v6118
    %v6120 = vlaneseq
    %v6121 = vshrl.u32 %v6120, 7
    %v6122 = vsub.s32 1, %v6121
    %v6123 = vrot.slane %v6114, %v6122
    %v6124 = vlaneseq
    %v6125 = vshrl.u32 %v6124, 7
    %v6126 = vsub.s32 2, %v6125
    %v6127 = vrot.slane %v6114, %v6126
    %v6128 = vlaneseq
    %v6129 = vshrl.u32 %v6128, 7
    %v6130 = vsub.s32 3, %v6129
    %v6131 = vrot.slane %v6114, %v6130
    %v6136 = vadd.f32 %v6067, %v6119
    %v6137 = vadd.f32 %v6069, %v6123
    %v6138 = vadd.f32 %v6108, %v6127
    %v6139 = vadd.f32 %v6110, %v6131
    %v6140 = vxor.u32 %v6136, 2147483648
    %v6141 = vmul.f32 %v6140, 1.442695
    %v6142 = vpow.pop %v6141
    %v6143 = vadd.f32 %v6142, 1.0
    %v6144 = vrcp.pop %v6143
    %v6145 = vmul.f32 1.0, %v6144
    %v6146 = vxor.u32 %v6137, 2147483648
    %v6147 = vmul.f32 %v6146, 1.442695
    %v6148 = vpow.pop %v6147
    %v6149 = vadd.f32 %v6148, 1.0
    %v6150 = vrcp.pop %v6149
    %v6151 = vmul.f32 1.0, %v6150
    %v6152 = vtanh.pop %v6138
    %v6153 = vxor.u32 %v6139, 2147483648
    %v6154 = vmul.f32 %v6153, 1.442695
    %v6155 = vpow.pop %v6154
    %v6156 = vadd.f32 %v6155, 1.0
    %v6157 = vrcp.pop %v6156
    %v6158 = vmul.f32 1.0, %v6157
    %v6159 = vmul.f32 %v6151, %v5227
    %v6160 = vmul.f32 %v6145, %v6152
    %v6161 = vadd.f32 %v6159, %v6160
    %v6162 = vtanh.pop %v6161
    %v6163 = vmul.f32 %v6158, %v6162
    %6164 = vst [vmem:[#allocation3] sm:$0xff] %v5563
    %6165 = vst [vmem:[#allocation4] sm:$0xff] %v5561
    %6166 = vst [vmem:[#allocation5] sm:$0xff] %v6163
    %6167 = vst [vmem:[#allocation6] sm:$0xff] %v6161
    %s6168 = scalar_lea.vmem %s11, 40
    %6169 = vst [vmem:[%s6168] sm:$0xff] %v6163
    %v6170 = vld [vmem:[#allocation3] sm:$0xff]
    %v6171 = vld [vmem:[#allocation4] sm:$0xff]
    %v6172 = vld [vmem:[#allocation5] sm:$0xff]
    %v6173 = vld [vmem:[#allocation6] sm:$0xff]
    %s6174 = smul.u32 6, 4
    %s6175 = smul.addr %s6174, 8
    %s6176 = scalar_lea.vmem [#allocation2], %s6175
    %v6177 = vld [vmem:[%s6176] sm:$0xff]
    %v6178 = vld [vmem:[%s6176 + $0x8] sm:$0xff]
    %v6179 = vld [vmem:[%s6176 + $0x10] sm:$0xff]
    %v6180 = vld [vmem:[%s6176 + $0x18] sm:$0xff]
    %v6181 = vpack.c.bf16 %v6170, %v6170
    %v6182 = vld [vmem:[#allocation7] sm:$0xff]
    %v6183 = vld [vmem:[#allocation7 + $0x8] sm:$0xff]
    %v6184 = vld [vmem:[#allocation7 + $0x10] sm:$0xff]
    %v6185 = vld [vmem:[#allocation7 + $0x18] sm:$0xff]
    %v6186 = vld [vmem:[#allocation7 + $0x20] sm:$0xff]
    %v6187 = vld [vmem:[#allocation7 + $0x28] sm:$0xff]
    %v6188 = vld [vmem:[#allocation7 + $0x30] sm:$0xff]
    %v6189 = vld [vmem:[#allocation7 + $0x38] sm:$0xff]
    %v6190 = vld [vmem:[#allocation7 + $0x40] sm:$0xff]
    %v6191 = vld [vmem:[#allocation7 + $0x48] sm:$0xff]
    %v6192 = vld [vmem:[#allocation7 + $0x50] sm:$0xff]
    %v6193 = vld [vmem:[#allocation7 + $0x58] sm:$0xff]
    %v6194 = vld [vmem:[#allocation7 + $0x60] sm:$0xff]
    %v6195 = vld [vmem:[#allocation7 + $0x68] sm:$0xff]
    %v6196 = vld [vmem:[#allocation7 + $0x70] sm:$0xff]
    %v6197 = vld [vmem:[#allocation7 + $0x78] sm:$0xff]
    %v6198 = vld [vmem:[#allocation7 + $0x80] sm:$0xff]
    %v6199 = vld [vmem:[#allocation7 + $0x88] sm:$0xff]
    %v6200 = vld [vmem:[#allocation7 + $0x90] sm:$0xff]
    %v6201 = vld [vmem:[#allocation7 + $0x98] sm:$0xff]
    %v6202 = vld [vmem:[#allocation7 + $0xa0] sm:$0xff]
    %v6203 = vld [vmem:[#allocation7 + $0xa8] sm:$0xff]
    %v6204 = vld [vmem:[#allocation7 + $0xb0] sm:$0xff]
    %v6205 = vld [vmem:[#allocation7 + $0xb8] sm:$0xff]
    %v6206 = vld [vmem:[#allocation7 + $0xc0] sm:$0xff]
    %v6207 = vld [vmem:[#allocation7 + $0xc8] sm:$0xff]
    %v6208 = vld [vmem:[#allocation7 + $0xd0] sm:$0xff]
    %v6209 = vld [vmem:[#allocation7 + $0xd8] sm:$0xff]
    %v6210 = vld [vmem:[#allocation7 + $0xe0] sm:$0xff]
    %v6211 = vld [vmem:[#allocation7 + $0xe8] sm:$0xff]
    %v6212 = vld [vmem:[#allocation7 + $0xf0] sm:$0xff]
    %v6213 = vld [vmem:[#allocation7 + $0xf8] sm:$0xff]
    %v6246 = vunpack.c.l.b16 %v6182
    %v6247 = vunpack.c.h.b16 %v6182
    %v6248 = vunpack.c.l.b16 %v6183
    %v6249 = vunpack.c.h.b16 %v6183
    %v6250 = vunpack.c.l.b16 %v6184
    %v6251 = vunpack.c.h.b16 %v6184
    %v6252 = vunpack.c.l.b16 %v6185
    %v6253 = vunpack.c.h.b16 %v6185
    %v6254 = vunpack.c.l.b16 %v6186
    %v6255 = vunpack.c.h.b16 %v6186
    %v6256 = vunpack.c.l.b16 %v6187
    %v6257 = vunpack.c.h.b16 %v6187
    %v6258 = vunpack.c.l.b16 %v6188
    %v6259 = vunpack.c.h.b16 %v6188
    %v6260 = vunpack.c.l.b16 %v6189
    %v6261 = vunpack.c.h.b16 %v6189
    %v6262 = vunpack.c.l.b16 %v6190
    %v6263 = vunpack.c.h.b16 %v6190
    %v6264 = vunpack.c.l.b16 %v6191
    %v6265 = vunpack.c.h.b16 %v6191
    %v6266 = vunpack.c.l.b16 %v6192
    %v6267 = vunpack.c.h.b16 %v6192
    %v6268 = vunpack.c.l.b16 %v6193
    %v6269 = vunpack.c.h.b16 %v6193
    %v6270 = vunpack.c.l.b16 %v6194
    %v6271 = vunpack.c.h.b16 %v6194
    %v6272 = vunpack.c.l.b16 %v6195
    %v6273 = vunpack.c.h.b16 %v6195
    %v6274 = vunpack.c.l.b16 %v6196
    %v6275 = vunpack.c.h.b16 %v6196
    %v6276 = vunpack.c.l.b16 %v6197
    %v6277 = vunpack.c.h.b16 %v6197
    %v6278 = vunpack.c.l.b16 %v6198
    %v6279 = vunpack.c.h.b16 %v6198
    %v6280 = vunpack.c.l.b16 %v6199
    %v6281 = vunpack.c.h.b16 %v6199
    %v6282 = vunpack.c.l.b16 %v6200
    %v6283 = vunpack.c.h.b16 %v6200
    %v6284 = vunpack.c.l.b16 %v6201
    %v6285 = vunpack.c.h.b16 %v6201
    %v6286 = vunpack.c.l.b16 %v6202
    %v6287 = vunpack.c.h.b16 %v6202
    %v6288 = vunpack.c.l.b16 %v6203
    %v6289 = vunpack.c.h.b16 %v6203
    %v6290 = vunpack.c.l.b16 %v6204
    %v6291 = vunpack.c.h.b16 %v6204
    %v6292 = vunpack.c.l.b16 %v6205
    %v6293 = vunpack.c.h.b16 %v6205
    %v6294 = vunpack.c.l.b16 %v6206
    %v6295 = vunpack.c.h.b16 %v6206
    %v6296 = vunpack.c.l.b16 %v6207
    %v6297 = vunpack.c.h.b16 %v6207
    %v6298 = vunpack.c.l.b16 %v6208
    %v6299 = vunpack.c.h.b16 %v6208
    %v6300 = vunpack.c.l.b16 %v6209
    %v6301 = vunpack.c.h.b16 %v6209
    %v6302 = vunpack.c.l.b16 %v6210
    %v6303 = vunpack.c.h.b16 %v6210
    %v6304 = vunpack.c.l.b16 %v6211
    %v6305 = vunpack.c.h.b16 %v6211
    %v6306 = vunpack.c.l.b16 %v6212
    %v6307 = vunpack.c.h.b16 %v6212
    %v6308 = vunpack.c.l.b16 %v6213
    %v6309 = vunpack.c.h.b16 %v6213
    %v6310 = vpack.c.b16 %v6250, %v6246
    %v6311 = vpack.c.b16 %v6251, %v6247
    %v6312 = vpack.c.b16 %v6252, %v6248
    %v6313 = vpack.c.b16 %v6253, %v6249
    %v6314 = vpack.c.b16 %v6258, %v6254
    %v6315 = vpack.c.b16 %v6259, %v6255
    %v6316 = vpack.c.b16 %v6260, %v6256
    %v6317 = vpack.c.b16 %v6261, %v6257
    %v6318 = vpack.c.b16 %v6266, %v6262
    %v6319 = vpack.c.b16 %v6267, %v6263
    %v6320 = vpack.c.b16 %v6268, %v6264
    %v6321 = vpack.c.b16 %v6269, %v6265
    %v6322 = vpack.c.b16 %v6274, %v6270
    %v6323 = vpack.c.b16 %v6275, %v6271
    %v6324 = vpack.c.b16 %v6276, %v6272
    %v6325 = vpack.c.b16 %v6277, %v6273
    %v6326 = vpack.c.b16 %v6282, %v6278
    %v6327 = vpack.c.b16 %v6283, %v6279
    %v6328 = vpack.c.b16 %v6284, %v6280
    %v6329 = vpack.c.b16 %v6285, %v6281
    %v6330 = vpack.c.b16 %v6290, %v6286
    %v6331 = vpack.c.b16 %v6291, %v6287
    %v6332 = vpack.c.b16 %v6292, %v6288
    %v6333 = vpack.c.b16 %v6293, %v6289
    %v6334 = vpack.c.b16 %v6298, %v6294
    %v6335 = vpack.c.b16 %v6299, %v6295
    %v6336 = vpack.c.b16 %v6300, %v6296
    %v6337 = vpack.c.b16 %v6301, %v6297
    %v6338 = vpack.c.b16 %v6306, %v6302
    %v6339 = vpack.c.b16 %v6307, %v6303
    %v6340 = vpack.c.b16 %v6308, %v6304
    %v6341 = vpack.c.b16 %v6309, %v6305
    %6374 = vmatprep.subr.bf16.mxu0 %v6311
    %6375 = vmatpush1.bf16.msra.mxu0 %v6310
    %6376 = vmatprep.subr.bf16.mxu0 %v6315
    %6377 = vmatpush1.bf16.msra.mxu0 %v6314
    %6378 = vmatprep.subr.bf16.mxu0 %v6319
    %6379 = vmatpush1.bf16.msra.mxu0 %v6318
    %6380 = vmatprep.subr.bf16.mxu0 %v6323
    %6381 = vmatpush1.bf16.msra.mxu0 %v6322
    %6382 = vmatprep.subr.bf16.mxu0 %v6327
    %6383 = vmatpush1.bf16.msra.mxu0 %v6326
    %6384 = vmatprep.subr.bf16.mxu0 %v6331
    %6385 = vmatpush1.bf16.msra.mxu0 %v6330
    %6386 = vmatprep.subr.bf16.mxu0 %v6335
    %6387 = vmatpush1.bf16.msra.mxu0 %v6334
    %6388 = vmatprep.subr.bf16.mxu0 %v6339
    %6389 = vmatpush1.bf16.msra.mxu0 %v6338
    %6390 = vmatprep.subr.bf16.mxu0 0
    %6391 = vmatpush1.bf16.msra.mxu0 0
    %6392 = vmatprep.subr.bf16.mxu0 0
    %6393 = vmatpush1.bf16.msra.mxu0 0
    %6394 = vmatprep.subr.bf16.mxu0 0
    %6395 = vmatpush1.bf16.msra.mxu0 0
    %6396 = vmatprep.subr.bf16.mxu0 0
    %6397 = vmatpush1.bf16.msra.mxu0 0
    %6398 = vmatprep.subr.bf16.mxu0 0
    %6399 = vmatpush1.bf16.msra.mxu0 0
    %6400 = vmatprep.subr.bf16.mxu0 0
    %6401 = vmatpush1.bf16.msra.mxu0 0
    %6402 = vmatprep.subr.bf16.mxu0 0
    %6403 = vmatpush1.bf16.msra.mxu0 0
    %6404 = vmatprep.subr.bf16.mxu0 0
    %6405 = vmatpush1.bf16.msra.mxu0 0
    %6406 = vmatprep.mubr.bf16.mxu0 0
    %6407 = vmatmul.mubr.bf16.gmra.mrb[0].mxu0 %v6181
    %v6408 = vpop.f32.mrb[0].mxu0
    %v6409 = vadd.f32 0.0, %v6408
    %v6410 = vpop.f32.mrb[0].mxu0
    %v6411 = vadd.f32 0.0, %v6410
    %v6412 = vpop.f32.mrb[0].mxu0
    %v6413 = vpop.f32.mrb[0].mxu0
    %6414 = vdwg.mxu0
    %6415 = vmatprep.subr.bf16.mxu0 %v6313
    %6416 = vmatpush1.bf16.msra.mxu0 %v6312
    %6417 = vmatprep.subr.bf16.mxu0 %v6317
    %6418 = vmatpush1.bf16.msra.mxu0 %v6316
    %6419 = vmatprep.subr.bf16.mxu0 %v6321
    %6420 = vmatpush1.bf16.msra.mxu0 %v6320
    %6421 = vmatprep.subr.bf16.mxu0 %v6325
    %6422 = vmatpush1.bf16.msra.mxu0 %v6324
    %6423 = vmatprep.subr.bf16.mxu0 %v6329
    %6424 = vmatpush1.bf16.msra.mxu0 %v6328
    %6425 = vmatprep.subr.bf16.mxu0 %v6333
    %6426 = vmatpush1.bf16.msra.mxu0 %v6332
    %6427 = vmatprep.subr.bf16.mxu0 %v6337
    %6428 = vmatpush1.bf16.msra.mxu0 %v6336
    %6429 = vmatprep.subr.bf16.mxu0 %v6341
    %6430 = vmatpush1.bf16.msra.mxu0 %v6340
    %6431 = vmatprep.subr.bf16.mxu0 0
    %6432 = vmatpush1.bf16.msra.mxu0 0
    %6433 = vmatprep.subr.bf16.mxu0 0
    %6434 = vmatpush1.bf16.msra.mxu0 0
    %6435 = vmatprep.subr.bf16.mxu0 0
    %6436 = vmatpush1.bf16.msra.mxu0 0
    %6437 = vmatprep.subr.bf16.mxu0 0
    %6438 = vmatpush1.bf16.msra.mxu0 0
    %6439 = vmatprep.subr.bf16.mxu0 0
    %6440 = vmatpush1.bf16.msra.mxu0 0
    %6441 = vmatprep.subr.bf16.mxu0 0
    %6442 = vmatpush1.bf16.msra.mxu0 0
    %6443 = vmatprep.subr.bf16.mxu0 0
    %6444 = vmatpush1.bf16.msra.mxu0 0
    %6445 = vmatprep.subr.bf16.mxu0 0
    %6446 = vmatpush1.bf16.msra.mxu0 0
    %6447 = vmatprep.mubr.bf16.mxu0 0
    %6448 = vmatmul.mubr.bf16.gmra.mrb[0].mxu0 %v6181
    %v6449 = vpop.f32.mrb[0].mxu0
    %v6450 = vadd.f32 0.0, %v6449
    %v6451 = vpop.f32.mrb[0].mxu0
    %v6452 = vadd.f32 0.0, %v6451
    %v6453 = vpop.f32.mrb[0].mxu0
    %v6454 = vpop.f32.mrb[0].mxu0
    %6455 = vdwg.mxu0
    %v6456 = vadd.f32 %v6177, %v6409
    %v6457 = vadd.f32 %v6178, %v6411
    %v6458 = vadd.f32 %v6179, %v6450
    %v6459 = vadd.f32 %v6180, %v6452
    %v6460 = vld [vmem:[%s3] sm:$0xf]
    %v6462 = vlaneseq
    %v6463 = vshrl.u32 %v6462, 7
    %v6464 = vsub.s32 0, %v6463
    %v6465 = vrot.slane %v6460, %v6464
    %v6466 = vlaneseq
    %v6467 = vshrl.u32 %v6466, 7
    %v6468 = vsub.s32 1, %v6467
    %v6469 = vrot.slane %v6460, %v6468
    %v6470 = vlaneseq
    %v6471 = vshrl.u32 %v6470, 7
    %v6472 = vsub.s32 2, %v6471
    %v6473 = vrot.slane %v6460, %v6472
    %v6474 = vlaneseq
    %v6475 = vshrl.u32 %v6474, 7
    %v6476 = vsub.s32 3, %v6475
    %v6477 = vrot.slane %v6460, %v6476
    %v6482 = vadd.f32 %v6456, %v6465
    %v6483 = vadd.f32 %v6457, %v6469
    %v6484 = vadd.f32 %v6458, %v6473
    %v6485 = vadd.f32 %v6459, %v6477
    %v6486 = vxor.u32 %v6482, 2147483648
    %v6487 = vmul.f32 %v6486, 1.442695
    %v6488 = vpow.pop %v6487
    %v6489 = vadd.f32 %v6488, 1.0
    %v6490 = vrcp.pop %v6489
    %v6491 = vmul.f32 1.0, %v6490
    %v6492 = vxor.u32 %v6483, 2147483648
    %v6493 = vmul.f32 %v6492, 1.442695
    %v6494 = vpow.pop %v6493
    %v6495 = vadd.f32 %v6494, 1.0
    %v6496 = vrcp.pop %v6495
    %v6497 = vmul.f32 1.0, %v6496
    %v6498 = vtanh.pop %v6484
    %v6499 = vxor.u32 %v6485, 2147483648
    %v6500 = vmul.f32 %v6499, 1.442695
    %v6501 = vpow.pop %v6500
    %v6502 = vadd.f32 %v6501, 1.0
    %v6503 = vrcp.pop %v6502
    %v6504 = vmul.f32 1.0, %v6503
    %v6505 = vmul.f32 %v6497, %v6171
    %v6506 = vmul.f32 %v6491, %v6498
    %v6507 = vadd.f32 %v6505, %v6506
    %v6508 = vtanh.pop %v6507
    %v6509 = vmul.f32 %v6504, %v6508
    %v6510 = vpack.c.bf16 %v6509, %v6509
    %v6511 = vld [vmem:[#allocation9] sm:$0xff]
    %v6512 = vld [vmem:[#allocation9 + $0x8] sm:$0xff]
    %v6513 = vld [vmem:[#allocation9 + $0x10] sm:$0xff]
    %v6514 = vld [vmem:[#allocation9 + $0x18] sm:$0xff]
    %v6515 = vld [vmem:[#allocation9 + $0x20] sm:$0xff]
    %v6516 = vld [vmem:[#allocation9 + $0x28] sm:$0xff]
    %v6517 = vld [vmem:[#allocation9 + $0x30] sm:$0xff]
    %v6518 = vld [vmem:[#allocation9 + $0x38] sm:$0xff]
    %v6519 = vld [vmem:[#allocation9 + $0x40] sm:$0xff]
    %v6520 = vld [vmem:[#allocation9 + $0x48] sm:$0xff]
    %v6521 = vld [vmem:[#allocation9 + $0x50] sm:$0xff]
    %v6522 = vld [vmem:[#allocation9 + $0x58] sm:$0xff]
    %v6523 = vld [vmem:[#allocation9 + $0x60] sm:$0xff]
    %v6524 = vld [vmem:[#allocation9 + $0x68] sm:$0xff]
    %v6525 = vld [vmem:[#allocation9 + $0x70] sm:$0xff]
    %v6526 = vld [vmem:[#allocation9 + $0x78] sm:$0xff]
    %v6527 = vld [vmem:[#allocation9 + $0x80] sm:$0xff]
    %v6528 = vld [vmem:[#allocation9 + $0x88] sm:$0xff]
    %v6529 = vld [vmem:[#allocation9 + $0x90] sm:$0xff]
    %v6530 = vld [vmem:[#allocation9 + $0x98] sm:$0xff]
    %v6531 = vld [vmem:[#allocation9 + $0xa0] sm:$0xff]
    %v6532 = vld [vmem:[#allocation9 + $0xa8] sm:$0xff]
    %v6533 = vld [vmem:[#allocation9 + $0xb0] sm:$0xff]
    %v6534 = vld [vmem:[#allocation9 + $0xb8] sm:$0xff]
    %v6535 = vld [vmem:[#allocation9 + $0xc0] sm:$0xff]
    %v6536 = vld [vmem:[#allocation9 + $0xc8] sm:$0xff]
    %v6537 = vld [vmem:[#allocation9 + $0xd0] sm:$0xff]
    %v6538 = vld [vmem:[#allocation9 + $0xd8] sm:$0xff]
    %v6539 = vld [vmem:[#allocation9 + $0xe0] sm:$0xff]
    %v6540 = vld [vmem:[#allocation9 + $0xe8] sm:$0xff]
    %v6541 = vld [vmem:[#allocation9 + $0xf0] sm:$0xff]
    %v6542 = vld [vmem:[#allocation9 + $0xf8] sm:$0xff]
    %v6543 = vpack.c.bf16 %v6172, %v6172
    %v6544 = vld [vmem:[#allocation11] sm:$0xff]
    %v6545 = vld [vmem:[#allocation11 + $0x8] sm:$0xff]
    %v6546 = vld [vmem:[#allocation11 + $0x10] sm:$0xff]
    %v6547 = vld [vmem:[#allocation11 + $0x18] sm:$0xff]
    %v6548 = vld [vmem:[#allocation11 + $0x20] sm:$0xff]
    %v6549 = vld [vmem:[#allocation11 + $0x28] sm:$0xff]
    %v6550 = vld [vmem:[#allocation11 + $0x30] sm:$0xff]
    %v6551 = vld [vmem:[#allocation11 + $0x38] sm:$0xff]
    %v6552 = vld [vmem:[#allocation11 + $0x40] sm:$0xff]
    %v6553 = vld [vmem:[#allocation11 + $0x48] sm:$0xff]
    %v6554 = vld [vmem:[#allocation11 + $0x50] sm:$0xff]
    %v6555 = vld [vmem:[#allocation11 + $0x58] sm:$0xff]
    %v6556 = vld [vmem:[#allocation11 + $0x60] sm:$0xff]
    %v6557 = vld [vmem:[#allocation11 + $0x68] sm:$0xff]
    %v6558 = vld [vmem:[#allocation11 + $0x70] sm:$0xff]
    %v6559 = vld [vmem:[#allocation11 + $0x78] sm:$0xff]
    %v6560 = vld [vmem:[#allocation11 + $0x80] sm:$0xff]
    %v6561 = vld [vmem:[#allocation11 + $0x88] sm:$0xff]
    %v6562 = vld [vmem:[#allocation11 + $0x90] sm:$0xff]
    %v6563 = vld [vmem:[#allocation11 + $0x98] sm:$0xff]
    %v6564 = vld [vmem:[#allocation11 + $0xa0] sm:$0xff]
    %v6565 = vld [vmem:[#allocation11 + $0xa8] sm:$0xff]
    %v6566 = vld [vmem:[#allocation11 + $0xb0] sm:$0xff]
    %v6567 = vld [vmem:[#allocation11 + $0xb8] sm:$0xff]
    %v6568 = vld [vmem:[#allocation11 + $0xc0] sm:$0xff]
    %v6569 = vld [vmem:[#allocation11 + $0xc8] sm:$0xff]
    %v6570 = vld [vmem:[#allocation11 + $0xd0] sm:$0xff]
    %v6571 = vld [vmem:[#allocation11 + $0xd8] sm:$0xff]
    %v6572 = vld [vmem:[#allocation11 + $0xe0] sm:$0xff]
    %v6573 = vld [vmem:[#allocation11 + $0xe8] sm:$0xff]
    %v6574 = vld [vmem:[#allocation11 + $0xf0] sm:$0xff]
    %v6575 = vld [vmem:[#allocation11 + $0xf8] sm:$0xff]
    %v6608 = vunpack.c.l.b16 %v6544
    %v6609 = vunpack.c.h.b16 %v6544
    %v6610 = vunpack.c.l.b16 %v6545
    %v6611 = vunpack.c.h.b16 %v6545
    %v6612 = vunpack.c.l.b16 %v6546
    %v6613 = vunpack.c.h.b16 %v6546
    %v6614 = vunpack.c.l.b16 %v6547
    %v6615 = vunpack.c.h.b16 %v6547
    %v6616 = vunpack.c.l.b16 %v6548
    %v6617 = vunpack.c.h.b16 %v6548
    %v6618 = vunpack.c.l.b16 %v6549
    %v6619 = vunpack.c.h.b16 %v6549
    %v6620 = vunpack.c.l.b16 %v6550
    %v6621 = vunpack.c.h.b16 %v6550
    %v6622 = vunpack.c.l.b16 %v6551
    %v6623 = vunpack.c.h.b16 %v6551
    %v6624 = vunpack.c.l.b16 %v6552
    %v6625 = vunpack.c.h.b16 %v6552
    %v6626 = vunpack.c.l.b16 %v6553
    %v6627 = vunpack.c.h.b16 %v6553
    %v6628 = vunpack.c.l.b16 %v6554
    %v6629 = vunpack.c.h.b16 %v6554
    %v6630 = vunpack.c.l.b16 %v6555
    %v6631 = vunpack.c.h.b16 %v6555
    %v6632 = vunpack.c.l.b16 %v6556
    %v6633 = vunpack.c.h.b16 %v6556
    %v6634 = vunpack.c.l.b16 %v6557
    %v6635 = vunpack.c.h.b16 %v6557
    %v6636 = vunpack.c.l.b16 %v6558
    %v6637 = vunpack.c.h.b16 %v6558
    %v6638 = vunpack.c.l.b16 %v6559
    %v6639 = vunpack.c.h.b16 %v6559
    %v6640 = vunpack.c.l.b16 %v6560
    %v6641 = vunpack.c.h.b16 %v6560
    %v6642 = vunpack.c.l.b16 %v6561
    %v6643 = vunpack.c.h.b16 %v6561
    %v6644 = vunpack.c.l.b16 %v6562
    %v6645 = vunpack.c.h.b16 %v6562
    %v6646 = vunpack.c.l.b16 %v6563
    %v6647 = vunpack.c.h.b16 %v6563
    %v6648 = vunpack.c.l.b16 %v6564
    %v6649 = vunpack.c.h.b16 %v6564
    %v6650 = vunpack.c.l.b16 %v6565
    %v6651 = vunpack.c.h.b16 %v6565
    %v6652 = vunpack.c.l.b16 %v6566
    %v6653 = vunpack.c.h.b16 %v6566
    %v6654 = vunpack.c.l.b16 %v6567
    %v6655 = vunpack.c.h.b16 %v6567
    %v6656 = vunpack.c.l.b16 %v6568
    %v6657 = vunpack.c.h.b16 %v6568
    %v6658 = vunpack.c.l.b16 %v6569
    %v6659 = vunpack.c.h.b16 %v6569
    %v6660 = vunpack.c.l.b16 %v6570
    %v6661 = vunpack.c.h.b16 %v6570
    %v6662 = vunpack.c.l.b16 %v6571
    %v6663 = vunpack.c.h.b16 %v6571
    %v6664 = vunpack.c.l.b16 %v6572
    %v6665 = vunpack.c.h.b16 %v6572
    %v6666 = vunpack.c.l.b16 %v6573
    %v6667 = vunpack.c.h.b16 %v6573
    %v6668 = vunpack.c.l.b16 %v6574
    %v6669 = vunpack.c.h.b16 %v6574
    %v6670 = vunpack.c.l.b16 %v6575
    %v6671 = vunpack.c.h.b16 %v6575
    %v6672 = vpack.c.b16 %v6612, %v6608
    %v6673 = vpack.c.b16 %v6613, %v6609
    %v6674 = vpack.c.b16 %v6614, %v6610
    %v6675 = vpack.c.b16 %v6615, %v6611
    %v6676 = vpack.c.b16 %v6620, %v6616
    %v6677 = vpack.c.b16 %v6621, %v6617
    %v6678 = vpack.c.b16 %v6622, %v6618
    %v6679 = vpack.c.b16 %v6623, %v6619
    %v6680 = vpack.c.b16 %v6628, %v6624
    %v6681 = vpack.c.b16 %v6629, %v6625
    %v6682 = vpack.c.b16 %v6630, %v6626
    %v6683 = vpack.c.b16 %v6631, %v6627
    %v6684 = vpack.c.b16 %v6636, %v6632
    %v6685 = vpack.c.b16 %v6637, %v6633
    %v6686 = vpack.c.b16 %v6638, %v6634
    %v6687 = vpack.c.b16 %v6639, %v6635
    %v6688 = vpack.c.b16 %v6644, %v6640
    %v6689 = vpack.c.b16 %v6645, %v6641
    %v6690 = vpack.c.b16 %v6646, %v6642
    %v6691 = vpack.c.b16 %v6647, %v6643
    %v6692 = vpack.c.b16 %v6652, %v6648
    %v6693 = vpack.c.b16 %v6653, %v6649
    %v6694 = vpack.c.b16 %v6654, %v6650
    %v6695 = vpack.c.b16 %v6655, %v6651
    %v6696 = vpack.c.b16 %v6660, %v6656
    %v6697 = vpack.c.b16 %v6661, %v6657
    %v6698 = vpack.c.b16 %v6662, %v6658
    %v6699 = vpack.c.b16 %v6663, %v6659
    %v6700 = vpack.c.b16 %v6668, %v6664
    %v6701 = vpack.c.b16 %v6669, %v6665
    %v6702 = vpack.c.b16 %v6670, %v6666
    %v6703 = vpack.c.b16 %v6671, %v6667
    %6736 = vmatprep.subr.bf16.mxu0 %v6673
    %6737 = vmatpush1.bf16.msra.mxu0 %v6672
    %6738 = vmatprep.subr.bf16.mxu0 %v6677
    %6739 = vmatpush1.bf16.msra.mxu0 %v6676
    %6740 = vmatprep.subr.bf16.mxu0 %v6681
    %6741 = vmatpush1.bf16.msra.mxu0 %v6680
    %6742 = vmatprep.subr.bf16.mxu0 %v6685
    %6743 = vmatpush1.bf16.msra.mxu0 %v6684
    %6744 = vmatprep.subr.bf16.mxu0 %v6689
    %6745 = vmatpush1.bf16.msra.mxu0 %v6688
    %6746 = vmatprep.subr.bf16.mxu0 %v6693
    %6747 = vmatpush1.bf16.msra.mxu0 %v6692
    %6748 = vmatprep.subr.bf16.mxu0 %v6697
    %6749 = vmatpush1.bf16.msra.mxu0 %v6696
    %6750 = vmatprep.subr.bf16.mxu0 %v6701
    %6751 = vmatpush1.bf16.msra.mxu0 %v6700
    %6752 = vmatprep.subr.bf16.mxu0 0
    %6753 = vmatpush1.bf16.msra.mxu0 0
    %6754 = vmatprep.subr.bf16.mxu0 0
    %6755 = vmatpush1.bf16.msra.mxu0 0
    %6756 = vmatprep.subr.bf16.mxu0 0
    %6757 = vmatpush1.bf16.msra.mxu0 0
    %6758 = vmatprep.subr.bf16.mxu0 0
    %6759 = vmatpush1.bf16.msra.mxu0 0
    %6760 = vmatprep.subr.bf16.mxu0 0
    %6761 = vmatpush1.bf16.msra.mxu0 0
    %6762 = vmatprep.subr.bf16.mxu0 0
    %6763 = vmatpush1.bf16.msra.mxu0 0
    %6764 = vmatprep.subr.bf16.mxu0 0
    %6765 = vmatpush1.bf16.msra.mxu0 0
    %6766 = vmatprep.subr.bf16.mxu0 0
    %6767 = vmatpush1.bf16.msra.mxu0 0
    %6768 = vmatprep.mubr.bf16.mxu0 0
    %6769 = vmatmul.mubr.bf16.gmra.mrb[0].mxu0 %v6543
    %v6770 = vpop.f32.mrb[0].mxu0
    %v6771 = vadd.f32 0.0, %v6770
    %v6772 = vpop.f32.mrb[0].mxu0
    %v6773 = vadd.f32 0.0, %v6772
    %v6774 = vpop.f32.mrb[0].mxu0
    %v6775 = vpop.f32.mrb[0].mxu0
    %6776 = vdwg.mxu0
    %6777 = vmatprep.subr.bf16.mxu0 %v6675
    %6778 = vmatpush1.bf16.msra.mxu0 %v6674
    %6779 = vmatprep.subr.bf16.mxu0 %v6679
    %6780 = vmatpush1.bf16.msra.mxu0 %v6678
    %6781 = vmatprep.subr.bf16.mxu0 %v6683
    %6782 = vmatpush1.bf16.msra.mxu0 %v6682
    %6783 = vmatprep.subr.bf16.mxu0 %v6687
    %6784 = vmatpush1.bf16.msra.mxu0 %v6686
    %6785 = vmatprep.subr.bf16.mxu0 %v6691
    %6786 = vmatpush1.bf16.msra.mxu0 %v6690
    %6787 = vmatprep.subr.bf16.mxu0 %v6695
    %6788 = vmatpush1.bf16.msra.mxu0 %v6694
    %6789 = vmatprep.subr.bf16.mxu0 %v6699
    %6790 = vmatpush1.bf16.msra.mxu0 %v6698
    %6791 = vmatprep.subr.bf16.mxu0 %v6703
    %6792 = vmatpush1.bf16.msra.mxu0 %v6702
    %6793 = vmatprep.subr.bf16.mxu0 0
    %6794 = vmatpush1.bf16.msra.mxu0 0
    %6795 = vmatprep.subr.bf16.mxu0 0
    %6796 = vmatpush1.bf16.msra.mxu0 0
    %6797 = vmatprep.subr.bf16.mxu0 0
    %6798 = vmatpush1.bf16.msra.mxu0 0
    %6799 = vmatprep.subr.bf16.mxu0 0
    %6800 = vmatpush1.bf16.msra.mxu0 0
    %6801 = vmatprep.subr.bf16.mxu0 0
    %6802 = vmatpush1.bf16.msra.mxu0 0
    %6803 = vmatprep.subr.bf16.mxu0 0
    %6804 = vmatpush1.bf16.msra.mxu0 0
    %6805 = vmatprep.subr.bf16.mxu0 0
    %6806 = vmatpush1.bf16.msra.mxu0 0
    %6807 = vmatprep.subr.bf16.mxu0 0
    %6808 = vmatpush1.bf16.msra.mxu0 0
    %6809 = vmatprep.mubr.bf16.mxu0 0
    %6810 = vmatmul.mubr.bf16.gmra.mrb[0].mxu0 %v6543
    %v6811 = vpop.f32.mrb[0].mxu0
    %v6812 = vadd.f32 0.0, %v6811
    %v6813 = vpop.f32.mrb[0].mxu0
    %v6814 = vadd.f32 0.0, %v6813
    %v6815 = vpop.f32.mrb[0].mxu0
    %v6816 = vpop.f32.mrb[0].mxu0
    %6817 = vdwg.mxu0
    %v6850 = vunpack.c.l.b16 %v6511
    %v6851 = vunpack.c.h.b16 %v6511
    %v6852 = vunpack.c.l.b16 %v6512
    %v6853 = vunpack.c.h.b16 %v6512
    %v6854 = vunpack.c.l.b16 %v6513
    %v6855 = vunpack.c.h.b16 %v6513
    %v6856 = vunpack.c.l.b16 %v6514
    %v6857 = vunpack.c.h.b16 %v6514
    %v6858 = vunpack.c.l.b16 %v6515
    %v6859 = vunpack.c.h.b16 %v6515
    %v6860 = vunpack.c.l.b16 %v6516
    %v6861 = vunpack.c.h.b16 %v6516
    %v6862 = vunpack.c.l.b16 %v6517
    %v6863 = vunpack.c.h.b16 %v6517
    %v6864 = vunpack.c.l.b16 %v6518
    %v6865 = vunpack.c.h.b16 %v6518
    %v6866 = vunpack.c.l.b16 %v6519
    %v6867 = vunpack.c.h.b16 %v6519
    %v6868 = vunpack.c.l.b16 %v6520
    %v6869 = vunpack.c.h.b16 %v6520
    %v6870 = vunpack.c.l.b16 %v6521
    %v6871 = vunpack.c.h.b16 %v6521
    %v6872 = vunpack.c.l.b16 %v6522
    %v6873 = vunpack.c.h.b16 %v6522
    %v6874 = vunpack.c.l.b16 %v6523
    %v6875 = vunpack.c.h.b16 %v6523
    %v6876 = vunpack.c.l.b16 %v6524
    %v6877 = vunpack.c.h.b16 %v6524
    %v6878 = vunpack.c.l.b16 %v6525
    %v6879 = vunpack.c.h.b16 %v6525
    %v6880 = vunpack.c.l.b16 %v6526
    %v6881 = vunpack.c.h.b16 %v6526
    %v6882 = vunpack.c.l.b16 %v6527
    %v6883 = vunpack.c.h.b16 %v6527
    %v6884 = vunpack.c.l.b16 %v6528
    %v6885 = vunpack.c.h.b16 %v6528
    %v6886 = vunpack.c.l.b16 %v6529
    %v6887 = vunpack.c.h.b16 %v6529
    %v6888 = vunpack.c.l.b16 %v6530
    %v6889 = vunpack.c.h.b16 %v6530
    %v6890 = vunpack.c.l.b16 %v6531
    %v6891 = vunpack.c.h.b16 %v6531
    %v6892 = vunpack.c.l.b16 %v6532
    %v6893 = vunpack.c.h.b16 %v6532
    %v6894 = vunpack.c.l.b16 %v6533
    %v6895 = vunpack.c.h.b16 %v6533
    %v6896 = vunpack.c.l.b16 %v6534
    %v6897 = vunpack.c.h.b16 %v6534
    %v6898 = vunpack.c.l.b16 %v6535
    %v6899 = vunpack.c.h.b16 %v6535
    %v6900 = vunpack.c.l.b16 %v6536
    %v6901 = vunpack.c.h.b16 %v6536
    %v6902 = vunpack.c.l.b16 %v6537
    %v6903 = vunpack.c.h.b16 %v6537
    %v6904 = vunpack.c.l.b16 %v6538
    %v6905 = vunpack.c.h.b16 %v6538
    %v6906 = vunpack.c.l.b16 %v6539
    %v6907 = vunpack.c.h.b16 %v6539
    %v6908 = vunpack.c.l.b16 %v6540
    %v6909 = vunpack.c.h.b16 %v6540
    %v6910 = vunpack.c.l.b16 %v6541
    %v6911 = vunpack.c.h.b16 %v6541
    %v6912 = vunpack.c.l.b16 %v6542
    %v6913 = vunpack.c.h.b16 %v6542
    %v6914 = vpack.c.b16 %v6854, %v6850
    %v6915 = vpack.c.b16 %v6855, %v6851
    %v6916 = vpack.c.b16 %v6856, %v6852
    %v6917 = vpack.c.b16 %v6857, %v6853
    %v6918 = vpack.c.b16 %v6862, %v6858
    %v6919 = vpack.c.b16 %v6863, %v6859
    %v6920 = vpack.c.b16 %v6864, %v6860
    %v6921 = vpack.c.b16 %v6865, %v6861
    %v6922 = vpack.c.b16 %v6870, %v6866
    %v6923 = vpack.c.b16 %v6871, %v6867
    %v6924 = vpack.c.b16 %v6872, %v6868
    %v6925 = vpack.c.b16 %v6873, %v6869
    %v6926 = vpack.c.b16 %v6878, %v6874
    %v6927 = vpack.c.b16 %v6879, %v6875
    %v6928 = vpack.c.b16 %v6880, %v6876
    %v6929 = vpack.c.b16 %v6881, %v6877
    %v6930 = vpack.c.b16 %v6886, %v6882
    %v6931 = vpack.c.b16 %v6887, %v6883
    %v6932 = vpack.c.b16 %v6888, %v6884
    %v6933 = vpack.c.b16 %v6889, %v6885
    %v6934 = vpack.c.b16 %v6894, %v6890
    %v6935 = vpack.c.b16 %v6895, %v6891
    %v6936 = vpack.c.b16 %v6896, %v6892
    %v6937 = vpack.c.b16 %v6897, %v6893
    %v6938 = vpack.c.b16 %v6902, %v6898
    %v6939 = vpack.c.b16 %v6903, %v6899
    %v6940 = vpack.c.b16 %v6904, %v6900
    %v6941 = vpack.c.b16 %v6905, %v6901
    %v6942 = vpack.c.b16 %v6910, %v6906
    %v6943 = vpack.c.b16 %v6911, %v6907
    %v6944 = vpack.c.b16 %v6912, %v6908
    %v6945 = vpack.c.b16 %v6913, %v6909
    %6978 = vmatprep.subr.bf16.mxu0 %v6915
    %6979 = vmatpush1.bf16.msra.mxu0 %v6914
    %6980 = vmatprep.subr.bf16.mxu0 %v6919
    %6981 = vmatpush1.bf16.msra.mxu0 %v6918
    %6982 = vmatprep.subr.bf16.mxu0 %v6923
    %6983 = vmatpush1.bf16.msra.mxu0 %v6922
    %6984 = vmatprep.subr.bf16.mxu0 %v6927
    %6985 = vmatpush1.bf16.msra.mxu0 %v6926
    %6986 = vmatprep.subr.bf16.mxu0 %v6931
    %6987 = vmatpush1.bf16.msra.mxu0 %v6930
    %6988 = vmatprep.subr.bf16.mxu0 %v6935
    %6989 = vmatpush1.bf16.msra.mxu0 %v6934
    %6990 = vmatprep.subr.bf16.mxu0 %v6939
    %6991 = vmatpush1.bf16.msra.mxu0 %v6938
    %6992 = vmatprep.subr.bf16.mxu0 %v6943
    %6993 = vmatpush1.bf16.msra.mxu0 %v6942
    %6994 = vmatprep.subr.bf16.mxu0 0
    %6995 = vmatpush1.bf16.msra.mxu0 0
    %6996 = vmatprep.subr.bf16.mxu0 0
    %6997 = vmatpush1.bf16.msra.mxu0 0
    %6998 = vmatprep.subr.bf16.mxu0 0
    %6999 = vmatpush1.bf16.msra.mxu0 0
    %7000 = vmatprep.subr.bf16.mxu0 0
    %7001 = vmatpush1.bf16.msra.mxu0 0
    %7002 = vmatprep.subr.bf16.mxu0 0
    %7003 = vmatpush1.bf16.msra.mxu0 0
    %7004 = vmatprep.subr.bf16.mxu0 0
    %7005 = vmatpush1.bf16.msra.mxu0 0
    %7006 = vmatprep.subr.bf16.mxu0 0
    %7007 = vmatpush1.bf16.msra.mxu0 0
    %7008 = vmatprep.subr.bf16.mxu0 0
    %7009 = vmatpush1.bf16.msra.mxu0 0
    %7010 = vmatprep.mubr.bf16.mxu0 0
    %7011 = vmatmul.mubr.bf16.gmra.mrb[0].mxu0 %v6510
    %v7012 = vpop.f32.mrb[0].mxu0
    %v7013 = vadd.f32 %v6771, %v7012
    %v7014 = vpop.f32.mrb[0].mxu0
    %v7015 = vadd.f32 %v6773, %v7014
    %v7016 = vpop.f32.mrb[0].mxu0
    %v7017 = vpop.f32.mrb[0].mxu0
    %7018 = vdwg.mxu0
    %7019 = vmatprep.subr.bf16.mxu0 %v6917
    %7020 = vmatpush1.bf16.msra.mxu0 %v6916
    %7021 = vmatprep.subr.bf16.mxu0 %v6921
    %7022 = vmatpush1.bf16.msra.mxu0 %v6920
    %7023 = vmatprep.subr.bf16.mxu0 %v6925
    %7024 = vmatpush1.bf16.msra.mxu0 %v6924
    %7025 = vmatprep.subr.bf16.mxu0 %v6929
    %7026 = vmatpush1.bf16.msra.mxu0 %v6928
    %7027 = vmatprep.subr.bf16.mxu0 %v6933
    %7028 = vmatpush1.bf16.msra.mxu0 %v6932
    %7029 = vmatprep.subr.bf16.mxu0 %v6937
    %7030 = vmatpush1.bf16.msra.mxu0 %v6936
    %7031 = vmatprep.subr.bf16.mxu0 %v6941
    %7032 = vmatpush1.bf16.msra.mxu0 %v6940
    %7033 = vmatprep.subr.bf16.mxu0 %v6945
    %7034 = vmatpush1.bf16.msra.mxu0 %v6944
    %7035 = vmatprep.subr.bf16.mxu0 0
    %7036 = vmatpush1.bf16.msra.mxu0 0
    %7037 = vmatprep.subr.bf16.mxu0 0
    %7038 = vmatpush1.bf16.msra.mxu0 0
    %7039 = vmatprep.subr.bf16.mxu0 0
    %7040 = vmatpush1.bf16.msra.mxu0 0
    %7041 = vmatprep.subr.bf16.mxu0 0
    %7042 = vmatpush1.bf16.msra.mxu0 0
    %7043 = vmatprep.subr.bf16.mxu0 0
    %7044 = vmatpush1.bf16.msra.mxu0 0
    %7045 = vmatprep.subr.bf16.mxu0 0
    %7046 = vmatpush1.bf16.msra.mxu0 0
    %7047 = vmatprep.subr.bf16.mxu0 0
    %7048 = vmatpush1.bf16.msra.mxu0 0
    %7049 = vmatprep.subr.bf16.mxu0 0
    %7050 = vmatpush1.bf16.msra.mxu0 0
    %7051 = vmatprep.mubr.bf16.mxu0 0
    %7052 = vmatmul.mubr.bf16.gmra.mrb[0].mxu0 %v6510
    %v7053 = vpop.f32.mrb[0].mxu0
    %v7054 = vadd.f32 %v6812, %v7053
    %v7055 = vpop.f32.mrb[0].mxu0
    %v7056 = vadd.f32 %v6814, %v7055
    %v7057 = vpop.f32.mrb[0].mxu0
    %v7058 = vpop.f32.mrb[0].mxu0
    %7059 = vdwg.mxu0
    %v7060 = vld [vmem:[%s6] sm:$0xf]
    %v7062 = vlaneseq
    %v7063 = vshrl.u32 %v7062, 7
    %v7064 = vsub.s32 0, %v7063
    %v7065 = vrot.slane %v7060, %v7064
    %v7066 = vlaneseq
    %v7067 = vshrl.u32 %v7066, 7
    %v7068 = vsub.s32 1, %v7067
    %v7069 = vrot.slane %v7060, %v7068
    %v7070 = vlaneseq
    %v7071 = vshrl.u32 %v7070, 7
    %v7072 = vsub.s32 2, %v7071
    %v7073 = vrot.slane %v7060, %v7072
    %v7074 = vlaneseq
    %v7075 = vshrl.u32 %v7074, 7
    %v7076 = vsub.s32 3, %v7075
    %v7077 = vrot.slane %v7060, %v7076
    %v7082 = vadd.f32 %v7013, %v7065
    %v7083 = vadd.f32 %v7015, %v7069
    %v7084 = vadd.f32 %v7054, %v7073
    %v7085 = vadd.f32 %v7056, %v7077
    %v7086 = vxor.u32 %v7082, 2147483648
    %v7087 = vmul.f32 %v7086, 1.442695
    %v7088 = vpow.pop %v7087
    %v7089 = vadd.f32 %v7088, 1.0
    %v7090 = vrcp.pop %v7089
    %v7091 = vmul.f32 1.0, %v7090
    %v7092 = vxor.u32 %v7083, 2147483648
    %v7093 = vmul.f32 %v7092, 1.442695
    %v7094 = vpow.pop %v7093
    %v7095 = vadd.f32 %v7094, 1.0
    %v7096 = vrcp.pop %v7095
    %v7097 = vmul.f32 1.0, %v7096
    %v7098 = vtanh.pop %v7084
    %v7099 = vxor.u32 %v7085, 2147483648
    %v7100 = vmul.f32 %v7099, 1.442695
    %v7101 = vpow.pop %v7100
    %v7102 = vadd.f32 %v7101, 1.0
    %v7103 = vrcp.pop %v7102
    %v7104 = vmul.f32 1.0, %v7103
    %v7105 = vmul.f32 %v7097, %v6173
    %v7106 = vmul.f32 %v7091, %v7098
    %v7107 = vadd.f32 %v7105, %v7106
    %v7108 = vtanh.pop %v7107
    %v7109 = vmul.f32 %v7104, %v7108
    %7110 = vst [vmem:[#allocation3] sm:$0xff] %v6509
    %7111 = vst [vmem:[#allocation4] sm:$0xff] %v6507
    %7112 = vst [vmem:[#allocation5] sm:$0xff] %v7109
    %7113 = vst [vmem:[#allocation6] sm:$0xff] %v7107
    %s7114 = scalar_lea.vmem %s11, 48
    %7115 = vst [vmem:[%s7114] sm:$0xff] %v7109
    %v7116 = vld [vmem:[#allocation3] sm:$0xff]
    %v7117 = vld [vmem:[#allocation4] sm:$0xff]
    %v7118 = vld [vmem:[#allocation5] sm:$0xff]
    %v7119 = vld [vmem:[#allocation6] sm:$0xff]
    %s7120 = smul.u32 7, 4
    %s7121 = smul.addr %s7120, 8
    %s7122 = scalar_lea.vmem [#allocation2], %s7121
    %v7123 = vld [vmem:[%s7122] sm:$0xff]
    %v7124 = vld [vmem:[%s7122 + $0x8] sm:$0xff]
    %v7125 = vld [vmem:[%s7122 + $0x10] sm:$0xff]
    %v7126 = vld [vmem:[%s7122 + $0x18] sm:$0xff]
    %v7127 = vpack.c.bf16 %v7116, %v7116
    %v7128 = vld [vmem:[#allocation7] sm:$0xff]
    %v7129 = vld [vmem:[#allocation7 + $0x8] sm:$0xff]
    %v7130 = vld [vmem:[#allocation7 + $0x10] sm:$0xff]
    %v7131 = vld [vmem:[#allocation7 + $0x18] sm:$0xff]
    %v7132 = vld [vmem:[#allocation7 + $0x20] sm:$0xff]
    %v7133 = vld [vmem:[#allocation7 + $0x28] sm:$0xff]
    %v7134 = vld [vmem:[#allocation7 + $0x30] sm:$0xff]
    %v7135 = vld [vmem:[#allocation7 + $0x38] sm:$0xff]
    %v7136 = vld [vmem:[#allocation7 + $0x40] sm:$0xff]
    %v7137 = vld [vmem:[#allocation7 + $0x48] sm:$0xff]
    %v7138 = vld [vmem:[#allocation7 + $0x50] sm:$0xff]
    %v7139 = vld [vmem:[#allocation7 + $0x58] sm:$0xff]
    %v7140 = vld [vmem:[#allocation7 + $0x60] sm:$0xff]
    %v7141 = vld [vmem:[#allocation7 + $0x68] sm:$0xff]
    %v7142 = vld [vmem:[#allocation7 + $0x70] sm:$0xff]
    %v7143 = vld [vmem:[#allocation7 + $0x78] sm:$0xff]
    %v7144 = vld [vmem:[#allocation7 + $0x80] sm:$0xff]
    %v7145 = vld [vmem:[#allocation7 + $0x88] sm:$0xff]
    %v7146 = vld [vmem:[#allocation7 + $0x90] sm:$0xff]
    %v7147 = vld [vmem:[#allocation7 + $0x98] sm:$0xff]
    %v7148 = vld [vmem:[#allocation7 + $0xa0] sm:$0xff]
    %v7149 = vld [vmem:[#allocation7 + $0xa8] sm:$0xff]
    %v7150 = vld [vmem:[#allocation7 + $0xb0] sm:$0xff]
    %v7151 = vld [vmem:[#allocation7 + $0xb8] sm:$0xff]
    %v7152 = vld [vmem:[#allocation7 + $0xc0] sm:$0xff]
    %v7153 = vld [vmem:[#allocation7 + $0xc8] sm:$0xff]
    %v7154 = vld [vmem:[#allocation7 + $0xd0] sm:$0xff]
    %v7155 = vld [vmem:[#allocation7 + $0xd8] sm:$0xff]
    %v7156 = vld [vmem:[#allocation7 + $0xe0] sm:$0xff]
    %v7157 = vld [vmem:[#allocation7 + $0xe8] sm:$0xff]
    %v7158 = vld [vmem:[#allocation7 + $0xf0] sm:$0xff]
    %v7159 = vld [vmem:[#allocation7 + $0xf8] sm:$0xff]
    %v7192 = vunpack.c.l.b16 %v7128
    %v7193 = vunpack.c.h.b16 %v7128
    %v7194 = vunpack.c.l.b16 %v7129
    %v7195 = vunpack.c.h.b16 %v7129
    %v7196 = vunpack.c.l.b16 %v7130
    %v7197 = vunpack.c.h.b16 %v7130
    %v7198 = vunpack.c.l.b16 %v7131
    %v7199 = vunpack.c.h.b16 %v7131
    %v7200 = vunpack.c.l.b16 %v7132
    %v7201 = vunpack.c.h.b16 %v7132
    %v7202 = vunpack.c.l.b16 %v7133
    %v7203 = vunpack.c.h.b16 %v7133
    %v7204 = vunpack.c.l.b16 %v7134
    %v7205 = vunpack.c.h.b16 %v7134
    %v7206 = vunpack.c.l.b16 %v7135
    %v7207 = vunpack.c.h.b16 %v7135
    %v7208 = vunpack.c.l.b16 %v7136
    %v7209 = vunpack.c.h.b16 %v7136
    %v7210 = vunpack.c.l.b16 %v7137
    %v7211 = vunpack.c.h.b16 %v7137
    %v7212 = vunpack.c.l.b16 %v7138
    %v7213 = vunpack.c.h.b16 %v7138
    %v7214 = vunpack.c.l.b16 %v7139
    %v7215 = vunpack.c.h.b16 %v7139
    %v7216 = vunpack.c.l.b16 %v7140
    %v7217 = vunpack.c.h.b16 %v7140
    %v7218 = vunpack.c.l.b16 %v7141
    %v7219 = vunpack.c.h.b16 %v7141
    %v7220 = vunpack.c.l.b16 %v7142
    %v7221 = vunpack.c.h.b16 %v7142
    %v7222 = vunpack.c.l.b16 %v7143
    %v7223 = vunpack.c.h.b16 %v7143
    %v7224 = vunpack.c.l.b16 %v7144
    %v7225 = vunpack.c.h.b16 %v7144
    %v7226 = vunpack.c.l.b16 %v7145
    %v7227 = vunpack.c.h.b16 %v7145
    %v7228 = vunpack.c.l.b16 %v7146
    %v7229 = vunpack.c.h.b16 %v7146
    %v7230 = vunpack.c.l.b16 %v7147
    %v7231 = vunpack.c.h.b16 %v7147
    %v7232 = vunpack.c.l.b16 %v7148
    %v7233 = vunpack.c.h.b16 %v7148
    %v7234 = vunpack.c.l.b16 %v7149
    %v7235 = vunpack.c.h.b16 %v7149
    %v7236 = vunpack.c.l.b16 %v7150
    %v7237 = vunpack.c.h.b16 %v7150
    %v7238 = vunpack.c.l.b16 %v7151
    %v7239 = vunpack.c.h.b16 %v7151
    %v7240 = vunpack.c.l.b16 %v7152
    %v7241 = vunpack.c.h.b16 %v7152
    %v7242 = vunpack.c.l.b16 %v7153
    %v7243 = vunpack.c.h.b16 %v7153
    %v7244 = vunpack.c.l.b16 %v7154
    %v7245 = vunpack.c.h.b16 %v7154
    %v7246 = vunpack.c.l.b16 %v7155
    %v7247 = vunpack.c.h.b16 %v7155
    %v7248 = vunpack.c.l.b16 %v7156
    %v7249 = vunpack.c.h.b16 %v7156
    %v7250 = vunpack.c.l.b16 %v7157
    %v7251 = vunpack.c.h.b16 %v7157
    %v7252 = vunpack.c.l.b16 %v7158
    %v7253 = vunpack.c.h.b16 %v7158
    %v7254 = vunpack.c.l.b16 %v7159
    %v7255 = vunpack.c.h.b16 %v7159
    %v7256 = vpack.c.b16 %v7196, %v7192
    %v7257 = vpack.c.b16 %v7197, %v7193
    %v7258 = vpack.c.b16 %v7198, %v7194
    %v7259 = vpack.c.b16 %v7199, %v7195
    %v7260 = vpack.c.b16 %v7204, %v7200
    %v7261 = vpack.c.b16 %v7205, %v7201
    %v7262 = vpack.c.b16 %v7206, %v7202
    %v7263 = vpack.c.b16 %v7207, %v7203
    %v7264 = vpack.c.b16 %v7212, %v7208
    %v7265 = vpack.c.b16 %v7213, %v7209
    %v7266 = vpack.c.b16 %v7214, %v7210
    %v7267 = vpack.c.b16 %v7215, %v7211
    %v7268 = vpack.c.b16 %v7220, %v7216
    %v7269 = vpack.c.b16 %v7221, %v7217
    %v7270 = vpack.c.b16 %v7222, %v7218
    %v7271 = vpack.c.b16 %v7223, %v7219
    %v7272 = vpack.c.b16 %v7228, %v7224
    %v7273 = vpack.c.b16 %v7229, %v7225
    %v7274 = vpack.c.b16 %v7230, %v7226
    %v7275 = vpack.c.b16 %v7231, %v7227
    %v7276 = vpack.c.b16 %v7236, %v7232
    %v7277 = vpack.c.b16 %v7237, %v7233
    %v7278 = vpack.c.b16 %v7238, %v7234
    %v7279 = vpack.c.b16 %v7239, %v7235
    %v7280 = vpack.c.b16 %v7244, %v7240
    %v7281 = vpack.c.b16 %v7245, %v7241
    %v7282 = vpack.c.b16 %v7246, %v7242
    %v7283 = vpack.c.b16 %v7247, %v7243
    %v7284 = vpack.c.b16 %v7252, %v7248
    %v7285 = vpack.c.b16 %v7253, %v7249
    %v7286 = vpack.c.b16 %v7254, %v7250
    %v7287 = vpack.c.b16 %v7255, %v7251
    %7320 = vmatprep.subr.bf16.mxu0 %v7257
    %7321 = vmatpush1.bf16.msra.mxu0 %v7256
    %7322 = vmatprep.subr.bf16.mxu0 %v7261
    %7323 = vmatpush1.bf16.msra.mxu0 %v7260
    %7324 = vmatprep.subr.bf16.mxu0 %v7265
    %7325 = vmatpush1.bf16.msra.mxu0 %v7264
    %7326 = vmatprep.subr.bf16.mxu0 %v7269
    %7327 = vmatpush1.bf16.msra.mxu0 %v7268
    %7328 = vmatprep.subr.bf16.mxu0 %v7273
    %7329 = vmatpush1.bf16.msra.mxu0 %v7272
    %7330 = vmatprep.subr.bf16.mxu0 %v7277
    %7331 = vmatpush1.bf16.msra.mxu0 %v7276
    %7332 = vmatprep.subr.bf16.mxu0 %v7281
    %7333 = vmatpush1.bf16.msra.mxu0 %v7280
    %7334 = vmatprep.subr.bf16.mxu0 %v7285
    %7335 = vmatpush1.bf16.msra.mxu0 %v7284
    %7336 = vmatprep.subr.bf16.mxu0 0
    %7337 = vmatpush1.bf16.msra.mxu0 0
    %7338 = vmatprep.subr.bf16.mxu0 0
    %7339 = vmatpush1.bf16.msra.mxu0 0
    %7340 = vmatprep.subr.bf16.mxu0 0
    %7341 = vmatpush1.bf16.msra.mxu0 0
    %7342 = vmatprep.subr.bf16.mxu0 0
    %7343 = vmatpush1.bf16.msra.mxu0 0
    %7344 = vmatprep.subr.bf16.mxu0 0
    %7345 = vmatpush1.bf16.msra.mxu0 0
    %7346 = vmatprep.subr.bf16.mxu0 0
    %7347 = vmatpush1.bf16.msra.mxu0 0
    %7348 = vmatprep.subr.bf16.mxu0 0
    %7349 = vmatpush1.bf16.msra.mxu0 0
    %7350 = vmatprep.subr.bf16.mxu0 0
    %7351 = vmatpush1.bf16.msra.mxu0 0
    %7352 = vmatprep.mubr.bf16.mxu0 0
    %7353 = vmatmul.mubr.bf16.gmra.mrb[0].mxu0 %v7127
    %v7354 = vpop.f32.mrb[0].mxu0
    %v7355 = vadd.f32 0.0, %v7354
    %v7356 = vpop.f32.mrb[0].mxu0
    %v7357 = vadd.f32 0.0, %v7356
    %v7358 = vpop.f32.mrb[0].mxu0
    %v7359 = vpop.f32.mrb[0].mxu0
    %7360 = vdwg.mxu0
    %7361 = vmatprep.subr.bf16.mxu0 %v7259
    %7362 = vmatpush1.bf16.msra.mxu0 %v7258
    %7363 = vmatprep.subr.bf16.mxu0 %v7263
    %7364 = vmatpush1.bf16.msra.mxu0 %v7262
    %7365 = vmatprep.subr.bf16.mxu0 %v7267
    %7366 = vmatpush1.bf16.msra.mxu0 %v7266
    %7367 = vmatprep.subr.bf16.mxu0 %v7271
    %7368 = vmatpush1.bf16.msra.mxu0 %v7270
    %7369 = vmatprep.subr.bf16.mxu0 %v7275
    %7370 = vmatpush1.bf16.msra.mxu0 %v7274
    %7371 = vmatprep.subr.bf16.mxu0 %v7279
    %7372 = vmatpush1.bf16.msra.mxu0 %v7278
    %7373 = vmatprep.subr.bf16.mxu0 %v7283
    %7374 = vmatpush1.bf16.msra.mxu0 %v7282
    %7375 = vmatprep.subr.bf16.mxu0 %v7287
    %7376 = vmatpush1.bf16.msra.mxu0 %v7286
    %7377 = vmatprep.subr.bf16.mxu0 0
    %7378 = vmatpush1.bf16.msra.mxu0 0
    %7379 = vmatprep.subr.bf16.mxu0 0
    %7380 = vmatpush1.bf16.msra.mxu0 0
    %7381 = vmatprep.subr.bf16.mxu0 0
    %7382 = vmatpush1.bf16.msra.mxu0 0
    %7383 = vmatprep.subr.bf16.mxu0 0
    %7384 = vmatpush1.bf16.msra.mxu0 0
    %7385 = vmatprep.subr.bf16.mxu0 0
    %7386 = vmatpush1.bf16.msra.mxu0 0
    %7387 = vmatprep.subr.bf16.mxu0 0
    %7388 = vmatpush1.bf16.msra.mxu0 0
    %7389 = vmatprep.subr.bf16.mxu0 0
    %7390 = vmatpush1.bf16.msra.mxu0 0
    %7391 = vmatprep.subr.bf16.mxu0 0
    %7392 = vmatpush1.bf16.msra.mxu0 0
    %7393 = vmatprep.mubr.bf16.mxu0 0
    %7394 = vmatmul.mubr.bf16.gmra.mrb[0].mxu0 %v7127
    %v7395 = vpop.f32.mrb[0].mxu0
    %v7396 = vadd.f32 0.0, %v7395
    %v7397 = vpop.f32.mrb[0].mxu0
    %v7398 = vadd.f32 0.0, %v7397
    %v7399 = vpop.f32.mrb[0].mxu0
    %v7400 = vpop.f32.mrb[0].mxu0
    %7401 = vdwg.mxu0
    %v7402 = vadd.f32 %v7123, %v7355
    %v7403 = vadd.f32 %v7124, %v7357
    %v7404 = vadd.f32 %v7125, %v7396
    %v7405 = vadd.f32 %v7126, %v7398
    %v7406 = vld [vmem:[%s3] sm:$0xf]
    %v7408 = vlaneseq
    %v7409 = vshrl.u32 %v7408, 7
    %v7410 = vsub.s32 0, %v7409
    %v7411 = vrot.slane %v7406, %v7410
    %v7412 = vlaneseq
    %v7413 = vshrl.u32 %v7412, 7
    %v7414 = vsub.s32 1, %v7413
    %v7415 = vrot.slane %v7406, %v7414
    %v7416 = vlaneseq
    %v7417 = vshrl.u32 %v7416, 7
    %v7418 = vsub.s32 2, %v7417
    %v7419 = vrot.slane %v7406, %v7418
    %v7420 = vlaneseq
    %v7421 = vshrl.u32 %v7420, 7
    %v7422 = vsub.s32 3, %v7421
    %v7423 = vrot.slane %v7406, %v7422
    %v7428 = vadd.f32 %v7402, %v7411
    %v7429 = vadd.f32 %v7403, %v7415
    %v7430 = vadd.f32 %v7404, %v7419
    %v7431 = vadd.f32 %v7405, %v7423
    %v7432 = vxor.u32 %v7428, 2147483648
    %v7433 = vmul.f32 %v7432, 1.442695
    %v7434 = vpow.pop %v7433
    %v7435 = vadd.f32 %v7434, 1.0
    %v7436 = vrcp.pop %v7435
    %v7437 = vmul.f32 1.0, %v7436
    %v7438 = vxor.u32 %v7429, 2147483648
    %v7439 = vmul.f32 %v7438, 1.442695
    %v7440 = vpow.pop %v7439
    %v7441 = vadd.f32 %v7440, 1.0
    %v7442 = vrcp.pop %v7441
    %v7443 = vmul.f32 1.0, %v7442
    %v7444 = vtanh.pop %v7430
    %v7445 = vxor.u32 %v7431, 2147483648
    %v7446 = vmul.f32 %v7445, 1.442695
    %v7447 = vpow.pop %v7446
    %v7448 = vadd.f32 %v7447, 1.0
    %v7449 = vrcp.pop %v7448
    %v7450 = vmul.f32 1.0, %v7449
    %v7451 = vmul.f32 %v7443, %v7117
    %v7452 = vmul.f32 %v7437, %v7444
    %v7453 = vadd.f32 %v7451, %v7452
    %v7454 = vtanh.pop %v7453
    %v7455 = vmul.f32 %v7450, %v7454
    %v7456 = vpack.c.bf16 %v7455, %v7455
    %v7457 = vld [vmem:[#allocation9] sm:$0xff]
    %v7458 = vld [vmem:[#allocation9 + $0x8] sm:$0xff]
    %v7459 = vld [vmem:[#allocation9 + $0x10] sm:$0xff]
    %v7460 = vld [vmem:[#allocation9 + $0x18] sm:$0xff]
    %v7461 = vld [vmem:[#allocation9 + $0x20] sm:$0xff]
    %v7462 = vld [vmem:[#allocation9 + $0x28] sm:$0xff]
    %v7463 = vld [vmem:[#allocation9 + $0x30] sm:$0xff]
    %v7464 = vld [vmem:[#allocation9 + $0x38] sm:$0xff]
    %v7465 = vld [vmem:[#allocation9 + $0x40] sm:$0xff]
    %v7466 = vld [vmem:[#allocation9 + $0x48] sm:$0xff]
    %v7467 = vld [vmem:[#allocation9 + $0x50] sm:$0xff]
    %v7468 = vld [vmem:[#allocation9 + $0x58] sm:$0xff]
    %v7469 = vld [vmem:[#allocation9 + $0x60] sm:$0xff]
    %v7470 = vld [vmem:[#allocation9 + $0x68] sm:$0xff]
    %v7471 = vld [vmem:[#allocation9 + $0x70] sm:$0xff]
    %v7472 = vld [vmem:[#allocation9 + $0x78] sm:$0xff]
    %v7473 = vld [vmem:[#allocation9 + $0x80] sm:$0xff]
    %v7474 = vld [vmem:[#allocation9 + $0x88] sm:$0xff]
    %v7475 = vld [vmem:[#allocation9 + $0x90] sm:$0xff]
    %v7476 = vld [vmem:[#allocation9 + $0x98] sm:$0xff]
    %v7477 = vld [vmem:[#allocation9 + $0xa0] sm:$0xff]
    %v7478 = vld [vmem:[#allocation9 + $0xa8] sm:$0xff]
    %v7479 = vld [vmem:[#allocation9 + $0xb0] sm:$0xff]
    %v7480 = vld [vmem:[#allocation9 + $0xb8] sm:$0xff]
    %v7481 = vld [vmem:[#allocation9 + $0xc0] sm:$0xff]
    %v7482 = vld [vmem:[#allocation9 + $0xc8] sm:$0xff]
    %v7483 = vld [vmem:[#allocation9 + $0xd0] sm:$0xff]
    %v7484 = vld [vmem:[#allocation9 + $0xd8] sm:$0xff]
    %v7485 = vld [vmem:[#allocation9 + $0xe0] sm:$0xff]
    %v7486 = vld [vmem:[#allocation9 + $0xe8] sm:$0xff]
    %v7487 = vld [vmem:[#allocation9 + $0xf0] sm:$0xff]
    %v7488 = vld [vmem:[#allocation9 + $0xf8] sm:$0xff]
    %v7489 = vpack.c.bf16 %v7118, %v7118
    %v7490 = vld [vmem:[#allocation11] sm:$0xff]
    %v7491 = vld [vmem:[#allocation11 + $0x8] sm:$0xff]
    %v7492 = vld [vmem:[#allocation11 + $0x10] sm:$0xff]
    %v7493 = vld [vmem:[#allocation11 + $0x18] sm:$0xff]
    %v7494 = vld [vmem:[#allocation11 + $0x20] sm:$0xff]
    %v7495 = vld [vmem:[#allocation11 + $0x28] sm:$0xff]
    %v7496 = vld [vmem:[#allocation11 + $0x30] sm:$0xff]
    %v7497 = vld [vmem:[#allocation11 + $0x38] sm:$0xff]
    %v7498 = vld [vmem:[#allocation11 + $0x40] sm:$0xff]
    %v7499 = vld [vmem:[#allocation11 + $0x48] sm:$0xff]
    %v7500 = vld [vmem:[#allocation11 + $0x50] sm:$0xff]
    %v7501 = vld [vmem:[#allocation11 + $0x58] sm:$0xff]
    %v7502 = vld [vmem:[#allocation11 + $0x60] sm:$0xff]
    %v7503 = vld [vmem:[#allocation11 + $0x68] sm:$0xff]
    %v7504 = vld [vmem:[#allocation11 + $0x70] sm:$0xff]
    %v7505 = vld [vmem:[#allocation11 + $0x78] sm:$0xff]
    %v7506 = vld [vmem:[#allocation11 + $0x80] sm:$0xff]
    %v7507 = vld [vmem:[#allocation11 + $0x88] sm:$0xff]
    %v7508 = vld [vmem:[#allocation11 + $0x90] sm:$0xff]
    %v7509 = vld [vmem:[#allocation11 + $0x98] sm:$0xff]
    %v7510 = vld [vmem:[#allocation11 + $0xa0] sm:$0xff]
    %v7511 = vld [vmem:[#allocation11 + $0xa8] sm:$0xff]
    %v7512 = vld [vmem:[#allocation11 + $0xb0] sm:$0xff]
    %v7513 = vld [vmem:[#allocation11 + $0xb8] sm:$0xff]
    %v7514 = vld [vmem:[#allocation11 + $0xc0] sm:$0xff]
    %v7515 = vld [vmem:[#allocation11 + $0xc8] sm:$0xff]
    %v7516 = vld [vmem:[#allocation11 + $0xd0] sm:$0xff]
    %v7517 = vld [vmem:[#allocation11 + $0xd8] sm:$0xff]
    %v7518 = vld [vmem:[#allocation11 + $0xe0] sm:$0xff]
    %v7519 = vld [vmem:[#allocation11 + $0xe8] sm:$0xff]
    %v7520 = vld [vmem:[#allocation11 + $0xf0] sm:$0xff]
    %v7521 = vld [vmem:[#allocation11 + $0xf8] sm:$0xff]
    %v7554 = vunpack.c.l.b16 %v7490
    %v7555 = vunpack.c.h.b16 %v7490
    %v7556 = vunpack.c.l.b16 %v7491
    %v7557 = vunpack.c.h.b16 %v7491
    %v7558 = vunpack.c.l.b16 %v7492
    %v7559 = vunpack.c.h.b16 %v7492
    %v7560 = vunpack.c.l.b16 %v7493
    %v7561 = vunpack.c.h.b16 %v7493
    %v7562 = vunpack.c.l.b16 %v7494
    %v7563 = vunpack.c.h.b16 %v7494
    %v7564 = vunpack.c.l.b16 %v7495
    %v7565 = vunpack.c.h.b16 %v7495
    %v7566 = vunpack.c.l.b16 %v7496
    %v7567 = vunpack.c.h.b16 %v7496
    %v7568 = vunpack.c.l.b16 %v7497
    %v7569 = vunpack.c.h.b16 %v7497
    %v7570 = vunpack.c.l.b16 %v7498
    %v7571 = vunpack.c.h.b16 %v7498
    %v7572 = vunpack.c.l.b16 %v7499
    %v7573 = vunpack.c.h.b16 %v7499
    %v7574 = vunpack.c.l.b16 %v7500
    %v7575 = vunpack.c.h.b16 %v7500
    %v7576 = vunpack.c.l.b16 %v7501
    %v7577 = vunpack.c.h.b16 %v7501
    %v7578 = vunpack.c.l.b16 %v7502
    %v7579 = vunpack.c.h.b16 %v7502
    %v7580 = vunpack.c.l.b16 %v7503
    %v7581 = vunpack.c.h.b16 %v7503
    %v7582 = vunpack.c.l.b16 %v7504
    %v7583 = vunpack.c.h.b16 %v7504
    %v7584 = vunpack.c.l.b16 %v7505
    %v7585 = vunpack.c.h.b16 %v7505
    %v7586 = vunpack.c.l.b16 %v7506
    %v7587 = vunpack.c.h.b16 %v7506
    %v7588 = vunpack.c.l.b16 %v7507
    %v7589 = vunpack.c.h.b16 %v7507
    %v7590 = vunpack.c.l.b16 %v7508
    %v7591 = vunpack.c.h.b16 %v7508
    %v7592 = vunpack.c.l.b16 %v7509
    %v7593 = vunpack.c.h.b16 %v7509
    %v7594 = vunpack.c.l.b16 %v7510
    %v7595 = vunpack.c.h.b16 %v7510
    %v7596 = vunpack.c.l.b16 %v7511
    %v7597 = vunpack.c.h.b16 %v7511
    %v7598 = vunpack.c.l.b16 %v7512
    %v7599 = vunpack.c.h.b16 %v7512
    %v7600 = vunpack.c.l.b16 %v7513
    %v7601 = vunpack.c.h.b16 %v7513
    %v7602 = vunpack.c.l.b16 %v7514
    %v7603 = vunpack.c.h.b16 %v7514
    %v7604 = vunpack.c.l.b16 %v7515
    %v7605 = vunpack.c.h.b16 %v7515
    %v7606 = vunpack.c.l.b16 %v7516
    %v7607 = vunpack.c.h.b16 %v7516
    %v7608 = vunpack.c.l.b16 %v7517
    %v7609 = vunpack.c.h.b16 %v7517
    %v7610 = vunpack.c.l.b16 %v7518
    %v7611 = vunpack.c.h.b16 %v7518
    %v7612 = vunpack.c.l.b16 %v7519
    %v7613 = vunpack.c.h.b16 %v7519
    %v7614 = vunpack.c.l.b16 %v7520
    %v7615 = vunpack.c.h.b16 %v7520
    %v7616 = vunpack.c.l.b16 %v7521
    %v7617 = vunpack.c.h.b16 %v7521
    %v7618 = vpack.c.b16 %v7558, %v7554
    %v7619 = vpack.c.b16 %v7559, %v7555
    %v7620 = vpack.c.b16 %v7560, %v7556
    %v7621 = vpack.c.b16 %v7561, %v7557
    %v7622 = vpack.c.b16 %v7566, %v7562
    %v7623 = vpack.c.b16 %v7567, %v7563
    %v7624 = vpack.c.b16 %v7568, %v7564
    %v7625 = vpack.c.b16 %v7569, %v7565
    %v7626 = vpack.c.b16 %v7574, %v7570
    %v7627 = vpack.c.b16 %v7575, %v7571
    %v7628 = vpack.c.b16 %v7576, %v7572
    %v7629 = vpack.c.b16 %v7577, %v7573
    %v7630 = vpack.c.b16 %v7582, %v7578
    %v7631 = vpack.c.b16 %v7583, %v7579
    %v7632 = vpack.c.b16 %v7584, %v7580
    %v7633 = vpack.c.b16 %v7585, %v7581
    %v7634 = vpack.c.b16 %v7590, %v7586
    %v7635 = vpack.c.b16 %v7591, %v7587
    %v7636 = vpack.c.b16 %v7592, %v7588
    %v7637 = vpack.c.b16 %v7593, %v7589
    %v7638 = vpack.c.b16 %v7598, %v7594
    %v7639 = vpack.c.b16 %v7599, %v7595
    %v7640 = vpack.c.b16 %v7600, %v7596
    %v7641 = vpack.c.b16 %v7601, %v7597
    %v7642 = vpack.c.b16 %v7606, %v7602
    %v7643 = vpack.c.b16 %v7607, %v7603
    %v7644 = vpack.c.b16 %v7608, %v7604
    %v7645 = vpack.c.b16 %v7609, %v7605
    %v7646 = vpack.c.b16 %v7614, %v7610
    %v7647 = vpack.c.b16 %v7615, %v7611
    %v7648 = vpack.c.b16 %v7616, %v7612
    %v7649 = vpack.c.b16 %v7617, %v7613
    %7682 = vmatprep.subr.bf16.mxu0 %v7619
    %7683 = vmatpush1.bf16.msra.mxu0 %v7618
    %7684 = vmatprep.subr.bf16.mxu0 %v7623
    %7685 = vmatpush1.bf16.msra.mxu0 %v7622
    %7686 = vmatprep.subr.bf16.mxu0 %v7627
    %7687 = vmatpush1.bf16.msra.mxu0 %v7626
    %7688 = vmatprep.subr.bf16.mxu0 %v7631
    %7689 = vmatpush1.bf16.msra.mxu0 %v7630
    %7690 = vmatprep.subr.bf16.mxu0 %v7635
    %7691 = vmatpush1.bf16.msra.mxu0 %v7634
    %7692 = vmatprep.subr.bf16.mxu0 %v7639
    %7693 = vmatpush1.bf16.msra.mxu0 %v7638
    %7694 = vmatprep.subr.bf16.mxu0 %v7643
    %7695 = vmatpush1.bf16.msra.mxu0 %v7642
    %7696 = vmatprep.subr.bf16.mxu0 %v7647
    %7697 = vmatpush1.bf16.msra.mxu0 %v7646
    %7698 = vmatprep.subr.bf16.mxu0 0
    %7699 = vmatpush1.bf16.msra.mxu0 0
    %7700 = vmatprep.subr.bf16.mxu0 0
    %7701 = vmatpush1.bf16.msra.mxu0 0
    %7702 = vmatprep.subr.bf16.mxu0 0
    %7703 = vmatpush1.bf16.msra.mxu0 0
    %7704 = vmatprep.subr.bf16.mxu0 0
    %7705 = vmatpush1.bf16.msra.mxu0 0
    %7706 = vmatprep.subr.bf16.mxu0 0
    %7707 = vmatpush1.bf16.msra.mxu0 0
    %7708 = vmatprep.subr.bf16.mxu0 0
    %7709 = vmatpush1.bf16.msra.mxu0 0
    %7710 = vmatprep.subr.bf16.mxu0 0
    %7711 = vmatpush1.bf16.msra.mxu0 0
    %7712 = vmatprep.subr.bf16.mxu0 0
    %7713 = vmatpush1.bf16.msra.mxu0 0
    %7714 = vmatprep.mubr.bf16.mxu0 0
    %7715 = vmatmul.mubr.bf16.gmra.mrb[0].mxu0 %v7489
    %v7716 = vpop.f32.mrb[0].mxu0
    %v7717 = vadd.f32 0.0, %v7716
    %v7718 = vpop.f32.mrb[0].mxu0
    %v7719 = vadd.f32 0.0, %v7718
    %v7720 = vpop.f32.mrb[0].mxu0
    %v7721 = vpop.f32.mrb[0].mxu0
    %7722 = vdwg.mxu0
    %7723 = vmatprep.subr.bf16.mxu0 %v7621
    %7724 = vmatpush1.bf16.msra.mxu0 %v7620
    %7725 = vmatprep.subr.bf16.mxu0 %v7625
    %7726 = vmatpush1.bf16.msra.mxu0 %v7624
    %7727 = vmatprep.subr.bf16.mxu0 %v7629
    %7728 = vmatpush1.bf16.msra.mxu0 %v7628
    %7729 = vmatprep.subr.bf16.mxu0 %v7633
    %7730 = vmatpush1.bf16.msra.mxu0 %v7632
    %7731 = vmatprep.subr.bf16.mxu0 %v7637
    %7732 = vmatpush1.bf16.msra.mxu0 %v7636
    %7733 = vmatprep.subr.bf16.mxu0 %v7641
    %7734 = vmatpush1.bf16.msra.mxu0 %v7640
    %7735 = vmatprep.subr.bf16.mxu0 %v7645
    %7736 = vmatpush1.bf16.msra.mxu0 %v7644
    %7737 = vmatprep.subr.bf16.mxu0 %v7649
    %7738 = vmatpush1.bf16.msra.mxu0 %v7648
    %7739 = vmatprep.subr.bf16.mxu0 0
    %7740 = vmatpush1.bf16.msra.mxu0 0
    %7741 = vmatprep.subr.bf16.mxu0 0
    %7742 = vmatpush1.bf16.msra.mxu0 0
    %7743 = vmatprep.subr.bf16.mxu0 0
    %7744 = vmatpush1.bf16.msra.mxu0 0
    %7745 = vmatprep.subr.bf16.mxu0 0
    %7746 = vmatpush1.bf16.msra.mxu0 0
    %7747 = vmatprep.subr.bf16.mxu0 0
    %7748 = vmatpush1.bf16.msra.mxu0 0
    %7749 = vmatprep.subr.bf16.mxu0 0
    %7750 = vmatpush1.bf16.msra.mxu0 0
    %7751 = vmatprep.subr.bf16.mxu0 0
    %7752 = vmatpush1.bf16.msra.mxu0 0
    %7753 = vmatprep.subr.bf16.mxu0 0
    %7754 = vmatpush1.bf16.msra.mxu0 0
    %7755 = vmatprep.mubr.bf16.mxu0 0
    %7756 = vmatmul.mubr.bf16.gmra.mrb[0].mxu0 %v7489
    %v7757 = vpop.f32.mrb[0].mxu0
    %v7758 = vadd.f32 0.0, %v7757
    %v7759 = vpop.f32.mrb[0].mxu0
    %v7760 = vadd.f32 0.0, %v7759
    %v7761 = vpop.f32.mrb[0].mxu0
    %v7762 = vpop.f32.mrb[0].mxu0
    %7763 = vdwg.mxu0
    %v7796 = vunpack.c.l.b16 %v7457
    %v7797 = vunpack.c.h.b16 %v7457
    %v7798 = vunpack.c.l.b16 %v7458
    %v7799 = vunpack.c.h.b16 %v7458
    %v7800 = vunpack.c.l.b16 %v7459
    %v7801 = vunpack.c.h.b16 %v7459
    %v7802 = vunpack.c.l.b16 %v7460
    %v7803 = vunpack.c.h.b16 %v7460
    %v7804 = vunpack.c.l.b16 %v7461
    %v7805 = vunpack.c.h.b16 %v7461
    %v7806 = vunpack.c.l.b16 %v7462
    %v7807 = vunpack.c.h.b16 %v7462
    %v7808 = vunpack.c.l.b16 %v7463
    %v7809 = vunpack.c.h.b16 %v7463
    %v7810 = vunpack.c.l.b16 %v7464
    %v7811 = vunpack.c.h.b16 %v7464
    %v7812 = vunpack.c.l.b16 %v7465
    %v7813 = vunpack.c.h.b16 %v7465
    %v7814 = vunpack.c.l.b16 %v7466
    %v7815 = vunpack.c.h.b16 %v7466
    %v7816 = vunpack.c.l.b16 %v7467
    %v7817 = vunpack.c.h.b16 %v7467
    %v7818 = vunpack.c.l.b16 %v7468
    %v7819 = vunpack.c.h.b16 %v7468
    %v7820 = vunpack.c.l.b16 %v7469
    %v7821 = vunpack.c.h.b16 %v7469
    %v7822 = vunpack.c.l.b16 %v7470
    %v7823 = vunpack.c.h.b16 %v7470
    %v7824 = vunpack.c.l.b16 %v7471
    %v7825 = vunpack.c.h.b16 %v7471
    %v7826 = vunpack.c.l.b16 %v7472
    %v7827 = vunpack.c.h.b16 %v7472
    %v7828 = vunpack.c.l.b16 %v7473
    %v7829 = vunpack.c.h.b16 %v7473
    %v7830 = vunpack.c.l.b16 %v7474
    %v7831 = vunpack.c.h.b16 %v7474
    %v7832 = vunpack.c.l.b16 %v7475
    %v7833 = vunpack.c.h.b16 %v7475
    %v7834 = vunpack.c.l.b16 %v7476
    %v7835 = vunpack.c.h.b16 %v7476
    %v7836 = vunpack.c.l.b16 %v7477
    %v7837 = vunpack.c.h.b16 %v7477
    %v7838 = vunpack.c.l.b16 %v7478
    %v7839 = vunpack.c.h.b16 %v7478
    %v7840 = vunpack.c.l.b16 %v7479
    %v7841 = vunpack.c.h.b16 %v7479
    %v7842 = vunpack.c.l.b16 %v7480
    %v7843 = vunpack.c.h.b16 %v7480
    %v7844 = vunpack.c.l.b16 %v7481
    %v7845 = vunpack.c.h.b16 %v7481
    %v7846 = vunpack.c.l.b16 %v7482
    %v7847 = vunpack.c.h.b16 %v7482
    %v7848 = vunpack.c.l.b16 %v7483
    %v7849 = vunpack.c.h.b16 %v7483
    %v7850 = vunpack.c.l.b16 %v7484
    %v7851 = vunpack.c.h.b16 %v7484
    %v7852 = vunpack.c.l.b16 %v7485
    %v7853 = vunpack.c.h.b16 %v7485
    %v7854 = vunpack.c.l.b16 %v7486
    %v7855 = vunpack.c.h.b16 %v7486
    %v7856 = vunpack.c.l.b16 %v7487
    %v7857 = vunpack.c.h.b16 %v7487
    %v7858 = vunpack.c.l.b16 %v7488
    %v7859 = vunpack.c.h.b16 %v7488
    %v7860 = vpack.c.b16 %v7800, %v7796
    %v7861 = vpack.c.b16 %v7801, %v7797
    %v7862 = vpack.c.b16 %v7802, %v7798
    %v7863 = vpack.c.b16 %v7803, %v7799
    %v7864 = vpack.c.b16 %v7808, %v7804
    %v7865 = vpack.c.b16 %v7809, %v7805
    %v7866 = vpack.c.b16 %v7810, %v7806
    %v7867 = vpack.c.b16 %v7811, %v7807
    %v7868 = vpack.c.b16 %v7816, %v7812
    %v7869 = vpack.c.b16 %v7817, %v7813
    %v7870 = vpack.c.b16 %v7818, %v7814
    %v7871 = vpack.c.b16 %v7819, %v7815
    %v7872 = vpack.c.b16 %v7824, %v7820
    %v7873 = vpack.c.b16 %v7825, %v7821
    %v7874 = vpack.c.b16 %v7826, %v7822
    %v7875 = vpack.c.b16 %v7827, %v7823
    %v7876 = vpack.c.b16 %v7832, %v7828
    %v7877 = vpack.c.b16 %v7833, %v7829
    %v7878 = vpack.c.b16 %v7834, %v7830
    %v7879 = vpack.c.b16 %v7835, %v7831
    %v7880 = vpack.c.b16 %v7840, %v7836
    %v7881 = vpack.c.b16 %v7841, %v7837
    %v7882 = vpack.c.b16 %v7842, %v7838
    %v7883 = vpack.c.b16 %v7843, %v7839
    %v7884 = vpack.c.b16 %v7848, %v7844
    %v7885 = vpack.c.b16 %v7849, %v7845
    %v7886 = vpack.c.b16 %v7850, %v7846
    %v7887 = vpack.c.b16 %v7851, %v7847
    %v7888 = vpack.c.b16 %v7856, %v7852
    %v7889 = vpack.c.b16 %v7857, %v7853
    %v7890 = vpack.c.b16 %v7858, %v7854
    %v7891 = vpack.c.b16 %v7859, %v7855
    %7924 = vmatprep.subr.bf16.mxu0 %v7861
    %7925 = vmatpush1.bf16.msra.mxu0 %v7860
    %7926 = vmatprep.subr.bf16.mxu0 %v7865
    %7927 = vmatpush1.bf16.msra.mxu0 %v7864
    %7928 = vmatprep.subr.bf16.mxu0 %v7869
    %7929 = vmatpush1.bf16.msra.mxu0 %v7868
    %7930 = vmatprep.subr.bf16.mxu0 %v7873
    %7931 = vmatpush1.bf16.msra.mxu0 %v7872
    %7932 = vmatprep.subr.bf16.mxu0 %v7877
    %7933 = vmatpush1.bf16.msra.mxu0 %v7876
    %7934 = vmatprep.subr.bf16.mxu0 %v7881
    %7935 = vmatpush1.bf16.msra.mxu0 %v7880
    %7936 = vmatprep.subr.bf16.mxu0 %v7885
    %7937 = vmatpush1.bf16.msra.mxu0 %v7884
    %7938 = vmatprep.subr.bf16.mxu0 %v7889
    %7939 = vmatpush1.bf16.msra.mxu0 %v7888
    %7940 = vmatprep.subr.bf16.mxu0 0
    %7941 = vmatpush1.bf16.msra.mxu0 0
    %7942 = vmatprep.subr.bf16.mxu0 0
    %7943 = vmatpush1.bf16.msra.mxu0 0
    %7944 = vmatprep.subr.bf16.mxu0 0
    %7945 = vmatpush1.bf16.msra.mxu0 0
    %7946 = vmatprep.subr.bf16.mxu0 0
    %7947 = vmatpush1.bf16.msra.mxu0 0
    %7948 = vmatprep.subr.bf16.mxu0 0
    %7949 = vmatpush1.bf16.msra.mxu0 0
    %7950 = vmatprep.subr.bf16.mxu0 0
    %7951 = vmatpush1.bf16.msra.mxu0 0
    %7952 = vmatprep.subr.bf16.mxu0 0
    %7953 = vmatpush1.bf16.msra.mxu0 0
    %7954 = vmatprep.subr.bf16.mxu0 0
    %7955 = vmatpush1.bf16.msra.mxu0 0
    %7956 = vmatprep.mubr.bf16.mxu0 0
    %7957 = vmatmul.mubr.bf16.gmra.mrb[0].mxu0 %v7456
    %v7958 = vpop.f32.mrb[0].mxu0
    %v7959 = vadd.f32 %v7717, %v7958
    %v7960 = vpop.f32.mrb[0].mxu0
    %v7961 = vadd.f32 %v7719, %v7960
    %v7962 = vpop.f32.mrb[0].mxu0
    %v7963 = vpop.f32.mrb[0].mxu0
    %7964 = vdwg.mxu0
    %7965 = vmatprep.subr.bf16.mxu0 %v7863
    %7966 = vmatpush1.bf16.msra.mxu0 %v7862
    %7967 = vmatprep.subr.bf16.mxu0 %v7867
    %7968 = vmatpush1.bf16.msra.mxu0 %v7866
    %7969 = vmatprep.subr.bf16.mxu0 %v7871
    %7970 = vmatpush1.bf16.msra.mxu0 %v7870
    %7971 = vmatprep.subr.bf16.mxu0 %v7875
    %7972 = vmatpush1.bf16.msra.mxu0 %v7874
    %7973 = vmatprep.subr.bf16.mxu0 %v7879
    %7974 = vmatpush1.bf16.msra.mxu0 %v7878
    %7975 = vmatprep.subr.bf16.mxu0 %v7883
    %7976 = vmatpush1.bf16.msra.mxu0 %v7882
    %7977 = vmatprep.subr.bf16.mxu0 %v7887
    %7978 = vmatpush1.bf16.msra.mxu0 %v7886
    %7979 = vmatprep.subr.bf16.mxu0 %v7891
    %7980 = vmatpush1.bf16.msra.mxu0 %v7890
    %7981 = vmatprep.subr.bf16.mxu0 0
    %7982 = vmatpush1.bf16.msra.mxu0 0
    %7983 = vmatprep.subr.bf16.mxu0 0
    %7984 = vmatpush1.bf16.msra.mxu0 0
    %7985 = vmatprep.subr.bf16.mxu0 0
    %7986 = vmatpush1.bf16.msra.mxu0 0
    %7987 = vmatprep.subr.bf16.mxu0 0
    %7988 = vmatpush1.bf16.msra.mxu0 0
    %7989 = vmatprep.subr.bf16.mxu0 0
    %7990 = vmatpush1.bf16.msra.mxu0 0
    %7991 = vmatprep.subr.bf16.mxu0 0
    %7992 = vmatpush1.bf16.msra.mxu0 0
    %7993 = vmatprep.subr.bf16.mxu0 0
    %7994 = vmatpush1.bf16.msra.mxu0 0
    %7995 = vmatprep.subr.bf16.mxu0 0
    %7996 = vmatpush1.bf16.msra.mxu0 0
    %7997 = vmatprep.mubr.bf16.mxu0 0
    %7998 = vmatmul.mubr.bf16.gmra.mrb[0].mxu0 %v7456
    %v7999 = vpop.f32.mrb[0].mxu0
    %v8000 = vadd.f32 %v7758, %v7999
    %v8001 = vpop.f32.mrb[0].mxu0
    %v8002 = vadd.f32 %v7760, %v8001
    %v8003 = vpop.f32.mrb[0].mxu0
    %v8004 = vpop.f32.mrb[0].mxu0
    %8005 = vdwg.mxu0
    %v8006 = vld [vmem:[%s6] sm:$0xf]
    %v8008 = vlaneseq
    %v8009 = vshrl.u32 %v8008, 7
    %v8010 = vsub.s32 0, %v8009
    %v8011 = vrot.slane %v8006, %v8010
    %v8012 = vlaneseq
    %v8013 = vshrl.u32 %v8012, 7
    %v8014 = vsub.s32 1, %v8013
    %v8015 = vrot.slane %v8006, %v8014
    %v8016 = vlaneseq
    %v8017 = vshrl.u32 %v8016, 7
    %v8018 = vsub.s32 2, %v8017
    %v8019 = vrot.slane %v8006, %v8018
    %v8020 = vlaneseq
    %v8021 = vshrl.u32 %v8020, 7
    %v8022 = vsub.s32 3, %v8021
    %v8023 = vrot.slane %v8006, %v8022
    %v8028 = vadd.f32 %v7959, %v8011
    %v8029 = vadd.f32 %v7961, %v8015
    %v8030 = vadd.f32 %v8000, %v8019
    %v8031 = vadd.f32 %v8002, %v8023
    %v8032 = vxor.u32 %v8028, 2147483648
    %v8033 = vmul.f32 %v8032, 1.442695
    %v8034 = vpow.pop %v8033
    %v8035 = vadd.f32 %v8034, 1.0
    %v8036 = vrcp.pop %v8035
    %v8037 = vmul.f32 1.0, %v8036
    %v8038 = vxor.u32 %v8029, 2147483648
    %v8039 = vmul.f32 %v8038, 1.442695
    %v8040 = vpow.pop %v8039
    %v8041 = vadd.f32 %v8040, 1.0
    %v8042 = vrcp.pop %v8041
    %v8043 = vmul.f32 1.0, %v8042
    %v8044 = vtanh.pop %v8030
    %v8045 = vxor.u32 %v8031, 2147483648
    %v8046 = vmul.f32 %v8045, 1.442695
    %v8047 = vpow.pop %v8046
    %v8048 = vadd.f32 %v8047, 1.0
    %v8049 = vrcp.pop %v8048
    %v8050 = vmul.f32 1.0, %v8049
    %v8051 = vmul.f32 %v8043, %v7119
    %v8052 = vmul.f32 %v8037, %v8044
    %v8053 = vadd.f32 %v8051, %v8052
    %v8054 = vtanh.pop %v8053
    %v8055 = vmul.f32 %v8050, %v8054
    %8056 = vst [vmem:[#allocation3] sm:$0xff] %v7455
    %8057 = vst [vmem:[#allocation4] sm:$0xff] %v7453
    %8058 = vst [vmem:[#allocation5] sm:$0xff] %v8055
    %8059 = vst [vmem:[#allocation6] sm:$0xff] %v8053
    %s8060 = scalar_lea.vmem %s11, 56
    %8061 = vst [vmem:[%s8060] sm:$0xff] %v8055
    %v8062 = vld [vmem:[#allocation3] sm:$0xff]
    %8063 = vst [vmem:[%s12] sm:$0xff] %v8062
    %v8064 = vld [vmem:[#allocation4] sm:$0xff]
    %8065 = vst [vmem:[%s13] sm:$0xff] %v8064
    %v8066 = vld [vmem:[#allocation5] sm:$0xff]
    %8067 = vst [vmem:[%s14] sm:$0xff] %v8066
    %v8068 = vld [vmem:[#allocation6] sm:$0xff]
    %8069 = vst [vmem:[%s15] sm:$0xff] %v8068
    // Predicated region
    $region58: #{rnnlm_forward.2} parent=1 // pred_check
      _
    $region59: #{rnnlm_forward.2} parent=1 // pred_check_branch
      %8071 = sbr.rel (0) target = $region61
    $region60: #{rnnlm_forward.2} parent=1 // pred_region
      _
    $region61: #{rnnlm_forward.2} parent=1 // pred_fallthru
      _
    // Predicated region
    $region62: #{rnnlm_forward.2} parent=1 // pred_check
      _
    $region63: #{rnnlm_forward.2} parent=1 // pred_check_branch
      %8073 = sbr.rel (0) target = $region65
    $region64: #{rnnlm_forward.2} parent=1 // pred_region
      _
    $region65: #{rnnlm_forward.2} parent=1 // pred_fallthru
      _
    // Predicated region
    $region66: #{rnnlm_forward.2} parent=1 // pred_check
      _
    $region67: #{rnnlm_forward.2} parent=1 // pred_check_branch
      %8075 = sbr.rel (0) target = $region69
    $region68: #{rnnlm_forward.2} parent=1 // pred_region
      _
    $region69: #{rnnlm_forward.2} parent=1 // pred_fallthru
      _
    // Predicated region
    $region70: #{rnnlm_forward.2} parent=1 // pred_check
      _
    $region71: #{rnnlm_forward.2} parent=1 // pred_check_branch
      %8077 = sbr.rel (0) target = $region73
    $region72: #{rnnlm_forward.2} parent=1 // pred_region
      _
    $region73: #{rnnlm_forward.2} parent=1 // pred_fallthru
      _
    // Predicated region
    $region74: #{rnnlm_forward.2} parent=1 // pred_check
      _
    $region75: #{rnnlm_forward.2} parent=1 // pred_check_branch
      %8079 = sbr.rel (0) target = $region77
    $region76: #{rnnlm_forward.2} parent=1 // pred_region
      _
    $region77: #{rnnlm_forward.2} parent=1 // pred_fallthru
      _
    // Predicated region
    $region78: #{rnnlm_forward.2} parent=1 // pred_check
      _
    $region79: #{rnnlm_forward.2} parent=1 // pred_check_branch
      %8081 = sbr.rel (0) target = $region81
    $region80: #{rnnlm_forward.2} parent=1 // pred_region
      _
    $region81: #{rnnlm_forward.2} parent=1 // pred_fallthru
      _
    // Predicated region
    $region82: #{rnnlm_forward.2} parent=1 // pred_check
      _
    $region83: #{rnnlm_forward.2} parent=1 // pred_check_branch
      %8083 = sbr.rel (0) target = $region85
    $region84: #{rnnlm_forward.2} parent=1 // pred_region
      _
    $region85: #{rnnlm_forward.2} parent=1 // pred_fallthru
      _
    // Predicated region
    $region86: #{rnnlm_forward.2} parent=1 // pred_check
      _
    $region87: #{rnnlm_forward.2} parent=1 // pred_check_branch
      %8085 = sbr.rel (0) target = $region89
    $region88: #{rnnlm_forward.2} parent=1 // pred_region
      _
    $region89: #{rnnlm_forward.2} parent=1 // pred_fallthru
      _
    // Predicated region
    $region90: #{rnnlm_forward.2} parent=1 // pred_check
      _
    $region91: #{rnnlm_forward.2} parent=1 // pred_check_branch
      %8087 = sbr.rel (0) target = $region93
    $region92: #{rnnlm_forward.2} parent=1 // pred_region
      _
    $region93: #{rnnlm_forward.2} parent=1 // pred_fallthru
      _
    // Predicated region
    $region94: #{rnnlm_forward.2} parent=1 // pred_check
      _
    $region95: #{rnnlm_forward.2} parent=1 // pred_check_branch
      %8089 = sbr.rel (0) target = $region97
    $region96: #{rnnlm_forward.2} parent=1 // pred_region
      _
    $region97: #{rnnlm_forward.2} parent=1 // pred_fallthru
      _
    %8090 = vsyncpa [#allocation8], 1
    %8091 = vsyncpa [#allocation10], 1

</llo_original>
